<compile_context>
chip_gen: v6e
topology: v6e:2x2x1
jax: 0.10.0
libtpu: 0.0.40
codegen_flags: <defaults>
</compile_context>

<pallas_src>
import jax
import jax.numpy as jnp
from jax import lax
from jax.experimental import pallas as pl
from jax.experimental.pallas import tpu as pltpu


def _silu(a):
    # SiLU = a * sigmoid(a); explicit exp + reciprocal for safe Mosaic lowering.
    return a * pl.reciprocal(1.0 + jnp.exp(-a), approx=False)


def _maxpool5(v):
    """5x5 / stride 1 / pad 2 max pool on (H, W, C), separable 5x1 then 1x5."""
    H, W, C = v.shape
    # Vertical pass (leading axis -> cheap full-row slices).
    rpad = jnp.full((2, W, C), -jnp.inf, jnp.float32)
    vp = jnp.concatenate([rpad, v, rpad], axis=0)          # (H+4, W, C)
    m = vp[0:H]
    for d in range(1, 5):
        m = jnp.maximum(m, vp[d:d + H])
    # Horizontal pass (sublane axis -> no lane rotations).
    cpad = jnp.full((H, 2, C), -jnp.inf, jnp.float32)
    hp = jnp.concatenate([cpad, m, cpad], axis=1)          # (H, W+4, C)
    out = hp[:, 0:W]
    for d in range(1, 5):
        out = jnp.maximum(out, hp[:, d:d + W])
    return out


def sppf_kernel(x_ref, w1_ref, b1_ref, w2_ref, b2_ref, o_ref):
    """One batch element, channels-last.

    x_ref  : (H, W, Cin)      VMEM
    w1_ref : (Cin, Ch)        VMEM   (BN-folded cv1 weight, transposed)
    b1_ref : (1, Ch)          VMEM   (BN-folded cv1 bias)
    w2_ref : (4*Ch, Cout)     VMEM   (BN-folded cv2 weight, concat order x,y1,y2,y3)
    b2_ref : (1, Cout)        VMEM   (BN-folded cv2 bias)
    o_ref  : (H, W, Cout)     VMEM
    """
    H, W, Cin = x_ref.shape
    Ch = w1_ref.shape[1]
    Cout = o_ref.shape[2]
    HW = H * W

    def dot(a, b):
        return jnp.dot(a, b, preferred_element_type=jnp.float32,
                       precision=lax.Precision.HIGHEST)

    # ---- cv1: 1x1 conv (BN folded) + SiLU on the MXU ----
    x2 = x_ref[...].reshape(HW, Cin)
    t2 = _silu(dot(x2, w1_ref[...]) + b1_ref[...])         # (HW, Ch)
    t = t2.reshape(H, W, Ch)

    # ---- three chained 5x5 max pools ----
    y1 = _maxpool5(t)
    y2 = _maxpool5(y1)
    y3 = _maxpool5(y2)

    # ---- cv2 on concat(t, y1, y2, y3): 4 weight blocks, one accumulator ----
    w2 = w2_ref[...]                                       # (4*Ch, Cout)
    acc = dot(t2, w2[0:Ch])
    acc = acc + dot(y1.reshape(HW, Ch), w2[Ch:2 * Ch])
    acc = acc + dot(y2.reshape(HW, Ch), w2[2 * Ch:3 * Ch])
    acc = acc + dot(y3.reshape(HW, Ch), w2[3 * Ch:4 * Ch])
    out = _silu(acc + b2_ref[...])                         # (HW, Cout)
    o_ref[...] = out.reshape(H, W, Cout).astype(o_ref.dtype)


def sppf_forward(x_nchw, w1f, b1f, w2f, b2f):
    """Public wrapper: NCHW in / NCHW out (PyTorch convention)."""
    N, Cin, H, W = x_nchw.shape
    Ch = w1f.shape[0]
    Cout = w2f.shape[0]

    # Layout plumbing outside the kernel: channels-last activations,
    # (in, out)-ordered weights, 2-D biases for lane broadcast.
    x_nhwc = jnp.transpose(x_nchw, (0, 2, 3, 1))
    w1 = jnp.transpose(w1f, (1, 0))                        # (Cin, Ch)
    w2 = jnp.transpose(w2f, (1, 0))                        # (4*Ch, Cout)
    b1 = b1f.reshape(1, Ch)
    b2 = b2f.reshape(1, Cout)

    out_nhwc = pl.pallas_call(
        sppf_kernel,
        out_shape=jax.ShapeDtypeStruct((N, H, W, Cout), jnp.float32),
        grid=(N,),
        in_specs=[
            pl.BlockSpec((None, H, W, Cin), lambda n: (n, 0, 0, 0)),
            pl.BlockSpec((Cin, Ch), lambda n: (0, 0)),
            pl.BlockSpec((1, Ch), lambda n: (0, 0)),
            pl.BlockSpec((4 * Ch, Cout), lambda n: (0, 0)),
            pl.BlockSpec((1, Cout), lambda n: (0, 0)),
        ],
        out_specs=pl.BlockSpec((None, H, W, Cout), lambda n: (n, 0, 0, 0)),
        compiler_params=pltpu.CompilerParams(
            dimension_semantics=("parallel",),
            vmem_limit_bytes=32 * 1024 * 1024,
        ),
    )(x_nhwc, w1, b1, w2, b2)

    return jnp.transpose(out_nhwc, (0, 3, 1, 2))


# ------------------------- parameter setup (glue) -------------------------

def fold_bn(conv_w, gamma, beta, mean, var, eps=1e-5):
    """Fold eval-mode BatchNorm2d into a bias-free 1x1 conv.

    conv_w: (Cout, Cin) -> folded (Cout, Cin) weight and (Cout,) bias.
    """
    scale = gamma / jnp.sqrt(var + eps)
    w_f = conv_w * scale[:, None]
    b_f = beta - mean * scale
    return w_f.astype(jnp.float32), b_f.astype(jnp.float32)


def make_params(key, in_channels, out_channels):
    hidden = in_channels // 2
    ks = jax.random.split(key, 10)
    # cv1: Conv2d(in, hidden, 1, bias=False) + BN(hidden)
    w1 = 0.2 * jax.random.normal(ks[0], (hidden, in_channels), jnp.float32)
    g1 = jax.random.uniform(ks[1], (hidden,), jnp.float32, 0.8, 1.2)
    be1 = 0.1 * jax.random.normal(ks[2], (hidden,), jnp.float32)
    m1 = 0.1 * jax.random.normal(ks[3], (hidden,), jnp.float32)
    v1 = jax.random.uniform(ks[4], (hidden,), jnp.float32, 0.5, 1.5)
    # cv2: Conv2d(4*hidden, out, 1, bias=False) + BN(out)
    w2 = 0.2 * jax.random.normal(ks[5], (out_channels, 4 * hidden), jnp.float32)
    g2 = jax.random.uniform(ks[6], (out_channels,), jnp.float32, 0.8, 1.2)
    be2 = 0.1 * jax.random.normal(ks[7], (out_channels,), jnp.float32)
    m2 = 0.1 * jax.random.normal(ks[8], (out_channels,), jnp.float32)
    v2 = jax.random.uniform(ks[9], (out_channels,), jnp.float32, 0.5, 1.5)
    w1f, b1f = fold_bn(w1, g1, be1, m1, v1)
    w2f, b2f = fold_bn(w2, g2, be2, m2, v2)
    return w1f, b1f, w2f, b2f


# ------------------------- pure-JAX reference -------------------------

def sppf_reference(x, w1f, b1f, w2f, b2f):
    def conv1x1_silu(v, w, b):
        y = jnp.einsum("nchw,oc->nohw", v, w,
                       precision="highest") + b[None, :, None, None]
        return y * jax.nn.sigmoid(y)

    def maxpool5(v):
        return lax.reduce_window(
            v, -jnp.inf, lax.max,
            window_dimensions=(1, 1, 5, 5),
            window_strides=(1, 1, 1, 1),
            padding=[(0, 0), (0, 0), (2, 2), (2, 2)],
        )

    t = conv1x1_silu(x, w1f, b1f)
    y1 = maxpool5(t)
    y2 = maxpool5(y1)
    y3 = maxpool5(y2)
    cat = jnp.concatenate([t, y1, y2, y3], axis=1)
    return conv1x1_silu(cat, w2f, b2f)


if __name__ == "__main__":
    N, Cin, H, W = 2, 4, 16, 16
    Cout = 8

    key = jax.random.PRNGKey(0)
    kx, kp = jax.random.split(key)
    x = jax.random.normal(kx, (N, Cin, H, W), jnp.float32)
    w1f, b1f, w2f, b2f = make_params(kp, Cin, Cout)

    out = jax.block_until_ready(sppf_forward(x, w1f, b1f, w2f, b2f))
    ref = jax.block_until_ready(sppf_reference(x, w1f, b1f, w2f, b2f))

    assert out.shape == (N, Cout, H, W), out.shape
    max_err = float(jnp.max(jnp.abs(out - ref)))
    assert jnp.allclose(out, ref, rtol=1e-3, atol=1e-3), max_err
    print("KERNEL_OK")
</pallas_src>

<mosaic_0001>
module attributes {stable_mosaic.version = 11 : i64} {
  func.func @sppf_kernel(%arg0: i32, %arg1: memref<1x16x16x4xf32, #tpu.memory_space<vmem>>, %arg2: memref<4x2xf32, #tpu.memory_space<vmem>>, %arg3: memref<1x2xf32, #tpu.memory_space<vmem>>, %arg4: memref<8x8xf32, #tpu.memory_space<vmem>>, %arg5: memref<1x8xf32, #tpu.memory_space<vmem>>, %arg6: memref<1x16x16x8xf32, #tpu.memory_space<vmem>>) attributes {dimension_semantics = [#tpu.dimension_semantics<parallel>], iteration_bounds = array<i64: 2>, scalar_prefetch = 0 : i64, scratch_operands = 0 : i64, tpu.core_type = #tpu.core_type<tc>, window_params = [{transform_indices = @transform_0, window_bounds = array<i64: 1, 16, 16, 4>}, {pipeline_mode = #tpu.pipeline_mode<synchronous>, transform_indices = @transform_1, window_bounds = array<i64: 4, 2>}, {pipeline_mode = #tpu.pipeline_mode<synchronous>, transform_indices = @transform_2, window_bounds = array<i64: 1, 2>}, {pipeline_mode = #tpu.pipeline_mode<synchronous>, transform_indices = @transform_3, window_bounds = array<i64: 8, 8>}, {pipeline_mode = #tpu.pipeline_mode<synchronous>, transform_indices = @transform_4, window_bounds = array<i64: 1, 8>}, {transform_indices = @transform_5, window_bounds = array<i64: 1, 16, 16, 8>}]} {
    %c0 = arith.constant 0 : index
    %c0_0 = arith.constant 0 : index
    %c0_1 = arith.constant 0 : index
    %c0_2 = arith.constant 0 : index
    %0 = vector.load %arg1[%c0, %c0_0, %c0_1, %c0_2] : memref<1x16x16x4xf32, #tpu.memory_space<vmem>>, vector<1x16x16x4xf32>
    %1 = vector.shape_cast %0 : vector<1x16x16x4xf32> to vector<16x16x4xf32>
    %2 = vector.shape_cast %1 : vector<16x16x4xf32> to vector<256x4xf32>
    %c0_3 = arith.constant 0 : index
    %c0_4 = arith.constant 0 : index
    %3 = vector.load %arg2[%c0_3, %c0_4] : memref<4x2xf32, #tpu.memory_space<vmem>>, vector<4x2xf32>
    %cst = arith.constant dense<0.000000e+00> : vector<256x2xf32>
    %4 = tpu.matmul %2, %3, %cst {dimension_numbers = #tpu.dot_dimension_numbers<[1], [0], [0], [1], [0, 0, 1, 1], [], []>, precision = #tpu.contract_precision<fp32>} : vector<256x4xf32>, vector<4x2xf32>, vector<256x2xf32> -> vector<256x2xf32>
    %c0_5 = arith.constant 0 : index
    %c0_6 = arith.constant 0 : index
    %5 = vector.load %arg3[%c0_5, %c0_6] : memref<1x2xf32, #tpu.memory_space<vmem>>, vector<1x2xf32>
    %6 = vector.broadcast %5 : vector<1x2xf32> to vector<256x2xf32>
    %7 = arith.addf %4, %6 : vector<256x2xf32>
    %cst_7 = arith.constant 0.000000e+00 : f32
    %8 = vector.broadcast %cst_7 : f32 to vector<256x2xf32>
    %9 = arith.subf %8, %7 : vector<256x2xf32>
    %10 = math.exp %9 : vector<256x2xf32>
    %cst_8 = arith.constant 1.000000e+00 : f32
    %11 = vector.broadcast %cst_8 : f32 to vector<256x2xf32>
    %12 = arith.addf %11, %10 : vector<256x2xf32>
    %13 = tpu.reciprocal %12 : vector<256x2xf32> -> vector<256x2xf32>
    %14 = arith.mulf %7, %13 : vector<256x2xf32>
    %15 = vector.shape_cast %14 : vector<256x2xf32> to vector<16x16x2xf32>
    %cst_9 = arith.constant 0xFF800000 : f32
    %16 = vector.broadcast %cst_9 : f32 to vector<2x16x2xf32>
    %17 = tpu.concatenate %16, %15, %16 in 0 : vector<2x16x2xf32>, vector<16x16x2xf32>, vector<2x16x2xf32> -> vector<20x16x2xf32>
    %18 = vector.extract_strided_slice %17 {offsets = [0, 0, 0], sizes = [16, 16, 2], strides = [1, 1, 1]} : vector<20x16x2xf32> to vector<16x16x2xf32>
    %19 = vector.extract_strided_slice %17 {offsets = [1, 0, 0], sizes = [16, 16, 2], strides = [1, 1, 1]} : vector<20x16x2xf32> to vector<16x16x2xf32>
    %20 = arith.maximumf %18, %19 : vector<16x16x2xf32>
    %21 = vector.extract_strided_slice %17 {offsets = [2, 0, 0], sizes = [16, 16, 2], strides = [1, 1, 1]} : vector<20x16x2xf32> to vector<16x16x2xf32>
    %22 = arith.maximumf %20, %21 : vector<16x16x2xf32>
    %23 = vector.extract_strided_slice %17 {offsets = [3, 0, 0], sizes = [16, 16, 2], strides = [1, 1, 1]} : vector<20x16x2xf32> to vector<16x16x2xf32>
    %24 = arith.maximumf %22, %23 : vector<16x16x2xf32>
    %25 = vector.extract_strided_slice %17 {offsets = [4, 0, 0], sizes = [16, 16, 2], strides = [1, 1, 1]} : vector<20x16x2xf32> to vector<16x16x2xf32>
    %26 = arith.maximumf %24, %25 : vector<16x16x2xf32>
    %cst_10 = arith.constant 0xFF800000 : f32
    %27 = vector.broadcast %cst_10 : f32 to vector<16x2x2xf32>
    %28 = tpu.concatenate %27, %26, %27 in 1 : vector<16x2x2xf32>, vector<16x16x2xf32>, vector<16x2x2xf32> -> vector<16x20x2xf32>
    %29 = vector.extract_strided_slice %28 {offsets = [0, 0, 0], sizes = [16, 16, 2], strides = [1, 1, 1]} : vector<16x20x2xf32> to vector<16x16x2xf32>
    %30 = vector.extract_strided_slice %28 {offsets = [0, 1, 0], sizes = [16, 16, 2], strides = [1, 1, 1]} : vector<16x20x2xf32> to vector<16x16x2xf32>
    %31 = arith.maximumf %29, %30 : vector<16x16x2xf32>
    %32 = vector.extract_strided_slice %28 {offsets = [0, 2, 0], sizes = [16, 16, 2], strides = [1, 1, 1]} : vector<16x20x2xf32> to vector<16x16x2xf32>
    %33 = arith.maximumf %31, %32 : vector<16x16x2xf32>
    %34 = vector.extract_strided_slice %28 {offsets = [0, 3, 0], sizes = [16, 16, 2], strides = [1, 1, 1]} : vector<16x20x2xf32> to vector<16x16x2xf32>
    %35 = arith.maximumf %33, %34 : vector<16x16x2xf32>
    %36 = vector.extract_strided_slice %28 {offsets = [0, 4, 0], sizes = [16, 16, 2], strides = [1, 1, 1]} : vector<16x20x2xf32> to vector<16x16x2xf32>
    %37 = arith.maximumf %35, %36 : vector<16x16x2xf32>
    %cst_11 = arith.constant 0xFF800000 : f32
    %38 = vector.broadcast %cst_11 : f32 to vector<2x16x2xf32>
    %39 = tpu.concatenate %38, %37, %38 in 0 : vector<2x16x2xf32>, vector<16x16x2xf32>, vector<2x16x2xf32> -> vector<20x16x2xf32>
    %40 = vector.extract_strided_slice %39 {offsets = [0, 0, 0], sizes = [16, 16, 2], strides = [1, 1, 1]} : vector<20x16x2xf32> to vector<16x16x2xf32>
    %41 = vector.extract_strided_slice %39 {offsets = [1, 0, 0], sizes = [16, 16, 2], strides = [1, 1, 1]} : vector<20x16x2xf32> to vector<16x16x2xf32>
    %42 = arith.maximumf %40, %41 : vector<16x16x2xf32>
    %43 = vector.extract_strided_slice %39 {offsets = [2, 0, 0], sizes = [16, 16, 2], strides = [1, 1, 1]} : vector<20x16x2xf32> to vector<16x16x2xf32>
    %44 = arith.maximumf %42, %43 : vector<16x16x2xf32>
    %45 = vector.extract_strided_slice %39 {offsets = [3, 0, 0], sizes = [16, 16, 2], strides = [1, 1, 1]} : vector<20x16x2xf32> to vector<16x16x2xf32>
    %46 = arith.maximumf %44, %45 : vector<16x16x2xf32>
    %47 = vector.extract_strided_slice %39 {offsets = [4, 0, 0], sizes = [16, 16, 2], strides = [1, 1, 1]} : vector<20x16x2xf32> to vector<16x16x2xf32>
    %48 = arith.maximumf %46, %47 : vector<16x16x2xf32>
    %cst_12 = arith.constant 0xFF800000 : f32
    %49 = vector.broadcast %cst_12 : f32 to vector<16x2x2xf32>
    %50 = tpu.concatenate %49, %48, %49 in 1 : vector<16x2x2xf32>, vector<16x16x2xf32>, vector<16x2x2xf32> -> vector<16x20x2xf32>
    %51 = vector.extract_strided_slice %50 {offsets = [0, 0, 0], sizes = [16, 16, 2], strides = [1, 1, 1]} : vector<16x20x2xf32> to vector<16x16x2xf32>
    %52 = vector.extract_strided_slice %50 {offsets = [0, 1, 0], sizes = [16, 16, 2], strides = [1, 1, 1]} : vector<16x20x2xf32> to vector<16x16x2xf32>
    %53 = arith.maximumf %51, %52 : vector<16x16x2xf32>
    %54 = vector.extract_strided_slice %50 {offsets = [0, 2, 0], sizes = [16, 16, 2], strides = [1, 1, 1]} : vector<16x20x2xf32> to vector<16x16x2xf32>
    %55 = arith.maximumf %53, %54 : vector<16x16x2xf32>
    %56 = vector.extract_strided_slice %50 {offsets = [0, 3, 0], sizes = [16, 16, 2], strides = [1, 1, 1]} : vector<16x20x2xf32> to vector<16x16x2xf32>
    %57 = arith.maximumf %55, %56 : vector<16x16x2xf32>
    %58 = vector.extract_strided_slice %50 {offsets = [0, 4, 0], sizes = [16, 16, 2], strides = [1, 1, 1]} : vector<16x20x2xf32> to vector<16x16x2xf32>
    %59 = arith.maximumf %57, %58 : vector<16x16x2xf32>
    %cst_13 = arith.constant 0xFF800000 : f32
    %60 = vector.broadcast %cst_13 : f32 to vector<2x16x2xf32>
    %61 = tpu.concatenate %60, %59, %60 in 0 : vector<2x16x2xf32>, vector<16x16x2xf32>, vector<2x16x2xf32> -> vector<20x16x2xf32>
    %62 = vector.extract_strided_slice %61 {offsets = [0, 0, 0], sizes = [16, 16, 2], strides = [1, 1, 1]} : vector<20x16x2xf32> to vector<16x16x2xf32>
    %63 = vector.extract_strided_slice %61 {offsets = [1, 0, 0], sizes = [16, 16, 2], strides = [1, 1, 1]} : vector<20x16x2xf32> to vector<16x16x2xf32>
    %64 = arith.maximumf %62, %63 : vector<16x16x2xf32>
    %65 = vector.extract_strided_slice %61 {offsets = [2, 0, 0], sizes = [16, 16, 2], strides = [1, 1, 1]} : vector<20x16x2xf32> to vector<16x16x2xf32>
    %66 = arith.maximumf %64, %65 : vector<16x16x2xf32>
    %67 = vector.extract_strided_slice %61 {offsets = [3, 0, 0], sizes = [16, 16, 2], strides = [1, 1, 1]} : vector<20x16x2xf32> to vector<16x16x2xf32>
    %68 = arith.maximumf %66, %67 : vector<16x16x2xf32>
    %69 = vector.extract_strided_slice %61 {offsets = [4, 0, 0], sizes = [16, 16, 2], strides = [1, 1, 1]} : vector<20x16x2xf32> to vector<16x16x2xf32>
    %70 = arith.maximumf %68, %69 : vector<16x16x2xf32>
    %cst_14 = arith.constant 0xFF800000 : f32
    %71 = vector.broadcast %cst_14 : f32 to vector<16x2x2xf32>
    %72 = tpu.concatenate %71, %70, %71 in 1 : vector<16x2x2xf32>, vector<16x16x2xf32>, vector<16x2x2xf32> -> vector<16x20x2xf32>
    %73 = vector.extract_strided_slice %72 {offsets = [0, 0, 0], sizes = [16, 16, 2], strides = [1, 1, 1]} : vector<16x20x2xf32> to vector<16x16x2xf32>
    %74 = vector.extract_strided_slice %72 {offsets = [0, 1, 0], sizes = [16, 16, 2], strides = [1, 1, 1]} : vector<16x20x2xf32> to vector<16x16x2xf32>
    %75 = arith.maximumf %73, %74 : vector<16x16x2xf32>
    %76 = vector.extract_strided_slice %72 {offsets = [0, 2, 0], sizes = [16, 16, 2], strides = [1, 1, 1]} : vector<16x20x2xf32> to vector<16x16x2xf32>
    %77 = arith.maximumf %75, %76 : vector<16x16x2xf32>
    %78 = vector.extract_strided_slice %72 {offsets = [0, 3, 0], sizes = [16, 16, 2], strides = [1, 1, 1]} : vector<16x20x2xf32> to vector<16x16x2xf32>
    %79 = arith.maximumf %77, %78 : vector<16x16x2xf32>
    %80 = vector.extract_strided_slice %72 {offsets = [0, 4, 0], sizes = [16, 16, 2], strides = [1, 1, 1]} : vector<16x20x2xf32> to vector<16x16x2xf32>
    %81 = arith.maximumf %79, %80 : vector<16x16x2xf32>
    %c0_15 = arith.constant 0 : index
    %c0_16 = arith.constant 0 : index
    %82 = vector.load %arg4[%c0_15, %c0_16] : memref<8x8xf32, #tpu.memory_space<vmem>>, vector<8x8xf32>
    %83 = vector.extract_strided_slice %82 {offsets = [0, 0], sizes = [2, 8], strides = [1, 1]} : vector<8x8xf32> to vector<2x8xf32>
    %cst_17 = arith.constant dense<0.000000e+00> : vector<256x8xf32>
    %84 = tpu.matmul %14, %83, %cst_17 {dimension_numbers = #tpu.dot_dimension_numbers<[1], [0], [0], [1], [0, 0, 1, 1], [], []>, precision = #tpu.contract_precision<fp32>} : vector<256x2xf32>, vector<2x8xf32>, vector<256x8xf32> -> vector<256x8xf32>
    %85 = vector.shape_cast %37 : vector<16x16x2xf32> to vector<256x2xf32>
    %86 = vector.extract_strided_slice %82 {offsets = [2, 0], sizes = [2, 8], strides = [1, 1]} : vector<8x8xf32> to vector<2x8xf32>
    %cst_18 = arith.constant dense<0.000000e+00> : vector<256x8xf32>
    %87 = tpu.matmul %85, %86, %cst_18 {dimension_numbers = #tpu.dot_dimension_numbers<[1], [0], [0], [1], [0, 0, 1, 1], [], []>, precision = #tpu.contract_precision<fp32>} : vector<256x2xf32>, vector<2x8xf32>, vector<256x8xf32> -> vector<256x8xf32>
    %88 = arith.addf %84, %87 : vector<256x8xf32>
    %89 = vector.shape_cast %59 : vector<16x16x2xf32> to vector<256x2xf32>
    %90 = vector.extract_strided_slice %82 {offsets = [4, 0], sizes = [2, 8], strides = [1, 1]} : vector<8x8xf32> to vector<2x8xf32>
    %cst_19 = arith.constant dense<0.000000e+00> : vector<256x8xf32>
    %91 = tpu.matmul %89, %90, %cst_19 {dimension_numbers = #tpu.dot_dimension_numbers<[1], [0], [0], [1], [0, 0, 1, 1], [], []>, precision = #tpu.contract_precision<fp32>} : vector<256x2xf32>, vector<2x8xf32>, vector<256x8xf32> -> vector<256x8xf32>
    %92 = arith.addf %88, %91 : vector<256x8xf32>
    %93 = vector.shape_cast %81 : vector<16x16x2xf32> to vector<256x2xf32>
    %94 = vector.extract_strided_slice %82 {offsets = [6, 0], sizes = [2, 8], strides = [1, 1]} : vector<8x8xf32> to vector<2x8xf32>
    %cst_20 = arith.constant dense<0.000000e+00> : vector<256x8xf32>
    %95 = tpu.matmul %93, %94, %cst_20 {dimension_numbers = #tpu.dot_dimension_numbers<[1], [0], [0], [1], [0, 0, 1, 1], [], []>, precision = #tpu.contract_precision<fp32>} : vector<256x2xf32>, vector<2x8xf32>, vector<256x8xf32> -> vector<256x8xf32>
    %96 = arith.addf %92, %95 : vector<256x8xf32>
    %c0_21 = arith.constant 0 : index
    %c0_22 = arith.constant 0 : index
    %97 = vector.load %arg5[%c0_21, %c0_22] : memref<1x8xf32, #tpu.memory_space<vmem>>, vector<1x8xf32>
    %98 = vector.broadcast %97 : vector<1x8xf32> to vector<256x8xf32>
    %99 = arith.addf %96, %98 : vector<256x8xf32>
    %cst_23 = arith.constant 0.000000e+00 : f32
    %100 = vector.broadcast %cst_23 : f32 to vector<256x8xf32>
    %101 = arith.subf %100, %99 : vector<256x8xf32>
    %102 = math.exp %101 : vector<256x8xf32>
    %cst_24 = arith.constant 1.000000e+00 : f32
    %103 = vector.broadcast %cst_24 : f32 to vector<256x8xf32>
    %104 = arith.addf %103, %102 : vector<256x8xf32>
    %105 = tpu.reciprocal %104 : vector<256x8xf32> -> vector<256x8xf32>
    %106 = arith.mulf %99, %105 : vector<256x8xf32>
    %107 = vector.shape_cast %106 : vector<256x8xf32> to vector<16x16x8xf32>
    %c0_25 = arith.constant 0 : index
    %c0_26 = arith.constant 0 : index
    %c0_27 = arith.constant 0 : index
    %c0_28 = arith.constant 0 : index
    %108 = vector.load %arg6[%c0_25, %c0_26, %c0_27, %c0_28] : memref<1x16x16x8xf32, #tpu.memory_space<vmem>>, vector<1x16x16x8xf32>
    %109 = vector.shape_cast %108 : vector<1x16x16x8xf32> to vector<16x16x8xf32>
    %110 = vector.shape_cast %107 : vector<16x16x8xf32> to vector<1x16x16x8xf32>
    tpu.vector_store %arg6[%c0_25, %c0_26, %c0_27, %c0_28], %110 {strides = array<i32>} : memref<1x16x16x8xf32, #tpu.memory_space<vmem>>, vector<1x16x16x8xf32>,
    return
  }
  func.func @transform_0(%arg0: i32) -> (i32, i32, i32, i32) {
    %c0_i32 = arith.constant 0 : i32
    %c0_i32_0 = arith.constant 0 : i32
    %c0_i32_1 = arith.constant 0 : i32
    %c0_i32_2 = arith.constant 0 : i32
    return %arg0, %c0_i32, %c0_i32_0, %c0_i32_1 : i32, i32, i32, i32
  }
  func.func @transform_1(%arg0: i32) -> (i32, i32) {
    %c0_i32 = arith.constant 0 : i32
    %c0_i32_0 = arith.constant 0 : i32
    %c0_i32_1 = arith.constant 0 : i32
    return %c0_i32, %c0_i32_0 : i32, i32
  }
  func.func @transform_2(%arg0: i32) -> (i32, i32) {
    %c0_i32 = arith.constant 0 : i32
    %c0_i32_0 = arith.constant 0 : i32
    %c0_i32_1 = arith.constant 0 : i32
    return %c0_i32, %c0_i32_0 : i32, i32
  }
  func.func @transform_3(%arg0: i32) -> (i32, i32) {
    %c0_i32 = arith.constant 0 : i32
    %c0_i32_0 = arith.constant 0 : i32
    %c0_i32_1 = arith.constant 0 : i32
    return %c0_i32, %c0_i32_0 : i32, i32
  }
  func.func @transform_4(%arg0: i32) -> (i32, i32) {
    %c0_i32 = arith.constant 0 : i32
    %c0_i32_0 = arith.constant 0 : i32
    %c0_i32_1 = arith.constant 0 : i32
    return %c0_i32, %c0_i32_0 : i32, i32
  }
  func.func @transform_5(%arg0: i32) -> (i32, i32, i32, i32) {
    %c0_i32 = arith.constant 0 : i32
    %c0_i32_0 = arith.constant 0 : i32
    %c0_i32_1 = arith.constant 0 : i32
    %c0_i32_2 = arith.constant 0 : i32
    return %arg0, %c0_i32, %c0_i32_0, %c0_i32_1 : i32, i32, i32, i32
  }
}

</mosaic_0001>

<llo_original>
// kernel: tpu_custom_call.1
$region0: #{tpu_custom_call.1}
  #allocation0 [shape = 'u32[]', space=smem, size = 0x4, offset = 0x4, fixed_abs, tag = 'smem constant byte address 0x4 - core index']
  #allocation1 [shape = 'u32[144,128]{1,0:T(1,128)}', space=vmem, size = 0x12000, scoped, tag = 'internal scratch']
  %s0 = inlined_call_operand.vmem [shape: f32[2,16,16,4], index: 0, kind: input, shape index: {}]
  %s1 = inlined_call_operand.vmem [shape: f32[4,2], index: 1, kind: input, shape index: {}]
  %s2 = inlined_call_operand.vmem [shape: f32[1,2], index: 2, kind: input, shape index: {}]
  %s3 = inlined_call_operand.vmem [shape: f32[8,8], index: 3, kind: input, shape index: {}]
  %s4 = inlined_call_operand.vmem [shape: f32[1,8], index: 4, kind: input, shape index: {}]
  %s5 = inlined_call_operand.vmem [shape: f32[2,16,16,8], index: 5, kind: output, shape index: {}]
  %s6 = sld [smem:[#allocation0]]
  $region53: #{tpu_custom_call.1} parent=0
    _
  %s8 = ssub.s32 1, %s6
  %s9 = scalar_select 0, %s8, %s6
  loop: start=0, step=1, limit=4
  $region2: #{tpu_custom_call.1} parent=0 // loop_pre_header
    _
  $region3: #{tpu_custom_call.1} parent=0 // loop_header
    %s11 = sphi 0, %s15
    %p12 = scmp.ge.s32.totalorder %s11, 4
    %s21 = sphi 0, %s23
    %s24 = sphi 0, %s21
    %s25 = sphi 0, %s24
    %s41 = sphi 0, %s25
    %s45 = sphi 0, %s45
    %s47 = sphi 0, %s45
    %s48 = sphi 0, %s47
    %s62 = sphi 0, %s48
    %s66 = sphi 0, %s66
    %s68 = sphi 0, %s66
    %s69 = sphi 0, %s68
    %s83 = sphi 0, %s69
    %s87 = sphi 0, %s87
    %s89 = sphi 0, %s87
    %s90 = sphi 0, %s89
    %s104 = sphi 0, %s90
    %s108 = sphi 0, %s108
    %s110 = sphi 0, %s108
    %s111 = sphi 0, %s110
    %s125 = sphi 0, %s111
    %s131 = sphi 0, %s133
    %s134 = sphi 0, %s131
    %s135 = sphi 0, %s134
    %s151 = sphi 0, %s135
  $region4: #{tpu_custom_call.1} parent=0 // loop_header_branch
    %14 = sbr.rel (%p12) target = $region8
  $region5: #{tpu_custom_call.1} parent=0 // loop_body
    %s16 = ssub.s32 %s11, 1
    %s17 = ssub.s32 %s11, 2
    %s18 = sadd.s32 %s11, 1
    %s19 = ssub.s32 %s11, %s18
    %p20 = scmp.eq.s32.totalorder %s19, 0
    %s22 = sadd.s32 %s21, 1
    %s23 = scalar_select %p20, %s21, %s22
    %p26 = pneg %p20
    %p27 = scmp.eq.s32.totalorder %s11, 1
    %p28 = por %p26, %p27
    %p29 = scmp.ne.s32.totalorder %s21, %s24
    %p30 = scmp.eq.s32.totalorder %s11, 0
    %p31 = por %p29, %p30
    %p32 = scmp.ne.s32.totalorder %s21, %s24
    %p33 = scmp.eq.s32.totalorder %s16, 1
    %p34 = por %p32, %p33
    %p35 = scmp.ne.s32.totalorder %s24, %s25
    %p36 = scmp.eq.s32.totalorder %s16, 0
    %p37 = por %p35, %p36
    %p38 = scmp.ne.s32.totalorder %s24, %s25
    %p39 = scmp.eq.s32.totalorder %s17, 1
    %p40 = por %p38, %p39
    %p42 = scmp.ne.s32.totalorder %s25, %s41
    %p43 = scmp.eq.s32.totalorder %s17, 0
    %p44 = por %p42, %p43
    %s46 = sadd.s32 %s45, 1
    %p49 = scmp.eq.s32.totalorder %s11, 1
    %p50 = scmp.ne.s32.totalorder %s45, %s47
    %p51 = scmp.eq.s32.totalorder %s11, 0
    %p52 = por %p50, %p51
    %p53 = scmp.ne.s32.totalorder %s45, %s47
    %p54 = scmp.eq.s32.totalorder %s16, 1
    %p55 = por %p53, %p54
    %p56 = scmp.ne.s32.totalorder %s47, %s48
    %p57 = scmp.eq.s32.totalorder %s16, 0
    %p58 = por %p56, %p57
    %p59 = scmp.ne.s32.totalorder %s47, %s48
    %p60 = scmp.eq.s32.totalorder %s17, 1
    %p61 = por %p59, %p60
    %p63 = scmp.ne.s32.totalorder %s48, %s62
    %p64 = scmp.eq.s32.totalorder %s17, 0
    %p65 = por %p63, %p64
    %s67 = sadd.s32 %s66, 1
    %p70 = scmp.eq.s32.totalorder %s11, 1
    %p71 = scmp.ne.s32.totalorder %s66, %s68
    %p72 = scmp.eq.s32.totalorder %s11, 0
    %p73 = por %p71, %p72
    %p74 = scmp.ne.s32.totalorder %s66, %s68
    %p75 = scmp.eq.s32.totalorder %s16, 1
    %p76 = por %p74, %p75
    %p77 = scmp.ne.s32.totalorder %s68, %s69
    %p78 = scmp.eq.s32.totalorder %s16, 0
    %p79 = por %p77, %p78
    %p80 = scmp.ne.s32.totalorder %s68, %s69
    %p81 = scmp.eq.s32.totalorder %s17, 1
    %p82 = por %p80, %p81
    %p84 = scmp.ne.s32.totalorder %s69, %s83
    %p85 = scmp.eq.s32.totalorder %s17, 0
    %p86 = por %p84, %p85
    %s88 = sadd.s32 %s87, 1
    %p91 = scmp.eq.s32.totalorder %s11, 1
    %p92 = scmp.ne.s32.totalorder %s87, %s89
    %p93 = scmp.eq.s32.totalorder %s11, 0
    %p94 = por %p92, %p93
    %p95 = scmp.ne.s32.totalorder %s87, %s89
    %p96 = scmp.eq.s32.totalorder %s16, 1
    %p97 = por %p95, %p96
    %p98 = scmp.ne.s32.totalorder %s89, %s90
    %p99 = scmp.eq.s32.totalorder %s16, 0
    %p100 = por %p98, %p99
    %p101 = scmp.ne.s32.totalorder %s89, %s90
    %p102 = scmp.eq.s32.totalorder %s17, 1
    %p103 = por %p101, %p102
    %p105 = scmp.ne.s32.totalorder %s90, %s104
    %p106 = scmp.eq.s32.totalorder %s17, 0
    %p107 = por %p105, %p106
    %s109 = sadd.s32 %s108, 1
    %p112 = scmp.eq.s32.totalorder %s11, 1
    %p113 = scmp.ne.s32.totalorder %s108, %s110
    %p114 = scmp.eq.s32.totalorder %s11, 0
    %p115 = por %p113, %p114
    %p116 = scmp.ne.s32.totalorder %s108, %s110
    %p117 = scmp.eq.s32.totalorder %s16, 1
    %p118 = por %p116, %p117
    %p119 = scmp.ne.s32.totalorder %s110, %s111
    %p120 = scmp.eq.s32.totalorder %s16, 0
    %p121 = por %p119, %p120
    %p122 = scmp.ne.s32.totalorder %s110, %s111
    %p123 = scmp.eq.s32.totalorder %s17, 1
    %p124 = por %p122, %p123
    %p126 = scmp.ne.s32.totalorder %s111, %s125
    %p127 = scmp.eq.s32.totalorder %s17, 0
    %p128 = por %p126, %p127
    %s129 = ssub.s32 %s11, %s18
    %p130 = scmp.eq.s32.totalorder %s129, 0
    %s132 = sadd.s32 %s131, 1
    %s133 = scalar_select %p130, %s131, %s132
    %p136 = pneg %p130
    %p137 = scmp.eq.s32.totalorder %s11, 1
    %p138 = por %p136, %p137
    %p139 = scmp.ne.s32.totalorder %s131, %s134
    %p140 = scmp.eq.s32.totalorder %s11, 0
    %p141 = por %p139, %p140
    %p142 = scmp.ne.s32.totalorder %s131, %s134
    %p143 = scmp.eq.s32.totalorder %s16, 1
    %p144 = por %p142, %p143
    %p145 = scmp.ne.s32.totalorder %s134, %s135
    %p146 = scmp.eq.s32.totalorder %s16, 0
    %p147 = por %p145, %p146
    %p148 = scmp.ne.s32.totalorder %s134, %s135
    %p149 = scmp.eq.s32.totalorder %s17, 1
    %p150 = por %p148, %p149
    %p152 = scmp.ne.s32.totalorder %s135, %s151
    %p153 = scmp.eq.s32.totalorder %s17, 0
    %p154 = por %p152, %p153
    %p155 = scmp.le.s32.totalorder 1, %s11
    %p156 = scmp.lt.s32.totalorder %s11, 3
    %p157 = pnand %p155, %p156
    %p158 = pneg %p157
    // Predicated region
    $region9: #{tpu_custom_call.1} parent=5 // pred_check
      _
    $region10: #{tpu_custom_call.1} parent=5 // pred_check_branch
      %160 = sbr.rel (%p157) target = $region12
    $region11: #{tpu_custom_call.1} parent=5 // pred_region
      %s161 = ssub.s32 %s11, 1
      // Predicated region
      $region13: #{tpu_custom_call.1} parent=11 // pred_check
        %p162 = pneg %p58
      $region14: #{tpu_custom_call.1} parent=11 // pred_check_branch
        %164 = sbr.rel (%p162) target = $region16
      $region15: #{tpu_custom_call.1} parent=11 // pred_region
        _
      $region16: #{tpu_custom_call.1} parent=11 // pred_fallthru
        _
      // Predicated region
      $region17: #{tpu_custom_call.1} parent=11 // pred_check
        %p165 = pneg %p79
      $region18: #{tpu_custom_call.1} parent=11 // pred_check_branch
        %167 = sbr.rel (%p165) target = $region20
      $region19: #{tpu_custom_call.1} parent=11 // pred_region
        _
      $region20: #{tpu_custom_call.1} parent=11 // pred_fallthru
        _
      // Predicated region
      $region21: #{tpu_custom_call.1} parent=11 // pred_check
        %p168 = pneg %p100
      $region22: #{tpu_custom_call.1} parent=11 // pred_check_branch
        %170 = sbr.rel (%p168) target = $region24
      $region23: #{tpu_custom_call.1} parent=11 // pred_region
        _
      $region24: #{tpu_custom_call.1} parent=11 // pred_fallthru
        _
      // Predicated region
      $region25: #{tpu_custom_call.1} parent=11 // pred_check
        %p171 = pneg %p121
      $region26: #{tpu_custom_call.1} parent=11 // pred_check_branch
        %173 = sbr.rel (%p171) target = $region28
      $region27: #{tpu_custom_call.1} parent=11 // pred_region
        _
      $region28: #{tpu_custom_call.1} parent=11 // pred_fallthru
        _
    $region12: #{tpu_custom_call.1} parent=5 // pred_fallthru
      _
    %p174 = scmp.lt.s32.totalorder %s11, 2
    // Predicated region
    $region29: #{tpu_custom_call.1} parent=5 // pred_check
      %p175 = pneg %p174
    $region30: #{tpu_custom_call.1} parent=5 // pred_check_branch
      %177 = sbr.rel (%p175) target = $region32
    $region31: #{tpu_custom_call.1} parent=5 // pred_region
      // Predicated region
      $region33: #{tpu_custom_call.1} parent=31 // pred_check
        %p178 = pneg %p31
      $region34: #{tpu_custom_call.1} parent=31 // pred_check_branch
        %180 = sbr.rel (%p178) target = $region36
      $region35: #{tpu_custom_call.1} parent=31 // pred_region
        %p181 = scmp.lt.s32.totalorder %s11, 1
        %s182 = scalar_select %p181, %s11, 1
        %s183 = smul.addr %s182, 32
        %s184 = smul.addr %s183, 8
        %s185 = scalar_lea.vmem %s0, %s184
      $region36: #{tpu_custom_call.1} parent=31 // pred_fallthru
        _
    $region32: #{tpu_custom_call.1} parent=5 // pred_fallthru
      _
    %p186 = scmp.le.s32.totalorder 1, %s11
    %p187 = scmp.lt.s32.totalorder %s11, 3
    %p188 = pnand %p186, %p187
    %p189 = pneg %p188
    // Predicated region
    $region37: #{tpu_custom_call.1} parent=5 // pred_check
      _
    $region38: #{tpu_custom_call.1} parent=5 // pred_check_branch
      %191 = sbr.rel (%p188) target = $region40
    $region39: #{tpu_custom_call.1} parent=5 // pred_region
      %s192 = ssub.s32 %s11, 1
      %p193 = scmp.lt.s32.totalorder %s16, 1
      %s194 = scalar_select %p193, %s16, 1
      %s195 = smul.addr %s194, 32
      %s196 = smul.addr %s195, 8
      %s197 = scalar_lea.vmem %s0, %s196
      %p198 = pneg %p37
      %p199 = pneg %p34
      %p200 = pneg %p58
      %p201 = pneg %p55
      %p202 = pneg %p79
      %p203 = pneg %p76
      %p204 = pneg %p100
      %p205 = pneg %p97
      %p206 = pneg %p121
      %p207 = pneg %p118
      %p208 = pneg %p147
      %p209 = pneg %p144
      %p210 = scmp.lt.s32.totalorder %s16, 1
      %s211 = scalar_select %p210, %s16, 1
      %s212 = smul.addr %s211, 32
      %s213 = smul.addr %s212, 8
      %s214 = scalar_lea.vmem %s5, %s213
      %p215 = scmp.lt.s32.totalorder %s16, 1
      %s216 = scalar_select %p215, %s16, 1
      %s217 = smul.addr %s216, 32
      %s218 = smul.addr %s217, 8
      %s219 = scalar_lea.vmem %s0, %s218
      %p220 = scmp.lt.s32.totalorder %s16, 1
      %s221 = scalar_select %p220, %s16, 1
      %s222 = smul.addr %s221, 32
      %s223 = smul.addr %s222, 8
      %s224 = scalar_lea.vmem %s5, %s223
      %v225 = vld [vmem:[%s219] sm:$0xff]
      %v226 = vld [vmem:[%s219 + $0x8] sm:$0xff]
      %v227 = vld [vmem:[%s219 + $0x10] sm:$0xff]
      %v228 = vld [vmem:[%s219 + $0x18] sm:$0xff]
      %v229 = vld [vmem:[%s219 + $0x20] sm:$0xff]
      %v230 = vld [vmem:[%s219 + $0x28] sm:$0xff]
      %v231 = vld [vmem:[%s219 + $0x30] sm:$0xff]
      %v232 = vld [vmem:[%s219 + $0x38] sm:$0xff]
      %v233 = vld [vmem:[%s219 + $0x40] sm:$0xff]
      %v234 = vld [vmem:[%s219 + $0x48] sm:$0xff]
      %v235 = vld [vmem:[%s219 + $0x50] sm:$0xff]
      %v236 = vld [vmem:[%s219 + $0x58] sm:$0xff]
      %v237 = vld [vmem:[%s219 + $0x60] sm:$0xff]
      %v238 = vld [vmem:[%s219 + $0x68] sm:$0xff]
      %v239 = vld [vmem:[%s219 + $0x70] sm:$0xff]
      %v240 = vld [vmem:[%s219 + $0x78] sm:$0xff]
      %v241 = vld [vmem:[%s219 + $0x80] sm:$0xff]
      %v242 = vld [vmem:[%s219 + $0x88] sm:$0xff]
      %v243 = vld [vmem:[%s219 + $0x90] sm:$0xff]
      %v244 = vld [vmem:[%s219 + $0x98] sm:$0xff]
      %v245 = vld [vmem:[%s219 + $0xa0] sm:$0xff]
      %v246 = vld [vmem:[%s219 + $0xa8] sm:$0xff]
      %v247 = vld [vmem:[%s219 + $0xb0] sm:$0xff]
      %v248 = vld [vmem:[%s219 + $0xb8] sm:$0xff]
      %v249 = vld [vmem:[%s219 + $0xc0] sm:$0xff]
      %v250 = vld [vmem:[%s219 + $0xc8] sm:$0xff]
      %v251 = vld [vmem:[%s219 + $0xd0] sm:$0xff]
      %v252 = vld [vmem:[%s219 + $0xd8] sm:$0xff]
      %v253 = vld [vmem:[%s219 + $0xe0] sm:$0xff]
      %v254 = vld [vmem:[%s219 + $0xe8] sm:$0xff]
      %v255 = vld [vmem:[%s219 + $0xf0] sm:$0xff]
      %v256 = vld [vmem:[%s219 + $0xf8] sm:$0xff]
      %v257 = vld [vmem:[%s1] sm:$0xf]
      %v258 = vld [vmem:[%s2] sm:$0x1]
      %v260 = vlaneseq
      %v261 = vshrl.u32 %v260, 7
      %v262 = vsub.s32 0, %v261
      %v263 = vrot.slane %v258, %v262
      %vm265 = vcmask 31744
      %v267 = vsel %vm265, %v225, 0
      %v270 = vsel %vm265, %v226, 0
      %v273 = vsel %vm265, %v227, 0
      %v276 = vsel %vm265, %v228, 0
      %v279 = vsel %vm265, %v229, 0
      %v282 = vsel %vm265, %v230, 0
      %v285 = vsel %vm265, %v231, 0
      %v288 = vsel %vm265, %v232, 0
      %v291 = vsel %vm265, %v233, 0
      %v294 = vsel %vm265, %v234, 0
      %v297 = vsel %vm265, %v235, 0
      %v300 = vsel %vm265, %v236, 0
      %v303 = vsel %vm265, %v237, 0
      %v306 = vsel %vm265, %v238, 0
      %v309 = vsel %vm265, %v239, 0
      %v312 = vsel %vm265, %v240, 0
      %v315 = vsel %vm265, %v241, 0
      %v318 = vsel %vm265, %v242, 0
      %v321 = vsel %vm265, %v243, 0
      %v324 = vsel %vm265, %v244, 0
      %v327 = vsel %vm265, %v245, 0
      %v330 = vsel %vm265, %v246, 0
      %v333 = vsel %vm265, %v247, 0
      %v336 = vsel %vm265, %v248, 0
      %v339 = vsel %vm265, %v249, 0
      %v342 = vsel %vm265, %v250, 0
      %v345 = vsel %vm265, %v251, 0
      %v348 = vsel %vm265, %v252, 0
      %v351 = vsel %vm265, %v253, 0
      %v354 = vsel %vm265, %v254, 0
      %v357 = vsel %vm265, %v255, 0
      %v360 = vsel %vm265, %v256, 0
      %vm362 = vcmask 1043456
      %v364 = vsel %vm362, %v257, 0
      %366 = vmatprep.subr.mxu0 0.0
      %367 = vmatpush1.msra.mxu0 0.0
      %368 = vmatprep.subr.mxu0 0.0
      %369 = vmatpush1.msra.mxu0 0.0
      %370 = vmatprep.subr.mxu0 0.0
      %371 = vmatpush1.msra.mxu0 0.0
      %372 = vmatprep.subr.mxu0 0.0
      %373 = vmatpush1.msra.mxu0 0.0
      %374 = vmatprep.subr.mxu0 0.0
      %375 = vmatpush1.msra.mxu0 0.0
      %376 = vmatprep.subr.mxu0 0.0
      %377 = vmatpush1.msra.mxu0 0.0
      %378 = vmatprep.subr.mxu0 0.0
      %379 = vmatpush1.msra.mxu0 0.0
      %380 = vmatprep.subr.mxu0 0.0
      %381 = vmatpush1.msra.mxu0 0.0
      %382 = vmatprep.subr.mxu0 0.0
      %383 = vmatpush1.msra.mxu0 0.0
      %384 = vmatprep.subr.mxu0 0.0
      %385 = vmatpush1.msra.mxu0 0.0
      %386 = vmatprep.subr.mxu0 0.0
      %387 = vmatpush1.msra.mxu0 0.0
      %388 = vmatprep.subr.mxu0 0.0
      %389 = vmatpush1.msra.mxu0 0.0
      %390 = vmatprep.subr.mxu0 0.0
      %391 = vmatpush1.msra.mxu0 0.0
      %392 = vmatprep.subr.mxu0 0.0
      %393 = vmatpush1.msra.mxu0 0.0
      %394 = vmatprep.subr.mxu0 0.0
      %395 = vmatpush1.msra.mxu0 0.0
      %396 = vmatprep.subr.mxu0 0.0
      %v397 = vand.u32 %v364, 4294901760
      %398 = vmatpush1.msra.mxu0 %v397
      %399 = vmatprep.subr.mxu0 0.0
      %400 = vmatpush2.msra.mxu0 0.0
      %401 = vmatprep.subr.mxu0 0.0
      %402 = vmatpush2.msra.mxu0 0.0
      %403 = vmatprep.subr.mxu0 0.0
      %404 = vmatpush2.msra.mxu0 0.0
      %405 = vmatprep.subr.mxu0 0.0
      %406 = vmatpush2.msra.mxu0 0.0
      %407 = vmatprep.subr.mxu0 0.0
      %408 = vmatpush2.msra.mxu0 0.0
      %409 = vmatprep.subr.mxu0 0.0
      %410 = vmatpush2.msra.mxu0 0.0
      %411 = vmatprep.subr.mxu0 0.0
      %412 = vmatpush2.msra.mxu0 0.0
      %413 = vmatprep.subr.mxu0 0.0
      %414 = vmatpush2.msra.mxu0 0.0
      %415 = vmatprep.subr.mxu0 0.0
      %416 = vmatpush2.msra.mxu0 0.0
      %417 = vmatprep.subr.mxu0 0.0
      %418 = vmatpush2.msra.mxu0 0.0
      %419 = vmatprep.subr.mxu0 0.0
      %420 = vmatpush2.msra.mxu0 0.0
      %421 = vmatprep.subr.mxu0 0.0
      %422 = vmatpush2.msra.mxu0 0.0
      %423 = vmatprep.subr.mxu0 0.0
      %424 = vmatpush2.msra.mxu0 0.0
      %425 = vmatprep.subr.mxu0 0.0
      %426 = vmatpush2.msra.mxu0 0.0
      %427 = vmatprep.subr.mxu0 0.0
      %428 = vmatpush2.msra.mxu0 0.0
      %429 = vmatprep.subr.mxu0 0.0
      %430 = vmatpush2.msra.mxu0 0.0
      %431 = vmatprep.mubr.f32.mxu0 0.0
      %v432 = vand.u32 %v267, 4294901760
      %v433 = vsub.f32 %v267, %v432
      %v434 = vand.u32 %v433, 4294901760
      %v435 = vsub.f32 %v433, %v434
      %v436 = vand.u32 %v435, 4294901760
      %437 = vmatmul.mubr.f32.gmra.mxu0 %v436
      %v438 = vpop.f32.mrf.mxu0
      %v439 = vadd.f32 %v263, %v438
      %v440 = vpop.f32.mrf.mxu0
      %441 = vmatprep.mubr.f32.mxu0 0.0
      %v442 = vand.u32 %v270, 4294901760
      %v443 = vsub.f32 %v270, %v442
      %v444 = vand.u32 %v443, 4294901760
      %v445 = vsub.f32 %v443, %v444
      %v446 = vand.u32 %v445, 4294901760
      %447 = vmatmul.mubr.f32.gmra.mxu0 %v446
      %v448 = vpop.f32.mrf.mxu0
      %v449 = vadd.f32 %v263, %v448
      %v450 = vpop.f32.mrf.mxu0
      %451 = vmatprep.mubr.f32.mxu0 0.0
      %v452 = vand.u32 %v273, 4294901760
      %v453 = vsub.f32 %v273, %v452
      %v454 = vand.u32 %v453, 4294901760
      %v455 = vsub.f32 %v453, %v454
      %v456 = vand.u32 %v455, 4294901760
      %457 = vmatmul.mubr.f32.gmra.mxu0 %v456
      %v458 = vpop.f32.mrf.mxu0
      %v459 = vadd.f32 %v263, %v458
      %v460 = vpop.f32.mrf.mxu0
      %461 = vmatprep.mubr.f32.mxu0 0.0
      %v462 = vand.u32 %v276, 4294901760
      %v463 = vsub.f32 %v276, %v462
      %v464 = vand.u32 %v463, 4294901760
      %v465 = vsub.f32 %v463, %v464
      %v466 = vand.u32 %v465, 4294901760
      %467 = vmatmul.mubr.f32.gmra.mxu0 %v466
      %v468 = vpop.f32.mrf.mxu0
      %v469 = vadd.f32 %v263, %v468
      %v470 = vpop.f32.mrf.mxu0
      %471 = vmatprep.mubr.f32.mxu0 0.0
      %v472 = vand.u32 %v279, 4294901760
      %v473 = vsub.f32 %v279, %v472
      %v474 = vand.u32 %v473, 4294901760
      %v475 = vsub.f32 %v473, %v474
      %v476 = vand.u32 %v475, 4294901760
      %477 = vmatmul.mubr.f32.gmra.mxu0 %v476
      %v478 = vpop.f32.mrf.mxu0
      %v479 = vadd.f32 %v263, %v478
      %v480 = vpop.f32.mrf.mxu0
      %481 = vmatprep.mubr.f32.mxu0 0.0
      %v482 = vand.u32 %v282, 4294901760
      %v483 = vsub.f32 %v282, %v482
      %v484 = vand.u32 %v483, 4294901760
      %v485 = vsub.f32 %v483, %v484
      %v486 = vand.u32 %v485, 4294901760
      %487 = vmatmul.mubr.f32.gmra.mxu0 %v486
      %v488 = vpop.f32.mrf.mxu0
      %v489 = vadd.f32 %v263, %v488
      %v490 = vpop.f32.mrf.mxu0
      %491 = vmatprep.mubr.f32.mxu0 0.0
      %v492 = vand.u32 %v285, 4294901760
      %v493 = vsub.f32 %v285, %v492
      %v494 = vand.u32 %v493, 4294901760
      %v495 = vsub.f32 %v493, %v494
      %v496 = vand.u32 %v495, 4294901760
      %497 = vmatmul.mubr.f32.gmra.mxu0 %v496
      %v498 = vpop.f32.mrf.mxu0
      %v499 = vadd.f32 %v263, %v498
      %v500 = vpop.f32.mrf.mxu0
      %501 = vmatprep.mubr.f32.mxu0 0.0
      %v502 = vand.u32 %v288, 4294901760
      %v503 = vsub.f32 %v288, %v502
      %v504 = vand.u32 %v503, 4294901760
      %v505 = vsub.f32 %v503, %v504
      %v506 = vand.u32 %v505, 4294901760
      %507 = vmatmul.mubr.f32.gmra.mxu0 %v506
      %v508 = vpop.f32.mrf.mxu0
      %v509 = vadd.f32 %v263, %v508
      %v510 = vpop.f32.mrf.mxu0
      %511 = vmatprep.mubr.f32.mxu0 0.0
      %v512 = vand.u32 %v291, 4294901760
      %v513 = vsub.f32 %v291, %v512
      %v514 = vand.u32 %v513, 4294901760
      %v515 = vsub.f32 %v513, %v514
      %v516 = vand.u32 %v515, 4294901760
      %517 = vmatmul.mubr.f32.gmra.mxu0 %v516
      %v518 = vpop.f32.mrf.mxu0
      %v519 = vadd.f32 %v263, %v518
      %v520 = vpop.f32.mrf.mxu0
      %521 = vmatprep.mubr.f32.mxu0 0.0
      %v522 = vand.u32 %v294, 4294901760
      %v523 = vsub.f32 %v294, %v522
      %v524 = vand.u32 %v523, 4294901760
      %v525 = vsub.f32 %v523, %v524
      %v526 = vand.u32 %v525, 4294901760
      %527 = vmatmul.mubr.f32.gmra.mxu0 %v526
      %v528 = vpop.f32.mrf.mxu0
      %v529 = vadd.f32 %v263, %v528
      %v530 = vpop.f32.mrf.mxu0
      %531 = vmatprep.mubr.f32.mxu0 0.0
      %v532 = vand.u32 %v297, 4294901760
      %v533 = vsub.f32 %v297, %v532
      %v534 = vand.u32 %v533, 4294901760
      %v535 = vsub.f32 %v533, %v534
      %v536 = vand.u32 %v535, 4294901760
      %537 = vmatmul.mubr.f32.gmra.mxu0 %v536
      %v538 = vpop.f32.mrf.mxu0
      %v539 = vadd.f32 %v263, %v538
      %v540 = vpop.f32.mrf.mxu0
      %541 = vmatprep.mubr.f32.mxu0 0.0
      %v542 = vand.u32 %v300, 4294901760
      %v543 = vsub.f32 %v300, %v542
      %v544 = vand.u32 %v543, 4294901760
      %v545 = vsub.f32 %v543, %v544
      %v546 = vand.u32 %v545, 4294901760
      %547 = vmatmul.mubr.f32.gmra.mxu0 %v546
      %v548 = vpop.f32.mrf.mxu0
      %v549 = vadd.f32 %v263, %v548
      %v550 = vpop.f32.mrf.mxu0
      %551 = vmatprep.mubr.f32.mxu0 0.0
      %v552 = vand.u32 %v303, 4294901760
      %v553 = vsub.f32 %v303, %v552
      %v554 = vand.u32 %v553, 4294901760
      %v555 = vsub.f32 %v553, %v554
      %v556 = vand.u32 %v555, 4294901760
      %557 = vmatmul.mubr.f32.gmra.mxu0 %v556
      %v558 = vpop.f32.mrf.mxu0
      %v559 = vadd.f32 %v263, %v558
      %v560 = vpop.f32.mrf.mxu0
      %561 = vmatprep.mubr.f32.mxu0 0.0
      %v562 = vand.u32 %v306, 4294901760
      %v563 = vsub.f32 %v306, %v562
      %v564 = vand.u32 %v563, 4294901760
      %v565 = vsub.f32 %v563, %v564
      %v566 = vand.u32 %v565, 4294901760
      %567 = vmatmul.mubr.f32.gmra.mxu0 %v566
      %v568 = vpop.f32.mrf.mxu0
      %v569 = vadd.f32 %v263, %v568
      %v570 = vpop.f32.mrf.mxu0
      %571 = vmatprep.mubr.f32.mxu0 0.0
      %v572 = vand.u32 %v309, 4294901760
      %v573 = vsub.f32 %v309, %v572
      %v574 = vand.u32 %v573, 4294901760
      %v575 = vsub.f32 %v573, %v574
      %v576 = vand.u32 %v575, 4294901760
      %577 = vmatmul.mubr.f32.gmra.mxu0 %v576
      %v578 = vpop.f32.mrf.mxu0
      %v579 = vadd.f32 %v263, %v578
      %v580 = vpop.f32.mrf.mxu0
      %581 = vmatprep.mubr.f32.mxu0 0.0
      %v582 = vand.u32 %v312, 4294901760
      %v583 = vsub.f32 %v312, %v582
      %v584 = vand.u32 %v583, 4294901760
      %v585 = vsub.f32 %v583, %v584
      %v586 = vand.u32 %v585, 4294901760
      %587 = vmatmul.mubr.f32.gmra.mxu0 %v586
      %v588 = vpop.f32.mrf.mxu0
      %v589 = vadd.f32 %v263, %v588
      %v590 = vpop.f32.mrf.mxu0
      %591 = vmatprep.mubr.f32.mxu0 0.0
      %v592 = vand.u32 %v315, 4294901760
      %v593 = vsub.f32 %v315, %v592
      %v594 = vand.u32 %v593, 4294901760
      %v595 = vsub.f32 %v593, %v594
      %v596 = vand.u32 %v595, 4294901760
      %597 = vmatmul.mubr.f32.gmra.mxu0 %v596
      %v598 = vpop.f32.mrf.mxu0
      %v599 = vadd.f32 %v263, %v598
      %v600 = vpop.f32.mrf.mxu0
      %601 = vmatprep.mubr.f32.mxu0 0.0
      %v602 = vand.u32 %v318, 4294901760
      %v603 = vsub.f32 %v318, %v602
      %v604 = vand.u32 %v603, 4294901760
      %v605 = vsub.f32 %v603, %v604
      %v606 = vand.u32 %v605, 4294901760
      %607 = vmatmul.mubr.f32.gmra.mxu0 %v606
      %v608 = vpop.f32.mrf.mxu0
      %v609 = vadd.f32 %v263, %v608
      %v610 = vpop.f32.mrf.mxu0
      %611 = vmatprep.mubr.f32.mxu0 0.0
      %v612 = vand.u32 %v321, 4294901760
      %v613 = vsub.f32 %v321, %v612
      %v614 = vand.u32 %v613, 4294901760
      %v615 = vsub.f32 %v613, %v614
      %v616 = vand.u32 %v615, 4294901760
      %617 = vmatmul.mubr.f32.gmra.mxu0 %v616
      %v618 = vpop.f32.mrf.mxu0
      %v619 = vadd.f32 %v263, %v618
      %v620 = vpop.f32.mrf.mxu0
      %621 = vmatprep.mubr.f32.mxu0 0.0
      %v622 = vand.u32 %v324, 4294901760
      %v623 = vsub.f32 %v324, %v622
      %v624 = vand.u32 %v623, 4294901760
      %v625 = vsub.f32 %v623, %v624
      %v626 = vand.u32 %v625, 4294901760
      %627 = vmatmul.mubr.f32.gmra.mxu0 %v626
      %v628 = vpop.f32.mrf.mxu0
      %v629 = vadd.f32 %v263, %v628
      %v630 = vpop.f32.mrf.mxu0
      %631 = vmatprep.mubr.f32.mxu0 0.0
      %v632 = vand.u32 %v327, 4294901760
      %v633 = vsub.f32 %v327, %v632
      %v634 = vand.u32 %v633, 4294901760
      %v635 = vsub.f32 %v633, %v634
      %v636 = vand.u32 %v635, 4294901760
      %637 = vmatmul.mubr.f32.gmra.mxu0 %v636
      %v638 = vpop.f32.mrf.mxu0
      %v639 = vadd.f32 %v263, %v638
      %v640 = vpop.f32.mrf.mxu0
      %641 = vmatprep.mubr.f32.mxu0 0.0
      %v642 = vand.u32 %v330, 4294901760
      %v643 = vsub.f32 %v330, %v642
      %v644 = vand.u32 %v643, 4294901760
      %v645 = vsub.f32 %v643, %v644
      %v646 = vand.u32 %v645, 4294901760
      %647 = vmatmul.mubr.f32.gmra.mxu0 %v646
      %v648 = vpop.f32.mrf.mxu0
      %v649 = vadd.f32 %v263, %v648
      %v650 = vpop.f32.mrf.mxu0
      %651 = vmatprep.mubr.f32.mxu0 0.0
      %v652 = vand.u32 %v333, 4294901760
      %v653 = vsub.f32 %v333, %v652
      %v654 = vand.u32 %v653, 4294901760
      %v655 = vsub.f32 %v653, %v654
      %v656 = vand.u32 %v655, 4294901760
      %657 = vmatmul.mubr.f32.gmra.mxu0 %v656
      %v658 = vpop.f32.mrf.mxu0
      %v659 = vadd.f32 %v263, %v658
      %v660 = vpop.f32.mrf.mxu0
      %661 = vmatprep.mubr.f32.mxu0 0.0
      %v662 = vand.u32 %v336, 4294901760
      %v663 = vsub.f32 %v336, %v662
      %v664 = vand.u32 %v663, 4294901760
      %v665 = vsub.f32 %v663, %v664
      %v666 = vand.u32 %v665, 4294901760
      %667 = vmatmul.mubr.f32.gmra.mxu0 %v666
      %v668 = vpop.f32.mrf.mxu0
      %v669 = vadd.f32 %v263, %v668
      %v670 = vpop.f32.mrf.mxu0
      %671 = vmatprep.mubr.f32.mxu0 0.0
      %v672 = vand.u32 %v339, 4294901760
      %v673 = vsub.f32 %v339, %v672
      %v674 = vand.u32 %v673, 4294901760
      %v675 = vsub.f32 %v673, %v674
      %v676 = vand.u32 %v675, 4294901760
      %677 = vmatmul.mubr.f32.gmra.mxu0 %v676
      %v678 = vpop.f32.mrf.mxu0
      %v679 = vadd.f32 %v263, %v678
      %v680 = vpop.f32.mrf.mxu0
      %681 = vmatprep.mubr.f32.mxu0 0.0
      %v682 = vand.u32 %v342, 4294901760
      %v683 = vsub.f32 %v342, %v682
      %v684 = vand.u32 %v683, 4294901760
      %v685 = vsub.f32 %v683, %v684
      %v686 = vand.u32 %v685, 4294901760
      %687 = vmatmul.mubr.f32.gmra.mxu0 %v686
      %v688 = vpop.f32.mrf.mxu0
      %v689 = vadd.f32 %v263, %v688
      %v690 = vpop.f32.mrf.mxu0
      %691 = vmatprep.mubr.f32.mxu0 0.0
      %v692 = vand.u32 %v345, 4294901760
      %v693 = vsub.f32 %v345, %v692
      %v694 = vand.u32 %v693, 4294901760
      %v695 = vsub.f32 %v693, %v694
      %v696 = vand.u32 %v695, 4294901760
      %697 = vmatmul.mubr.f32.gmra.mxu0 %v696
      %v698 = vpop.f32.mrf.mxu0
      %v699 = vadd.f32 %v263, %v698
      %v700 = vpop.f32.mrf.mxu0
      %701 = vmatprep.mubr.f32.mxu0 0.0
      %v702 = vand.u32 %v348, 4294901760
      %v703 = vsub.f32 %v348, %v702
      %v704 = vand.u32 %v703, 4294901760
      %v705 = vsub.f32 %v703, %v704
      %v706 = vand.u32 %v705, 4294901760
      %707 = vmatmul.mubr.f32.gmra.mxu0 %v706
      %v708 = vpop.f32.mrf.mxu0
      %v709 = vadd.f32 %v263, %v708
      %v710 = vpop.f32.mrf.mxu0
      %711 = vmatprep.mubr.f32.mxu0 0.0
      %v712 = vand.u32 %v351, 4294901760
      %v713 = vsub.f32 %v351, %v712
      %v714 = vand.u32 %v713, 4294901760
      %v715 = vsub.f32 %v713, %v714
      %v716 = vand.u32 %v715, 4294901760
      %717 = vmatmul.mubr.f32.gmra.mxu0 %v716
      %v718 = vpop.f32.mrf.mxu0
      %v719 = vadd.f32 %v263, %v718
      %v720 = vpop.f32.mrf.mxu0
      %721 = vmatprep.mubr.f32.mxu0 0.0
      %v722 = vand.u32 %v354, 4294901760
      %v723 = vsub.f32 %v354, %v722
      %v724 = vand.u32 %v723, 4294901760
      %v725 = vsub.f32 %v723, %v724
      %v726 = vand.u32 %v725, 4294901760
      %727 = vmatmul.mubr.f32.gmra.mxu0 %v726
      %v728 = vpop.f32.mrf.mxu0
      %v729 = vadd.f32 %v263, %v728
      %v730 = vpop.f32.mrf.mxu0
      %731 = vmatprep.mubr.f32.mxu0 0.0
      %v732 = vand.u32 %v357, 4294901760
      %v733 = vsub.f32 %v357, %v732
      %v734 = vand.u32 %v733, 4294901760
      %v735 = vsub.f32 %v733, %v734
      %v736 = vand.u32 %v735, 4294901760
      %737 = vmatmul.mubr.f32.gmra.mxu0 %v736
      %v738 = vpop.f32.mrf.mxu0
      %v739 = vadd.f32 %v263, %v738
      %v740 = vpop.f32.mrf.mxu0
      %741 = vmatprep.mubr.f32.mxu0 0.0
      %v742 = vand.u32 %v360, 4294901760
      %v743 = vsub.f32 %v360, %v742
      %v744 = vand.u32 %v743, 4294901760
      %v745 = vsub.f32 %v743, %v744
      %v746 = vand.u32 %v745, 4294901760
      %747 = vmatmul.mubr.f32.gmra.mxu0 %v746
      %v748 = vpop.f32.mrf.mxu0
      %v749 = vadd.f32 %v263, %v748
      %v750 = vpop.f32.mrf.mxu0
      %751 = vdwg.mxu0
      %752 = vmatprep.subr.mxu0 0.0
      %753 = vmatpush1.msra.mxu0 0.0
      %754 = vmatprep.subr.mxu0 0.0
      %755 = vmatpush1.msra.mxu0 0.0
      %756 = vmatprep.subr.mxu0 0.0
      %757 = vmatpush1.msra.mxu0 0.0
      %758 = vmatprep.subr.mxu0 0.0
      %759 = vmatpush1.msra.mxu0 0.0
      %760 = vmatprep.subr.mxu0 0.0
      %761 = vmatpush1.msra.mxu0 0.0
      %762 = vmatprep.subr.mxu0 0.0
      %763 = vmatpush1.msra.mxu0 0.0
      %764 = vmatprep.subr.mxu0 0.0
      %765 = vmatpush1.msra.mxu0 0.0
      %766 = vmatprep.subr.mxu0 0.0
      %767 = vmatpush1.msra.mxu0 0.0
      %768 = vmatprep.subr.mxu0 0.0
      %769 = vmatpush1.msra.mxu0 0.0
      %770 = vmatprep.subr.mxu0 0.0
      %771 = vmatpush1.msra.mxu0 0.0
      %772 = vmatprep.subr.mxu0 0.0
      %773 = vmatpush1.msra.mxu0 0.0
      %774 = vmatprep.subr.mxu0 0.0
      %775 = vmatpush1.msra.mxu0 0.0
      %776 = vmatprep.subr.mxu0 0.0
      %777 = vmatpush1.msra.mxu0 0.0
      %778 = vmatprep.subr.mxu0 0.0
      %779 = vmatpush1.msra.mxu0 0.0
      %780 = vmatprep.subr.mxu0 0.0
      %781 = vmatpush1.msra.mxu0 0.0
      %782 = vmatprep.subr.mxu0 0.0
      %v783 = vand.u32 %v364, 4294901760
      %v784 = vsub.f32 %v364, %v783
      %v785 = vand.u32 %v784, 4294901760
      %v786 = vsub.f32 %v784, %v785
      %v787 = vand.u32 %v786, 4294901760
      %788 = vmatpush1.msra.mxu0 %v787
      %789 = vmatprep.subr.mxu0 0.0
      %790 = vmatpush2.msra.mxu0 0.0
      %791 = vmatprep.subr.mxu0 0.0
      %792 = vmatpush2.msra.mxu0 0.0
      %793 = vmatprep.subr.mxu0 0.0
      %794 = vmatpush2.msra.mxu0 0.0
      %795 = vmatprep.subr.mxu0 0.0
      %796 = vmatpush2.msra.mxu0 0.0
      %797 = vmatprep.subr.mxu0 0.0
      %798 = vmatpush2.msra.mxu0 0.0
      %799 = vmatprep.subr.mxu0 0.0
      %800 = vmatpush2.msra.mxu0 0.0
      %801 = vmatprep.subr.mxu0 0.0
      %802 = vmatpush2.msra.mxu0 0.0
      %803 = vmatprep.subr.mxu0 0.0
      %804 = vmatpush2.msra.mxu0 0.0
      %805 = vmatprep.subr.mxu0 0.0
      %806 = vmatpush2.msra.mxu0 0.0
      %807 = vmatprep.subr.mxu0 0.0
      %808 = vmatpush2.msra.mxu0 0.0
      %809 = vmatprep.subr.mxu0 0.0
      %810 = vmatpush2.msra.mxu0 0.0
      %811 = vmatprep.subr.mxu0 0.0
      %812 = vmatpush2.msra.mxu0 0.0
      %813 = vmatprep.subr.mxu0 0.0
      %814 = vmatpush2.msra.mxu0 0.0
      %815 = vmatprep.subr.mxu0 0.0
      %816 = vmatpush2.msra.mxu0 0.0
      %817 = vmatprep.subr.mxu0 0.0
      %818 = vmatpush2.msra.mxu0 0.0
      %819 = vmatprep.subr.mxu0 0.0
      %820 = vmatpush2.msra.mxu0 0.0
      %821 = vmatprep.mubr.f32.mxu0 0.0
      %v822 = vand.u32 %v267, 4294901760
      %823 = vmatmul.mubr.f32.gmra.mxu0 %v822
      %v824 = vpop.f32.mrf.mxu0
      %v825 = vadd.f32 %v439, %v824
      %v826 = vpop.f32.mrf.mxu0
      %827 = vmatprep.mubr.f32.mxu0 0.0
      %v828 = vand.u32 %v270, 4294901760
      %829 = vmatmul.mubr.f32.gmra.mxu0 %v828
      %v830 = vpop.f32.mrf.mxu0
      %v831 = vadd.f32 %v449, %v830
      %v832 = vpop.f32.mrf.mxu0
      %833 = vmatprep.mubr.f32.mxu0 0.0
      %v834 = vand.u32 %v273, 4294901760
      %835 = vmatmul.mubr.f32.gmra.mxu0 %v834
      %v836 = vpop.f32.mrf.mxu0
      %v837 = vadd.f32 %v459, %v836
      %v838 = vpop.f32.mrf.mxu0
      %839 = vmatprep.mubr.f32.mxu0 0.0
      %v840 = vand.u32 %v276, 4294901760
      %841 = vmatmul.mubr.f32.gmra.mxu0 %v840
      %v842 = vpop.f32.mrf.mxu0
      %v843 = vadd.f32 %v469, %v842
      %v844 = vpop.f32.mrf.mxu0
      %845 = vmatprep.mubr.f32.mxu0 0.0
      %v846 = vand.u32 %v279, 4294901760
      %847 = vmatmul.mubr.f32.gmra.mxu0 %v846
      %v848 = vpop.f32.mrf.mxu0
      %v849 = vadd.f32 %v479, %v848
      %v850 = vpop.f32.mrf.mxu0
      %851 = vmatprep.mubr.f32.mxu0 0.0
      %v852 = vand.u32 %v282, 4294901760
      %853 = vmatmul.mubr.f32.gmra.mxu0 %v852
      %v854 = vpop.f32.mrf.mxu0
      %v855 = vadd.f32 %v489, %v854
      %v856 = vpop.f32.mrf.mxu0
      %857 = vmatprep.mubr.f32.mxu0 0.0
      %v858 = vand.u32 %v285, 4294901760
      %859 = vmatmul.mubr.f32.gmra.mxu0 %v858
      %v860 = vpop.f32.mrf.mxu0
      %v861 = vadd.f32 %v499, %v860
      %v862 = vpop.f32.mrf.mxu0
      %863 = vmatprep.mubr.f32.mxu0 0.0
      %v864 = vand.u32 %v288, 4294901760
      %865 = vmatmul.mubr.f32.gmra.mxu0 %v864
      %v866 = vpop.f32.mrf.mxu0
      %v867 = vadd.f32 %v509, %v866
      %v868 = vpop.f32.mrf.mxu0
      %869 = vmatprep.mubr.f32.mxu0 0.0
      %v870 = vand.u32 %v291, 4294901760
      %871 = vmatmul.mubr.f32.gmra.mxu0 %v870
      %v872 = vpop.f32.mrf.mxu0
      %v873 = vadd.f32 %v519, %v872
      %v874 = vpop.f32.mrf.mxu0
      %875 = vmatprep.mubr.f32.mxu0 0.0
      %v876 = vand.u32 %v294, 4294901760
      %877 = vmatmul.mubr.f32.gmra.mxu0 %v876
      %v878 = vpop.f32.mrf.mxu0
      %v879 = vadd.f32 %v529, %v878
      %v880 = vpop.f32.mrf.mxu0
      %881 = vmatprep.mubr.f32.mxu0 0.0
      %v882 = vand.u32 %v297, 4294901760
      %883 = vmatmul.mubr.f32.gmra.mxu0 %v882
      %v884 = vpop.f32.mrf.mxu0
      %v885 = vadd.f32 %v539, %v884
      %v886 = vpop.f32.mrf.mxu0
      %887 = vmatprep.mubr.f32.mxu0 0.0
      %v888 = vand.u32 %v300, 4294901760
      %889 = vmatmul.mubr.f32.gmra.mxu0 %v888
      %v890 = vpop.f32.mrf.mxu0
      %v891 = vadd.f32 %v549, %v890
      %v892 = vpop.f32.mrf.mxu0
      %893 = vmatprep.mubr.f32.mxu0 0.0
      %v894 = vand.u32 %v303, 4294901760
      %895 = vmatmul.mubr.f32.gmra.mxu0 %v894
      %v896 = vpop.f32.mrf.mxu0
      %v897 = vadd.f32 %v559, %v896
      %v898 = vpop.f32.mrf.mxu0
      %899 = vmatprep.mubr.f32.mxu0 0.0
      %v900 = vand.u32 %v306, 4294901760
      %901 = vmatmul.mubr.f32.gmra.mxu0 %v900
      %v902 = vpop.f32.mrf.mxu0
      %v903 = vadd.f32 %v569, %v902
      %v904 = vpop.f32.mrf.mxu0
      %905 = vmatprep.mubr.f32.mxu0 0.0
      %v906 = vand.u32 %v309, 4294901760
      %907 = vmatmul.mubr.f32.gmra.mxu0 %v906
      %v908 = vpop.f32.mrf.mxu0
      %v909 = vadd.f32 %v579, %v908
      %v910 = vpop.f32.mrf.mxu0
      %911 = vmatprep.mubr.f32.mxu0 0.0
      %v912 = vand.u32 %v312, 4294901760
      %913 = vmatmul.mubr.f32.gmra.mxu0 %v912
      %v914 = vpop.f32.mrf.mxu0
      %v915 = vadd.f32 %v589, %v914
      %v916 = vpop.f32.mrf.mxu0
      %917 = vmatprep.mubr.f32.mxu0 0.0
      %v918 = vand.u32 %v315, 4294901760
      %919 = vmatmul.mubr.f32.gmra.mxu0 %v918
      %v920 = vpop.f32.mrf.mxu0
      %v921 = vadd.f32 %v599, %v920
      %v922 = vpop.f32.mrf.mxu0
      %923 = vmatprep.mubr.f32.mxu0 0.0
      %v924 = vand.u32 %v318, 4294901760
      %925 = vmatmul.mubr.f32.gmra.mxu0 %v924
      %v926 = vpop.f32.mrf.mxu0
      %v927 = vadd.f32 %v609, %v926
      %v928 = vpop.f32.mrf.mxu0
      %929 = vmatprep.mubr.f32.mxu0 0.0
      %v930 = vand.u32 %v321, 4294901760
      %931 = vmatmul.mubr.f32.gmra.mxu0 %v930
      %v932 = vpop.f32.mrf.mxu0
      %v933 = vadd.f32 %v619, %v932
      %v934 = vpop.f32.mrf.mxu0
      %935 = vmatprep.mubr.f32.mxu0 0.0
      %v936 = vand.u32 %v324, 4294901760
      %937 = vmatmul.mubr.f32.gmra.mxu0 %v936
      %v938 = vpop.f32.mrf.mxu0
      %v939 = vadd.f32 %v629, %v938
      %v940 = vpop.f32.mrf.mxu0
      %941 = vmatprep.mubr.f32.mxu0 0.0
      %v942 = vand.u32 %v327, 4294901760
      %943 = vmatmul.mubr.f32.gmra.mxu0 %v942
      %v944 = vpop.f32.mrf.mxu0
      %v945 = vadd.f32 %v639, %v944
      %v946 = vpop.f32.mrf.mxu0
      %947 = vmatprep.mubr.f32.mxu0 0.0
      %v948 = vand.u32 %v330, 4294901760
      %949 = vmatmul.mubr.f32.gmra.mxu0 %v948
      %v950 = vpop.f32.mrf.mxu0
      %v951 = vadd.f32 %v649, %v950
      %v952 = vpop.f32.mrf.mxu0
      %953 = vmatprep.mubr.f32.mxu0 0.0
      %v954 = vand.u32 %v333, 4294901760
      %955 = vmatmul.mubr.f32.gmra.mxu0 %v954
      %v956 = vpop.f32.mrf.mxu0
      %v957 = vadd.f32 %v659, %v956
      %v958 = vpop.f32.mrf.mxu0
      %959 = vmatprep.mubr.f32.mxu0 0.0
      %v960 = vand.u32 %v336, 4294901760
      %961 = vmatmul.mubr.f32.gmra.mxu0 %v960
      %v962 = vpop.f32.mrf.mxu0
      %v963 = vadd.f32 %v669, %v962
      %v964 = vpop.f32.mrf.mxu0
      %965 = vmatprep.mubr.f32.mxu0 0.0
      %v966 = vand.u32 %v339, 4294901760
      %967 = vmatmul.mubr.f32.gmra.mxu0 %v966
      %v968 = vpop.f32.mrf.mxu0
      %v969 = vadd.f32 %v679, %v968
      %v970 = vpop.f32.mrf.mxu0
      %971 = vmatprep.mubr.f32.mxu0 0.0
      %v972 = vand.u32 %v342, 4294901760
      %973 = vmatmul.mubr.f32.gmra.mxu0 %v972
      %v974 = vpop.f32.mrf.mxu0
      %v975 = vadd.f32 %v689, %v974
      %v976 = vpop.f32.mrf.mxu0
      %977 = vmatprep.mubr.f32.mxu0 0.0
      %v978 = vand.u32 %v345, 4294901760
      %979 = vmatmul.mubr.f32.gmra.mxu0 %v978
      %v980 = vpop.f32.mrf.mxu0
      %v981 = vadd.f32 %v699, %v980
      %v982 = vpop.f32.mrf.mxu0
      %983 = vmatprep.mubr.f32.mxu0 0.0
      %v984 = vand.u32 %v348, 4294901760
      %985 = vmatmul.mubr.f32.gmra.mxu0 %v984
      %v986 = vpop.f32.mrf.mxu0
      %v987 = vadd.f32 %v709, %v986
      %v988 = vpop.f32.mrf.mxu0
      %989 = vmatprep.mubr.f32.mxu0 0.0
      %v990 = vand.u32 %v351, 4294901760
      %991 = vmatmul.mubr.f32.gmra.mxu0 %v990
      %v992 = vpop.f32.mrf.mxu0
      %v993 = vadd.f32 %v719, %v992
      %v994 = vpop.f32.mrf.mxu0
      %995 = vmatprep.mubr.f32.mxu0 0.0
      %v996 = vand.u32 %v354, 4294901760
      %997 = vmatmul.mubr.f32.gmra.mxu0 %v996
      %v998 = vpop.f32.mrf.mxu0
      %v999 = vadd.f32 %v729, %v998
      %v1000 = vpop.f32.mrf.mxu0
      %1001 = vmatprep.mubr.f32.mxu0 0.0
      %v1002 = vand.u32 %v357, 4294901760
      %1003 = vmatmul.mubr.f32.gmra.mxu0 %v1002
      %v1004 = vpop.f32.mrf.mxu0
      %v1005 = vadd.f32 %v739, %v1004
      %v1006 = vpop.f32.mrf.mxu0
      %1007 = vmatprep.mubr.f32.mxu0 0.0
      %v1008 = vand.u32 %v360, 4294901760
      %1009 = vmatmul.mubr.f32.gmra.mxu0 %v1008
      %v1010 = vpop.f32.mrf.mxu0
      %v1011 = vadd.f32 %v749, %v1010
      %v1012 = vpop.f32.mrf.mxu0
      %1013 = vdwg.mxu0
      %1014 = vmatprep.subr.mxu0 0.0
      %1015 = vmatpush1.msra.mxu0 0.0
      %1016 = vmatprep.subr.mxu0 0.0
      %1017 = vmatpush1.msra.mxu0 0.0
      %1018 = vmatprep.subr.mxu0 0.0
      %1019 = vmatpush1.msra.mxu0 0.0
      %1020 = vmatprep.subr.mxu0 0.0
      %1021 = vmatpush1.msra.mxu0 0.0
      %1022 = vmatprep.subr.mxu0 0.0
      %1023 = vmatpush1.msra.mxu0 0.0
      %1024 = vmatprep.subr.mxu0 0.0
      %1025 = vmatpush1.msra.mxu0 0.0
      %1026 = vmatprep.subr.mxu0 0.0
      %1027 = vmatpush1.msra.mxu0 0.0
      %1028 = vmatprep.subr.mxu0 0.0
      %1029 = vmatpush1.msra.mxu0 0.0
      %1030 = vmatprep.subr.mxu0 0.0
      %1031 = vmatpush1.msra.mxu0 0.0
      %1032 = vmatprep.subr.mxu0 0.0
      %1033 = vmatpush1.msra.mxu0 0.0
      %1034 = vmatprep.subr.mxu0 0.0
      %1035 = vmatpush1.msra.mxu0 0.0
      %1036 = vmatprep.subr.mxu0 0.0
      %1037 = vmatpush1.msra.mxu0 0.0
      %1038 = vmatprep.subr.mxu0 0.0
      %1039 = vmatpush1.msra.mxu0 0.0
      %1040 = vmatprep.subr.mxu0 0.0
      %1041 = vmatpush1.msra.mxu0 0.0
      %1042 = vmatprep.subr.mxu0 0.0
      %1043 = vmatpush1.msra.mxu0 0.0
      %1044 = vmatprep.subr.mxu0 0.0
      %v1045 = vand.u32 %v364, 4294901760
      %v1046 = vsub.f32 %v364, %v1045
      %1047 = vmatpush1.msra.mxu0 %v1046
      %1048 = vmatprep.subr.mxu0 0.0
      %1049 = vmatpush2.msra.mxu0 0.0
      %1050 = vmatprep.subr.mxu0 0.0
      %1051 = vmatpush2.msra.mxu0 0.0
      %1052 = vmatprep.subr.mxu0 0.0
      %1053 = vmatpush2.msra.mxu0 0.0
      %1054 = vmatprep.subr.mxu0 0.0
      %1055 = vmatpush2.msra.mxu0 0.0
      %1056 = vmatprep.subr.mxu0 0.0
      %1057 = vmatpush2.msra.mxu0 0.0
      %1058 = vmatprep.subr.mxu0 0.0
      %1059 = vmatpush2.msra.mxu0 0.0
      %1060 = vmatprep.subr.mxu0 0.0
      %1061 = vmatpush2.msra.mxu0 0.0
      %1062 = vmatprep.subr.mxu0 0.0
      %1063 = vmatpush2.msra.mxu0 0.0
      %1064 = vmatprep.subr.mxu0 0.0
      %1065 = vmatpush2.msra.mxu0 0.0
      %1066 = vmatprep.subr.mxu0 0.0
      %1067 = vmatpush2.msra.mxu0 0.0
      %1068 = vmatprep.subr.mxu0 0.0
      %1069 = vmatpush2.msra.mxu0 0.0
      %1070 = vmatprep.subr.mxu0 0.0
      %1071 = vmatpush2.msra.mxu0 0.0
      %1072 = vmatprep.subr.mxu0 0.0
      %1073 = vmatpush2.msra.mxu0 0.0
      %1074 = vmatprep.subr.mxu0 0.0
      %1075 = vmatpush2.msra.mxu0 0.0
      %1076 = vmatprep.subr.mxu0 0.0
      %1077 = vmatpush2.msra.mxu0 0.0
      %1078 = vmatprep.subr.mxu0 0.0
      %1079 = vmatpush2.msra.mxu0 0.0
      %1080 = vmatprep.mubr.f32.mxu0 0.0
      %v1081 = vand.u32 %v267, 4294901760
      %v1082 = vsub.f32 %v267, %v1081
      %1083 = vmatmul.mubr.f32.gmra.mxu0 %v1082
      %v1084 = vpop.f32.mrf.mxu0
      %v1085 = vadd.f32 %v825, %v1084
      %v1086 = vpop.f32.mrf.mxu0
      %1087 = vmatprep.mubr.f32.mxu0 0.0
      %v1088 = vand.u32 %v270, 4294901760
      %v1089 = vsub.f32 %v270, %v1088
      %1090 = vmatmul.mubr.f32.gmra.mxu0 %v1089
      %v1091 = vpop.f32.mrf.mxu0
      %v1092 = vadd.f32 %v831, %v1091
      %v1093 = vpop.f32.mrf.mxu0
      %1094 = vmatprep.mubr.f32.mxu0 0.0
      %v1095 = vand.u32 %v273, 4294901760
      %v1096 = vsub.f32 %v273, %v1095
      %1097 = vmatmul.mubr.f32.gmra.mxu0 %v1096
      %v1098 = vpop.f32.mrf.mxu0
      %v1099 = vadd.f32 %v837, %v1098
      %v1100 = vpop.f32.mrf.mxu0
      %1101 = vmatprep.mubr.f32.mxu0 0.0
      %v1102 = vand.u32 %v276, 4294901760
      %v1103 = vsub.f32 %v276, %v1102
      %1104 = vmatmul.mubr.f32.gmra.mxu0 %v1103
      %v1105 = vpop.f32.mrf.mxu0
      %v1106 = vadd.f32 %v843, %v1105
      %v1107 = vpop.f32.mrf.mxu0
      %1108 = vmatprep.mubr.f32.mxu0 0.0
      %v1109 = vand.u32 %v279, 4294901760
      %v1110 = vsub.f32 %v279, %v1109
      %1111 = vmatmul.mubr.f32.gmra.mxu0 %v1110
      %v1112 = vpop.f32.mrf.mxu0
      %v1113 = vadd.f32 %v849, %v1112
      %v1114 = vpop.f32.mrf.mxu0
      %1115 = vmatprep.mubr.f32.mxu0 0.0
      %v1116 = vand.u32 %v282, 4294901760
      %v1117 = vsub.f32 %v282, %v1116
      %1118 = vmatmul.mubr.f32.gmra.mxu0 %v1117
      %v1119 = vpop.f32.mrf.mxu0
      %v1120 = vadd.f32 %v855, %v1119
      %v1121 = vpop.f32.mrf.mxu0
      %1122 = vmatprep.mubr.f32.mxu0 0.0
      %v1123 = vand.u32 %v285, 4294901760
      %v1124 = vsub.f32 %v285, %v1123
      %1125 = vmatmul.mubr.f32.gmra.mxu0 %v1124
      %v1126 = vpop.f32.mrf.mxu0
      %v1127 = vadd.f32 %v861, %v1126
      %v1128 = vpop.f32.mrf.mxu0
      %1129 = vmatprep.mubr.f32.mxu0 0.0
      %v1130 = vand.u32 %v288, 4294901760
      %v1131 = vsub.f32 %v288, %v1130
      %1132 = vmatmul.mubr.f32.gmra.mxu0 %v1131
      %v1133 = vpop.f32.mrf.mxu0
      %v1134 = vadd.f32 %v867, %v1133
      %v1135 = vpop.f32.mrf.mxu0
      %1136 = vmatprep.mubr.f32.mxu0 0.0
      %v1137 = vand.u32 %v291, 4294901760
      %v1138 = vsub.f32 %v291, %v1137
      %1139 = vmatmul.mubr.f32.gmra.mxu0 %v1138
      %v1140 = vpop.f32.mrf.mxu0
      %v1141 = vadd.f32 %v873, %v1140
      %v1142 = vpop.f32.mrf.mxu0
      %1143 = vmatprep.mubr.f32.mxu0 0.0
      %v1144 = vand.u32 %v294, 4294901760
      %v1145 = vsub.f32 %v294, %v1144
      %1146 = vmatmul.mubr.f32.gmra.mxu0 %v1145
      %v1147 = vpop.f32.mrf.mxu0
      %v1148 = vadd.f32 %v879, %v1147
      %v1149 = vpop.f32.mrf.mxu0
      %1150 = vmatprep.mubr.f32.mxu0 0.0
      %v1151 = vand.u32 %v297, 4294901760
      %v1152 = vsub.f32 %v297, %v1151
      %1153 = vmatmul.mubr.f32.gmra.mxu0 %v1152
      %v1154 = vpop.f32.mrf.mxu0
      %v1155 = vadd.f32 %v885, %v1154
      %v1156 = vpop.f32.mrf.mxu0
      %1157 = vmatprep.mubr.f32.mxu0 0.0
      %v1158 = vand.u32 %v300, 4294901760
      %v1159 = vsub.f32 %v300, %v1158
      %1160 = vmatmul.mubr.f32.gmra.mxu0 %v1159
      %v1161 = vpop.f32.mrf.mxu0
      %v1162 = vadd.f32 %v891, %v1161
      %v1163 = vpop.f32.mrf.mxu0
      %1164 = vmatprep.mubr.f32.mxu0 0.0
      %v1165 = vand.u32 %v303, 4294901760
      %v1166 = vsub.f32 %v303, %v1165
      %1167 = vmatmul.mubr.f32.gmra.mxu0 %v1166
      %v1168 = vpop.f32.mrf.mxu0
      %v1169 = vadd.f32 %v897, %v1168
      %v1170 = vpop.f32.mrf.mxu0
      %1171 = vmatprep.mubr.f32.mxu0 0.0
      %v1172 = vand.u32 %v306, 4294901760
      %v1173 = vsub.f32 %v306, %v1172
      %1174 = vmatmul.mubr.f32.gmra.mxu0 %v1173
      %v1175 = vpop.f32.mrf.mxu0
      %v1176 = vadd.f32 %v903, %v1175
      %v1177 = vpop.f32.mrf.mxu0
      %1178 = vmatprep.mubr.f32.mxu0 0.0
      %v1179 = vand.u32 %v309, 4294901760
      %v1180 = vsub.f32 %v309, %v1179
      %1181 = vmatmul.mubr.f32.gmra.mxu0 %v1180
      %v1182 = vpop.f32.mrf.mxu0
      %v1183 = vadd.f32 %v909, %v1182
      %v1184 = vpop.f32.mrf.mxu0
      %1185 = vmatprep.mubr.f32.mxu0 0.0
      %v1186 = vand.u32 %v312, 4294901760
      %v1187 = vsub.f32 %v312, %v1186
      %1188 = vmatmul.mubr.f32.gmra.mxu0 %v1187
      %v1189 = vpop.f32.mrf.mxu0
      %v1190 = vadd.f32 %v915, %v1189
      %v1191 = vpop.f32.mrf.mxu0
      %1192 = vmatprep.mubr.f32.mxu0 0.0
      %v1193 = vand.u32 %v315, 4294901760
      %v1194 = vsub.f32 %v315, %v1193
      %1195 = vmatmul.mubr.f32.gmra.mxu0 %v1194
      %v1196 = vpop.f32.mrf.mxu0
      %v1197 = vadd.f32 %v921, %v1196
      %v1198 = vpop.f32.mrf.mxu0
      %1199 = vmatprep.mubr.f32.mxu0 0.0
      %v1200 = vand.u32 %v318, 4294901760
      %v1201 = vsub.f32 %v318, %v1200
      %1202 = vmatmul.mubr.f32.gmra.mxu0 %v1201
      %v1203 = vpop.f32.mrf.mxu0
      %v1204 = vadd.f32 %v927, %v1203
      %v1205 = vpop.f32.mrf.mxu0
      %1206 = vmatprep.mubr.f32.mxu0 0.0
      %v1207 = vand.u32 %v321, 4294901760
      %v1208 = vsub.f32 %v321, %v1207
      %1209 = vmatmul.mubr.f32.gmra.mxu0 %v1208
      %v1210 = vpop.f32.mrf.mxu0
      %v1211 = vadd.f32 %v933, %v1210
      %v1212 = vpop.f32.mrf.mxu0
      %1213 = vmatprep.mubr.f32.mxu0 0.0
      %v1214 = vand.u32 %v324, 4294901760
      %v1215 = vsub.f32 %v324, %v1214
      %1216 = vmatmul.mubr.f32.gmra.mxu0 %v1215
      %v1217 = vpop.f32.mrf.mxu0
      %v1218 = vadd.f32 %v939, %v1217
      %v1219 = vpop.f32.mrf.mxu0
      %1220 = vmatprep.mubr.f32.mxu0 0.0
      %v1221 = vand.u32 %v327, 4294901760
      %v1222 = vsub.f32 %v327, %v1221
      %1223 = vmatmul.mubr.f32.gmra.mxu0 %v1222
      %v1224 = vpop.f32.mrf.mxu0
      %v1225 = vadd.f32 %v945, %v1224
      %v1226 = vpop.f32.mrf.mxu0
      %1227 = vmatprep.mubr.f32.mxu0 0.0
      %v1228 = vand.u32 %v330, 4294901760
      %v1229 = vsub.f32 %v330, %v1228
      %1230 = vmatmul.mubr.f32.gmra.mxu0 %v1229
      %v1231 = vpop.f32.mrf.mxu0
      %v1232 = vadd.f32 %v951, %v1231
      %v1233 = vpop.f32.mrf.mxu0
      %1234 = vmatprep.mubr.f32.mxu0 0.0
      %v1235 = vand.u32 %v333, 4294901760
      %v1236 = vsub.f32 %v333, %v1235
      %1237 = vmatmul.mubr.f32.gmra.mxu0 %v1236
      %v1238 = vpop.f32.mrf.mxu0
      %v1239 = vadd.f32 %v957, %v1238
      %v1240 = vpop.f32.mrf.mxu0
      %1241 = vmatprep.mubr.f32.mxu0 0.0
      %v1242 = vand.u32 %v336, 4294901760
      %v1243 = vsub.f32 %v336, %v1242
      %1244 = vmatmul.mubr.f32.gmra.mxu0 %v1243
      %v1245 = vpop.f32.mrf.mxu0
      %v1246 = vadd.f32 %v963, %v1245
      %v1247 = vpop.f32.mrf.mxu0
      %1248 = vmatprep.mubr.f32.mxu0 0.0
      %v1249 = vand.u32 %v339, 4294901760
      %v1250 = vsub.f32 %v339, %v1249
      %1251 = vmatmul.mubr.f32.gmra.mxu0 %v1250
      %v1252 = vpop.f32.mrf.mxu0
      %v1253 = vadd.f32 %v969, %v1252
      %v1254 = vpop.f32.mrf.mxu0
      %1255 = vmatprep.mubr.f32.mxu0 0.0
      %v1256 = vand.u32 %v342, 4294901760
      %v1257 = vsub.f32 %v342, %v1256
      %1258 = vmatmul.mubr.f32.gmra.mxu0 %v1257
      %v1259 = vpop.f32.mrf.mxu0
      %v1260 = vadd.f32 %v975, %v1259
      %v1261 = vpop.f32.mrf.mxu0
      %1262 = vmatprep.mubr.f32.mxu0 0.0
      %v1263 = vand.u32 %v345, 4294901760
      %v1264 = vsub.f32 %v345, %v1263
      %1265 = vmatmul.mubr.f32.gmra.mxu0 %v1264
      %v1266 = vpop.f32.mrf.mxu0
      %v1267 = vadd.f32 %v981, %v1266
      %v1268 = vpop.f32.mrf.mxu0
      %1269 = vmatprep.mubr.f32.mxu0 0.0
      %v1270 = vand.u32 %v348, 4294901760
      %v1271 = vsub.f32 %v348, %v1270
      %1272 = vmatmul.mubr.f32.gmra.mxu0 %v1271
      %v1273 = vpop.f32.mrf.mxu0
      %v1274 = vadd.f32 %v987, %v1273
      %v1275 = vpop.f32.mrf.mxu0
      %1276 = vmatprep.mubr.f32.mxu0 0.0
      %v1277 = vand.u32 %v351, 4294901760
      %v1278 = vsub.f32 %v351, %v1277
      %1279 = vmatmul.mubr.f32.gmra.mxu0 %v1278
      %v1280 = vpop.f32.mrf.mxu0
      %v1281 = vadd.f32 %v993, %v1280
      %v1282 = vpop.f32.mrf.mxu0
      %1283 = vmatprep.mubr.f32.mxu0 0.0
      %v1284 = vand.u32 %v354, 4294901760
      %v1285 = vsub.f32 %v354, %v1284
      %1286 = vmatmul.mubr.f32.gmra.mxu0 %v1285
      %v1287 = vpop.f32.mrf.mxu0
      %v1288 = vadd.f32 %v999, %v1287
      %v1289 = vpop.f32.mrf.mxu0
      %1290 = vmatprep.mubr.f32.mxu0 0.0
      %v1291 = vand.u32 %v357, 4294901760
      %v1292 = vsub.f32 %v357, %v1291
      %1293 = vmatmul.mubr.f32.gmra.mxu0 %v1292
      %v1294 = vpop.f32.mrf.mxu0
      %v1295 = vadd.f32 %v1005, %v1294
      %v1296 = vpop.f32.mrf.mxu0
      %1297 = vmatprep.mubr.f32.mxu0 0.0
      %v1298 = vand.u32 %v360, 4294901760
      %v1299 = vsub.f32 %v360, %v1298
      %1300 = vmatmul.mubr.f32.gmra.mxu0 %v1299
      %v1301 = vpop.f32.mrf.mxu0
      %v1302 = vadd.f32 %v1011, %v1301
      %v1303 = vpop.f32.mrf.mxu0
      %1304 = vdwg.mxu0
      %1305 = vmatprep.subr.mxu0 0.0
      %1306 = vmatpush1.msra.mxu0 0.0
      %1307 = vmatprep.subr.mxu0 0.0
      %1308 = vmatpush1.msra.mxu0 0.0
      %1309 = vmatprep.subr.mxu0 0.0
      %1310 = vmatpush1.msra.mxu0 0.0
      %1311 = vmatprep.subr.mxu0 0.0
      %1312 = vmatpush1.msra.mxu0 0.0
      %1313 = vmatprep.subr.mxu0 0.0
      %1314 = vmatpush1.msra.mxu0 0.0
      %1315 = vmatprep.subr.mxu0 0.0
      %1316 = vmatpush1.msra.mxu0 0.0
      %1317 = vmatprep.subr.mxu0 0.0
      %1318 = vmatpush1.msra.mxu0 0.0
      %1319 = vmatprep.subr.mxu0 0.0
      %1320 = vmatpush1.msra.mxu0 0.0
      %1321 = vmatprep.subr.mxu0 0.0
      %1322 = vmatpush1.msra.mxu0 0.0
      %1323 = vmatprep.subr.mxu0 0.0
      %1324 = vmatpush1.msra.mxu0 0.0
      %1325 = vmatprep.subr.mxu0 0.0
      %1326 = vmatpush1.msra.mxu0 0.0
      %1327 = vmatprep.subr.mxu0 0.0
      %1328 = vmatpush1.msra.mxu0 0.0
      %1329 = vmatprep.subr.mxu0 0.0
      %1330 = vmatpush1.msra.mxu0 0.0
      %1331 = vmatprep.subr.mxu0 0.0
      %1332 = vmatpush1.msra.mxu0 0.0
      %1333 = vmatprep.subr.mxu0 0.0
      %1334 = vmatpush1.msra.mxu0 0.0
      %1335 = vmatprep.subr.mxu0 0.0
      %v1336 = vand.u32 %v364, 4294901760
      %1337 = vmatpush1.msra.mxu0 %v1336
      %1338 = vmatprep.subr.mxu0 0.0
      %1339 = vmatpush2.msra.mxu0 0.0
      %1340 = vmatprep.subr.mxu0 0.0
      %1341 = vmatpush2.msra.mxu0 0.0
      %1342 = vmatprep.subr.mxu0 0.0
      %1343 = vmatpush2.msra.mxu0 0.0
      %1344 = vmatprep.subr.mxu0 0.0
      %1345 = vmatpush2.msra.mxu0 0.0
      %1346 = vmatprep.subr.mxu0 0.0
      %1347 = vmatpush2.msra.mxu0 0.0
      %1348 = vmatprep.subr.mxu0 0.0
      %1349 = vmatpush2.msra.mxu0 0.0
      %1350 = vmatprep.subr.mxu0 0.0
      %1351 = vmatpush2.msra.mxu0 0.0
      %1352 = vmatprep.subr.mxu0 0.0
      %1353 = vmatpush2.msra.mxu0 0.0
      %1354 = vmatprep.subr.mxu0 0.0
      %1355 = vmatpush2.msra.mxu0 0.0
      %1356 = vmatprep.subr.mxu0 0.0
      %1357 = vmatpush2.msra.mxu0 0.0
      %1358 = vmatprep.subr.mxu0 0.0
      %1359 = vmatpush2.msra.mxu0 0.0
      %1360 = vmatprep.subr.mxu0 0.0
      %1361 = vmatpush2.msra.mxu0 0.0
      %1362 = vmatprep.subr.mxu0 0.0
      %1363 = vmatpush2.msra.mxu0 0.0
      %1364 = vmatprep.subr.mxu0 0.0
      %1365 = vmatpush2.msra.mxu0 0.0
      %1366 = vmatprep.subr.mxu0 0.0
      %1367 = vmatpush2.msra.mxu0 0.0
      %1368 = vmatprep.subr.mxu0 0.0
      %1369 = vmatpush2.msra.mxu0 0.0
      %1370 = vmatprep.mubr.f32.mxu0 0.0
      %v1371 = vand.u32 %v267, 4294901760
      %v1372 = vsub.f32 %v267, %v1371
      %v1373 = vand.u32 %v1372, 4294901760
      %1374 = vmatmul.mubr.f32.gmra.mxu0 %v1373
      %v1375 = vpop.f32.mrf.mxu0
      %v1376 = vadd.f32 %v1085, %v1375
      %v1377 = vpop.f32.mrf.mxu0
      %1378 = vmatprep.mubr.f32.mxu0 0.0
      %v1379 = vand.u32 %v270, 4294901760
      %v1380 = vsub.f32 %v270, %v1379
      %v1381 = vand.u32 %v1380, 4294901760
      %1382 = vmatmul.mubr.f32.gmra.mxu0 %v1381
      %v1383 = vpop.f32.mrf.mxu0
      %v1384 = vadd.f32 %v1092, %v1383
      %v1385 = vpop.f32.mrf.mxu0
      %1386 = vmatprep.mubr.f32.mxu0 0.0
      %v1387 = vand.u32 %v273, 4294901760
      %v1388 = vsub.f32 %v273, %v1387
      %v1389 = vand.u32 %v1388, 4294901760
      %1390 = vmatmul.mubr.f32.gmra.mxu0 %v1389
      %v1391 = vpop.f32.mrf.mxu0
      %v1392 = vadd.f32 %v1099, %v1391
      %v1393 = vpop.f32.mrf.mxu0
      %1394 = vmatprep.mubr.f32.mxu0 0.0
      %v1395 = vand.u32 %v276, 4294901760
      %v1396 = vsub.f32 %v276, %v1395
      %v1397 = vand.u32 %v1396, 4294901760
      %1398 = vmatmul.mubr.f32.gmra.mxu0 %v1397
      %v1399 = vpop.f32.mrf.mxu0
      %v1400 = vadd.f32 %v1106, %v1399
      %v1401 = vpop.f32.mrf.mxu0
      %1402 = vmatprep.mubr.f32.mxu0 0.0
      %v1403 = vand.u32 %v279, 4294901760
      %v1404 = vsub.f32 %v279, %v1403
      %v1405 = vand.u32 %v1404, 4294901760
      %1406 = vmatmul.mubr.f32.gmra.mxu0 %v1405
      %v1407 = vpop.f32.mrf.mxu0
      %v1408 = vadd.f32 %v1113, %v1407
      %v1409 = vpop.f32.mrf.mxu0
      %1410 = vmatprep.mubr.f32.mxu0 0.0
      %v1411 = vand.u32 %v282, 4294901760
      %v1412 = vsub.f32 %v282, %v1411
      %v1413 = vand.u32 %v1412, 4294901760
      %1414 = vmatmul.mubr.f32.gmra.mxu0 %v1413
      %v1415 = vpop.f32.mrf.mxu0
      %v1416 = vadd.f32 %v1120, %v1415
      %v1417 = vpop.f32.mrf.mxu0
      %1418 = vmatprep.mubr.f32.mxu0 0.0
      %v1419 = vand.u32 %v285, 4294901760
      %v1420 = vsub.f32 %v285, %v1419
      %v1421 = vand.u32 %v1420, 4294901760
      %1422 = vmatmul.mubr.f32.gmra.mxu0 %v1421
      %v1423 = vpop.f32.mrf.mxu0
      %v1424 = vadd.f32 %v1127, %v1423
      %v1425 = vpop.f32.mrf.mxu0
      %1426 = vmatprep.mubr.f32.mxu0 0.0
      %v1427 = vand.u32 %v288, 4294901760
      %v1428 = vsub.f32 %v288, %v1427
      %v1429 = vand.u32 %v1428, 4294901760
      %1430 = vmatmul.mubr.f32.gmra.mxu0 %v1429
      %v1431 = vpop.f32.mrf.mxu0
      %v1432 = vadd.f32 %v1134, %v1431
      %v1433 = vpop.f32.mrf.mxu0
      %1434 = vmatprep.mubr.f32.mxu0 0.0
      %v1435 = vand.u32 %v291, 4294901760
      %v1436 = vsub.f32 %v291, %v1435
      %v1437 = vand.u32 %v1436, 4294901760
      %1438 = vmatmul.mubr.f32.gmra.mxu0 %v1437
      %v1439 = vpop.f32.mrf.mxu0
      %v1440 = vadd.f32 %v1141, %v1439
      %v1441 = vpop.f32.mrf.mxu0
      %1442 = vmatprep.mubr.f32.mxu0 0.0
      %v1443 = vand.u32 %v294, 4294901760
      %v1444 = vsub.f32 %v294, %v1443
      %v1445 = vand.u32 %v1444, 4294901760
      %1446 = vmatmul.mubr.f32.gmra.mxu0 %v1445
      %v1447 = vpop.f32.mrf.mxu0
      %v1448 = vadd.f32 %v1148, %v1447
      %v1449 = vpop.f32.mrf.mxu0
      %1450 = vmatprep.mubr.f32.mxu0 0.0
      %v1451 = vand.u32 %v297, 4294901760
      %v1452 = vsub.f32 %v297, %v1451
      %v1453 = vand.u32 %v1452, 4294901760
      %1454 = vmatmul.mubr.f32.gmra.mxu0 %v1453
      %v1455 = vpop.f32.mrf.mxu0
      %v1456 = vadd.f32 %v1155, %v1455
      %v1457 = vpop.f32.mrf.mxu0
      %1458 = vmatprep.mubr.f32.mxu0 0.0
      %v1459 = vand.u32 %v300, 4294901760
      %v1460 = vsub.f32 %v300, %v1459
      %v1461 = vand.u32 %v1460, 4294901760
      %1462 = vmatmul.mubr.f32.gmra.mxu0 %v1461
      %v1463 = vpop.f32.mrf.mxu0
      %v1464 = vadd.f32 %v1162, %v1463
      %v1465 = vpop.f32.mrf.mxu0
      %1466 = vmatprep.mubr.f32.mxu0 0.0
      %v1467 = vand.u32 %v303, 4294901760
      %v1468 = vsub.f32 %v303, %v1467
      %v1469 = vand.u32 %v1468, 4294901760
      %1470 = vmatmul.mubr.f32.gmra.mxu0 %v1469
      %v1471 = vpop.f32.mrf.mxu0
      %v1472 = vadd.f32 %v1169, %v1471
      %v1473 = vpop.f32.mrf.mxu0
      %1474 = vmatprep.mubr.f32.mxu0 0.0
      %v1475 = vand.u32 %v306, 4294901760
      %v1476 = vsub.f32 %v306, %v1475
      %v1477 = vand.u32 %v1476, 4294901760
      %1478 = vmatmul.mubr.f32.gmra.mxu0 %v1477
      %v1479 = vpop.f32.mrf.mxu0
      %v1480 = vadd.f32 %v1176, %v1479
      %v1481 = vpop.f32.mrf.mxu0
      %1482 = vmatprep.mubr.f32.mxu0 0.0
      %v1483 = vand.u32 %v309, 4294901760
      %v1484 = vsub.f32 %v309, %v1483
      %v1485 = vand.u32 %v1484, 4294901760
      %1486 = vmatmul.mubr.f32.gmra.mxu0 %v1485
      %v1487 = vpop.f32.mrf.mxu0
      %v1488 = vadd.f32 %v1183, %v1487
      %v1489 = vpop.f32.mrf.mxu0
      %1490 = vmatprep.mubr.f32.mxu0 0.0
      %v1491 = vand.u32 %v312, 4294901760
      %v1492 = vsub.f32 %v312, %v1491
      %v1493 = vand.u32 %v1492, 4294901760
      %1494 = vmatmul.mubr.f32.gmra.mxu0 %v1493
      %v1495 = vpop.f32.mrf.mxu0
      %v1496 = vadd.f32 %v1190, %v1495
      %v1497 = vpop.f32.mrf.mxu0
      %1498 = vmatprep.mubr.f32.mxu0 0.0
      %v1499 = vand.u32 %v315, 4294901760
      %v1500 = vsub.f32 %v315, %v1499
      %v1501 = vand.u32 %v1500, 4294901760
      %1502 = vmatmul.mubr.f32.gmra.mxu0 %v1501
      %v1503 = vpop.f32.mrf.mxu0
      %v1504 = vadd.f32 %v1197, %v1503
      %v1505 = vpop.f32.mrf.mxu0
      %1506 = vmatprep.mubr.f32.mxu0 0.0
      %v1507 = vand.u32 %v318, 4294901760
      %v1508 = vsub.f32 %v318, %v1507
      %v1509 = vand.u32 %v1508, 4294901760
      %1510 = vmatmul.mubr.f32.gmra.mxu0 %v1509
      %v1511 = vpop.f32.mrf.mxu0
      %v1512 = vadd.f32 %v1204, %v1511
      %v1513 = vpop.f32.mrf.mxu0
      %1514 = vmatprep.mubr.f32.mxu0 0.0
      %v1515 = vand.u32 %v321, 4294901760
      %v1516 = vsub.f32 %v321, %v1515
      %v1517 = vand.u32 %v1516, 4294901760
      %1518 = vmatmul.mubr.f32.gmra.mxu0 %v1517
      %v1519 = vpop.f32.mrf.mxu0
      %v1520 = vadd.f32 %v1211, %v1519
      %v1521 = vpop.f32.mrf.mxu0
      %1522 = vmatprep.mubr.f32.mxu0 0.0
      %v1523 = vand.u32 %v324, 4294901760
      %v1524 = vsub.f32 %v324, %v1523
      %v1525 = vand.u32 %v1524, 4294901760
      %1526 = vmatmul.mubr.f32.gmra.mxu0 %v1525
      %v1527 = vpop.f32.mrf.mxu0
      %v1528 = vadd.f32 %v1218, %v1527
      %v1529 = vpop.f32.mrf.mxu0
      %1530 = vmatprep.mubr.f32.mxu0 0.0
      %v1531 = vand.u32 %v327, 4294901760
      %v1532 = vsub.f32 %v327, %v1531
      %v1533 = vand.u32 %v1532, 4294901760
      %1534 = vmatmul.mubr.f32.gmra.mxu0 %v1533
      %v1535 = vpop.f32.mrf.mxu0
      %v1536 = vadd.f32 %v1225, %v1535
      %v1537 = vpop.f32.mrf.mxu0
      %1538 = vmatprep.mubr.f32.mxu0 0.0
      %v1539 = vand.u32 %v330, 4294901760
      %v1540 = vsub.f32 %v330, %v1539
      %v1541 = vand.u32 %v1540, 4294901760
      %1542 = vmatmul.mubr.f32.gmra.mxu0 %v1541
      %v1543 = vpop.f32.mrf.mxu0
      %v1544 = vadd.f32 %v1232, %v1543
      %v1545 = vpop.f32.mrf.mxu0
      %1546 = vmatprep.mubr.f32.mxu0 0.0
      %v1547 = vand.u32 %v333, 4294901760
      %v1548 = vsub.f32 %v333, %v1547
      %v1549 = vand.u32 %v1548, 4294901760
      %1550 = vmatmul.mubr.f32.gmra.mxu0 %v1549
      %v1551 = vpop.f32.mrf.mxu0
      %v1552 = vadd.f32 %v1239, %v1551
      %v1553 = vpop.f32.mrf.mxu0
      %1554 = vmatprep.mubr.f32.mxu0 0.0
      %v1555 = vand.u32 %v336, 4294901760
      %v1556 = vsub.f32 %v336, %v1555
      %v1557 = vand.u32 %v1556, 4294901760
      %1558 = vmatmul.mubr.f32.gmra.mxu0 %v1557
      %v1559 = vpop.f32.mrf.mxu0
      %v1560 = vadd.f32 %v1246, %v1559
      %v1561 = vpop.f32.mrf.mxu0
      %1562 = vmatprep.mubr.f32.mxu0 0.0
      %v1563 = vand.u32 %v339, 4294901760
      %v1564 = vsub.f32 %v339, %v1563
      %v1565 = vand.u32 %v1564, 4294901760
      %1566 = vmatmul.mubr.f32.gmra.mxu0 %v1565
      %v1567 = vpop.f32.mrf.mxu0
      %v1568 = vadd.f32 %v1253, %v1567
      %v1569 = vpop.f32.mrf.mxu0
      %1570 = vmatprep.mubr.f32.mxu0 0.0
      %v1571 = vand.u32 %v342, 4294901760
      %v1572 = vsub.f32 %v342, %v1571
      %v1573 = vand.u32 %v1572, 4294901760
      %1574 = vmatmul.mubr.f32.gmra.mxu0 %v1573
      %v1575 = vpop.f32.mrf.mxu0
      %v1576 = vadd.f32 %v1260, %v1575
      %v1577 = vpop.f32.mrf.mxu0
      %1578 = vmatprep.mubr.f32.mxu0 0.0
      %v1579 = vand.u32 %v345, 4294901760
      %v1580 = vsub.f32 %v345, %v1579
      %v1581 = vand.u32 %v1580, 4294901760
      %1582 = vmatmul.mubr.f32.gmra.mxu0 %v1581
      %v1583 = vpop.f32.mrf.mxu0
      %v1584 = vadd.f32 %v1267, %v1583
      %v1585 = vpop.f32.mrf.mxu0
      %1586 = vmatprep.mubr.f32.mxu0 0.0
      %v1587 = vand.u32 %v348, 4294901760
      %v1588 = vsub.f32 %v348, %v1587
      %v1589 = vand.u32 %v1588, 4294901760
      %1590 = vmatmul.mubr.f32.gmra.mxu0 %v1589
      %v1591 = vpop.f32.mrf.mxu0
      %v1592 = vadd.f32 %v1274, %v1591
      %v1593 = vpop.f32.mrf.mxu0
      %1594 = vmatprep.mubr.f32.mxu0 0.0
      %v1595 = vand.u32 %v351, 4294901760
      %v1596 = vsub.f32 %v351, %v1595
      %v1597 = vand.u32 %v1596, 4294901760
      %1598 = vmatmul.mubr.f32.gmra.mxu0 %v1597
      %v1599 = vpop.f32.mrf.mxu0
      %v1600 = vadd.f32 %v1281, %v1599
      %v1601 = vpop.f32.mrf.mxu0
      %1602 = vmatprep.mubr.f32.mxu0 0.0
      %v1603 = vand.u32 %v354, 4294901760
      %v1604 = vsub.f32 %v354, %v1603
      %v1605 = vand.u32 %v1604, 4294901760
      %1606 = vmatmul.mubr.f32.gmra.mxu0 %v1605
      %v1607 = vpop.f32.mrf.mxu0
      %v1608 = vadd.f32 %v1288, %v1607
      %v1609 = vpop.f32.mrf.mxu0
      %1610 = vmatprep.mubr.f32.mxu0 0.0
      %v1611 = vand.u32 %v357, 4294901760
      %v1612 = vsub.f32 %v357, %v1611
      %v1613 = vand.u32 %v1612, 4294901760
      %1614 = vmatmul.mubr.f32.gmra.mxu0 %v1613
      %v1615 = vpop.f32.mrf.mxu0
      %v1616 = vadd.f32 %v1295, %v1615
      %v1617 = vpop.f32.mrf.mxu0
      %1618 = vmatprep.mubr.f32.mxu0 0.0
      %v1619 = vand.u32 %v360, 4294901760
      %v1620 = vsub.f32 %v360, %v1619
      %v1621 = vand.u32 %v1620, 4294901760
      %1622 = vmatmul.mubr.f32.gmra.mxu0 %v1621
      %v1623 = vpop.f32.mrf.mxu0
      %v1624 = vadd.f32 %v1302, %v1623
      %v1625 = vpop.f32.mrf.mxu0
      %1626 = vdwg.mxu0
      %1627 = vmatprep.subr.mxu0 0.0
      %1628 = vmatpush1.msra.mxu0 0.0
      %1629 = vmatprep.subr.mxu0 0.0
      %1630 = vmatpush1.msra.mxu0 0.0
      %1631 = vmatprep.subr.mxu0 0.0
      %1632 = vmatpush1.msra.mxu0 0.0
      %1633 = vmatprep.subr.mxu0 0.0
      %1634 = vmatpush1.msra.mxu0 0.0
      %1635 = vmatprep.subr.mxu0 0.0
      %1636 = vmatpush1.msra.mxu0 0.0
      %1637 = vmatprep.subr.mxu0 0.0
      %1638 = vmatpush1.msra.mxu0 0.0
      %1639 = vmatprep.subr.mxu0 0.0
      %1640 = vmatpush1.msra.mxu0 0.0
      %1641 = vmatprep.subr.mxu0 0.0
      %1642 = vmatpush1.msra.mxu0 0.0
      %1643 = vmatprep.subr.mxu0 0.0
      %1644 = vmatpush1.msra.mxu0 0.0
      %1645 = vmatprep.subr.mxu0 0.0
      %1646 = vmatpush1.msra.mxu0 0.0
      %1647 = vmatprep.subr.mxu0 0.0
      %1648 = vmatpush1.msra.mxu0 0.0
      %1649 = vmatprep.subr.mxu0 0.0
      %1650 = vmatpush1.msra.mxu0 0.0
      %1651 = vmatprep.subr.mxu0 0.0
      %1652 = vmatpush1.msra.mxu0 0.0
      %1653 = vmatprep.subr.mxu0 0.0
      %1654 = vmatpush1.msra.mxu0 0.0
      %1655 = vmatprep.subr.mxu0 0.0
      %1656 = vmatpush1.msra.mxu0 0.0
      %1657 = vmatprep.subr.mxu0 0.0
      %v1658 = vand.u32 %v364, 4294901760
      %v1659 = vsub.f32 %v364, %v1658
      %v1660 = vand.u32 %v1659, 4294901760
      %1661 = vmatpush1.msra.mxu0 %v1660
      %1662 = vmatprep.subr.mxu0 0.0
      %1663 = vmatpush2.msra.mxu0 0.0
      %1664 = vmatprep.subr.mxu0 0.0
      %1665 = vmatpush2.msra.mxu0 0.0
      %1666 = vmatprep.subr.mxu0 0.0
      %1667 = vmatpush2.msra.mxu0 0.0
      %1668 = vmatprep.subr.mxu0 0.0
      %1669 = vmatpush2.msra.mxu0 0.0
      %1670 = vmatprep.subr.mxu0 0.0
      %1671 = vmatpush2.msra.mxu0 0.0
      %1672 = vmatprep.subr.mxu0 0.0
      %1673 = vmatpush2.msra.mxu0 0.0
      %1674 = vmatprep.subr.mxu0 0.0
      %1675 = vmatpush2.msra.mxu0 0.0
      %1676 = vmatprep.subr.mxu0 0.0
      %1677 = vmatpush2.msra.mxu0 0.0
      %1678 = vmatprep.subr.mxu0 0.0
      %1679 = vmatpush2.msra.mxu0 0.0
      %1680 = vmatprep.subr.mxu0 0.0
      %1681 = vmatpush2.msra.mxu0 0.0
      %1682 = vmatprep.subr.mxu0 0.0
      %1683 = vmatpush2.msra.mxu0 0.0
      %1684 = vmatprep.subr.mxu0 0.0
      %1685 = vmatpush2.msra.mxu0 0.0
      %1686 = vmatprep.subr.mxu0 0.0
      %1687 = vmatpush2.msra.mxu0 0.0
      %1688 = vmatprep.subr.mxu0 0.0
      %1689 = vmatpush2.msra.mxu0 0.0
      %1690 = vmatprep.subr.mxu0 0.0
      %1691 = vmatpush2.msra.mxu0 0.0
      %1692 = vmatprep.subr.mxu0 0.0
      %1693 = vmatpush2.msra.mxu0 0.0
      %1694 = vmatprep.mubr.f32.mxu0 0.0
      %v1695 = vand.u32 %v267, 4294901760
      %1696 = vmatmul.mubr.f32.gmra.mxu0 %v1695
      %v1697 = vpop.f32.mrf.mxu0
      %v1698 = vadd.f32 %v1376, %v1697
      %v1699 = vpop.f32.mrf.mxu0
      %1700 = vmatprep.mubr.f32.mxu0 0.0
      %v1701 = vand.u32 %v270, 4294901760
      %1702 = vmatmul.mubr.f32.gmra.mxu0 %v1701
      %v1703 = vpop.f32.mrf.mxu0
      %v1704 = vadd.f32 %v1384, %v1703
      %v1705 = vpop.f32.mrf.mxu0
      %1706 = vmatprep.mubr.f32.mxu0 0.0
      %v1707 = vand.u32 %v273, 4294901760
      %1708 = vmatmul.mubr.f32.gmra.mxu0 %v1707
      %v1709 = vpop.f32.mrf.mxu0
      %v1710 = vadd.f32 %v1392, %v1709
      %v1711 = vpop.f32.mrf.mxu0
      %1712 = vmatprep.mubr.f32.mxu0 0.0
      %v1713 = vand.u32 %v276, 4294901760
      %1714 = vmatmul.mubr.f32.gmra.mxu0 %v1713
      %v1715 = vpop.f32.mrf.mxu0
      %v1716 = vadd.f32 %v1400, %v1715
      %v1717 = vpop.f32.mrf.mxu0
      %1718 = vmatprep.mubr.f32.mxu0 0.0
      %v1719 = vand.u32 %v279, 4294901760
      %1720 = vmatmul.mubr.f32.gmra.mxu0 %v1719
      %v1721 = vpop.f32.mrf.mxu0
      %v1722 = vadd.f32 %v1408, %v1721
      %v1723 = vpop.f32.mrf.mxu0
      %1724 = vmatprep.mubr.f32.mxu0 0.0
      %v1725 = vand.u32 %v282, 4294901760
      %1726 = vmatmul.mubr.f32.gmra.mxu0 %v1725
      %v1727 = vpop.f32.mrf.mxu0
      %v1728 = vadd.f32 %v1416, %v1727
      %v1729 = vpop.f32.mrf.mxu0
      %1730 = vmatprep.mubr.f32.mxu0 0.0
      %v1731 = vand.u32 %v285, 4294901760
      %1732 = vmatmul.mubr.f32.gmra.mxu0 %v1731
      %v1733 = vpop.f32.mrf.mxu0
      %v1734 = vadd.f32 %v1424, %v1733
      %v1735 = vpop.f32.mrf.mxu0
      %1736 = vmatprep.mubr.f32.mxu0 0.0
      %v1737 = vand.u32 %v288, 4294901760
      %1738 = vmatmul.mubr.f32.gmra.mxu0 %v1737
      %v1739 = vpop.f32.mrf.mxu0
      %v1740 = vadd.f32 %v1432, %v1739
      %v1741 = vpop.f32.mrf.mxu0
      %1742 = vmatprep.mubr.f32.mxu0 0.0
      %v1743 = vand.u32 %v291, 4294901760
      %1744 = vmatmul.mubr.f32.gmra.mxu0 %v1743
      %v1745 = vpop.f32.mrf.mxu0
      %v1746 = vadd.f32 %v1440, %v1745
      %v1747 = vpop.f32.mrf.mxu0
      %1748 = vmatprep.mubr.f32.mxu0 0.0
      %v1749 = vand.u32 %v294, 4294901760
      %1750 = vmatmul.mubr.f32.gmra.mxu0 %v1749
      %v1751 = vpop.f32.mrf.mxu0
      %v1752 = vadd.f32 %v1448, %v1751
      %v1753 = vpop.f32.mrf.mxu0
      %1754 = vmatprep.mubr.f32.mxu0 0.0
      %v1755 = vand.u32 %v297, 4294901760
      %1756 = vmatmul.mubr.f32.gmra.mxu0 %v1755
      %v1757 = vpop.f32.mrf.mxu0
      %v1758 = vadd.f32 %v1456, %v1757
      %v1759 = vpop.f32.mrf.mxu0
      %1760 = vmatprep.mubr.f32.mxu0 0.0
      %v1761 = vand.u32 %v300, 4294901760
      %1762 = vmatmul.mubr.f32.gmra.mxu0 %v1761
      %v1763 = vpop.f32.mrf.mxu0
      %v1764 = vadd.f32 %v1464, %v1763
      %v1765 = vpop.f32.mrf.mxu0
      %1766 = vmatprep.mubr.f32.mxu0 0.0
      %v1767 = vand.u32 %v303, 4294901760
      %1768 = vmatmul.mubr.f32.gmra.mxu0 %v1767
      %v1769 = vpop.f32.mrf.mxu0
      %v1770 = vadd.f32 %v1472, %v1769
      %v1771 = vpop.f32.mrf.mxu0
      %1772 = vmatprep.mubr.f32.mxu0 0.0
      %v1773 = vand.u32 %v306, 4294901760
      %1774 = vmatmul.mubr.f32.gmra.mxu0 %v1773
      %v1775 = vpop.f32.mrf.mxu0
      %v1776 = vadd.f32 %v1480, %v1775
      %v1777 = vpop.f32.mrf.mxu0
      %1778 = vmatprep.mubr.f32.mxu0 0.0
      %v1779 = vand.u32 %v309, 4294901760
      %1780 = vmatmul.mubr.f32.gmra.mxu0 %v1779
      %v1781 = vpop.f32.mrf.mxu0
      %v1782 = vadd.f32 %v1488, %v1781
      %v1783 = vpop.f32.mrf.mxu0
      %1784 = vmatprep.mubr.f32.mxu0 0.0
      %v1785 = vand.u32 %v312, 4294901760
      %1786 = vmatmul.mubr.f32.gmra.mxu0 %v1785
      %v1787 = vpop.f32.mrf.mxu0
      %v1788 = vadd.f32 %v1496, %v1787
      %v1789 = vpop.f32.mrf.mxu0
      %1790 = vmatprep.mubr.f32.mxu0 0.0
      %v1791 = vand.u32 %v315, 4294901760
      %1792 = vmatmul.mubr.f32.gmra.mxu0 %v1791
      %v1793 = vpop.f32.mrf.mxu0
      %v1794 = vadd.f32 %v1504, %v1793
      %v1795 = vpop.f32.mrf.mxu0
      %1796 = vmatprep.mubr.f32.mxu0 0.0
      %v1797 = vand.u32 %v318, 4294901760
      %1798 = vmatmul.mubr.f32.gmra.mxu0 %v1797
      %v1799 = vpop.f32.mrf.mxu0
      %v1800 = vadd.f32 %v1512, %v1799
      %v1801 = vpop.f32.mrf.mxu0
      %1802 = vmatprep.mubr.f32.mxu0 0.0
      %v1803 = vand.u32 %v321, 4294901760
      %1804 = vmatmul.mubr.f32.gmra.mxu0 %v1803
      %v1805 = vpop.f32.mrf.mxu0
      %v1806 = vadd.f32 %v1520, %v1805
      %v1807 = vpop.f32.mrf.mxu0
      %1808 = vmatprep.mubr.f32.mxu0 0.0
      %v1809 = vand.u32 %v324, 4294901760
      %1810 = vmatmul.mubr.f32.gmra.mxu0 %v1809
      %v1811 = vpop.f32.mrf.mxu0
      %v1812 = vadd.f32 %v1528, %v1811
      %v1813 = vpop.f32.mrf.mxu0
      %1814 = vmatprep.mubr.f32.mxu0 0.0
      %v1815 = vand.u32 %v327, 4294901760
      %1816 = vmatmul.mubr.f32.gmra.mxu0 %v1815
      %v1817 = vpop.f32.mrf.mxu0
      %v1818 = vadd.f32 %v1536, %v1817
      %v1819 = vpop.f32.mrf.mxu0
      %1820 = vmatprep.mubr.f32.mxu0 0.0
      %v1821 = vand.u32 %v330, 4294901760
      %1822 = vmatmul.mubr.f32.gmra.mxu0 %v1821
      %v1823 = vpop.f32.mrf.mxu0
      %v1824 = vadd.f32 %v1544, %v1823
      %v1825 = vpop.f32.mrf.mxu0
      %1826 = vmatprep.mubr.f32.mxu0 0.0
      %v1827 = vand.u32 %v333, 4294901760
      %1828 = vmatmul.mubr.f32.gmra.mxu0 %v1827
      %v1829 = vpop.f32.mrf.mxu0
      %v1830 = vadd.f32 %v1552, %v1829
      %v1831 = vpop.f32.mrf.mxu0
      %1832 = vmatprep.mubr.f32.mxu0 0.0
      %v1833 = vand.u32 %v336, 4294901760
      %1834 = vmatmul.mubr.f32.gmra.mxu0 %v1833
      %v1835 = vpop.f32.mrf.mxu0
      %v1836 = vadd.f32 %v1560, %v1835
      %v1837 = vpop.f32.mrf.mxu0
      %1838 = vmatprep.mubr.f32.mxu0 0.0
      %v1839 = vand.u32 %v339, 4294901760
      %1840 = vmatmul.mubr.f32.gmra.mxu0 %v1839
      %v1841 = vpop.f32.mrf.mxu0
      %v1842 = vadd.f32 %v1568, %v1841
      %v1843 = vpop.f32.mrf.mxu0
      %1844 = vmatprep.mubr.f32.mxu0 0.0
      %v1845 = vand.u32 %v342, 4294901760
      %1846 = vmatmul.mubr.f32.gmra.mxu0 %v1845
      %v1847 = vpop.f32.mrf.mxu0
      %v1848 = vadd.f32 %v1576, %v1847
      %v1849 = vpop.f32.mrf.mxu0
      %1850 = vmatprep.mubr.f32.mxu0 0.0
      %v1851 = vand.u32 %v345, 4294901760
      %1852 = vmatmul.mubr.f32.gmra.mxu0 %v1851
      %v1853 = vpop.f32.mrf.mxu0
      %v1854 = vadd.f32 %v1584, %v1853
      %v1855 = vpop.f32.mrf.mxu0
      %1856 = vmatprep.mubr.f32.mxu0 0.0
      %v1857 = vand.u32 %v348, 4294901760
      %1858 = vmatmul.mubr.f32.gmra.mxu0 %v1857
      %v1859 = vpop.f32.mrf.mxu0
      %v1860 = vadd.f32 %v1592, %v1859
      %v1861 = vpop.f32.mrf.mxu0
      %1862 = vmatprep.mubr.f32.mxu0 0.0
      %v1863 = vand.u32 %v351, 4294901760
      %1864 = vmatmul.mubr.f32.gmra.mxu0 %v1863
      %v1865 = vpop.f32.mrf.mxu0
      %v1866 = vadd.f32 %v1600, %v1865
      %v1867 = vpop.f32.mrf.mxu0
      %1868 = vmatprep.mubr.f32.mxu0 0.0
      %v1869 = vand.u32 %v354, 4294901760
      %1870 = vmatmul.mubr.f32.gmra.mxu0 %v1869
      %v1871 = vpop.f32.mrf.mxu0
      %v1872 = vadd.f32 %v1608, %v1871
      %v1873 = vpop.f32.mrf.mxu0
      %1874 = vmatprep.mubr.f32.mxu0 0.0
      %v1875 = vand.u32 %v357, 4294901760
      %1876 = vmatmul.mubr.f32.gmra.mxu0 %v1875
      %v1877 = vpop.f32.mrf.mxu0
      %v1878 = vadd.f32 %v1616, %v1877
      %v1879 = vpop.f32.mrf.mxu0
      %1880 = vmatprep.mubr.f32.mxu0 0.0
      %v1881 = vand.u32 %v360, 4294901760
      %1882 = vmatmul.mubr.f32.gmra.mxu0 %v1881
      %v1883 = vpop.f32.mrf.mxu0
      %v1884 = vadd.f32 %v1624, %v1883
      %v1885 = vpop.f32.mrf.mxu0
      %1886 = vdwg.mxu0
      %1887 = vmatprep.subr.mxu0 0.0
      %1888 = vmatpush1.msra.mxu0 0.0
      %1889 = vmatprep.subr.mxu0 0.0
      %1890 = vmatpush1.msra.mxu0 0.0
      %1891 = vmatprep.subr.mxu0 0.0
      %1892 = vmatpush1.msra.mxu0 0.0
      %1893 = vmatprep.subr.mxu0 0.0
      %1894 = vmatpush1.msra.mxu0 0.0
      %1895 = vmatprep.subr.mxu0 0.0
      %1896 = vmatpush1.msra.mxu0 0.0
      %1897 = vmatprep.subr.mxu0 0.0
      %1898 = vmatpush1.msra.mxu0 0.0
      %1899 = vmatprep.subr.mxu0 0.0
      %1900 = vmatpush1.msra.mxu0 0.0
      %1901 = vmatprep.subr.mxu0 0.0
      %1902 = vmatpush1.msra.mxu0 0.0
      %1903 = vmatprep.subr.mxu0 0.0
      %1904 = vmatpush1.msra.mxu0 0.0
      %1905 = vmatprep.subr.mxu0 0.0
      %1906 = vmatpush1.msra.mxu0 0.0
      %1907 = vmatprep.subr.mxu0 0.0
      %1908 = vmatpush1.msra.mxu0 0.0
      %1909 = vmatprep.subr.mxu0 0.0
      %1910 = vmatpush1.msra.mxu0 0.0
      %1911 = vmatprep.subr.mxu0 0.0
      %1912 = vmatpush1.msra.mxu0 0.0
      %1913 = vmatprep.subr.mxu0 0.0
      %1914 = vmatpush1.msra.mxu0 0.0
      %1915 = vmatprep.subr.mxu0 0.0
      %1916 = vmatpush1.msra.mxu0 0.0
      %1917 = vmatprep.subr.mxu0 0.0
      %v1918 = vand.u32 %v364, 4294901760
      %1919 = vmatpush1.msra.mxu0 %v1918
      %1920 = vmatprep.subr.mxu0 0.0
      %1921 = vmatpush2.msra.mxu0 0.0
      %1922 = vmatprep.subr.mxu0 0.0
      %1923 = vmatpush2.msra.mxu0 0.0
      %1924 = vmatprep.subr.mxu0 0.0
      %1925 = vmatpush2.msra.mxu0 0.0
      %1926 = vmatprep.subr.mxu0 0.0
      %1927 = vmatpush2.msra.mxu0 0.0
      %1928 = vmatprep.subr.mxu0 0.0
      %1929 = vmatpush2.msra.mxu0 0.0
      %1930 = vmatprep.subr.mxu0 0.0
      %1931 = vmatpush2.msra.mxu0 0.0
      %1932 = vmatprep.subr.mxu0 0.0
      %1933 = vmatpush2.msra.mxu0 0.0
      %1934 = vmatprep.subr.mxu0 0.0
      %1935 = vmatpush2.msra.mxu0 0.0
      %1936 = vmatprep.subr.mxu0 0.0
      %1937 = vmatpush2.msra.mxu0 0.0
      %1938 = vmatprep.subr.mxu0 0.0
      %1939 = vmatpush2.msra.mxu0 0.0
      %1940 = vmatprep.subr.mxu0 0.0
      %1941 = vmatpush2.msra.mxu0 0.0
      %1942 = vmatprep.subr.mxu0 0.0
      %1943 = vmatpush2.msra.mxu0 0.0
      %1944 = vmatprep.subr.mxu0 0.0
      %1945 = vmatpush2.msra.mxu0 0.0
      %1946 = vmatprep.subr.mxu0 0.0
      %1947 = vmatpush2.msra.mxu0 0.0
      %1948 = vmatprep.subr.mxu0 0.0
      %1949 = vmatpush2.msra.mxu0 0.0
      %1950 = vmatprep.subr.mxu0 0.0
      %1951 = vmatpush2.msra.mxu0 0.0
      %1952 = vmatprep.mubr.f32.mxu0 0.0
      %v1953 = vand.u32 %v267, 4294901760
      %1954 = vmatmul.mubr.f32.gmra.mxu0 %v1953
      %v1955 = vpop.f32.mrf.mxu0
      %v1956 = vadd.f32 %v1698, %v1955
      %v1957 = vpop.f32.mrf.mxu0
      %1958 = vmatprep.mubr.f32.mxu0 0.0
      %v1959 = vand.u32 %v270, 4294901760
      %1960 = vmatmul.mubr.f32.gmra.mxu0 %v1959
      %v1961 = vpop.f32.mrf.mxu0
      %v1962 = vadd.f32 %v1704, %v1961
      %v1963 = vpop.f32.mrf.mxu0
      %1964 = vmatprep.mubr.f32.mxu0 0.0
      %v1965 = vand.u32 %v273, 4294901760
      %1966 = vmatmul.mubr.f32.gmra.mxu0 %v1965
      %v1967 = vpop.f32.mrf.mxu0
      %v1968 = vadd.f32 %v1710, %v1967
      %v1969 = vpop.f32.mrf.mxu0
      %1970 = vmatprep.mubr.f32.mxu0 0.0
      %v1971 = vand.u32 %v276, 4294901760
      %1972 = vmatmul.mubr.f32.gmra.mxu0 %v1971
      %v1973 = vpop.f32.mrf.mxu0
      %v1974 = vadd.f32 %v1716, %v1973
      %v1975 = vpop.f32.mrf.mxu0
      %1976 = vmatprep.mubr.f32.mxu0 0.0
      %v1977 = vand.u32 %v279, 4294901760
      %1978 = vmatmul.mubr.f32.gmra.mxu0 %v1977
      %v1979 = vpop.f32.mrf.mxu0
      %v1980 = vadd.f32 %v1722, %v1979
      %v1981 = vpop.f32.mrf.mxu0
      %1982 = vmatprep.mubr.f32.mxu0 0.0
      %v1983 = vand.u32 %v282, 4294901760
      %1984 = vmatmul.mubr.f32.gmra.mxu0 %v1983
      %v1985 = vpop.f32.mrf.mxu0
      %v1986 = vadd.f32 %v1728, %v1985
      %v1987 = vpop.f32.mrf.mxu0
      %1988 = vmatprep.mubr.f32.mxu0 0.0
      %v1989 = vand.u32 %v285, 4294901760
      %1990 = vmatmul.mubr.f32.gmra.mxu0 %v1989
      %v1991 = vpop.f32.mrf.mxu0
      %v1992 = vadd.f32 %v1734, %v1991
      %v1993 = vpop.f32.mrf.mxu0
      %1994 = vmatprep.mubr.f32.mxu0 0.0
      %v1995 = vand.u32 %v288, 4294901760
      %1996 = vmatmul.mubr.f32.gmra.mxu0 %v1995
      %v1997 = vpop.f32.mrf.mxu0
      %v1998 = vadd.f32 %v1740, %v1997
      %v1999 = vpop.f32.mrf.mxu0
      %2000 = vmatprep.mubr.f32.mxu0 0.0
      %v2001 = vand.u32 %v291, 4294901760
      %2002 = vmatmul.mubr.f32.gmra.mxu0 %v2001
      %v2003 = vpop.f32.mrf.mxu0
      %v2004 = vadd.f32 %v1746, %v2003
      %v2005 = vpop.f32.mrf.mxu0
      %2006 = vmatprep.mubr.f32.mxu0 0.0
      %v2007 = vand.u32 %v294, 4294901760
      %2008 = vmatmul.mubr.f32.gmra.mxu0 %v2007
      %v2009 = vpop.f32.mrf.mxu0
      %v2010 = vadd.f32 %v1752, %v2009
      %v2011 = vpop.f32.mrf.mxu0
      %2012 = vmatprep.mubr.f32.mxu0 0.0
      %v2013 = vand.u32 %v297, 4294901760
      %2014 = vmatmul.mubr.f32.gmra.mxu0 %v2013
      %v2015 = vpop.f32.mrf.mxu0
      %v2016 = vadd.f32 %v1758, %v2015
      %v2017 = vpop.f32.mrf.mxu0
      %2018 = vmatprep.mubr.f32.mxu0 0.0
      %v2019 = vand.u32 %v300, 4294901760
      %2020 = vmatmul.mubr.f32.gmra.mxu0 %v2019
      %v2021 = vpop.f32.mrf.mxu0
      %v2022 = vadd.f32 %v1764, %v2021
      %v2023 = vpop.f32.mrf.mxu0
      %2024 = vmatprep.mubr.f32.mxu0 0.0
      %v2025 = vand.u32 %v303, 4294901760
      %2026 = vmatmul.mubr.f32.gmra.mxu0 %v2025
      %v2027 = vpop.f32.mrf.mxu0
      %v2028 = vadd.f32 %v1770, %v2027
      %v2029 = vpop.f32.mrf.mxu0
      %2030 = vmatprep.mubr.f32.mxu0 0.0
      %v2031 = vand.u32 %v306, 4294901760
      %2032 = vmatmul.mubr.f32.gmra.mxu0 %v2031
      %v2033 = vpop.f32.mrf.mxu0
      %v2034 = vadd.f32 %v1776, %v2033
      %v2035 = vpop.f32.mrf.mxu0
      %2036 = vmatprep.mubr.f32.mxu0 0.0
      %v2037 = vand.u32 %v309, 4294901760
      %2038 = vmatmul.mubr.f32.gmra.mxu0 %v2037
      %v2039 = vpop.f32.mrf.mxu0
      %v2040 = vadd.f32 %v1782, %v2039
      %v2041 = vpop.f32.mrf.mxu0
      %2042 = vmatprep.mubr.f32.mxu0 0.0
      %v2043 = vand.u32 %v312, 4294901760
      %2044 = vmatmul.mubr.f32.gmra.mxu0 %v2043
      %v2045 = vpop.f32.mrf.mxu0
      %v2046 = vadd.f32 %v1788, %v2045
      %v2047 = vpop.f32.mrf.mxu0
      %2048 = vmatprep.mubr.f32.mxu0 0.0
      %v2049 = vand.u32 %v315, 4294901760
      %2050 = vmatmul.mubr.f32.gmra.mxu0 %v2049
      %v2051 = vpop.f32.mrf.mxu0
      %v2052 = vadd.f32 %v1794, %v2051
      %v2053 = vpop.f32.mrf.mxu0
      %2054 = vmatprep.mubr.f32.mxu0 0.0
      %v2055 = vand.u32 %v318, 4294901760
      %2056 = vmatmul.mubr.f32.gmra.mxu0 %v2055
      %v2057 = vpop.f32.mrf.mxu0
      %v2058 = vadd.f32 %v1800, %v2057
      %v2059 = vpop.f32.mrf.mxu0
      %2060 = vmatprep.mubr.f32.mxu0 0.0
      %v2061 = vand.u32 %v321, 4294901760
      %2062 = vmatmul.mubr.f32.gmra.mxu0 %v2061
      %v2063 = vpop.f32.mrf.mxu0
      %v2064 = vadd.f32 %v1806, %v2063
      %v2065 = vpop.f32.mrf.mxu0
      %2066 = vmatprep.mubr.f32.mxu0 0.0
      %v2067 = vand.u32 %v324, 4294901760
      %2068 = vmatmul.mubr.f32.gmra.mxu0 %v2067
      %v2069 = vpop.f32.mrf.mxu0
      %v2070 = vadd.f32 %v1812, %v2069
      %v2071 = vpop.f32.mrf.mxu0
      %2072 = vmatprep.mubr.f32.mxu0 0.0
      %v2073 = vand.u32 %v327, 4294901760
      %2074 = vmatmul.mubr.f32.gmra.mxu0 %v2073
      %v2075 = vpop.f32.mrf.mxu0
      %v2076 = vadd.f32 %v1818, %v2075
      %v2077 = vpop.f32.mrf.mxu0
      %2078 = vmatprep.mubr.f32.mxu0 0.0
      %v2079 = vand.u32 %v330, 4294901760
      %2080 = vmatmul.mubr.f32.gmra.mxu0 %v2079
      %v2081 = vpop.f32.mrf.mxu0
      %v2082 = vadd.f32 %v1824, %v2081
      %v2083 = vpop.f32.mrf.mxu0
      %2084 = vmatprep.mubr.f32.mxu0 0.0
      %v2085 = vand.u32 %v333, 4294901760
      %2086 = vmatmul.mubr.f32.gmra.mxu0 %v2085
      %v2087 = vpop.f32.mrf.mxu0
      %v2088 = vadd.f32 %v1830, %v2087
      %v2089 = vpop.f32.mrf.mxu0
      %2090 = vmatprep.mubr.f32.mxu0 0.0
      %v2091 = vand.u32 %v336, 4294901760
      %2092 = vmatmul.mubr.f32.gmra.mxu0 %v2091
      %v2093 = vpop.f32.mrf.mxu0
      %v2094 = vadd.f32 %v1836, %v2093
      %v2095 = vpop.f32.mrf.mxu0
      %2096 = vmatprep.mubr.f32.mxu0 0.0
      %v2097 = vand.u32 %v339, 4294901760
      %2098 = vmatmul.mubr.f32.gmra.mxu0 %v2097
      %v2099 = vpop.f32.mrf.mxu0
      %v2100 = vadd.f32 %v1842, %v2099
      %v2101 = vpop.f32.mrf.mxu0
      %2102 = vmatprep.mubr.f32.mxu0 0.0
      %v2103 = vand.u32 %v342, 4294901760
      %2104 = vmatmul.mubr.f32.gmra.mxu0 %v2103
      %v2105 = vpop.f32.mrf.mxu0
      %v2106 = vadd.f32 %v1848, %v2105
      %v2107 = vpop.f32.mrf.mxu0
      %2108 = vmatprep.mubr.f32.mxu0 0.0
      %v2109 = vand.u32 %v345, 4294901760
      %2110 = vmatmul.mubr.f32.gmra.mxu0 %v2109
      %v2111 = vpop.f32.mrf.mxu0
      %v2112 = vadd.f32 %v1854, %v2111
      %v2113 = vpop.f32.mrf.mxu0
      %2114 = vmatprep.mubr.f32.mxu0 0.0
      %v2115 = vand.u32 %v348, 4294901760
      %2116 = vmatmul.mubr.f32.gmra.mxu0 %v2115
      %v2117 = vpop.f32.mrf.mxu0
      %v2118 = vadd.f32 %v1860, %v2117
      %v2119 = vpop.f32.mrf.mxu0
      %2120 = vmatprep.mubr.f32.mxu0 0.0
      %v2121 = vand.u32 %v351, 4294901760
      %2122 = vmatmul.mubr.f32.gmra.mxu0 %v2121
      %v2123 = vpop.f32.mrf.mxu0
      %v2124 = vadd.f32 %v1866, %v2123
      %v2125 = vpop.f32.mrf.mxu0
      %2126 = vmatprep.mubr.f32.mxu0 0.0
      %v2127 = vand.u32 %v354, 4294901760
      %2128 = vmatmul.mubr.f32.gmra.mxu0 %v2127
      %v2129 = vpop.f32.mrf.mxu0
      %v2130 = vadd.f32 %v1872, %v2129
      %v2131 = vpop.f32.mrf.mxu0
      %2132 = vmatprep.mubr.f32.mxu0 0.0
      %v2133 = vand.u32 %v357, 4294901760
      %2134 = vmatmul.mubr.f32.gmra.mxu0 %v2133
      %v2135 = vpop.f32.mrf.mxu0
      %v2136 = vadd.f32 %v1878, %v2135
      %v2137 = vpop.f32.mrf.mxu0
      %2138 = vmatprep.mubr.f32.mxu0 0.0
      %v2139 = vand.u32 %v360, 4294901760
      %2140 = vmatmul.mubr.f32.gmra.mxu0 %v2139
      %v2141 = vpop.f32.mrf.mxu0
      %v2142 = vadd.f32 %v1884, %v2141
      %v2143 = vpop.f32.mrf.mxu0
      %2144 = vdwg.mxu0
      %v2145 = vsub.f32 0.0, %v1956
      %v2146 = vsub.f32 0.0, %v1962
      %v2147 = vsub.f32 0.0, %v1968
      %v2148 = vsub.f32 0.0, %v1974
      %v2149 = vsub.f32 0.0, %v1980
      %v2150 = vsub.f32 0.0, %v1986
      %v2151 = vsub.f32 0.0, %v1992
      %v2152 = vsub.f32 0.0, %v1998
      %v2153 = vsub.f32 0.0, %v2004
      %v2154 = vsub.f32 0.0, %v2010
      %v2155 = vsub.f32 0.0, %v2016
      %v2156 = vsub.f32 0.0, %v2022
      %v2157 = vsub.f32 0.0, %v2028
      %v2158 = vsub.f32 0.0, %v2034
      %v2159 = vsub.f32 0.0, %v2040
      %v2160 = vsub.f32 0.0, %v2046
      %v2161 = vsub.f32 0.0, %v2052
      %v2162 = vsub.f32 0.0, %v2058
      %v2163 = vsub.f32 0.0, %v2064
      %v2164 = vsub.f32 0.0, %v2070
      %v2165 = vsub.f32 0.0, %v2076
      %v2166 = vsub.f32 0.0, %v2082
      %v2167 = vsub.f32 0.0, %v2088
      %v2168 = vsub.f32 0.0, %v2094
      %v2169 = vsub.f32 0.0, %v2100
      %v2170 = vsub.f32 0.0, %v2106
      %v2171 = vsub.f32 0.0, %v2112
      %v2172 = vsub.f32 0.0, %v2118
      %v2173 = vsub.f32 0.0, %v2124
      %v2174 = vsub.f32 0.0, %v2130
      %v2175 = vsub.f32 0.0, %v2136
      %v2176 = vsub.f32 0.0, %v2142
      %v2177 = vmul.f32 %v2145, 1.442695
      %v2178 = vpow.pop %v2177
      %v2179 = vmul.f32 %v2146, 1.442695
      %v2180 = vpow.pop %v2179
      %v2181 = vmul.f32 %v2147, 1.442695
      %v2182 = vpow.pop %v2181
      %v2183 = vmul.f32 %v2148, 1.442695
      %v2184 = vpow.pop %v2183
      %v2185 = vmul.f32 %v2149, 1.442695
      %v2186 = vpow.pop %v2185
      %v2187 = vmul.f32 %v2150, 1.442695
      %v2188 = vpow.pop %v2187
      %v2189 = vmul.f32 %v2151, 1.442695
      %v2190 = vpow.pop %v2189
      %v2191 = vmul.f32 %v2152, 1.442695
      %v2192 = vpow.pop %v2191
      %v2193 = vmul.f32 %v2153, 1.442695
      %v2194 = vpow.pop %v2193
      %v2195 = vmul.f32 %v2154, 1.442695
      %v2196 = vpow.pop %v2195
      %v2197 = vmul.f32 %v2155, 1.442695
      %v2198 = vpow.pop %v2197
      %v2199 = vmul.f32 %v2156, 1.442695
      %v2200 = vpow.pop %v2199
      %v2201 = vmul.f32 %v2157, 1.442695
      %v2202 = vpow.pop %v2201
      %v2203 = vmul.f32 %v2158, 1.442695
      %v2204 = vpow.pop %v2203
      %v2205 = vmul.f32 %v2159, 1.442695
      %v2206 = vpow.pop %v2205
      %v2207 = vmul.f32 %v2160, 1.442695
      %v2208 = vpow.pop %v2207
      %v2209 = vmul.f32 %v2161, 1.442695
      %v2210 = vpow.pop %v2209
      %v2211 = vmul.f32 %v2162, 1.442695
      %v2212 = vpow.pop %v2211
      %v2213 = vmul.f32 %v2163, 1.442695
      %v2214 = vpow.pop %v2213
      %v2215 = vmul.f32 %v2164, 1.442695
      %v2216 = vpow.pop %v2215
      %v2217 = vmul.f32 %v2165, 1.442695
      %v2218 = vpow.pop %v2217
      %v2219 = vmul.f32 %v2166, 1.442695
      %v2220 = vpow.pop %v2219
      %v2221 = vmul.f32 %v2167, 1.442695
      %v2222 = vpow.pop %v2221
      %v2223 = vmul.f32 %v2168, 1.442695
      %v2224 = vpow.pop %v2223
      %v2225 = vmul.f32 %v2169, 1.442695
      %v2226 = vpow.pop %v2225
      %v2227 = vmul.f32 %v2170, 1.442695
      %v2228 = vpow.pop %v2227
      %v2229 = vmul.f32 %v2171, 1.442695
      %v2230 = vpow.pop %v2229
      %v2231 = vmul.f32 %v2172, 1.442695
      %v2232 = vpow.pop %v2231
      %v2233 = vmul.f32 %v2173, 1.442695
      %v2234 = vpow.pop %v2233
      %v2235 = vmul.f32 %v2174, 1.442695
      %v2236 = vpow.pop %v2235
      %v2237 = vmul.f32 %v2175, 1.442695
      %v2238 = vpow.pop %v2237
      %v2239 = vmul.f32 %v2176, 1.442695
      %v2240 = vpow.pop %v2239
      %v2241 = vadd.f32 %v2178, 1.0
      %v2242 = vadd.f32 %v2180, 1.0
      %v2243 = vadd.f32 %v2182, 1.0
      %v2244 = vadd.f32 %v2184, 1.0
      %v2245 = vadd.f32 %v2186, 1.0
      %v2246 = vadd.f32 %v2188, 1.0
      %v2247 = vadd.f32 %v2190, 1.0
      %v2248 = vadd.f32 %v2192, 1.0
      %v2249 = vadd.f32 %v2194, 1.0
      %v2250 = vadd.f32 %v2196, 1.0
      %v2251 = vadd.f32 %v2198, 1.0
      %v2252 = vadd.f32 %v2200, 1.0
      %v2253 = vadd.f32 %v2202, 1.0
      %v2254 = vadd.f32 %v2204, 1.0
      %v2255 = vadd.f32 %v2206, 1.0
      %v2256 = vadd.f32 %v2208, 1.0
      %v2257 = vadd.f32 %v2210, 1.0
      %v2258 = vadd.f32 %v2212, 1.0
      %v2259 = vadd.f32 %v2214, 1.0
      %v2260 = vadd.f32 %v2216, 1.0
      %v2261 = vadd.f32 %v2218, 1.0
      %v2262 = vadd.f32 %v2220, 1.0
      %v2263 = vadd.f32 %v2222, 1.0
      %v2264 = vadd.f32 %v2224, 1.0
      %v2265 = vadd.f32 %v2226, 1.0
      %v2266 = vadd.f32 %v2228, 1.0
      %v2267 = vadd.f32 %v2230, 1.0
      %v2268 = vadd.f32 %v2232, 1.0
      %v2269 = vadd.f32 %v2234, 1.0
      %v2270 = vadd.f32 %v2236, 1.0
      %v2271 = vadd.f32 %v2238, 1.0
      %v2272 = vadd.f32 %v2240, 1.0
      %v2273 = vrcp.pop %v2241
      %v2274 = vrcp.pop %v2242
      %v2275 = vrcp.pop %v2243
      %v2276 = vrcp.pop %v2244
      %v2277 = vrcp.pop %v2245
      %v2278 = vrcp.pop %v2246
      %v2279 = vrcp.pop %v2247
      %v2280 = vrcp.pop %v2248
      %v2281 = vrcp.pop %v2249
      %v2282 = vrcp.pop %v2250
      %v2283 = vrcp.pop %v2251
      %v2284 = vrcp.pop %v2252
      %v2285 = vrcp.pop %v2253
      %v2286 = vrcp.pop %v2254
      %v2287 = vrcp.pop %v2255
      %v2288 = vrcp.pop %v2256
      %v2289 = vrcp.pop %v2257
      %v2290 = vrcp.pop %v2258
      %v2291 = vrcp.pop %v2259
      %v2292 = vrcp.pop %v2260
      %v2293 = vrcp.pop %v2261
      %v2294 = vrcp.pop %v2262
      %v2295 = vrcp.pop %v2263
      %v2296 = vrcp.pop %v2264
      %v2297 = vrcp.pop %v2265
      %v2298 = vrcp.pop %v2266
      %v2299 = vrcp.pop %v2267
      %v2300 = vrcp.pop %v2268
      %v2301 = vrcp.pop %v2269
      %v2302 = vrcp.pop %v2270
      %v2303 = vrcp.pop %v2271
      %v2304 = vrcp.pop %v2272
      %v2305 = vmul.f32 %v1956, %v2273
      %v2306 = vmul.f32 %v1962, %v2274
      %v2307 = vmul.f32 %v1968, %v2275
      %v2308 = vmul.f32 %v1974, %v2276
      %v2309 = vmul.f32 %v1980, %v2277
      %v2310 = vmul.f32 %v1986, %v2278
      %v2311 = vmul.f32 %v1992, %v2279
      %v2312 = vmul.f32 %v1998, %v2280
      %v2313 = vmul.f32 %v2004, %v2281
      %v2314 = vmul.f32 %v2010, %v2282
      %v2315 = vmul.f32 %v2016, %v2283
      %v2316 = vmul.f32 %v2022, %v2284
      %v2317 = vmul.f32 %v2028, %v2285
      %v2318 = vmul.f32 %v2034, %v2286
      %v2319 = vmul.f32 %v2040, %v2287
      %v2320 = vmul.f32 %v2046, %v2288
      %v2321 = vmul.f32 %v2052, %v2289
      %v2322 = vmul.f32 %v2058, %v2290
      %v2323 = vmul.f32 %v2064, %v2291
      %v2324 = vmul.f32 %v2070, %v2292
      %v2325 = vmul.f32 %v2076, %v2293
      %v2326 = vmul.f32 %v2082, %v2294
      %v2327 = vmul.f32 %v2088, %v2295
      %v2328 = vmul.f32 %v2094, %v2296
      %v2329 = vmul.f32 %v2100, %v2297
      %v2330 = vmul.f32 %v2106, %v2298
      %v2331 = vmul.f32 %v2112, %v2299
      %v2332 = vmul.f32 %v2118, %v2300
      %v2333 = vmul.f32 %v2124, %v2301
      %v2334 = vmul.f32 %v2130, %v2302
      %v2335 = vmul.f32 %v2136, %v2303
      %v2336 = vmul.f32 %v2142, %v2304
      %v2337 = vmax.f32 %v2305, %v2307
      %v2338 = vmax.f32 %v2306, %v2308
      %v2339 = vmax.f32 %v2307, %v2309
      %v2340 = vmax.f32 %v2308, %v2310
      %v2341 = vmax.f32 %v2309, %v2311
      %v2342 = vmax.f32 %v2310, %v2312
      %v2343 = vmax.f32 %v2311, %v2313
      %v2344 = vmax.f32 %v2312, %v2314
      %v2345 = vmax.f32 %v2313, %v2315
      %v2346 = vmax.f32 %v2314, %v2316
      %v2347 = vmax.f32 %v2315, %v2317
      %v2348 = vmax.f32 %v2316, %v2318
      %v2349 = vmax.f32 %v2317, %v2319
      %v2350 = vmax.f32 %v2318, %v2320
      %v2351 = vmax.f32 %v2319, %v2321
      %v2352 = vmax.f32 %v2320, %v2322
      %v2353 = vmax.f32 %v2321, %v2323
      %v2354 = vmax.f32 %v2322, %v2324
      %v2355 = vmax.f32 %v2323, %v2325
      %v2356 = vmax.f32 %v2324, %v2326
      %v2357 = vmax.f32 %v2325, %v2327
      %v2358 = vmax.f32 %v2326, %v2328
      %v2359 = vmax.f32 %v2327, %v2329
      %v2360 = vmax.f32 %v2328, %v2330
      %v2361 = vmax.f32 %v2329, %v2331
      %v2362 = vmax.f32 %v2330, %v2332
      %v2363 = vmax.f32 %v2331, %v2333
      %v2364 = vmax.f32 %v2332, %v2334
      %v2365 = vmax.f32 %v2337, %v2309
      %v2366 = vmax.f32 %v2338, %v2310
      %v2367 = vmax.f32 %v2339, %v2311
      %v2368 = vmax.f32 %v2340, %v2312
      %v2369 = vmax.f32 %v2341, %v2313
      %v2370 = vmax.f32 %v2342, %v2314
      %v2371 = vmax.f32 %v2343, %v2315
      %v2372 = vmax.f32 %v2344, %v2316
      %v2373 = vmax.f32 %v2345, %v2317
      %v2374 = vmax.f32 %v2346, %v2318
      %v2375 = vmax.f32 %v2347, %v2319
      %v2376 = vmax.f32 %v2348, %v2320
      %v2377 = vmax.f32 %v2349, %v2321
      %v2378 = vmax.f32 %v2350, %v2322
      %v2379 = vmax.f32 %v2351, %v2323
      %v2380 = vmax.f32 %v2352, %v2324
      %v2381 = vmax.f32 %v2353, %v2325
      %v2382 = vmax.f32 %v2354, %v2326
      %v2383 = vmax.f32 %v2355, %v2327
      %v2384 = vmax.f32 %v2356, %v2328
      %v2385 = vmax.f32 %v2357, %v2329
      %v2386 = vmax.f32 %v2358, %v2330
      %v2387 = vmax.f32 %v2359, %v2331
      %v2388 = vmax.f32 %v2360, %v2332
      %v2389 = vmax.f32 %v2361, %v2333
      %v2390 = vmax.f32 %v2362, %v2334
      %v2391 = vmax.f32 %v2363, %v2335
      %v2392 = vmax.f32 %v2364, %v2336
      %v2393 = vmax.f32 %v2365, %v2311
      %v2394 = vmax.f32 %v2366, %v2312
      %v2395 = vmax.f32 %v2367, %v2313
      %v2396 = vmax.f32 %v2368, %v2314
      %v2397 = vmax.f32 %v2369, %v2315
      %v2398 = vmax.f32 %v2370, %v2316
      %v2399 = vmax.f32 %v2371, %v2317
      %v2400 = vmax.f32 %v2372, %v2318
      %v2401 = vmax.f32 %v2373, %v2319
      %v2402 = vmax.f32 %v2374, %v2320
      %v2403 = vmax.f32 %v2375, %v2321
      %v2404 = vmax.f32 %v2376, %v2322
      %v2405 = vmax.f32 %v2377, %v2323
      %v2406 = vmax.f32 %v2378, %v2324
      %v2407 = vmax.f32 %v2379, %v2325
      %v2408 = vmax.f32 %v2380, %v2326
      %v2409 = vmax.f32 %v2381, %v2327
      %v2410 = vmax.f32 %v2382, %v2328
      %v2411 = vmax.f32 %v2383, %v2329
      %v2412 = vmax.f32 %v2384, %v2330
      %v2413 = vmax.f32 %v2385, %v2331
      %v2414 = vmax.f32 %v2386, %v2332
      %v2415 = vmax.f32 %v2387, %v2333
      %v2416 = vmax.f32 %v2388, %v2334
      %v2417 = vmax.f32 %v2389, %v2335
      %v2418 = vmax.f32 %v2390, %v2336
      %v2419 = vmax.f32 %v2393, %v2313
      %v2420 = vmax.f32 %v2394, %v2314
      %v2421 = vmax.f32 %v2395, %v2315
      %v2422 = vmax.f32 %v2396, %v2316
      %v2423 = vmax.f32 %v2397, %v2317
      %v2424 = vmax.f32 %v2398, %v2318
      %v2425 = vmax.f32 %v2399, %v2319
      %v2426 = vmax.f32 %v2400, %v2320
      %v2427 = vmax.f32 %v2401, %v2321
      %v2428 = vmax.f32 %v2402, %v2322
      %v2429 = vmax.f32 %v2403, %v2323
      %v2430 = vmax.f32 %v2404, %v2324
      %v2431 = vmax.f32 %v2405, %v2325
      %v2432 = vmax.f32 %v2406, %v2326
      %v2433 = vmax.f32 %v2407, %v2327
      %v2434 = vmax.f32 %v2408, %v2328
      %v2435 = vmax.f32 %v2409, %v2329
      %v2436 = vmax.f32 %v2410, %v2330
      %v2437 = vmax.f32 %v2411, %v2331
      %v2438 = vmax.f32 %v2412, %v2332
      %v2439 = vmax.f32 %v2413, %v2333
      %v2440 = vmax.f32 %v2414, %v2334
      %v2441 = vmax.f32 %v2415, %v2335
      %v2442 = vmax.f32 %v2416, %v2336
      %vm2475 = vcmask 1041408
      %v2476 = vrot.slane %v2365, 6
      %v2477 = vrot.slane %v2366, 6
      %v2478 = vsel %vm2475, %v2476, %v2477
      %v2479 = vrot.slane %v2393, 6
      %v2480 = vrot.slane %v2394, 6
      %v2481 = vsel %vm2475, %v2479, %v2480
      %v2482 = vrot.slane %v2419, 6
      %v2483 = vrot.slane %v2420, 6
      %v2484 = vsel %vm2475, %v2482, %v2483
      %v2485 = vrot.slane %v2421, 6
      %v2486 = vrot.slane %v2422, 6
      %v2487 = vsel %vm2475, %v2485, %v2486
      %v2488 = vrot.slane %v2423, 6
      %v2489 = vrot.slane %v2424, 6
      %v2490 = vsel %vm2475, %v2488, %v2489
      %v2491 = vrot.slane %v2425, 6
      %v2492 = vrot.slane %v2426, 6
      %v2493 = vsel %vm2475, %v2491, %v2492
      %v2494 = vrot.slane %v2427, 6
      %v2495 = vrot.slane %v2428, 6
      %v2496 = vsel %vm2475, %v2494, %v2495
      %v2497 = vrot.slane %v2429, 6
      %v2498 = vrot.slane %v2430, 6
      %v2499 = vsel %vm2475, %v2497, %v2498
      %v2500 = vrot.slane %v2431, 6
      %v2501 = vrot.slane %v2432, 6
      %v2502 = vsel %vm2475, %v2500, %v2501
      %v2503 = vrot.slane %v2433, 6
      %v2504 = vrot.slane %v2434, 6
      %v2505 = vsel %vm2475, %v2503, %v2504
      %v2506 = vrot.slane %v2435, 6
      %v2507 = vrot.slane %v2436, 6
      %v2508 = vsel %vm2475, %v2506, %v2507
      %v2509 = vrot.slane %v2437, 6
      %v2510 = vrot.slane %v2438, 6
      %v2511 = vsel %vm2475, %v2509, %v2510
      %v2512 = vrot.slane %v2439, 6
      %v2513 = vrot.slane %v2440, 6
      %v2514 = vsel %vm2475, %v2512, %v2513
      %v2515 = vrot.slane %v2441, 6
      %v2516 = vrot.slane %v2442, 6
      %v2517 = vsel %vm2475, %v2515, %v2516
      %v2518 = vrot.slane %v2417, 6
      %v2519 = vrot.slane %v2418, 6
      %v2520 = vsel %vm2475, %v2518, %v2519
      %v2521 = vrot.slane %v2391, 6
      %v2522 = vrot.slane %v2392, 6
      %v2523 = vsel %vm2475, %v2521, %v2522
      %v2572 = vsel %vm2475, -inf, %v2476
      %v2573 = vsel %vm2475, -inf, %v2479
      %v2574 = vsel %vm2475, -inf, %v2482
      %v2575 = vsel %vm2475, -inf, %v2485
      %v2576 = vsel %vm2475, -inf, %v2488
      %v2577 = vsel %vm2475, -inf, %v2491
      %v2578 = vsel %vm2475, -inf, %v2494
      %v2579 = vsel %vm2475, -inf, %v2497
      %v2580 = vsel %vm2475, -inf, %v2500
      %v2581 = vsel %vm2475, -inf, %v2503
      %v2582 = vsel %vm2475, -inf, %v2506
      %v2583 = vsel %vm2475, -inf, %v2509
      %v2584 = vsel %vm2475, -inf, %v2512
      %v2585 = vsel %vm2475, -inf, %v2515
      %v2586 = vsel %vm2475, -inf, %v2518
      %v2587 = vsel %vm2475, -inf, %v2521
      %v2588 = vsel %vm2475, %v2477, -inf
      %v2589 = vsel %vm2475, %v2480, -inf
      %v2590 = vsel %vm2475, %v2483, -inf
      %v2591 = vsel %vm2475, %v2486, -inf
      %v2592 = vsel %vm2475, %v2489, -inf
      %v2593 = vsel %vm2475, %v2492, -inf
      %v2594 = vsel %vm2475, %v2495, -inf
      %v2595 = vsel %vm2475, %v2498, -inf
      %v2596 = vsel %vm2475, %v2501, -inf
      %v2597 = vsel %vm2475, %v2504, -inf
      %v2598 = vsel %vm2475, %v2507, -inf
      %v2599 = vsel %vm2475, %v2510, -inf
      %v2600 = vsel %vm2475, %v2513, -inf
      %v2601 = vsel %vm2475, %v2516, -inf
      %v2602 = vsel %vm2475, %v2519, -inf
      %v2603 = vsel %vm2475, %v2522, -inf
      %vm2636 = vcmask 1046528
      %v2637 = vrot.slane %v2572, 1
      %v2638 = vrot.slane %v2478, 1
      %v2639 = vsel %vm2636, %v2637, %v2638
      %v2640 = vrot.slane %v2588, 1
      %v2641 = vsel %vm2636, %v2638, %v2640
      %v2642 = vrot.slane %v2573, 1
      %v2643 = vrot.slane %v2481, 1
      %v2644 = vsel %vm2636, %v2642, %v2643
      %v2645 = vrot.slane %v2589, 1
      %v2646 = vsel %vm2636, %v2643, %v2645
      %v2647 = vrot.slane %v2574, 1
      %v2648 = vrot.slane %v2484, 1
      %v2649 = vsel %vm2636, %v2647, %v2648
      %v2650 = vrot.slane %v2590, 1
      %v2651 = vsel %vm2636, %v2648, %v2650
      %v2652 = vrot.slane %v2575, 1
      %v2653 = vrot.slane %v2487, 1
      %v2654 = vsel %vm2636, %v2652, %v2653
      %v2655 = vrot.slane %v2591, 1
      %v2656 = vsel %vm2636, %v2653, %v2655
      %v2657 = vrot.slane %v2576, 1
      %v2658 = vrot.slane %v2490, 1
      %v2659 = vsel %vm2636, %v2657, %v2658
      %v2660 = vrot.slane %v2592, 1
      %v2661 = vsel %vm2636, %v2658, %v2660
      %v2662 = vrot.slane %v2577, 1
      %v2663 = vrot.slane %v2493, 1
      %v2664 = vsel %vm2636, %v2662, %v2663
      %v2665 = vrot.slane %v2593, 1
      %v2666 = vsel %vm2636, %v2663, %v2665
      %v2667 = vrot.slane %v2578, 1
      %v2668 = vrot.slane %v2496, 1
      %v2669 = vsel %vm2636, %v2667, %v2668
      %v2670 = vrot.slane %v2594, 1
      %v2671 = vsel %vm2636, %v2668, %v2670
      %v2672 = vrot.slane %v2579, 1
      %v2673 = vrot.slane %v2499, 1
      %v2674 = vsel %vm2636, %v2672, %v2673
      %v2675 = vrot.slane %v2595, 1
      %v2676 = vsel %vm2636, %v2673, %v2675
      %v2677 = vrot.slane %v2580, 1
      %v2678 = vrot.slane %v2502, 1
      %v2679 = vsel %vm2636, %v2677, %v2678
      %v2680 = vrot.slane %v2596, 1
      %v2681 = vsel %vm2636, %v2678, %v2680
      %v2682 = vrot.slane %v2581, 1
      %v2683 = vrot.slane %v2505, 1
      %v2684 = vsel %vm2636, %v2682, %v2683
      %v2685 = vrot.slane %v2597, 1
      %v2686 = vsel %vm2636, %v2683, %v2685
      %v2687 = vrot.slane %v2582, 1
      %v2688 = vrot.slane %v2508, 1
      %v2689 = vsel %vm2636, %v2687, %v2688
      %v2690 = vrot.slane %v2598, 1
      %v2691 = vsel %vm2636, %v2688, %v2690
      %v2692 = vrot.slane %v2583, 1
      %v2693 = vrot.slane %v2511, 1
      %v2694 = vsel %vm2636, %v2692, %v2693
      %v2695 = vrot.slane %v2599, 1
      %v2696 = vsel %vm2636, %v2693, %v2695
      %v2697 = vrot.slane %v2584, 1
      %v2698 = vrot.slane %v2514, 1
      %v2699 = vsel %vm2636, %v2697, %v2698
      %v2700 = vrot.slane %v2600, 1
      %v2701 = vsel %vm2636, %v2698, %v2700
      %v2702 = vrot.slane %v2585, 1
      %v2703 = vrot.slane %v2517, 1
      %v2704 = vsel %vm2636, %v2702, %v2703
      %v2705 = vrot.slane %v2601, 1
      %v2706 = vsel %vm2636, %v2703, %v2705
      %v2707 = vrot.slane %v2586, 1
      %v2708 = vrot.slane %v2520, 1
      %v2709 = vsel %vm2636, %v2707, %v2708
      %v2710 = vrot.slane %v2602, 1
      %v2711 = vsel %vm2636, %v2708, %v2710
      %v2712 = vrot.slane %v2587, 1
      %v2713 = vrot.slane %v2523, 1
      %v2714 = vsel %vm2636, %v2712, %v2713
      %v2715 = vrot.slane %v2603, 1
      %v2716 = vsel %vm2636, %v2713, %v2715
      %v2749 = vmax.f32 %v2572, %v2639
      %v2750 = vmax.f32 %v2478, %v2641
      %v2751 = vmax.f32 %v2573, %v2644
      %v2752 = vmax.f32 %v2481, %v2646
      %v2753 = vmax.f32 %v2574, %v2649
      %v2754 = vmax.f32 %v2484, %v2651
      %v2755 = vmax.f32 %v2575, %v2654
      %v2756 = vmax.f32 %v2487, %v2656
      %v2757 = vmax.f32 %v2576, %v2659
      %v2758 = vmax.f32 %v2490, %v2661
      %v2759 = vmax.f32 %v2577, %v2664
      %v2760 = vmax.f32 %v2493, %v2666
      %v2761 = vmax.f32 %v2578, %v2669
      %v2762 = vmax.f32 %v2496, %v2671
      %v2763 = vmax.f32 %v2579, %v2674
      %v2764 = vmax.f32 %v2499, %v2676
      %v2765 = vmax.f32 %v2580, %v2679
      %v2766 = vmax.f32 %v2502, %v2681
      %v2767 = vmax.f32 %v2581, %v2684
      %v2768 = vmax.f32 %v2505, %v2686
      %v2769 = vmax.f32 %v2582, %v2689
      %v2770 = vmax.f32 %v2508, %v2691
      %v2771 = vmax.f32 %v2583, %v2694
      %v2772 = vmax.f32 %v2511, %v2696
      %v2773 = vmax.f32 %v2584, %v2699
      %v2774 = vmax.f32 %v2514, %v2701
      %v2775 = vmax.f32 %v2585, %v2704
      %v2776 = vmax.f32 %v2517, %v2706
      %v2777 = vmax.f32 %v2586, %v2709
      %v2778 = vmax.f32 %v2520, %v2711
      %v2779 = vmax.f32 %v2587, %v2714
      %v2780 = vmax.f32 %v2523, %v2716
      %vm2781 = vcmask 1045504
      %v2782 = vrot.slane %v2572, 2
      %v2783 = vrot.slane %v2478, 2
      %v2784 = vsel %vm2781, %v2782, %v2783
      %v2785 = vrot.slane %v2588, 2
      %v2786 = vsel %vm2781, %v2783, %v2785
      %v2787 = vrot.slane %v2573, 2
      %v2788 = vrot.slane %v2481, 2
      %v2789 = vsel %vm2781, %v2787, %v2788
      %v2790 = vrot.slane %v2589, 2
      %v2791 = vsel %vm2781, %v2788, %v2790
      %v2792 = vrot.slane %v2574, 2
      %v2793 = vrot.slane %v2484, 2
      %v2794 = vsel %vm2781, %v2792, %v2793
      %v2795 = vrot.slane %v2590, 2
      %v2796 = vsel %vm2781, %v2793, %v2795
      %v2797 = vrot.slane %v2575, 2
      %v2798 = vrot.slane %v2487, 2
      %v2799 = vsel %vm2781, %v2797, %v2798
      %v2800 = vrot.slane %v2591, 2
      %v2801 = vsel %vm2781, %v2798, %v2800
      %v2802 = vrot.slane %v2576, 2
      %v2803 = vrot.slane %v2490, 2
      %v2804 = vsel %vm2781, %v2802, %v2803
      %v2805 = vrot.slane %v2592, 2
      %v2806 = vsel %vm2781, %v2803, %v2805
      %v2807 = vrot.slane %v2577, 2
      %v2808 = vrot.slane %v2493, 2
      %v2809 = vsel %vm2781, %v2807, %v2808
      %v2810 = vrot.slane %v2593, 2
      %v2811 = vsel %vm2781, %v2808, %v2810
      %v2812 = vrot.slane %v2578, 2
      %v2813 = vrot.slane %v2496, 2
      %v2814 = vsel %vm2781, %v2812, %v2813
      %v2815 = vrot.slane %v2594, 2
      %v2816 = vsel %vm2781, %v2813, %v2815
      %v2817 = vrot.slane %v2579, 2
      %v2818 = vrot.slane %v2499, 2
      %v2819 = vsel %vm2781, %v2817, %v2818
      %v2820 = vrot.slane %v2595, 2
      %v2821 = vsel %vm2781, %v2818, %v2820
      %v2822 = vrot.slane %v2580, 2
      %v2823 = vrot.slane %v2502, 2
      %v2824 = vsel %vm2781, %v2822, %v2823
      %v2825 = vrot.slane %v2596, 2
      %v2826 = vsel %vm2781, %v2823, %v2825
      %v2827 = vrot.slane %v2581, 2
      %v2828 = vrot.slane %v2505, 2
      %v2829 = vsel %vm2781, %v2827, %v2828
      %v2830 = vrot.slane %v2597, 2
      %v2831 = vsel %vm2781, %v2828, %v2830
      %v2832 = vrot.slane %v2582, 2
      %v2833 = vrot.slane %v2508, 2
      %v2834 = vsel %vm2781, %v2832, %v2833
      %v2835 = vrot.slane %v2598, 2
      %v2836 = vsel %vm2781, %v2833, %v2835
      %v2837 = vrot.slane %v2583, 2
      %v2838 = vrot.slane %v2511, 2
      %v2839 = vsel %vm2781, %v2837, %v2838
      %v2840 = vrot.slane %v2599, 2
      %v2841 = vsel %vm2781, %v2838, %v2840
      %v2842 = vrot.slane %v2584, 2
      %v2843 = vrot.slane %v2514, 2
      %v2844 = vsel %vm2781, %v2842, %v2843
      %v2845 = vrot.slane %v2600, 2
      %v2846 = vsel %vm2781, %v2843, %v2845
      %v2847 = vrot.slane %v2585, 2
      %v2848 = vrot.slane %v2517, 2
      %v2849 = vsel %vm2781, %v2847, %v2848
      %v2850 = vrot.slane %v2601, 2
      %v2851 = vsel %vm2781, %v2848, %v2850
      %v2852 = vrot.slane %v2586, 2
      %v2853 = vrot.slane %v2520, 2
      %v2854 = vsel %vm2781, %v2852, %v2853
      %v2855 = vrot.slane %v2602, 2
      %v2856 = vsel %vm2781, %v2853, %v2855
      %v2857 = vrot.slane %v2587, 2
      %v2858 = vrot.slane %v2523, 2
      %v2859 = vsel %vm2781, %v2857, %v2858
      %v2860 = vrot.slane %v2603, 2
      %v2861 = vsel %vm2781, %v2858, %v2860
      %v2894 = vmax.f32 %v2749, %v2784
      %v2895 = vmax.f32 %v2750, %v2786
      %v2896 = vmax.f32 %v2751, %v2789
      %v2897 = vmax.f32 %v2752, %v2791
      %v2898 = vmax.f32 %v2753, %v2794
      %v2899 = vmax.f32 %v2754, %v2796
      %v2900 = vmax.f32 %v2755, %v2799
      %v2901 = vmax.f32 %v2756, %v2801
      %v2902 = vmax.f32 %v2757, %v2804
      %v2903 = vmax.f32 %v2758, %v2806
      %v2904 = vmax.f32 %v2759, %v2809
      %v2905 = vmax.f32 %v2760, %v2811
      %v2906 = vmax.f32 %v2761, %v2814
      %v2907 = vmax.f32 %v2762, %v2816
      %v2908 = vmax.f32 %v2763, %v2819
      %v2909 = vmax.f32 %v2764, %v2821
      %v2910 = vmax.f32 %v2765, %v2824
      %v2911 = vmax.f32 %v2766, %v2826
      %v2912 = vmax.f32 %v2767, %v2829
      %v2913 = vmax.f32 %v2768, %v2831
      %v2914 = vmax.f32 %v2769, %v2834
      %v2915 = vmax.f32 %v2770, %v2836
      %v2916 = vmax.f32 %v2771, %v2839
      %v2917 = vmax.f32 %v2772, %v2841
      %v2918 = vmax.f32 %v2773, %v2844
      %v2919 = vmax.f32 %v2774, %v2846
      %v2920 = vmax.f32 %v2775, %v2849
      %v2921 = vmax.f32 %v2776, %v2851
      %v2922 = vmax.f32 %v2777, %v2854
      %v2923 = vmax.f32 %v2778, %v2856
      %v2924 = vmax.f32 %v2779, %v2859
      %v2925 = vmax.f32 %v2780, %v2861
      %vm2926 = vcmask 1044480
      %v2927 = vrot.slane %v2572, 3
      %v2928 = vrot.slane %v2478, 3
      %v2929 = vsel %vm2926, %v2927, %v2928
      %v2930 = vrot.slane %v2588, 3
      %v2931 = vsel %vm2926, %v2928, %v2930
      %v2932 = vrot.slane %v2573, 3
      %v2933 = vrot.slane %v2481, 3
      %v2934 = vsel %vm2926, %v2932, %v2933
      %v2935 = vrot.slane %v2589, 3
      %v2936 = vsel %vm2926, %v2933, %v2935
      %v2937 = vrot.slane %v2574, 3
      %v2938 = vrot.slane %v2484, 3
      %v2939 = vsel %vm2926, %v2937, %v2938
      %v2940 = vrot.slane %v2590, 3
      %v2941 = vsel %vm2926, %v2938, %v2940
      %v2942 = vrot.slane %v2575, 3
      %v2943 = vrot.slane %v2487, 3
      %v2944 = vsel %vm2926, %v2942, %v2943
      %v2945 = vrot.slane %v2591, 3
      %v2946 = vsel %vm2926, %v2943, %v2945
      %v2947 = vrot.slane %v2576, 3
      %v2948 = vrot.slane %v2490, 3
      %v2949 = vsel %vm2926, %v2947, %v2948
      %v2950 = vrot.slane %v2592, 3
      %v2951 = vsel %vm2926, %v2948, %v2950
      %v2952 = vrot.slane %v2577, 3
      %v2953 = vrot.slane %v2493, 3
      %v2954 = vsel %vm2926, %v2952, %v2953
      %v2955 = vrot.slane %v2593, 3
      %v2956 = vsel %vm2926, %v2953, %v2955
      %v2957 = vrot.slane %v2578, 3
      %v2958 = vrot.slane %v2496, 3
      %v2959 = vsel %vm2926, %v2957, %v2958
      %v2960 = vrot.slane %v2594, 3
      %v2961 = vsel %vm2926, %v2958, %v2960
      %v2962 = vrot.slane %v2579, 3
      %v2963 = vrot.slane %v2499, 3
      %v2964 = vsel %vm2926, %v2962, %v2963
      %v2965 = vrot.slane %v2595, 3
      %v2966 = vsel %vm2926, %v2963, %v2965
      %v2967 = vrot.slane %v2580, 3
      %v2968 = vrot.slane %v2502, 3
      %v2969 = vsel %vm2926, %v2967, %v2968
      %v2970 = vrot.slane %v2596, 3
      %v2971 = vsel %vm2926, %v2968, %v2970
      %v2972 = vrot.slane %v2581, 3
      %v2973 = vrot.slane %v2505, 3
      %v2974 = vsel %vm2926, %v2972, %v2973
      %v2975 = vrot.slane %v2597, 3
      %v2976 = vsel %vm2926, %v2973, %v2975
      %v2977 = vrot.slane %v2582, 3
      %v2978 = vrot.slane %v2508, 3
      %v2979 = vsel %vm2926, %v2977, %v2978
      %v2980 = vrot.slane %v2598, 3
      %v2981 = vsel %vm2926, %v2978, %v2980
      %v2982 = vrot.slane %v2583, 3
      %v2983 = vrot.slane %v2511, 3
      %v2984 = vsel %vm2926, %v2982, %v2983
      %v2985 = vrot.slane %v2599, 3
      %v2986 = vsel %vm2926, %v2983, %v2985
      %v2987 = vrot.slane %v2584, 3
      %v2988 = vrot.slane %v2514, 3
      %v2989 = vsel %vm2926, %v2987, %v2988
      %v2990 = vrot.slane %v2600, 3
      %v2991 = vsel %vm2926, %v2988, %v2990
      %v2992 = vrot.slane %v2585, 3
      %v2993 = vrot.slane %v2517, 3
      %v2994 = vsel %vm2926, %v2992, %v2993
      %v2995 = vrot.slane %v2601, 3
      %v2996 = vsel %vm2926, %v2993, %v2995
      %v2997 = vrot.slane %v2586, 3
      %v2998 = vrot.slane %v2520, 3
      %v2999 = vsel %vm2926, %v2997, %v2998
      %v3000 = vrot.slane %v2602, 3
      %v3001 = vsel %vm2926, %v2998, %v3000
      %v3002 = vrot.slane %v2587, 3
      %v3003 = vrot.slane %v2523, 3
      %v3004 = vsel %vm2926, %v3002, %v3003
      %v3005 = vrot.slane %v2603, 3
      %v3006 = vsel %vm2926, %v3003, %v3005
      %v3039 = vmax.f32 %v2894, %v2929
      %v3040 = vmax.f32 %v2895, %v2931
      %v3041 = vmax.f32 %v2896, %v2934
      %v3042 = vmax.f32 %v2897, %v2936
      %v3043 = vmax.f32 %v2898, %v2939
      %v3044 = vmax.f32 %v2899, %v2941
      %v3045 = vmax.f32 %v2900, %v2944
      %v3046 = vmax.f32 %v2901, %v2946
      %v3047 = vmax.f32 %v2902, %v2949
      %v3048 = vmax.f32 %v2903, %v2951
      %v3049 = vmax.f32 %v2904, %v2954
      %v3050 = vmax.f32 %v2905, %v2956
      %v3051 = vmax.f32 %v2906, %v2959
      %v3052 = vmax.f32 %v2907, %v2961
      %v3053 = vmax.f32 %v2908, %v2964
      %v3054 = vmax.f32 %v2909, %v2966
      %v3055 = vmax.f32 %v2910, %v2969
      %v3056 = vmax.f32 %v2911, %v2971
      %v3057 = vmax.f32 %v2912, %v2974
      %v3058 = vmax.f32 %v2913, %v2976
      %v3059 = vmax.f32 %v2914, %v2979
      %v3060 = vmax.f32 %v2915, %v2981
      %v3061 = vmax.f32 %v2916, %v2984
      %v3062 = vmax.f32 %v2917, %v2986
      %v3063 = vmax.f32 %v2918, %v2989
      %v3064 = vmax.f32 %v2919, %v2991
      %v3065 = vmax.f32 %v2920, %v2994
      %v3066 = vmax.f32 %v2921, %v2996
      %v3067 = vmax.f32 %v2922, %v2999
      %v3068 = vmax.f32 %v2923, %v3001
      %v3069 = vmax.f32 %v2924, %v3004
      %v3070 = vmax.f32 %v2925, %v3006
      %v3071 = vrot.slane %v2572, 4
      %v3072 = vrot.slane %v2478, 4
      %v3073 = vsel %vm362, %v3071, %v3072
      %v3074 = vrot.slane %v2588, 4
      %v3075 = vsel %vm362, %v3072, %v3074
      %v3076 = vrot.slane %v2573, 4
      %v3077 = vrot.slane %v2481, 4
      %v3078 = vsel %vm362, %v3076, %v3077
      %v3079 = vrot.slane %v2589, 4
      %v3080 = vsel %vm362, %v3077, %v3079
      %v3081 = vrot.slane %v2574, 4
      %v3082 = vrot.slane %v2484, 4
      %v3083 = vsel %vm362, %v3081, %v3082
      %v3084 = vrot.slane %v2590, 4
      %v3085 = vsel %vm362, %v3082, %v3084
      %v3086 = vrot.slane %v2575, 4
      %v3087 = vrot.slane %v2487, 4
      %v3088 = vsel %vm362, %v3086, %v3087
      %v3089 = vrot.slane %v2591, 4
      %v3090 = vsel %vm362, %v3087, %v3089
      %v3091 = vrot.slane %v2576, 4
      %v3092 = vrot.slane %v2490, 4
      %v3093 = vsel %vm362, %v3091, %v3092
      %v3094 = vrot.slane %v2592, 4
      %v3095 = vsel %vm362, %v3092, %v3094
      %v3096 = vrot.slane %v2577, 4
      %v3097 = vrot.slane %v2493, 4
      %v3098 = vsel %vm362, %v3096, %v3097
      %v3099 = vrot.slane %v2593, 4
      %v3100 = vsel %vm362, %v3097, %v3099
      %v3101 = vrot.slane %v2578, 4
      %v3102 = vrot.slane %v2496, 4
      %v3103 = vsel %vm362, %v3101, %v3102
      %v3104 = vrot.slane %v2594, 4
      %v3105 = vsel %vm362, %v3102, %v3104
      %v3106 = vrot.slane %v2579, 4
      %v3107 = vrot.slane %v2499, 4
      %v3108 = vsel %vm362, %v3106, %v3107
      %v3109 = vrot.slane %v2595, 4
      %v3110 = vsel %vm362, %v3107, %v3109
      %v3111 = vrot.slane %v2580, 4
      %v3112 = vrot.slane %v2502, 4
      %v3113 = vsel %vm362, %v3111, %v3112
      %v3114 = vrot.slane %v2596, 4
      %v3115 = vsel %vm362, %v3112, %v3114
      %v3116 = vrot.slane %v2581, 4
      %v3117 = vrot.slane %v2505, 4
      %v3118 = vsel %vm362, %v3116, %v3117
      %v3119 = vrot.slane %v2597, 4
      %v3120 = vsel %vm362, %v3117, %v3119
      %v3121 = vrot.slane %v2582, 4
      %v3122 = vrot.slane %v2508, 4
      %v3123 = vsel %vm362, %v3121, %v3122
      %v3124 = vrot.slane %v2598, 4
      %v3125 = vsel %vm362, %v3122, %v3124
      %v3126 = vrot.slane %v2583, 4
      %v3127 = vrot.slane %v2511, 4
      %v3128 = vsel %vm362, %v3126, %v3127
      %v3129 = vrot.slane %v2599, 4
      %v3130 = vsel %vm362, %v3127, %v3129
      %v3131 = vrot.slane %v2584, 4
      %v3132 = vrot.slane %v2514, 4
      %v3133 = vsel %vm362, %v3131, %v3132
      %v3134 = vrot.slane %v2600, 4
      %v3135 = vsel %vm362, %v3132, %v3134
      %v3136 = vrot.slane %v2585, 4
      %v3137 = vrot.slane %v2517, 4
      %v3138 = vsel %vm362, %v3136, %v3137
      %v3139 = vrot.slane %v2601, 4
      %v3140 = vsel %vm362, %v3137, %v3139
      %v3141 = vrot.slane %v2586, 4
      %v3142 = vrot.slane %v2520, 4
      %v3143 = vsel %vm362, %v3141, %v3142
      %v3144 = vrot.slane %v2602, 4
      %v3145 = vsel %vm362, %v3142, %v3144
      %v3146 = vrot.slane %v2587, 4
      %v3147 = vrot.slane %v2523, 4
      %v3148 = vsel %vm362, %v3146, %v3147
      %v3149 = vrot.slane %v2603, 4
      %v3150 = vsel %vm362, %v3147, %v3149
      %v3183 = vmax.f32 %v3039, %v3073
      %v3184 = vmax.f32 %v3040, %v3075
      %v3185 = vmax.f32 %v3041, %v3078
      %v3186 = vmax.f32 %v3042, %v3080
      %v3187 = vmax.f32 %v3043, %v3083
      %v3188 = vmax.f32 %v3044, %v3085
      %v3189 = vmax.f32 %v3045, %v3088
      %v3190 = vmax.f32 %v3046, %v3090
      %v3191 = vmax.f32 %v3047, %v3093
      %v3192 = vmax.f32 %v3048, %v3095
      %v3193 = vmax.f32 %v3049, %v3098
      %v3194 = vmax.f32 %v3050, %v3100
      %v3195 = vmax.f32 %v3051, %v3103
      %v3196 = vmax.f32 %v3052, %v3105
      %v3197 = vmax.f32 %v3053, %v3108
      %v3198 = vmax.f32 %v3054, %v3110
      %v3199 = vmax.f32 %v3055, %v3113
      %v3200 = vmax.f32 %v3056, %v3115
      %v3201 = vmax.f32 %v3057, %v3118
      %v3202 = vmax.f32 %v3058, %v3120
      %v3203 = vmax.f32 %v3059, %v3123
      %v3204 = vmax.f32 %v3060, %v3125
      %v3205 = vmax.f32 %v3061, %v3128
      %v3206 = vmax.f32 %v3062, %v3130
      %v3207 = vmax.f32 %v3063, %v3133
      %v3208 = vmax.f32 %v3064, %v3135
      %v3209 = vmax.f32 %v3065, %v3138
      %v3210 = vmax.f32 %v3066, %v3140
      %v3211 = vmax.f32 %v3067, %v3143
      %v3212 = vmax.f32 %v3068, %v3145
      %v3213 = vmax.f32 %v3069, %v3148
      %v3214 = vmax.f32 %v3070, %v3150
      %v3215 = vmax.f32 %v3183, %v3185
      %v3216 = vmax.f32 %v3184, %v3186
      %v3217 = vmax.f32 %v3185, %v3187
      %v3218 = vmax.f32 %v3186, %v3188
      %v3219 = vmax.f32 %v3187, %v3189
      %v3220 = vmax.f32 %v3188, %v3190
      %v3221 = vmax.f32 %v3189, %v3191
      %v3222 = vmax.f32 %v3190, %v3192
      %v3223 = vmax.f32 %v3191, %v3193
      %v3224 = vmax.f32 %v3192, %v3194
      %v3225 = vmax.f32 %v3193, %v3195
      %v3226 = vmax.f32 %v3194, %v3196
      %v3227 = vmax.f32 %v3195, %v3197
      %v3228 = vmax.f32 %v3196, %v3198
      %v3229 = vmax.f32 %v3197, %v3199
      %v3230 = vmax.f32 %v3198, %v3200
      %v3231 = vmax.f32 %v3199, %v3201
      %v3232 = vmax.f32 %v3200, %v3202
      %v3233 = vmax.f32 %v3201, %v3203
      %v3234 = vmax.f32 %v3202, %v3204
      %v3235 = vmax.f32 %v3203, %v3205
      %v3236 = vmax.f32 %v3204, %v3206
      %v3237 = vmax.f32 %v3205, %v3207
      %v3238 = vmax.f32 %v3206, %v3208
      %v3239 = vmax.f32 %v3207, %v3209
      %v3240 = vmax.f32 %v3208, %v3210
      %v3241 = vmax.f32 %v3209, %v3211
      %v3242 = vmax.f32 %v3210, %v3212
      %v3243 = vmax.f32 %v3215, %v3187
      %v3244 = vmax.f32 %v3216, %v3188
      %v3245 = vmax.f32 %v3217, %v3189
      %v3246 = vmax.f32 %v3218, %v3190
      %v3247 = vmax.f32 %v3219, %v3191
      %v3248 = vmax.f32 %v3220, %v3192
      %v3249 = vmax.f32 %v3221, %v3193
      %v3250 = vmax.f32 %v3222, %v3194
      %v3251 = vmax.f32 %v3223, %v3195
      %v3252 = vmax.f32 %v3224, %v3196
      %v3253 = vmax.f32 %v3225, %v3197
      %v3254 = vmax.f32 %v3226, %v3198
      %v3255 = vmax.f32 %v3227, %v3199
      %v3256 = vmax.f32 %v3228, %v3200
      %v3257 = vmax.f32 %v3229, %v3201
      %v3258 = vmax.f32 %v3230, %v3202
      %v3259 = vmax.f32 %v3231, %v3203
      %v3260 = vmax.f32 %v3232, %v3204
      %v3261 = vmax.f32 %v3233, %v3205
      %v3262 = vmax.f32 %v3234, %v3206
      %v3263 = vmax.f32 %v3235, %v3207
      %v3264 = vmax.f32 %v3236, %v3208
      %v3265 = vmax.f32 %v3237, %v3209
      %v3266 = vmax.f32 %v3238, %v3210
      %v3267 = vmax.f32 %v3239, %v3211
      %v3268 = vmax.f32 %v3240, %v3212
      %v3269 = vmax.f32 %v3241, %v3213
      %v3270 = vmax.f32 %v3242, %v3214
      %v3271 = vmax.f32 %v3243, %v3189
      %v3272 = vmax.f32 %v3244, %v3190
      %v3273 = vmax.f32 %v3245, %v3191
      %v3274 = vmax.f32 %v3246, %v3192
      %v3275 = vmax.f32 %v3247, %v3193
      %v3276 = vmax.f32 %v3248, %v3194
      %v3277 = vmax.f32 %v3249, %v3195
      %v3278 = vmax.f32 %v3250, %v3196
      %v3279 = vmax.f32 %v3251, %v3197
      %v3280 = vmax.f32 %v3252, %v3198
      %v3281 = vmax.f32 %v3253, %v3199
      %v3282 = vmax.f32 %v3254, %v3200
      %v3283 = vmax.f32 %v3255, %v3201
      %v3284 = vmax.f32 %v3256, %v3202
      %v3285 = vmax.f32 %v3257, %v3203
      %v3286 = vmax.f32 %v3258, %v3204
      %v3287 = vmax.f32 %v3259, %v3205
      %v3288 = vmax.f32 %v3260, %v3206
      %v3289 = vmax.f32 %v3261, %v3207
      %v3290 = vmax.f32 %v3262, %v3208
      %v3291 = vmax.f32 %v3263, %v3209
      %v3292 = vmax.f32 %v3264, %v3210
      %v3293 = vmax.f32 %v3265, %v3211
      %v3294 = vmax.f32 %v3266, %v3212
      %v3295 = vmax.f32 %v3267, %v3213
      %v3296 = vmax.f32 %v3268, %v3214
      %v3297 = vmax.f32 %v3271, %v3191
      %v3298 = vmax.f32 %v3272, %v3192
      %v3299 = vmax.f32 %v3273, %v3193
      %v3300 = vmax.f32 %v3274, %v3194
      %v3301 = vmax.f32 %v3275, %v3195
      %v3302 = vmax.f32 %v3276, %v3196
      %v3303 = vmax.f32 %v3277, %v3197
      %v3304 = vmax.f32 %v3278, %v3198
      %v3305 = vmax.f32 %v3279, %v3199
      %v3306 = vmax.f32 %v3280, %v3200
      %v3307 = vmax.f32 %v3281, %v3201
      %v3308 = vmax.f32 %v3282, %v3202
      %v3309 = vmax.f32 %v3283, %v3203
      %v3310 = vmax.f32 %v3284, %v3204
      %v3311 = vmax.f32 %v3285, %v3205
      %v3312 = vmax.f32 %v3286, %v3206
      %v3313 = vmax.f32 %v3287, %v3207
      %v3314 = vmax.f32 %v3288, %v3208
      %v3315 = vmax.f32 %v3289, %v3209
      %v3316 = vmax.f32 %v3290, %v3210
      %v3317 = vmax.f32 %v3291, %v3211
      %v3318 = vmax.f32 %v3292, %v3212
      %v3319 = vmax.f32 %v3293, %v3213
      %v3320 = vmax.f32 %v3294, %v3214
      %v3353 = vrot.slane %v3243, 6
      %v3354 = vrot.slane %v3244, 6
      %v3355 = vsel %vm2475, %v3353, %v3354
      %v3356 = vrot.slane %v3271, 6
      %v3357 = vrot.slane %v3272, 6
      %v3358 = vsel %vm2475, %v3356, %v3357
      %v3359 = vrot.slane %v3297, 6
      %v3360 = vrot.slane %v3298, 6
      %v3361 = vsel %vm2475, %v3359, %v3360
      %v3362 = vrot.slane %v3299, 6
      %v3363 = vrot.slane %v3300, 6
      %v3364 = vsel %vm2475, %v3362, %v3363
      %v3365 = vrot.slane %v3301, 6
      %v3366 = vrot.slane %v3302, 6
      %v3367 = vsel %vm2475, %v3365, %v3366
      %v3368 = vrot.slane %v3303, 6
      %v3369 = vrot.slane %v3304, 6
      %v3370 = vsel %vm2475, %v3368, %v3369
      %v3371 = vrot.slane %v3305, 6
      %v3372 = vrot.slane %v3306, 6
      %v3373 = vsel %vm2475, %v3371, %v3372
      %v3374 = vrot.slane %v3307, 6
      %v3375 = vrot.slane %v3308, 6
      %v3376 = vsel %vm2475, %v3374, %v3375
      %v3377 = vrot.slane %v3309, 6
      %v3378 = vrot.slane %v3310, 6
      %v3379 = vsel %vm2475, %v3377, %v3378
      %v3380 = vrot.slane %v3311, 6
      %v3381 = vrot.slane %v3312, 6
      %v3382 = vsel %vm2475, %v3380, %v3381
      %v3383 = vrot.slane %v3313, 6
      %v3384 = vrot.slane %v3314, 6
      %v3385 = vsel %vm2475, %v3383, %v3384
      %v3386 = vrot.slane %v3315, 6
      %v3387 = vrot.slane %v3316, 6
      %v3388 = vsel %vm2475, %v3386, %v3387
      %v3389 = vrot.slane %v3317, 6
      %v3390 = vrot.slane %v3318, 6
      %v3391 = vsel %vm2475, %v3389, %v3390
      %v3392 = vrot.slane %v3319, 6
      %v3393 = vrot.slane %v3320, 6
      %v3394 = vsel %vm2475, %v3392, %v3393
      %v3395 = vrot.slane %v3295, 6
      %v3396 = vrot.slane %v3296, 6
      %v3397 = vsel %vm2475, %v3395, %v3396
      %v3398 = vrot.slane %v3269, 6
      %v3399 = vrot.slane %v3270, 6
      %v3400 = vsel %vm2475, %v3398, %v3399
      %v3449 = vsel %vm2475, -inf, %v3353
      %v3450 = vsel %vm2475, -inf, %v3356
      %v3451 = vsel %vm2475, -inf, %v3359
      %v3452 = vsel %vm2475, -inf, %v3362
      %v3453 = vsel %vm2475, -inf, %v3365
      %v3454 = vsel %vm2475, -inf, %v3368
      %v3455 = vsel %vm2475, -inf, %v3371
      %v3456 = vsel %vm2475, -inf, %v3374
      %v3457 = vsel %vm2475, -inf, %v3377
      %v3458 = vsel %vm2475, -inf, %v3380
      %v3459 = vsel %vm2475, -inf, %v3383
      %v3460 = vsel %vm2475, -inf, %v3386
      %v3461 = vsel %vm2475, -inf, %v3389
      %v3462 = vsel %vm2475, -inf, %v3392
      %v3463 = vsel %vm2475, -inf, %v3395
      %v3464 = vsel %vm2475, -inf, %v3398
      %v3465 = vsel %vm2475, %v3354, -inf
      %v3466 = vsel %vm2475, %v3357, -inf
      %v3467 = vsel %vm2475, %v3360, -inf
      %v3468 = vsel %vm2475, %v3363, -inf
      %v3469 = vsel %vm2475, %v3366, -inf
      %v3470 = vsel %vm2475, %v3369, -inf
      %v3471 = vsel %vm2475, %v3372, -inf
      %v3472 = vsel %vm2475, %v3375, -inf
      %v3473 = vsel %vm2475, %v3378, -inf
      %v3474 = vsel %vm2475, %v3381, -inf
      %v3475 = vsel %vm2475, %v3384, -inf
      %v3476 = vsel %vm2475, %v3387, -inf
      %v3477 = vsel %vm2475, %v3390, -inf
      %v3478 = vsel %vm2475, %v3393, -inf
      %v3479 = vsel %vm2475, %v3396, -inf
      %v3480 = vsel %vm2475, %v3399, -inf
      %v3513 = vrot.slane %v3449, 1
      %v3514 = vrot.slane %v3355, 1
      %v3515 = vsel %vm2636, %v3513, %v3514
      %v3516 = vrot.slane %v3465, 1
      %v3517 = vsel %vm2636, %v3514, %v3516
      %v3518 = vrot.slane %v3450, 1
      %v3519 = vrot.slane %v3358, 1
      %v3520 = vsel %vm2636, %v3518, %v3519
      %v3521 = vrot.slane %v3466, 1
      %v3522 = vsel %vm2636, %v3519, %v3521
      %v3523 = vrot.slane %v3451, 1
      %v3524 = vrot.slane %v3361, 1
      %v3525 = vsel %vm2636, %v3523, %v3524
      %v3526 = vrot.slane %v3467, 1
      %v3527 = vsel %vm2636, %v3524, %v3526
      %v3528 = vrot.slane %v3452, 1
      %v3529 = vrot.slane %v3364, 1
      %v3530 = vsel %vm2636, %v3528, %v3529
      %v3531 = vrot.slane %v3468, 1
      %v3532 = vsel %vm2636, %v3529, %v3531
      %v3533 = vrot.slane %v3453, 1
      %v3534 = vrot.slane %v3367, 1
      %v3535 = vsel %vm2636, %v3533, %v3534
      %v3536 = vrot.slane %v3469, 1
      %v3537 = vsel %vm2636, %v3534, %v3536
      %v3538 = vrot.slane %v3454, 1
      %v3539 = vrot.slane %v3370, 1
      %v3540 = vsel %vm2636, %v3538, %v3539
      %v3541 = vrot.slane %v3470, 1
      %v3542 = vsel %vm2636, %v3539, %v3541
      %v3543 = vrot.slane %v3455, 1
      %v3544 = vrot.slane %v3373, 1
      %v3545 = vsel %vm2636, %v3543, %v3544
      %v3546 = vrot.slane %v3471, 1
      %v3547 = vsel %vm2636, %v3544, %v3546
      %v3548 = vrot.slane %v3456, 1
      %v3549 = vrot.slane %v3376, 1
      %v3550 = vsel %vm2636, %v3548, %v3549
      %v3551 = vrot.slane %v3472, 1
      %v3552 = vsel %vm2636, %v3549, %v3551
      %v3553 = vrot.slane %v3457, 1
      %v3554 = vrot.slane %v3379, 1
      %v3555 = vsel %vm2636, %v3553, %v3554
      %v3556 = vrot.slane %v3473, 1
      %v3557 = vsel %vm2636, %v3554, %v3556
      %v3558 = vrot.slane %v3458, 1
      %v3559 = vrot.slane %v3382, 1
      %v3560 = vsel %vm2636, %v3558, %v3559
      %v3561 = vrot.slane %v3474, 1
      %v3562 = vsel %vm2636, %v3559, %v3561
      %v3563 = vrot.slane %v3459, 1
      %v3564 = vrot.slane %v3385, 1
      %v3565 = vsel %vm2636, %v3563, %v3564
      %v3566 = vrot.slane %v3475, 1
      %v3567 = vsel %vm2636, %v3564, %v3566
      %v3568 = vrot.slane %v3460, 1
      %v3569 = vrot.slane %v3388, 1
      %v3570 = vsel %vm2636, %v3568, %v3569
      %v3571 = vrot.slane %v3476, 1
      %v3572 = vsel %vm2636, %v3569, %v3571
      %v3573 = vrot.slane %v3461, 1
      %v3574 = vrot.slane %v3391, 1
      %v3575 = vsel %vm2636, %v3573, %v3574
      %v3576 = vrot.slane %v3477, 1
      %v3577 = vsel %vm2636, %v3574, %v3576
      %v3578 = vrot.slane %v3462, 1
      %v3579 = vrot.slane %v3394, 1
      %v3580 = vsel %vm2636, %v3578, %v3579
      %v3581 = vrot.slane %v3478, 1
      %v3582 = vsel %vm2636, %v3579, %v3581
      %v3583 = vrot.slane %v3463, 1
      %v3584 = vrot.slane %v3397, 1
      %v3585 = vsel %vm2636, %v3583, %v3584
      %v3586 = vrot.slane %v3479, 1
      %v3587 = vsel %vm2636, %v3584, %v3586
      %v3588 = vrot.slane %v3464, 1
      %v3589 = vrot.slane %v3400, 1
      %v3590 = vsel %vm2636, %v3588, %v3589
      %v3591 = vrot.slane %v3480, 1
      %v3592 = vsel %vm2636, %v3589, %v3591
      %v3625 = vmax.f32 %v3449, %v3515
      %v3626 = vmax.f32 %v3355, %v3517
      %v3627 = vmax.f32 %v3450, %v3520
      %v3628 = vmax.f32 %v3358, %v3522
      %v3629 = vmax.f32 %v3451, %v3525
      %v3630 = vmax.f32 %v3361, %v3527
      %v3631 = vmax.f32 %v3452, %v3530
      %v3632 = vmax.f32 %v3364, %v3532
      %v3633 = vmax.f32 %v3453, %v3535
      %v3634 = vmax.f32 %v3367, %v3537
      %v3635 = vmax.f32 %v3454, %v3540
      %v3636 = vmax.f32 %v3370, %v3542
      %v3637 = vmax.f32 %v3455, %v3545
      %v3638 = vmax.f32 %v3373, %v3547
      %v3639 = vmax.f32 %v3456, %v3550
      %v3640 = vmax.f32 %v3376, %v3552
      %v3641 = vmax.f32 %v3457, %v3555
      %v3642 = vmax.f32 %v3379, %v3557
      %v3643 = vmax.f32 %v3458, %v3560
      %v3644 = vmax.f32 %v3382, %v3562
      %v3645 = vmax.f32 %v3459, %v3565
      %v3646 = vmax.f32 %v3385, %v3567
      %v3647 = vmax.f32 %v3460, %v3570
      %v3648 = vmax.f32 %v3388, %v3572
      %v3649 = vmax.f32 %v3461, %v3575
      %v3650 = vmax.f32 %v3391, %v3577
      %v3651 = vmax.f32 %v3462, %v3580
      %v3652 = vmax.f32 %v3394, %v3582
      %v3653 = vmax.f32 %v3463, %v3585
      %v3654 = vmax.f32 %v3397, %v3587
      %v3655 = vmax.f32 %v3464, %v3590
      %v3656 = vmax.f32 %v3400, %v3592
      %v3657 = vrot.slane %v3449, 2
      %v3658 = vrot.slane %v3355, 2
      %v3659 = vsel %vm2781, %v3657, %v3658
      %v3660 = vrot.slane %v3465, 2
      %v3661 = vsel %vm2781, %v3658, %v3660
      %v3662 = vrot.slane %v3450, 2
      %v3663 = vrot.slane %v3358, 2
      %v3664 = vsel %vm2781, %v3662, %v3663
      %v3665 = vrot.slane %v3466, 2
      %v3666 = vsel %vm2781, %v3663, %v3665
      %v3667 = vrot.slane %v3451, 2
      %v3668 = vrot.slane %v3361, 2
      %v3669 = vsel %vm2781, %v3667, %v3668
      %v3670 = vrot.slane %v3467, 2
      %v3671 = vsel %vm2781, %v3668, %v3670
      %v3672 = vrot.slane %v3452, 2
      %v3673 = vrot.slane %v3364, 2
      %v3674 = vsel %vm2781, %v3672, %v3673
      %v3675 = vrot.slane %v3468, 2
      %v3676 = vsel %vm2781, %v3673, %v3675
      %v3677 = vrot.slane %v3453, 2
      %v3678 = vrot.slane %v3367, 2
      %v3679 = vsel %vm2781, %v3677, %v3678
      %v3680 = vrot.slane %v3469, 2
      %v3681 = vsel %vm2781, %v3678, %v3680
      %v3682 = vrot.slane %v3454, 2
      %v3683 = vrot.slane %v3370, 2
      %v3684 = vsel %vm2781, %v3682, %v3683
      %v3685 = vrot.slane %v3470, 2
      %v3686 = vsel %vm2781, %v3683, %v3685
      %v3687 = vrot.slane %v3455, 2
      %v3688 = vrot.slane %v3373, 2
      %v3689 = vsel %vm2781, %v3687, %v3688
      %v3690 = vrot.slane %v3471, 2
      %v3691 = vsel %vm2781, %v3688, %v3690
      %v3692 = vrot.slane %v3456, 2
      %v3693 = vrot.slane %v3376, 2
      %v3694 = vsel %vm2781, %v3692, %v3693
      %v3695 = vrot.slane %v3472, 2
      %v3696 = vsel %vm2781, %v3693, %v3695
      %v3697 = vrot.slane %v3457, 2
      %v3698 = vrot.slane %v3379, 2
      %v3699 = vsel %vm2781, %v3697, %v3698
      %v3700 = vrot.slane %v3473, 2
      %v3701 = vsel %vm2781, %v3698, %v3700
      %v3702 = vrot.slane %v3458, 2
      %v3703 = vrot.slane %v3382, 2
      %v3704 = vsel %vm2781, %v3702, %v3703
      %v3705 = vrot.slane %v3474, 2
      %v3706 = vsel %vm2781, %v3703, %v3705
      %v3707 = vrot.slane %v3459, 2
      %v3708 = vrot.slane %v3385, 2
      %v3709 = vsel %vm2781, %v3707, %v3708
      %v3710 = vrot.slane %v3475, 2
      %v3711 = vsel %vm2781, %v3708, %v3710
      %v3712 = vrot.slane %v3460, 2
      %v3713 = vrot.slane %v3388, 2
      %v3714 = vsel %vm2781, %v3712, %v3713
      %v3715 = vrot.slane %v3476, 2
      %v3716 = vsel %vm2781, %v3713, %v3715
      %v3717 = vrot.slane %v3461, 2
      %v3718 = vrot.slane %v3391, 2
      %v3719 = vsel %vm2781, %v3717, %v3718
      %v3720 = vrot.slane %v3477, 2
      %v3721 = vsel %vm2781, %v3718, %v3720
      %v3722 = vrot.slane %v3462, 2
      %v3723 = vrot.slane %v3394, 2
      %v3724 = vsel %vm2781, %v3722, %v3723
      %v3725 = vrot.slane %v3478, 2
      %v3726 = vsel %vm2781, %v3723, %v3725
      %v3727 = vrot.slane %v3463, 2
      %v3728 = vrot.slane %v3397, 2
      %v3729 = vsel %vm2781, %v3727, %v3728
      %v3730 = vrot.slane %v3479, 2
      %v3731 = vsel %vm2781, %v3728, %v3730
      %v3732 = vrot.slane %v3464, 2
      %v3733 = vrot.slane %v3400, 2
      %v3734 = vsel %vm2781, %v3732, %v3733
      %v3735 = vrot.slane %v3480, 2
      %v3736 = vsel %vm2781, %v3733, %v3735
      %v3769 = vmax.f32 %v3625, %v3659
      %v3770 = vmax.f32 %v3626, %v3661
      %v3771 = vmax.f32 %v3627, %v3664
      %v3772 = vmax.f32 %v3628, %v3666
      %v3773 = vmax.f32 %v3629, %v3669
      %v3774 = vmax.f32 %v3630, %v3671
      %v3775 = vmax.f32 %v3631, %v3674
      %v3776 = vmax.f32 %v3632, %v3676
      %v3777 = vmax.f32 %v3633, %v3679
      %v3778 = vmax.f32 %v3634, %v3681
      %v3779 = vmax.f32 %v3635, %v3684
      %v3780 = vmax.f32 %v3636, %v3686
      %v3781 = vmax.f32 %v3637, %v3689
      %v3782 = vmax.f32 %v3638, %v3691
      %v3783 = vmax.f32 %v3639, %v3694
      %v3784 = vmax.f32 %v3640, %v3696
      %v3785 = vmax.f32 %v3641, %v3699
      %v3786 = vmax.f32 %v3642, %v3701
      %v3787 = vmax.f32 %v3643, %v3704
      %v3788 = vmax.f32 %v3644, %v3706
      %v3789 = vmax.f32 %v3645, %v3709
      %v3790 = vmax.f32 %v3646, %v3711
      %v3791 = vmax.f32 %v3647, %v3714
      %v3792 = vmax.f32 %v3648, %v3716
      %v3793 = vmax.f32 %v3649, %v3719
      %v3794 = vmax.f32 %v3650, %v3721
      %v3795 = vmax.f32 %v3651, %v3724
      %v3796 = vmax.f32 %v3652, %v3726
      %v3797 = vmax.f32 %v3653, %v3729
      %v3798 = vmax.f32 %v3654, %v3731
      %v3799 = vmax.f32 %v3655, %v3734
      %v3800 = vmax.f32 %v3656, %v3736
      %v3801 = vrot.slane %v3449, 3
      %v3802 = vrot.slane %v3355, 3
      %v3803 = vsel %vm2926, %v3801, %v3802
      %v3804 = vrot.slane %v3465, 3
      %v3805 = vsel %vm2926, %v3802, %v3804
      %v3806 = vrot.slane %v3450, 3
      %v3807 = vrot.slane %v3358, 3
      %v3808 = vsel %vm2926, %v3806, %v3807
      %v3809 = vrot.slane %v3466, 3
      %v3810 = vsel %vm2926, %v3807, %v3809
      %v3811 = vrot.slane %v3451, 3
      %v3812 = vrot.slane %v3361, 3
      %v3813 = vsel %vm2926, %v3811, %v3812
      %v3814 = vrot.slane %v3467, 3
      %v3815 = vsel %vm2926, %v3812, %v3814
      %v3816 = vrot.slane %v3452, 3
      %v3817 = vrot.slane %v3364, 3
      %v3818 = vsel %vm2926, %v3816, %v3817
      %v3819 = vrot.slane %v3468, 3
      %v3820 = vsel %vm2926, %v3817, %v3819
      %v3821 = vrot.slane %v3453, 3
      %v3822 = vrot.slane %v3367, 3
      %v3823 = vsel %vm2926, %v3821, %v3822
      %v3824 = vrot.slane %v3469, 3
      %v3825 = vsel %vm2926, %v3822, %v3824
      %v3826 = vrot.slane %v3454, 3
      %v3827 = vrot.slane %v3370, 3
      %v3828 = vsel %vm2926, %v3826, %v3827
      %v3829 = vrot.slane %v3470, 3
      %v3830 = vsel %vm2926, %v3827, %v3829
      %v3831 = vrot.slane %v3455, 3
      %v3832 = vrot.slane %v3373, 3
      %v3833 = vsel %vm2926, %v3831, %v3832
      %v3834 = vrot.slane %v3471, 3
      %v3835 = vsel %vm2926, %v3832, %v3834
      %v3836 = vrot.slane %v3456, 3
      %v3837 = vrot.slane %v3376, 3
      %v3838 = vsel %vm2926, %v3836, %v3837
      %v3839 = vrot.slane %v3472, 3
      %v3840 = vsel %vm2926, %v3837, %v3839
      %v3841 = vrot.slane %v3457, 3
      %v3842 = vrot.slane %v3379, 3
      %v3843 = vsel %vm2926, %v3841, %v3842
      %v3844 = vrot.slane %v3473, 3
      %v3845 = vsel %vm2926, %v3842, %v3844
      %v3846 = vrot.slane %v3458, 3
      %v3847 = vrot.slane %v3382, 3
      %v3848 = vsel %vm2926, %v3846, %v3847
      %v3849 = vrot.slane %v3474, 3
      %v3850 = vsel %vm2926, %v3847, %v3849
      %v3851 = vrot.slane %v3459, 3
      %v3852 = vrot.slane %v3385, 3
      %v3853 = vsel %vm2926, %v3851, %v3852
      %v3854 = vrot.slane %v3475, 3
      %v3855 = vsel %vm2926, %v3852, %v3854
      %v3856 = vrot.slane %v3460, 3
      %v3857 = vrot.slane %v3388, 3
      %v3858 = vsel %vm2926, %v3856, %v3857
      %v3859 = vrot.slane %v3476, 3
      %v3860 = vsel %vm2926, %v3857, %v3859
      %v3861 = vrot.slane %v3461, 3
      %v3862 = vrot.slane %v3391, 3
      %v3863 = vsel %vm2926, %v3861, %v3862
      %v3864 = vrot.slane %v3477, 3
      %v3865 = vsel %vm2926, %v3862, %v3864
      %v3866 = vrot.slane %v3462, 3
      %v3867 = vrot.slane %v3394, 3
      %v3868 = vsel %vm2926, %v3866, %v3867
      %v3869 = vrot.slane %v3478, 3
      %v3870 = vsel %vm2926, %v3867, %v3869
      %v3871 = vrot.slane %v3463, 3
      %v3872 = vrot.slane %v3397, 3
      %v3873 = vsel %vm2926, %v3871, %v3872
      %v3874 = vrot.slane %v3479, 3
      %v3875 = vsel %vm2926, %v3872, %v3874
      %v3876 = vrot.slane %v3464, 3
      %v3877 = vrot.slane %v3400, 3
      %v3878 = vsel %vm2926, %v3876, %v3877
      %v3879 = vrot.slane %v3480, 3
      %v3880 = vsel %vm2926, %v3877, %v3879
      %v3913 = vmax.f32 %v3769, %v3803
      %v3914 = vmax.f32 %v3770, %v3805
      %v3915 = vmax.f32 %v3771, %v3808
      %v3916 = vmax.f32 %v3772, %v3810
      %v3917 = vmax.f32 %v3773, %v3813
      %v3918 = vmax.f32 %v3774, %v3815
      %v3919 = vmax.f32 %v3775, %v3818
      %v3920 = vmax.f32 %v3776, %v3820
      %v3921 = vmax.f32 %v3777, %v3823
      %v3922 = vmax.f32 %v3778, %v3825
      %v3923 = vmax.f32 %v3779, %v3828
      %v3924 = vmax.f32 %v3780, %v3830
      %v3925 = vmax.f32 %v3781, %v3833
      %v3926 = vmax.f32 %v3782, %v3835
      %v3927 = vmax.f32 %v3783, %v3838
      %v3928 = vmax.f32 %v3784, %v3840
      %v3929 = vmax.f32 %v3785, %v3843
      %v3930 = vmax.f32 %v3786, %v3845
      %v3931 = vmax.f32 %v3787, %v3848
      %v3932 = vmax.f32 %v3788, %v3850
      %v3933 = vmax.f32 %v3789, %v3853
      %v3934 = vmax.f32 %v3790, %v3855
      %v3935 = vmax.f32 %v3791, %v3858
      %v3936 = vmax.f32 %v3792, %v3860
      %v3937 = vmax.f32 %v3793, %v3863
      %v3938 = vmax.f32 %v3794, %v3865
      %v3939 = vmax.f32 %v3795, %v3868
      %v3940 = vmax.f32 %v3796, %v3870
      %v3941 = vmax.f32 %v3797, %v3873
      %v3942 = vmax.f32 %v3798, %v3875
      %v3943 = vmax.f32 %v3799, %v3878
      %v3944 = vmax.f32 %v3800, %v3880
      %v3945 = vrot.slane %v3449, 4
      %v3946 = vrot.slane %v3355, 4
      %v3947 = vsel %vm362, %v3945, %v3946
      %v3948 = vrot.slane %v3465, 4
      %v3949 = vsel %vm362, %v3946, %v3948
      %v3950 = vrot.slane %v3450, 4
      %v3951 = vrot.slane %v3358, 4
      %v3952 = vsel %vm362, %v3950, %v3951
      %v3953 = vrot.slane %v3466, 4
      %v3954 = vsel %vm362, %v3951, %v3953
      %v3955 = vrot.slane %v3451, 4
      %v3956 = vrot.slane %v3361, 4
      %v3957 = vsel %vm362, %v3955, %v3956
      %v3958 = vrot.slane %v3467, 4
      %v3959 = vsel %vm362, %v3956, %v3958
      %v3960 = vrot.slane %v3452, 4
      %v3961 = vrot.slane %v3364, 4
      %v3962 = vsel %vm362, %v3960, %v3961
      %v3963 = vrot.slane %v3468, 4
      %v3964 = vsel %vm362, %v3961, %v3963
      %v3965 = vrot.slane %v3453, 4
      %v3966 = vrot.slane %v3367, 4
      %v3967 = vsel %vm362, %v3965, %v3966
      %v3968 = vrot.slane %v3469, 4
      %v3969 = vsel %vm362, %v3966, %v3968
      %v3970 = vrot.slane %v3454, 4
      %v3971 = vrot.slane %v3370, 4
      %v3972 = vsel %vm362, %v3970, %v3971
      %v3973 = vrot.slane %v3470, 4
      %v3974 = vsel %vm362, %v3971, %v3973
      %v3975 = vrot.slane %v3455, 4
      %v3976 = vrot.slane %v3373, 4
      %v3977 = vsel %vm362, %v3975, %v3976
      %v3978 = vrot.slane %v3471, 4
      %v3979 = vsel %vm362, %v3976, %v3978
      %v3980 = vrot.slane %v3456, 4
      %v3981 = vrot.slane %v3376, 4
      %v3982 = vsel %vm362, %v3980, %v3981
      %v3983 = vrot.slane %v3472, 4
      %v3984 = vsel %vm362, %v3981, %v3983
      %v3985 = vrot.slane %v3457, 4
      %v3986 = vrot.slane %v3379, 4
      %v3987 = vsel %vm362, %v3985, %v3986
      %v3988 = vrot.slane %v3473, 4
      %v3989 = vsel %vm362, %v3986, %v3988
      %v3990 = vrot.slane %v3458, 4
      %v3991 = vrot.slane %v3382, 4
      %v3992 = vsel %vm362, %v3990, %v3991
      %v3993 = vrot.slane %v3474, 4
      %v3994 = vsel %vm362, %v3991, %v3993
      %v3995 = vrot.slane %v3459, 4
      %v3996 = vrot.slane %v3385, 4
      %v3997 = vsel %vm362, %v3995, %v3996
      %v3998 = vrot.slane %v3475, 4
      %v3999 = vsel %vm362, %v3996, %v3998
      %v4000 = vrot.slane %v3460, 4
      %v4001 = vrot.slane %v3388, 4
      %v4002 = vsel %vm362, %v4000, %v4001
      %v4003 = vrot.slane %v3476, 4
      %v4004 = vsel %vm362, %v4001, %v4003
      %v4005 = vrot.slane %v3461, 4
      %v4006 = vrot.slane %v3391, 4
      %v4007 = vsel %vm362, %v4005, %v4006
      %v4008 = vrot.slane %v3477, 4
      %v4009 = vsel %vm362, %v4006, %v4008
      %v4010 = vrot.slane %v3462, 4
      %v4011 = vrot.slane %v3394, 4
      %v4012 = vsel %vm362, %v4010, %v4011
      %v4013 = vrot.slane %v3478, 4
      %v4014 = vsel %vm362, %v4011, %v4013
      %v4015 = vrot.slane %v3463, 4
      %v4016 = vrot.slane %v3397, 4
      %v4017 = vsel %vm362, %v4015, %v4016
      %v4018 = vrot.slane %v3479, 4
      %v4019 = vsel %vm362, %v4016, %v4018
      %v4020 = vrot.slane %v3464, 4
      %v4021 = vrot.slane %v3400, 4
      %v4022 = vsel %vm362, %v4020, %v4021
      %v4023 = vrot.slane %v3480, 4
      %v4024 = vsel %vm362, %v4021, %v4023
      %v4057 = vmax.f32 %v3913, %v3947
      %v4058 = vmax.f32 %v3914, %v3949
      %v4059 = vmax.f32 %v3915, %v3952
      %v4060 = vmax.f32 %v3916, %v3954
      %v4061 = vmax.f32 %v3917, %v3957
      %v4062 = vmax.f32 %v3918, %v3959
      %v4063 = vmax.f32 %v3919, %v3962
      %v4064 = vmax.f32 %v3920, %v3964
      %v4065 = vmax.f32 %v3921, %v3967
      %v4066 = vmax.f32 %v3922, %v3969
      %v4067 = vmax.f32 %v3923, %v3972
      %v4068 = vmax.f32 %v3924, %v3974
      %v4069 = vmax.f32 %v3925, %v3977
      %v4070 = vmax.f32 %v3926, %v3979
      %v4071 = vmax.f32 %v3927, %v3982
      %v4072 = vmax.f32 %v3928, %v3984
      %v4073 = vmax.f32 %v3929, %v3987
      %v4074 = vmax.f32 %v3930, %v3989
      %v4075 = vmax.f32 %v3931, %v3992
      %v4076 = vmax.f32 %v3932, %v3994
      %v4077 = vmax.f32 %v3933, %v3997
      %v4078 = vmax.f32 %v3934, %v3999
      %v4079 = vmax.f32 %v3935, %v4002
      %v4080 = vmax.f32 %v3936, %v4004
      %v4081 = vmax.f32 %v3937, %v4007
      %v4082 = vmax.f32 %v3938, %v4009
      %v4083 = vmax.f32 %v3939, %v4012
      %v4084 = vmax.f32 %v3940, %v4014
      %v4085 = vmax.f32 %v3941, %v4017
      %v4086 = vmax.f32 %v3942, %v4019
      %v4087 = vmax.f32 %v3943, %v4022
      %v4088 = vmax.f32 %v3944, %v4024
      %v4089 = vmax.f32 %v4057, %v4059
      %v4090 = vmax.f32 %v4058, %v4060
      %v4091 = vmax.f32 %v4059, %v4061
      %v4092 = vmax.f32 %v4060, %v4062
      %v4093 = vmax.f32 %v4061, %v4063
      %v4094 = vmax.f32 %v4062, %v4064
      %v4095 = vmax.f32 %v4063, %v4065
      %v4096 = vmax.f32 %v4064, %v4066
      %v4097 = vmax.f32 %v4065, %v4067
      %v4098 = vmax.f32 %v4066, %v4068
      %v4099 = vmax.f32 %v4067, %v4069
      %v4100 = vmax.f32 %v4068, %v4070
      %v4101 = vmax.f32 %v4069, %v4071
      %v4102 = vmax.f32 %v4070, %v4072
      %v4103 = vmax.f32 %v4071, %v4073
      %v4104 = vmax.f32 %v4072, %v4074
      %v4105 = vmax.f32 %v4073, %v4075
      %v4106 = vmax.f32 %v4074, %v4076
      %v4107 = vmax.f32 %v4075, %v4077
      %v4108 = vmax.f32 %v4076, %v4078
      %v4109 = vmax.f32 %v4077, %v4079
      %v4110 = vmax.f32 %v4078, %v4080
      %v4111 = vmax.f32 %v4079, %v4081
      %v4112 = vmax.f32 %v4080, %v4082
      %v4113 = vmax.f32 %v4081, %v4083
      %v4114 = vmax.f32 %v4082, %v4084
      %v4115 = vmax.f32 %v4083, %v4085
      %v4116 = vmax.f32 %v4084, %v4086
      %v4117 = vmax.f32 %v4089, %v4061
      %v4118 = vmax.f32 %v4090, %v4062
      %v4119 = vmax.f32 %v4091, %v4063
      %v4120 = vmax.f32 %v4092, %v4064
      %v4121 = vmax.f32 %v4093, %v4065
      %v4122 = vmax.f32 %v4094, %v4066
      %v4123 = vmax.f32 %v4095, %v4067
      %v4124 = vmax.f32 %v4096, %v4068
      %v4125 = vmax.f32 %v4097, %v4069
      %v4126 = vmax.f32 %v4098, %v4070
      %v4127 = vmax.f32 %v4099, %v4071
      %v4128 = vmax.f32 %v4100, %v4072
      %v4129 = vmax.f32 %v4101, %v4073
      %v4130 = vmax.f32 %v4102, %v4074
      %v4131 = vmax.f32 %v4103, %v4075
      %v4132 = vmax.f32 %v4104, %v4076
      %v4133 = vmax.f32 %v4105, %v4077
      %v4134 = vmax.f32 %v4106, %v4078
      %v4135 = vmax.f32 %v4107, %v4079
      %v4136 = vmax.f32 %v4108, %v4080
      %v4137 = vmax.f32 %v4109, %v4081
      %v4138 = vmax.f32 %v4110, %v4082
      %v4139 = vmax.f32 %v4111, %v4083
      %v4140 = vmax.f32 %v4112, %v4084
      %v4141 = vmax.f32 %v4113, %v4085
      %v4142 = vmax.f32 %v4114, %v4086
      %v4143 = vmax.f32 %v4115, %v4087
      %v4144 = vmax.f32 %v4116, %v4088
      %v4145 = vmax.f32 %v4117, %v4063
      %v4146 = vmax.f32 %v4118, %v4064
      %v4147 = vmax.f32 %v4119, %v4065
      %v4148 = vmax.f32 %v4120, %v4066
      %v4149 = vmax.f32 %v4121, %v4067
      %v4150 = vmax.f32 %v4122, %v4068
      %v4151 = vmax.f32 %v4123, %v4069
      %v4152 = vmax.f32 %v4124, %v4070
      %v4153 = vmax.f32 %v4125, %v4071
      %v4154 = vmax.f32 %v4126, %v4072
      %v4155 = vmax.f32 %v4127, %v4073
      %v4156 = vmax.f32 %v4128, %v4074
      %v4157 = vmax.f32 %v4129, %v4075
      %v4158 = vmax.f32 %v4130, %v4076
      %v4159 = vmax.f32 %v4131, %v4077
      %v4160 = vmax.f32 %v4132, %v4078
      %v4161 = vmax.f32 %v4133, %v4079
      %v4162 = vmax.f32 %v4134, %v4080
      %v4163 = vmax.f32 %v4135, %v4081
      %v4164 = vmax.f32 %v4136, %v4082
      %v4165 = vmax.f32 %v4137, %v4083
      %v4166 = vmax.f32 %v4138, %v4084
      %v4167 = vmax.f32 %v4139, %v4085
      %v4168 = vmax.f32 %v4140, %v4086
      %v4169 = vmax.f32 %v4141, %v4087
      %v4170 = vmax.f32 %v4142, %v4088
      %v4171 = vmax.f32 %v4145, %v4065
      %v4172 = vmax.f32 %v4146, %v4066
      %v4173 = vmax.f32 %v4147, %v4067
      %v4174 = vmax.f32 %v4148, %v4068
      %v4175 = vmax.f32 %v4149, %v4069
      %v4176 = vmax.f32 %v4150, %v4070
      %v4177 = vmax.f32 %v4151, %v4071
      %v4178 = vmax.f32 %v4152, %v4072
      %v4179 = vmax.f32 %v4153, %v4073
      %v4180 = vmax.f32 %v4154, %v4074
      %v4181 = vmax.f32 %v4155, %v4075
      %v4182 = vmax.f32 %v4156, %v4076
      %v4183 = vmax.f32 %v4157, %v4077
      %v4184 = vmax.f32 %v4158, %v4078
      %v4185 = vmax.f32 %v4159, %v4079
      %v4186 = vmax.f32 %v4160, %v4080
      %v4187 = vmax.f32 %v4161, %v4081
      %v4188 = vmax.f32 %v4162, %v4082
      %v4189 = vmax.f32 %v4163, %v4083
      %v4190 = vmax.f32 %v4164, %v4084
      %v4191 = vmax.f32 %v4165, %v4085
      %v4192 = vmax.f32 %v4166, %v4086
      %v4193 = vmax.f32 %v4167, %v4087
      %v4194 = vmax.f32 %v4168, %v4088
      %v4227 = vrot.slane %v4117, 6
      %v4228 = vrot.slane %v4118, 6
      %v4229 = vsel %vm2475, %v4227, %v4228
      %v4230 = vrot.slane %v4145, 6
      %v4231 = vrot.slane %v4146, 6
      %v4232 = vsel %vm2475, %v4230, %v4231
      %v4233 = vrot.slane %v4171, 6
      %v4234 = vrot.slane %v4172, 6
      %v4235 = vsel %vm2475, %v4233, %v4234
      %v4236 = vrot.slane %v4173, 6
      %v4237 = vrot.slane %v4174, 6
      %v4238 = vsel %vm2475, %v4236, %v4237
      %v4239 = vrot.slane %v4175, 6
      %v4240 = vrot.slane %v4176, 6
      %v4241 = vsel %vm2475, %v4239, %v4240
      %v4242 = vrot.slane %v4177, 6
      %v4243 = vrot.slane %v4178, 6
      %v4244 = vsel %vm2475, %v4242, %v4243
      %v4245 = vrot.slane %v4179, 6
      %v4246 = vrot.slane %v4180, 6
      %v4247 = vsel %vm2475, %v4245, %v4246
      %v4248 = vrot.slane %v4181, 6
      %v4249 = vrot.slane %v4182, 6
      %v4250 = vsel %vm2475, %v4248, %v4249
      %v4251 = vrot.slane %v4183, 6
      %v4252 = vrot.slane %v4184, 6
      %v4253 = vsel %vm2475, %v4251, %v4252
      %v4254 = vrot.slane %v4185, 6
      %v4255 = vrot.slane %v4186, 6
      %v4256 = vsel %vm2475, %v4254, %v4255
      %v4257 = vrot.slane %v4187, 6
      %v4258 = vrot.slane %v4188, 6
      %v4259 = vsel %vm2475, %v4257, %v4258
      %v4260 = vrot.slane %v4189, 6
      %v4261 = vrot.slane %v4190, 6
      %v4262 = vsel %vm2475, %v4260, %v4261
      %v4263 = vrot.slane %v4191, 6
      %v4264 = vrot.slane %v4192, 6
      %v4265 = vsel %vm2475, %v4263, %v4264
      %v4266 = vrot.slane %v4193, 6
      %v4267 = vrot.slane %v4194, 6
      %v4268 = vsel %vm2475, %v4266, %v4267
      %v4269 = vrot.slane %v4169, 6
      %v4270 = vrot.slane %v4170, 6
      %v4271 = vsel %vm2475, %v4269, %v4270
      %v4272 = vrot.slane %v4143, 6
      %v4273 = vrot.slane %v4144, 6
      %v4274 = vsel %vm2475, %v4272, %v4273
      %v4323 = vsel %vm2475, -inf, %v4227
      %v4324 = vsel %vm2475, -inf, %v4230
      %v4325 = vsel %vm2475, -inf, %v4233
      %v4326 = vsel %vm2475, -inf, %v4236
      %v4327 = vsel %vm2475, -inf, %v4239
      %v4328 = vsel %vm2475, -inf, %v4242
      %v4329 = vsel %vm2475, -inf, %v4245
      %v4330 = vsel %vm2475, -inf, %v4248
      %v4331 = vsel %vm2475, -inf, %v4251
      %v4332 = vsel %vm2475, -inf, %v4254
      %v4333 = vsel %vm2475, -inf, %v4257
      %v4334 = vsel %vm2475, -inf, %v4260
      %v4335 = vsel %vm2475, -inf, %v4263
      %v4336 = vsel %vm2475, -inf, %v4266
      %v4337 = vsel %vm2475, -inf, %v4269
      %v4338 = vsel %vm2475, -inf, %v4272
      %v4339 = vsel %vm2475, %v4228, -inf
      %v4340 = vsel %vm2475, %v4231, -inf
      %v4341 = vsel %vm2475, %v4234, -inf
      %v4342 = vsel %vm2475, %v4237, -inf
      %v4343 = vsel %vm2475, %v4240, -inf
      %v4344 = vsel %vm2475, %v4243, -inf
      %v4345 = vsel %vm2475, %v4246, -inf
      %v4346 = vsel %vm2475, %v4249, -inf
      %v4347 = vsel %vm2475, %v4252, -inf
      %v4348 = vsel %vm2475, %v4255, -inf
      %v4349 = vsel %vm2475, %v4258, -inf
      %v4350 = vsel %vm2475, %v4261, -inf
      %v4351 = vsel %vm2475, %v4264, -inf
      %v4352 = vsel %vm2475, %v4267, -inf
      %v4353 = vsel %vm2475, %v4270, -inf
      %v4354 = vsel %vm2475, %v4273, -inf
      %v4387 = vrot.slane %v4323, 1
      %v4388 = vrot.slane %v4229, 1
      %v4389 = vsel %vm2636, %v4387, %v4388
      %v4390 = vrot.slane %v4339, 1
      %v4391 = vsel %vm2636, %v4388, %v4390
      %v4392 = vrot.slane %v4324, 1
      %v4393 = vrot.slane %v4232, 1
      %v4394 = vsel %vm2636, %v4392, %v4393
      %v4395 = vrot.slane %v4340, 1
      %v4396 = vsel %vm2636, %v4393, %v4395
      %v4397 = vrot.slane %v4325, 1
      %v4398 = vrot.slane %v4235, 1
      %v4399 = vsel %vm2636, %v4397, %v4398
      %v4400 = vrot.slane %v4341, 1
      %v4401 = vsel %vm2636, %v4398, %v4400
      %v4402 = vrot.slane %v4326, 1
      %v4403 = vrot.slane %v4238, 1
      %v4404 = vsel %vm2636, %v4402, %v4403
      %v4405 = vrot.slane %v4342, 1
      %v4406 = vsel %vm2636, %v4403, %v4405
      %v4407 = vrot.slane %v4327, 1
      %v4408 = vrot.slane %v4241, 1
      %v4409 = vsel %vm2636, %v4407, %v4408
      %v4410 = vrot.slane %v4343, 1
      %v4411 = vsel %vm2636, %v4408, %v4410
      %v4412 = vrot.slane %v4328, 1
      %v4413 = vrot.slane %v4244, 1
      %v4414 = vsel %vm2636, %v4412, %v4413
      %v4415 = vrot.slane %v4344, 1
      %v4416 = vsel %vm2636, %v4413, %v4415
      %v4417 = vrot.slane %v4329, 1
      %v4418 = vrot.slane %v4247, 1
      %v4419 = vsel %vm2636, %v4417, %v4418
      %v4420 = vrot.slane %v4345, 1
      %v4421 = vsel %vm2636, %v4418, %v4420
      %v4422 = vrot.slane %v4330, 1
      %v4423 = vrot.slane %v4250, 1
      %v4424 = vsel %vm2636, %v4422, %v4423
      %v4425 = vrot.slane %v4346, 1
      %v4426 = vsel %vm2636, %v4423, %v4425
      %v4427 = vrot.slane %v4331, 1
      %v4428 = vrot.slane %v4253, 1
      %v4429 = vsel %vm2636, %v4427, %v4428
      %v4430 = vrot.slane %v4347, 1
      %v4431 = vsel %vm2636, %v4428, %v4430
      %v4432 = vrot.slane %v4332, 1
      %v4433 = vrot.slane %v4256, 1
      %v4434 = vsel %vm2636, %v4432, %v4433
      %v4435 = vrot.slane %v4348, 1
      %v4436 = vsel %vm2636, %v4433, %v4435
      %v4437 = vrot.slane %v4333, 1
      %v4438 = vrot.slane %v4259, 1
      %v4439 = vsel %vm2636, %v4437, %v4438
      %v4440 = vrot.slane %v4349, 1
      %v4441 = vsel %vm2636, %v4438, %v4440
      %v4442 = vrot.slane %v4334, 1
      %v4443 = vrot.slane %v4262, 1
      %v4444 = vsel %vm2636, %v4442, %v4443
      %v4445 = vrot.slane %v4350, 1
      %v4446 = vsel %vm2636, %v4443, %v4445
      %v4447 = vrot.slane %v4335, 1
      %v4448 = vrot.slane %v4265, 1
      %v4449 = vsel %vm2636, %v4447, %v4448
      %v4450 = vrot.slane %v4351, 1
      %v4451 = vsel %vm2636, %v4448, %v4450
      %v4452 = vrot.slane %v4336, 1
      %v4453 = vrot.slane %v4268, 1
      %v4454 = vsel %vm2636, %v4452, %v4453
      %v4455 = vrot.slane %v4352, 1
      %v4456 = vsel %vm2636, %v4453, %v4455
      %v4457 = vrot.slane %v4337, 1
      %v4458 = vrot.slane %v4271, 1
      %v4459 = vsel %vm2636, %v4457, %v4458
      %v4460 = vrot.slane %v4353, 1
      %v4461 = vsel %vm2636, %v4458, %v4460
      %v4462 = vrot.slane %v4338, 1
      %v4463 = vrot.slane %v4274, 1
      %v4464 = vsel %vm2636, %v4462, %v4463
      %v4465 = vrot.slane %v4354, 1
      %v4466 = vsel %vm2636, %v4463, %v4465
      %v4499 = vmax.f32 %v4323, %v4389
      %v4500 = vmax.f32 %v4229, %v4391
      %v4501 = vmax.f32 %v4324, %v4394
      %v4502 = vmax.f32 %v4232, %v4396
      %v4503 = vmax.f32 %v4325, %v4399
      %v4504 = vmax.f32 %v4235, %v4401
      %v4505 = vmax.f32 %v4326, %v4404
      %v4506 = vmax.f32 %v4238, %v4406
      %v4507 = vmax.f32 %v4327, %v4409
      %v4508 = vmax.f32 %v4241, %v4411
      %v4509 = vmax.f32 %v4328, %v4414
      %v4510 = vmax.f32 %v4244, %v4416
      %v4511 = vmax.f32 %v4329, %v4419
      %v4512 = vmax.f32 %v4247, %v4421
      %v4513 = vmax.f32 %v4330, %v4424
      %v4514 = vmax.f32 %v4250, %v4426
      %v4515 = vmax.f32 %v4331, %v4429
      %v4516 = vmax.f32 %v4253, %v4431
      %v4517 = vmax.f32 %v4332, %v4434
      %v4518 = vmax.f32 %v4256, %v4436
      %v4519 = vmax.f32 %v4333, %v4439
      %v4520 = vmax.f32 %v4259, %v4441
      %v4521 = vmax.f32 %v4334, %v4444
      %v4522 = vmax.f32 %v4262, %v4446
      %v4523 = vmax.f32 %v4335, %v4449
      %v4524 = vmax.f32 %v4265, %v4451
      %v4525 = vmax.f32 %v4336, %v4454
      %v4526 = vmax.f32 %v4268, %v4456
      %v4527 = vmax.f32 %v4337, %v4459
      %v4528 = vmax.f32 %v4271, %v4461
      %v4529 = vmax.f32 %v4338, %v4464
      %v4530 = vmax.f32 %v4274, %v4466
      %v4531 = vrot.slane %v4323, 2
      %v4532 = vrot.slane %v4229, 2
      %v4533 = vsel %vm2781, %v4531, %v4532
      %v4534 = vrot.slane %v4339, 2
      %v4535 = vsel %vm2781, %v4532, %v4534
      %v4536 = vrot.slane %v4324, 2
      %v4537 = vrot.slane %v4232, 2
      %v4538 = vsel %vm2781, %v4536, %v4537
      %v4539 = vrot.slane %v4340, 2
      %v4540 = vsel %vm2781, %v4537, %v4539
      %v4541 = vrot.slane %v4325, 2
      %v4542 = vrot.slane %v4235, 2
      %v4543 = vsel %vm2781, %v4541, %v4542
      %v4544 = vrot.slane %v4341, 2
      %v4545 = vsel %vm2781, %v4542, %v4544
      %v4546 = vrot.slane %v4326, 2
      %v4547 = vrot.slane %v4238, 2
      %v4548 = vsel %vm2781, %v4546, %v4547
      %v4549 = vrot.slane %v4342, 2
      %v4550 = vsel %vm2781, %v4547, %v4549
      %v4551 = vrot.slane %v4327, 2
      %v4552 = vrot.slane %v4241, 2
      %v4553 = vsel %vm2781, %v4551, %v4552
      %v4554 = vrot.slane %v4343, 2
      %v4555 = vsel %vm2781, %v4552, %v4554
      %v4556 = vrot.slane %v4328, 2
      %v4557 = vrot.slane %v4244, 2
      %v4558 = vsel %vm2781, %v4556, %v4557
      %v4559 = vrot.slane %v4344, 2
      %v4560 = vsel %vm2781, %v4557, %v4559
      %v4561 = vrot.slane %v4329, 2
      %v4562 = vrot.slane %v4247, 2
      %v4563 = vsel %vm2781, %v4561, %v4562
      %v4564 = vrot.slane %v4345, 2
      %v4565 = vsel %vm2781, %v4562, %v4564
      %v4566 = vrot.slane %v4330, 2
      %v4567 = vrot.slane %v4250, 2
      %v4568 = vsel %vm2781, %v4566, %v4567
      %v4569 = vrot.slane %v4346, 2
      %v4570 = vsel %vm2781, %v4567, %v4569
      %v4571 = vrot.slane %v4331, 2
      %v4572 = vrot.slane %v4253, 2
      %v4573 = vsel %vm2781, %v4571, %v4572
      %v4574 = vrot.slane %v4347, 2
      %v4575 = vsel %vm2781, %v4572, %v4574
      %v4576 = vrot.slane %v4332, 2
      %v4577 = vrot.slane %v4256, 2
      %v4578 = vsel %vm2781, %v4576, %v4577
      %v4579 = vrot.slane %v4348, 2
      %v4580 = vsel %vm2781, %v4577, %v4579
      %v4581 = vrot.slane %v4333, 2
      %v4582 = vrot.slane %v4259, 2
      %v4583 = vsel %vm2781, %v4581, %v4582
      %v4584 = vrot.slane %v4349, 2
      %v4585 = vsel %vm2781, %v4582, %v4584
      %v4586 = vrot.slane %v4334, 2
      %v4587 = vrot.slane %v4262, 2
      %v4588 = vsel %vm2781, %v4586, %v4587
      %v4589 = vrot.slane %v4350, 2
      %v4590 = vsel %vm2781, %v4587, %v4589
      %v4591 = vrot.slane %v4335, 2
      %v4592 = vrot.slane %v4265, 2
      %v4593 = vsel %vm2781, %v4591, %v4592
      %v4594 = vrot.slane %v4351, 2
      %v4595 = vsel %vm2781, %v4592, %v4594
      %v4596 = vrot.slane %v4336, 2
      %v4597 = vrot.slane %v4268, 2
      %v4598 = vsel %vm2781, %v4596, %v4597
      %v4599 = vrot.slane %v4352, 2
      %v4600 = vsel %vm2781, %v4597, %v4599
      %v4601 = vrot.slane %v4337, 2
      %v4602 = vrot.slane %v4271, 2
      %v4603 = vsel %vm2781, %v4601, %v4602
      %v4604 = vrot.slane %v4353, 2
      %v4605 = vsel %vm2781, %v4602, %v4604
      %v4606 = vrot.slane %v4338, 2
      %v4607 = vrot.slane %v4274, 2
      %v4608 = vsel %vm2781, %v4606, %v4607
      %v4609 = vrot.slane %v4354, 2
      %v4610 = vsel %vm2781, %v4607, %v4609
      %v4643 = vmax.f32 %v4499, %v4533
      %v4644 = vmax.f32 %v4500, %v4535
      %v4645 = vmax.f32 %v4501, %v4538
      %v4646 = vmax.f32 %v4502, %v4540
      %v4647 = vmax.f32 %v4503, %v4543
      %v4648 = vmax.f32 %v4504, %v4545
      %v4649 = vmax.f32 %v4505, %v4548
      %v4650 = vmax.f32 %v4506, %v4550
      %v4651 = vmax.f32 %v4507, %v4553
      %v4652 = vmax.f32 %v4508, %v4555
      %v4653 = vmax.f32 %v4509, %v4558
      %v4654 = vmax.f32 %v4510, %v4560
      %v4655 = vmax.f32 %v4511, %v4563
      %v4656 = vmax.f32 %v4512, %v4565
      %v4657 = vmax.f32 %v4513, %v4568
      %v4658 = vmax.f32 %v4514, %v4570
      %v4659 = vmax.f32 %v4515, %v4573
      %v4660 = vmax.f32 %v4516, %v4575
      %v4661 = vmax.f32 %v4517, %v4578
      %v4662 = vmax.f32 %v4518, %v4580
      %v4663 = vmax.f32 %v4519, %v4583
      %v4664 = vmax.f32 %v4520, %v4585
      %v4665 = vmax.f32 %v4521, %v4588
      %v4666 = vmax.f32 %v4522, %v4590
      %v4667 = vmax.f32 %v4523, %v4593
      %v4668 = vmax.f32 %v4524, %v4595
      %v4669 = vmax.f32 %v4525, %v4598
      %v4670 = vmax.f32 %v4526, %v4600
      %v4671 = vmax.f32 %v4527, %v4603
      %v4672 = vmax.f32 %v4528, %v4605
      %v4673 = vmax.f32 %v4529, %v4608
      %v4674 = vmax.f32 %v4530, %v4610
      %v4675 = vrot.slane %v4323, 3
      %v4676 = vrot.slane %v4229, 3
      %v4677 = vsel %vm2926, %v4675, %v4676
      %v4678 = vrot.slane %v4339, 3
      %v4679 = vsel %vm2926, %v4676, %v4678
      %v4680 = vrot.slane %v4324, 3
      %v4681 = vrot.slane %v4232, 3
      %v4682 = vsel %vm2926, %v4680, %v4681
      %v4683 = vrot.slane %v4340, 3
      %v4684 = vsel %vm2926, %v4681, %v4683
      %v4685 = vrot.slane %v4325, 3
      %v4686 = vrot.slane %v4235, 3
      %v4687 = vsel %vm2926, %v4685, %v4686
      %v4688 = vrot.slane %v4341, 3
      %v4689 = vsel %vm2926, %v4686, %v4688
      %v4690 = vrot.slane %v4326, 3
      %v4691 = vrot.slane %v4238, 3
      %v4692 = vsel %vm2926, %v4690, %v4691
      %v4693 = vrot.slane %v4342, 3
      %v4694 = vsel %vm2926, %v4691, %v4693
      %v4695 = vrot.slane %v4327, 3
      %v4696 = vrot.slane %v4241, 3
      %v4697 = vsel %vm2926, %v4695, %v4696
      %v4698 = vrot.slane %v4343, 3
      %v4699 = vsel %vm2926, %v4696, %v4698
      %v4700 = vrot.slane %v4328, 3
      %v4701 = vrot.slane %v4244, 3
      %v4702 = vsel %vm2926, %v4700, %v4701
      %v4703 = vrot.slane %v4344, 3
      %v4704 = vsel %vm2926, %v4701, %v4703
      %v4705 = vrot.slane %v4329, 3
      %v4706 = vrot.slane %v4247, 3
      %v4707 = vsel %vm2926, %v4705, %v4706
      %v4708 = vrot.slane %v4345, 3
      %v4709 = vsel %vm2926, %v4706, %v4708
      %v4710 = vrot.slane %v4330, 3
      %v4711 = vrot.slane %v4250, 3
      %v4712 = vsel %vm2926, %v4710, %v4711
      %v4713 = vrot.slane %v4346, 3
      %v4714 = vsel %vm2926, %v4711, %v4713
      %v4715 = vrot.slane %v4331, 3
      %v4716 = vrot.slane %v4253, 3
      %v4717 = vsel %vm2926, %v4715, %v4716
      %v4718 = vrot.slane %v4347, 3
      %v4719 = vsel %vm2926, %v4716, %v4718
      %v4720 = vrot.slane %v4332, 3
      %v4721 = vrot.slane %v4256, 3
      %v4722 = vsel %vm2926, %v4720, %v4721
      %v4723 = vrot.slane %v4348, 3
      %v4724 = vsel %vm2926, %v4721, %v4723
      %v4725 = vrot.slane %v4333, 3
      %v4726 = vrot.slane %v4259, 3
      %v4727 = vsel %vm2926, %v4725, %v4726
      %v4728 = vrot.slane %v4349, 3
      %v4729 = vsel %vm2926, %v4726, %v4728
      %v4730 = vrot.slane %v4334, 3
      %v4731 = vrot.slane %v4262, 3
      %v4732 = vsel %vm2926, %v4730, %v4731
      %v4733 = vrot.slane %v4350, 3
      %v4734 = vsel %vm2926, %v4731, %v4733
      %v4735 = vrot.slane %v4335, 3
      %v4736 = vrot.slane %v4265, 3
      %v4737 = vsel %vm2926, %v4735, %v4736
      %v4738 = vrot.slane %v4351, 3
      %v4739 = vsel %vm2926, %v4736, %v4738
      %v4740 = vrot.slane %v4336, 3
      %v4741 = vrot.slane %v4268, 3
      %v4742 = vsel %vm2926, %v4740, %v4741
      %v4743 = vrot.slane %v4352, 3
      %v4744 = vsel %vm2926, %v4741, %v4743
      %v4745 = vrot.slane %v4337, 3
      %v4746 = vrot.slane %v4271, 3
      %v4747 = vsel %vm2926, %v4745, %v4746
      %v4748 = vrot.slane %v4353, 3
      %v4749 = vsel %vm2926, %v4746, %v4748
      %v4750 = vrot.slane %v4338, 3
      %v4751 = vrot.slane %v4274, 3
      %v4752 = vsel %vm2926, %v4750, %v4751
      %v4753 = vrot.slane %v4354, 3
      %v4754 = vsel %vm2926, %v4751, %v4753
      %v4787 = vmax.f32 %v4643, %v4677
      %v4788 = vmax.f32 %v4644, %v4679
      %v4789 = vmax.f32 %v4645, %v4682
      %v4790 = vmax.f32 %v4646, %v4684
      %v4791 = vmax.f32 %v4647, %v4687
      %v4792 = vmax.f32 %v4648, %v4689
      %v4793 = vmax.f32 %v4649, %v4692
      %v4794 = vmax.f32 %v4650, %v4694
      %v4795 = vmax.f32 %v4651, %v4697
      %v4796 = vmax.f32 %v4652, %v4699
      %v4797 = vmax.f32 %v4653, %v4702
      %v4798 = vmax.f32 %v4654, %v4704
      %v4799 = vmax.f32 %v4655, %v4707
      %v4800 = vmax.f32 %v4656, %v4709
      %v4801 = vmax.f32 %v4657, %v4712
      %v4802 = vmax.f32 %v4658, %v4714
      %v4803 = vmax.f32 %v4659, %v4717
      %v4804 = vmax.f32 %v4660, %v4719
      %v4805 = vmax.f32 %v4661, %v4722
      %v4806 = vmax.f32 %v4662, %v4724
      %v4807 = vmax.f32 %v4663, %v4727
      %v4808 = vmax.f32 %v4664, %v4729
      %v4809 = vmax.f32 %v4665, %v4732
      %v4810 = vmax.f32 %v4666, %v4734
      %v4811 = vmax.f32 %v4667, %v4737
      %v4812 = vmax.f32 %v4668, %v4739
      %v4813 = vmax.f32 %v4669, %v4742
      %v4814 = vmax.f32 %v4670, %v4744
      %v4815 = vmax.f32 %v4671, %v4747
      %v4816 = vmax.f32 %v4672, %v4749
      %v4817 = vmax.f32 %v4673, %v4752
      %v4818 = vmax.f32 %v4674, %v4754
      %v4819 = vrot.slane %v4323, 4
      %v4820 = vrot.slane %v4229, 4
      %v4821 = vsel %vm362, %v4819, %v4820
      %v4822 = vrot.slane %v4339, 4
      %v4823 = vsel %vm362, %v4820, %v4822
      %v4824 = vrot.slane %v4324, 4
      %v4825 = vrot.slane %v4232, 4
      %v4826 = vsel %vm362, %v4824, %v4825
      %v4827 = vrot.slane %v4340, 4
      %v4828 = vsel %vm362, %v4825, %v4827
      %v4829 = vrot.slane %v4325, 4
      %v4830 = vrot.slane %v4235, 4
      %v4831 = vsel %vm362, %v4829, %v4830
      %v4832 = vrot.slane %v4341, 4
      %v4833 = vsel %vm362, %v4830, %v4832
      %v4834 = vrot.slane %v4326, 4
      %v4835 = vrot.slane %v4238, 4
      %v4836 = vsel %vm362, %v4834, %v4835
      %v4837 = vrot.slane %v4342, 4
      %v4838 = vsel %vm362, %v4835, %v4837
      %v4839 = vrot.slane %v4327, 4
      %v4840 = vrot.slane %v4241, 4
      %v4841 = vsel %vm362, %v4839, %v4840
      %v4842 = vrot.slane %v4343, 4
      %v4843 = vsel %vm362, %v4840, %v4842
      %v4844 = vrot.slane %v4328, 4
      %v4845 = vrot.slane %v4244, 4
      %v4846 = vsel %vm362, %v4844, %v4845
      %v4847 = vrot.slane %v4344, 4
      %v4848 = vsel %vm362, %v4845, %v4847
      %v4849 = vrot.slane %v4329, 4
      %v4850 = vrot.slane %v4247, 4
      %v4851 = vsel %vm362, %v4849, %v4850
      %v4852 = vrot.slane %v4345, 4
      %v4853 = vsel %vm362, %v4850, %v4852
      %v4854 = vrot.slane %v4330, 4
      %v4855 = vrot.slane %v4250, 4
      %v4856 = vsel %vm362, %v4854, %v4855
      %v4857 = vrot.slane %v4346, 4
      %v4858 = vsel %vm362, %v4855, %v4857
      %v4859 = vrot.slane %v4331, 4
      %v4860 = vrot.slane %v4253, 4
      %v4861 = vsel %vm362, %v4859, %v4860
      %v4862 = vrot.slane %v4347, 4
      %v4863 = vsel %vm362, %v4860, %v4862
      %v4864 = vrot.slane %v4332, 4
      %v4865 = vrot.slane %v4256, 4
      %v4866 = vsel %vm362, %v4864, %v4865
      %v4867 = vrot.slane %v4348, 4
      %v4868 = vsel %vm362, %v4865, %v4867
      %v4869 = vrot.slane %v4333, 4
      %v4870 = vrot.slane %v4259, 4
      %v4871 = vsel %vm362, %v4869, %v4870
      %v4872 = vrot.slane %v4349, 4
      %v4873 = vsel %vm362, %v4870, %v4872
      %v4874 = vrot.slane %v4334, 4
      %v4875 = vrot.slane %v4262, 4
      %v4876 = vsel %vm362, %v4874, %v4875
      %v4877 = vrot.slane %v4350, 4
      %v4878 = vsel %vm362, %v4875, %v4877
      %v4879 = vrot.slane %v4335, 4
      %v4880 = vrot.slane %v4265, 4
      %v4881 = vsel %vm362, %v4879, %v4880
      %v4882 = vrot.slane %v4351, 4
      %v4883 = vsel %vm362, %v4880, %v4882
      %v4884 = vrot.slane %v4336, 4
      %v4885 = vrot.slane %v4268, 4
      %v4886 = vsel %vm362, %v4884, %v4885
      %v4887 = vrot.slane %v4352, 4
      %v4888 = vsel %vm362, %v4885, %v4887
      %v4889 = vrot.slane %v4337, 4
      %v4890 = vrot.slane %v4271, 4
      %v4891 = vsel %vm362, %v4889, %v4890
      %v4892 = vrot.slane %v4353, 4
      %v4893 = vsel %vm362, %v4890, %v4892
      %v4894 = vrot.slane %v4338, 4
      %v4895 = vrot.slane %v4274, 4
      %v4896 = vsel %vm362, %v4894, %v4895
      %v4897 = vrot.slane %v4354, 4
      %v4898 = vsel %vm362, %v4895, %v4897
      %v4931 = vmax.f32 %v4787, %v4821
      %v4932 = vmax.f32 %v4788, %v4823
      %v4933 = vmax.f32 %v4789, %v4826
      %v4934 = vmax.f32 %v4790, %v4828
      %v4935 = vmax.f32 %v4791, %v4831
      %v4936 = vmax.f32 %v4792, %v4833
      %v4937 = vmax.f32 %v4793, %v4836
      %v4938 = vmax.f32 %v4794, %v4838
      %v4939 = vmax.f32 %v4795, %v4841
      %v4940 = vmax.f32 %v4796, %v4843
      %v4941 = vmax.f32 %v4797, %v4846
      %v4942 = vmax.f32 %v4798, %v4848
      %v4943 = vmax.f32 %v4799, %v4851
      %v4944 = vmax.f32 %v4800, %v4853
      %v4945 = vmax.f32 %v4801, %v4856
      %v4946 = vmax.f32 %v4802, %v4858
      %v4947 = vmax.f32 %v4803, %v4861
      %v4948 = vmax.f32 %v4804, %v4863
      %v4949 = vmax.f32 %v4805, %v4866
      %v4950 = vmax.f32 %v4806, %v4868
      %v4951 = vmax.f32 %v4807, %v4871
      %v4952 = vmax.f32 %v4808, %v4873
      %v4953 = vmax.f32 %v4809, %v4876
      %v4954 = vmax.f32 %v4810, %v4878
      %v4955 = vmax.f32 %v4811, %v4881
      %v4956 = vmax.f32 %v4812, %v4883
      %v4957 = vmax.f32 %v4813, %v4886
      %v4958 = vmax.f32 %v4814, %v4888
      %v4959 = vmax.f32 %v4815, %v4891
      %v4960 = vmax.f32 %v4816, %v4893
      %v4961 = vmax.f32 %v4817, %v4896
      %v4962 = vmax.f32 %v4818, %v4898
      %v4963 = vld [vmem:[%s3] sm:$0xff]
      %v4965 = vrot.slane %v4963, 2
      %vm4966 = vcmask 15360
      %v4968 = vsel %vm4966, %v3183, 0
      %v4971 = vsel %vm4966, %v3184, 0
      %v4974 = vsel %vm4966, %v3185, 0
      %v4977 = vsel %vm4966, %v3186, 0
      %v4980 = vsel %vm4966, %v3187, 0
      %v4983 = vsel %vm4966, %v3188, 0
      %v4986 = vsel %vm4966, %v3189, 0
      %v4989 = vsel %vm4966, %v3190, 0
      %v4992 = vsel %vm4966, %v3191, 0
      %v4995 = vsel %vm4966, %v3192, 0
      %v4998 = vsel %vm4966, %v3193, 0
      %v5001 = vsel %vm4966, %v3194, 0
      %v5004 = vsel %vm4966, %v3195, 0
      %v5007 = vsel %vm4966, %v3196, 0
      %v5010 = vsel %vm4966, %v3197, 0
      %v5013 = vsel %vm4966, %v3198, 0
      %v5016 = vsel %vm4966, %v3199, 0
      %v5019 = vsel %vm4966, %v3200, 0
      %v5022 = vsel %vm4966, %v3201, 0
      %v5025 = vsel %vm4966, %v3202, 0
      %v5028 = vsel %vm4966, %v3203, 0
      %v5031 = vsel %vm4966, %v3204, 0
      %v5034 = vsel %vm4966, %v3205, 0
      %v5037 = vsel %vm4966, %v3206, 0
      %v5040 = vsel %vm4966, %v3207, 0
      %v5043 = vsel %vm4966, %v3208, 0
      %v5046 = vsel %vm4966, %v3209, 0
      %v5049 = vsel %vm4966, %v3210, 0
      %v5052 = vsel %vm4966, %v3211, 0
      %v5055 = vsel %vm4966, %v3212, 0
      %v5058 = vsel %vm4966, %v3213, 0
      %v5061 = vsel %vm4966, %v3214, 0
      %v5063 = vsel %vm2475, %v4965, 0
      %5065 = vmatprep.subr.mxu0 0.0
      %5066 = vmatpush1.msra.mxu0 0.0
      %5067 = vmatprep.subr.mxu0 0.0
      %5068 = vmatpush1.msra.mxu0 0.0
      %5069 = vmatprep.subr.mxu0 0.0
      %5070 = vmatpush1.msra.mxu0 0.0
      %5071 = vmatprep.subr.mxu0 0.0
      %5072 = vmatpush1.msra.mxu0 0.0
      %5073 = vmatprep.subr.mxu0 0.0
      %5074 = vmatpush1.msra.mxu0 0.0
      %5075 = vmatprep.subr.mxu0 0.0
      %5076 = vmatpush1.msra.mxu0 0.0
      %5077 = vmatprep.subr.mxu0 0.0
      %5078 = vmatpush1.msra.mxu0 0.0
      %5079 = vmatprep.subr.mxu0 0.0
      %5080 = vmatpush1.msra.mxu0 0.0
      %5081 = vmatprep.subr.mxu0 0.0
      %5082 = vmatpush1.msra.mxu0 0.0
      %5083 = vmatprep.subr.mxu0 0.0
      %5084 = vmatpush1.msra.mxu0 0.0
      %5085 = vmatprep.subr.mxu0 0.0
      %5086 = vmatpush1.msra.mxu0 0.0
      %5087 = vmatprep.subr.mxu0 0.0
      %5088 = vmatpush1.msra.mxu0 0.0
      %5089 = vmatprep.subr.mxu0 0.0
      %5090 = vmatpush1.msra.mxu0 0.0
      %5091 = vmatprep.subr.mxu0 0.0
      %5092 = vmatpush1.msra.mxu0 0.0
      %5093 = vmatprep.subr.mxu0 0.0
      %5094 = vmatpush1.msra.mxu0 0.0
      %5095 = vmatprep.subr.mxu0 0.0
      %v5096 = vand.u32 %v5063, 4294901760
      %5097 = vmatpush1.msra.mxu0 %v5096
      %5098 = vmatprep.subr.mxu0 0.0
      %5099 = vmatpush2.msra.mxu0 0.0
      %5100 = vmatprep.subr.mxu0 0.0
      %5101 = vmatpush2.msra.mxu0 0.0
      %5102 = vmatprep.subr.mxu0 0.0
      %5103 = vmatpush2.msra.mxu0 0.0
      %5104 = vmatprep.subr.mxu0 0.0
      %5105 = vmatpush2.msra.mxu0 0.0
      %5106 = vmatprep.subr.mxu0 0.0
      %5107 = vmatpush2.msra.mxu0 0.0
      %5108 = vmatprep.subr.mxu0 0.0
      %5109 = vmatpush2.msra.mxu0 0.0
      %5110 = vmatprep.subr.mxu0 0.0
      %5111 = vmatpush2.msra.mxu0 0.0
      %5112 = vmatprep.subr.mxu0 0.0
      %5113 = vmatpush2.msra.mxu0 0.0
      %5114 = vmatprep.subr.mxu0 0.0
      %5115 = vmatpush2.msra.mxu0 0.0
      %5116 = vmatprep.subr.mxu0 0.0
      %5117 = vmatpush2.msra.mxu0 0.0
      %5118 = vmatprep.subr.mxu0 0.0
      %5119 = vmatpush2.msra.mxu0 0.0
      %5120 = vmatprep.subr.mxu0 0.0
      %5121 = vmatpush2.msra.mxu0 0.0
      %5122 = vmatprep.subr.mxu0 0.0
      %5123 = vmatpush2.msra.mxu0 0.0
      %5124 = vmatprep.subr.mxu0 0.0
      %5125 = vmatpush2.msra.mxu0 0.0
      %5126 = vmatprep.subr.mxu0 0.0
      %5127 = vmatpush2.msra.mxu0 0.0
      %5128 = vmatprep.subr.mxu0 0.0
      %5129 = vmatpush2.msra.mxu0 0.0
      %5130 = vmatprep.mubr.f32.mxu0 0.0
      %v5131 = vand.u32 %v4968, 4294901760
      %v5132 = vsub.f32 %v4968, %v5131
      %v5133 = vand.u32 %v5132, 4294901760
      %v5134 = vsub.f32 %v5132, %v5133
      %v5135 = vand.u32 %v5134, 4294901760
      %5136 = vmatmul.mubr.f32.gmra.mxu0 %v5135
      %v5137 = vpop.f32.mrf.mxu0
      %v5138 = vadd.f32 0.0, %v5137
      %v5139 = vpop.f32.mrf.mxu0
      %5140 = vmatprep.mubr.f32.mxu0 0.0
      %v5141 = vand.u32 %v4971, 4294901760
      %v5142 = vsub.f32 %v4971, %v5141
      %v5143 = vand.u32 %v5142, 4294901760
      %v5144 = vsub.f32 %v5142, %v5143
      %v5145 = vand.u32 %v5144, 4294901760
      %5146 = vmatmul.mubr.f32.gmra.mxu0 %v5145
      %v5147 = vpop.f32.mrf.mxu0
      %v5148 = vadd.f32 0.0, %v5147
      %v5149 = vpop.f32.mrf.mxu0
      %5150 = vmatprep.mubr.f32.mxu0 0.0
      %v5151 = vand.u32 %v4974, 4294901760
      %v5152 = vsub.f32 %v4974, %v5151
      %v5153 = vand.u32 %v5152, 4294901760
      %v5154 = vsub.f32 %v5152, %v5153
      %v5155 = vand.u32 %v5154, 4294901760
      %5156 = vmatmul.mubr.f32.gmra.mxu0 %v5155
      %v5157 = vpop.f32.mrf.mxu0
      %v5158 = vadd.f32 0.0, %v5157
      %v5159 = vpop.f32.mrf.mxu0
      %5160 = vmatprep.mubr.f32.mxu0 0.0
      %v5161 = vand.u32 %v4977, 4294901760
      %v5162 = vsub.f32 %v4977, %v5161
      %v5163 = vand.u32 %v5162, 4294901760
      %v5164 = vsub.f32 %v5162, %v5163
      %v5165 = vand.u32 %v5164, 4294901760
      %5166 = vmatmul.mubr.f32.gmra.mxu0 %v5165
      %v5167 = vpop.f32.mrf.mxu0
      %v5168 = vadd.f32 0.0, %v5167
      %v5169 = vpop.f32.mrf.mxu0
      %5170 = vmatprep.mubr.f32.mxu0 0.0
      %v5171 = vand.u32 %v4980, 4294901760
      %v5172 = vsub.f32 %v4980, %v5171
      %v5173 = vand.u32 %v5172, 4294901760
      %v5174 = vsub.f32 %v5172, %v5173
      %v5175 = vand.u32 %v5174, 4294901760
      %5176 = vmatmul.mubr.f32.gmra.mxu0 %v5175
      %v5177 = vpop.f32.mrf.mxu0
      %v5178 = vadd.f32 0.0, %v5177
      %v5179 = vpop.f32.mrf.mxu0
      %5180 = vmatprep.mubr.f32.mxu0 0.0
      %v5181 = vand.u32 %v4983, 4294901760
      %v5182 = vsub.f32 %v4983, %v5181
      %v5183 = vand.u32 %v5182, 4294901760
      %v5184 = vsub.f32 %v5182, %v5183
      %v5185 = vand.u32 %v5184, 4294901760
      %5186 = vmatmul.mubr.f32.gmra.mxu0 %v5185
      %v5187 = vpop.f32.mrf.mxu0
      %v5188 = vadd.f32 0.0, %v5187
      %v5189 = vpop.f32.mrf.mxu0
      %5190 = vmatprep.mubr.f32.mxu0 0.0
      %v5191 = vand.u32 %v4986, 4294901760
      %v5192 = vsub.f32 %v4986, %v5191
      %v5193 = vand.u32 %v5192, 4294901760
      %v5194 = vsub.f32 %v5192, %v5193
      %v5195 = vand.u32 %v5194, 4294901760
      %5196 = vmatmul.mubr.f32.gmra.mxu0 %v5195
      %v5197 = vpop.f32.mrf.mxu0
      %v5198 = vadd.f32 0.0, %v5197
      %v5199 = vpop.f32.mrf.mxu0
      %5200 = vmatprep.mubr.f32.mxu0 0.0
      %v5201 = vand.u32 %v4989, 4294901760
      %v5202 = vsub.f32 %v4989, %v5201
      %v5203 = vand.u32 %v5202, 4294901760
      %v5204 = vsub.f32 %v5202, %v5203
      %v5205 = vand.u32 %v5204, 4294901760
      %5206 = vmatmul.mubr.f32.gmra.mxu0 %v5205
      %v5207 = vpop.f32.mrf.mxu0
      %v5208 = vadd.f32 0.0, %v5207
      %v5209 = vpop.f32.mrf.mxu0
      %5210 = vmatprep.mubr.f32.mxu0 0.0
      %v5211 = vand.u32 %v4992, 4294901760
      %v5212 = vsub.f32 %v4992, %v5211
      %v5213 = vand.u32 %v5212, 4294901760
      %v5214 = vsub.f32 %v5212, %v5213
      %v5215 = vand.u32 %v5214, 4294901760
      %5216 = vmatmul.mubr.f32.gmra.mxu0 %v5215
      %v5217 = vpop.f32.mrf.mxu0
      %v5218 = vadd.f32 0.0, %v5217
      %v5219 = vpop.f32.mrf.mxu0
      %5220 = vmatprep.mubr.f32.mxu0 0.0
      %v5221 = vand.u32 %v4995, 4294901760
      %v5222 = vsub.f32 %v4995, %v5221
      %v5223 = vand.u32 %v5222, 4294901760
      %v5224 = vsub.f32 %v5222, %v5223
      %v5225 = vand.u32 %v5224, 4294901760
      %5226 = vmatmul.mubr.f32.gmra.mxu0 %v5225
      %v5227 = vpop.f32.mrf.mxu0
      %v5228 = vadd.f32 0.0, %v5227
      %v5229 = vpop.f32.mrf.mxu0
      %5230 = vmatprep.mubr.f32.mxu0 0.0
      %v5231 = vand.u32 %v4998, 4294901760
      %v5232 = vsub.f32 %v4998, %v5231
      %v5233 = vand.u32 %v5232, 4294901760
      %v5234 = vsub.f32 %v5232, %v5233
      %v5235 = vand.u32 %v5234, 4294901760
      %5236 = vmatmul.mubr.f32.gmra.mxu0 %v5235
      %v5237 = vpop.f32.mrf.mxu0
      %v5238 = vadd.f32 0.0, %v5237
      %v5239 = vpop.f32.mrf.mxu0
      %5240 = vmatprep.mubr.f32.mxu0 0.0
      %v5241 = vand.u32 %v5001, 4294901760
      %v5242 = vsub.f32 %v5001, %v5241
      %v5243 = vand.u32 %v5242, 4294901760
      %v5244 = vsub.f32 %v5242, %v5243
      %v5245 = vand.u32 %v5244, 4294901760
      %5246 = vmatmul.mubr.f32.gmra.mxu0 %v5245
      %v5247 = vpop.f32.mrf.mxu0
      %v5248 = vadd.f32 0.0, %v5247
      %v5249 = vpop.f32.mrf.mxu0
      %5250 = vmatprep.mubr.f32.mxu0 0.0
      %v5251 = vand.u32 %v5004, 4294901760
      %v5252 = vsub.f32 %v5004, %v5251
      %v5253 = vand.u32 %v5252, 4294901760
      %v5254 = vsub.f32 %v5252, %v5253
      %v5255 = vand.u32 %v5254, 4294901760
      %5256 = vmatmul.mubr.f32.gmra.mxu0 %v5255
      %v5257 = vpop.f32.mrf.mxu0
      %v5258 = vadd.f32 0.0, %v5257
      %v5259 = vpop.f32.mrf.mxu0
      %5260 = vmatprep.mubr.f32.mxu0 0.0
      %v5261 = vand.u32 %v5007, 4294901760
      %v5262 = vsub.f32 %v5007, %v5261
      %v5263 = vand.u32 %v5262, 4294901760
      %v5264 = vsub.f32 %v5262, %v5263
      %v5265 = vand.u32 %v5264, 4294901760
      %5266 = vmatmul.mubr.f32.gmra.mxu0 %v5265
      %v5267 = vpop.f32.mrf.mxu0
      %v5268 = vadd.f32 0.0, %v5267
      %v5269 = vpop.f32.mrf.mxu0
      %5270 = vmatprep.mubr.f32.mxu0 0.0
      %v5271 = vand.u32 %v5010, 4294901760
      %v5272 = vsub.f32 %v5010, %v5271
      %v5273 = vand.u32 %v5272, 4294901760
      %v5274 = vsub.f32 %v5272, %v5273
      %v5275 = vand.u32 %v5274, 4294901760
      %5276 = vmatmul.mubr.f32.gmra.mxu0 %v5275
      %v5277 = vpop.f32.mrf.mxu0
      %v5278 = vadd.f32 0.0, %v5277
      %v5279 = vpop.f32.mrf.mxu0
      %5280 = vmatprep.mubr.f32.mxu0 0.0
      %v5281 = vand.u32 %v5013, 4294901760
      %v5282 = vsub.f32 %v5013, %v5281
      %v5283 = vand.u32 %v5282, 4294901760
      %v5284 = vsub.f32 %v5282, %v5283
      %v5285 = vand.u32 %v5284, 4294901760
      %5286 = vmatmul.mubr.f32.gmra.mxu0 %v5285
      %v5287 = vpop.f32.mrf.mxu0
      %v5288 = vadd.f32 0.0, %v5287
      %v5289 = vpop.f32.mrf.mxu0
      %5290 = vmatprep.mubr.f32.mxu0 0.0
      %v5291 = vand.u32 %v5016, 4294901760
      %v5292 = vsub.f32 %v5016, %v5291
      %v5293 = vand.u32 %v5292, 4294901760
      %v5294 = vsub.f32 %v5292, %v5293
      %v5295 = vand.u32 %v5294, 4294901760
      %5296 = vmatmul.mubr.f32.gmra.mxu0 %v5295
      %v5297 = vpop.f32.mrf.mxu0
      %v5298 = vadd.f32 0.0, %v5297
      %v5299 = vpop.f32.mrf.mxu0
      %5300 = vmatprep.mubr.f32.mxu0 0.0
      %v5301 = vand.u32 %v5019, 4294901760
      %v5302 = vsub.f32 %v5019, %v5301
      %v5303 = vand.u32 %v5302, 4294901760
      %v5304 = vsub.f32 %v5302, %v5303
      %v5305 = vand.u32 %v5304, 4294901760
      %5306 = vmatmul.mubr.f32.gmra.mxu0 %v5305
      %v5307 = vpop.f32.mrf.mxu0
      %v5308 = vadd.f32 0.0, %v5307
      %v5309 = vpop.f32.mrf.mxu0
      %5310 = vmatprep.mubr.f32.mxu0 0.0
      %v5311 = vand.u32 %v5022, 4294901760
      %v5312 = vsub.f32 %v5022, %v5311
      %v5313 = vand.u32 %v5312, 4294901760
      %v5314 = vsub.f32 %v5312, %v5313
      %v5315 = vand.u32 %v5314, 4294901760
      %5316 = vmatmul.mubr.f32.gmra.mxu0 %v5315
      %v5317 = vpop.f32.mrf.mxu0
      %v5318 = vadd.f32 0.0, %v5317
      %v5319 = vpop.f32.mrf.mxu0
      %5320 = vmatprep.mubr.f32.mxu0 0.0
      %v5321 = vand.u32 %v5025, 4294901760
      %v5322 = vsub.f32 %v5025, %v5321
      %v5323 = vand.u32 %v5322, 4294901760
      %v5324 = vsub.f32 %v5322, %v5323
      %v5325 = vand.u32 %v5324, 4294901760
      %5326 = vmatmul.mubr.f32.gmra.mxu0 %v5325
      %v5327 = vpop.f32.mrf.mxu0
      %v5328 = vadd.f32 0.0, %v5327
      %v5329 = vpop.f32.mrf.mxu0
      %5330 = vmatprep.mubr.f32.mxu0 0.0
      %v5331 = vand.u32 %v5028, 4294901760
      %v5332 = vsub.f32 %v5028, %v5331
      %v5333 = vand.u32 %v5332, 4294901760
      %v5334 = vsub.f32 %v5332, %v5333
      %v5335 = vand.u32 %v5334, 4294901760
      %5336 = vmatmul.mubr.f32.gmra.mxu0 %v5335
      %v5337 = vpop.f32.mrf.mxu0
      %v5338 = vadd.f32 0.0, %v5337
      %v5339 = vpop.f32.mrf.mxu0
      %5340 = vmatprep.mubr.f32.mxu0 0.0
      %v5341 = vand.u32 %v5031, 4294901760
      %v5342 = vsub.f32 %v5031, %v5341
      %v5343 = vand.u32 %v5342, 4294901760
      %v5344 = vsub.f32 %v5342, %v5343
      %v5345 = vand.u32 %v5344, 4294901760
      %5346 = vmatmul.mubr.f32.gmra.mxu0 %v5345
      %v5347 = vpop.f32.mrf.mxu0
      %v5348 = vadd.f32 0.0, %v5347
      %v5349 = vpop.f32.mrf.mxu0
      %5350 = vmatprep.mubr.f32.mxu0 0.0
      %v5351 = vand.u32 %v5034, 4294901760
      %v5352 = vsub.f32 %v5034, %v5351
      %v5353 = vand.u32 %v5352, 4294901760
      %v5354 = vsub.f32 %v5352, %v5353
      %v5355 = vand.u32 %v5354, 4294901760
      %5356 = vmatmul.mubr.f32.gmra.mxu0 %v5355
      %v5357 = vpop.f32.mrf.mxu0
      %v5358 = vadd.f32 0.0, %v5357
      %v5359 = vpop.f32.mrf.mxu0
      %5360 = vmatprep.mubr.f32.mxu0 0.0
      %v5361 = vand.u32 %v5037, 4294901760
      %v5362 = vsub.f32 %v5037, %v5361
      %v5363 = vand.u32 %v5362, 4294901760
      %v5364 = vsub.f32 %v5362, %v5363
      %v5365 = vand.u32 %v5364, 4294901760
      %5366 = vmatmul.mubr.f32.gmra.mxu0 %v5365
      %v5367 = vpop.f32.mrf.mxu0
      %v5368 = vadd.f32 0.0, %v5367
      %v5369 = vpop.f32.mrf.mxu0
      %5370 = vmatprep.mubr.f32.mxu0 0.0
      %v5371 = vand.u32 %v5040, 4294901760
      %v5372 = vsub.f32 %v5040, %v5371
      %v5373 = vand.u32 %v5372, 4294901760
      %v5374 = vsub.f32 %v5372, %v5373
      %v5375 = vand.u32 %v5374, 4294901760
      %5376 = vmatmul.mubr.f32.gmra.mxu0 %v5375
      %v5377 = vpop.f32.mrf.mxu0
      %v5378 = vadd.f32 0.0, %v5377
      %v5379 = vpop.f32.mrf.mxu0
      %5380 = vmatprep.mubr.f32.mxu0 0.0
      %v5381 = vand.u32 %v5043, 4294901760
      %v5382 = vsub.f32 %v5043, %v5381
      %v5383 = vand.u32 %v5382, 4294901760
      %v5384 = vsub.f32 %v5382, %v5383
      %v5385 = vand.u32 %v5384, 4294901760
      %5386 = vmatmul.mubr.f32.gmra.mxu0 %v5385
      %v5387 = vpop.f32.mrf.mxu0
      %v5388 = vadd.f32 0.0, %v5387
      %v5389 = vpop.f32.mrf.mxu0
      %5390 = vmatprep.mubr.f32.mxu0 0.0
      %v5391 = vand.u32 %v5046, 4294901760
      %v5392 = vsub.f32 %v5046, %v5391
      %v5393 = vand.u32 %v5392, 4294901760
      %v5394 = vsub.f32 %v5392, %v5393
      %v5395 = vand.u32 %v5394, 4294901760
      %5396 = vmatmul.mubr.f32.gmra.mxu0 %v5395
      %v5397 = vpop.f32.mrf.mxu0
      %v5398 = vadd.f32 0.0, %v5397
      %v5399 = vpop.f32.mrf.mxu0
      %5400 = vmatprep.mubr.f32.mxu0 0.0
      %v5401 = vand.u32 %v5049, 4294901760
      %v5402 = vsub.f32 %v5049, %v5401
      %v5403 = vand.u32 %v5402, 4294901760
      %v5404 = vsub.f32 %v5402, %v5403
      %v5405 = vand.u32 %v5404, 4294901760
      %5406 = vmatmul.mubr.f32.gmra.mxu0 %v5405
      %v5407 = vpop.f32.mrf.mxu0
      %v5408 = vadd.f32 0.0, %v5407
      %v5409 = vpop.f32.mrf.mxu0
      %5410 = vmatprep.mubr.f32.mxu0 0.0
      %v5411 = vand.u32 %v5052, 4294901760
      %v5412 = vsub.f32 %v5052, %v5411
      %v5413 = vand.u32 %v5412, 4294901760
      %v5414 = vsub.f32 %v5412, %v5413
      %v5415 = vand.u32 %v5414, 4294901760
      %5416 = vmatmul.mubr.f32.gmra.mxu0 %v5415
      %v5417 = vpop.f32.mrf.mxu0
      %v5418 = vadd.f32 0.0, %v5417
      %v5419 = vpop.f32.mrf.mxu0
      %5420 = vmatprep.mubr.f32.mxu0 0.0
      %v5421 = vand.u32 %v5055, 4294901760
      %v5422 = vsub.f32 %v5055, %v5421
      %v5423 = vand.u32 %v5422, 4294901760
      %v5424 = vsub.f32 %v5422, %v5423
      %v5425 = vand.u32 %v5424, 4294901760
      %5426 = vmatmul.mubr.f32.gmra.mxu0 %v5425
      %v5427 = vpop.f32.mrf.mxu0
      %v5428 = vadd.f32 0.0, %v5427
      %v5429 = vpop.f32.mrf.mxu0
      %5430 = vmatprep.mubr.f32.mxu0 0.0
      %v5431 = vand.u32 %v5058, 4294901760
      %v5432 = vsub.f32 %v5058, %v5431
      %v5433 = vand.u32 %v5432, 4294901760
      %v5434 = vsub.f32 %v5432, %v5433
      %v5435 = vand.u32 %v5434, 4294901760
      %5436 = vmatmul.mubr.f32.gmra.mxu0 %v5435
      %v5437 = vpop.f32.mrf.mxu0
      %v5438 = vadd.f32 0.0, %v5437
      %v5439 = vpop.f32.mrf.mxu0
      %5440 = vmatprep.mubr.f32.mxu0 0.0
      %v5441 = vand.u32 %v5061, 4294901760
      %v5442 = vsub.f32 %v5061, %v5441
      %v5443 = vand.u32 %v5442, 4294901760
      %v5444 = vsub.f32 %v5442, %v5443
      %v5445 = vand.u32 %v5444, 4294901760
      %5446 = vmatmul.mubr.f32.gmra.mxu0 %v5445
      %v5447 = vpop.f32.mrf.mxu0
      %v5448 = vadd.f32 0.0, %v5447
      %v5449 = vpop.f32.mrf.mxu0
      %5450 = vdwg.mxu0
      %5451 = vmatprep.subr.mxu0 0.0
      %5452 = vmatpush1.msra.mxu0 0.0
      %5453 = vmatprep.subr.mxu0 0.0
      %5454 = vmatpush1.msra.mxu0 0.0
      %5455 = vmatprep.subr.mxu0 0.0
      %5456 = vmatpush1.msra.mxu0 0.0
      %5457 = vmatprep.subr.mxu0 0.0
      %5458 = vmatpush1.msra.mxu0 0.0
      %5459 = vmatprep.subr.mxu0 0.0
      %5460 = vmatpush1.msra.mxu0 0.0
      %5461 = vmatprep.subr.mxu0 0.0
      %5462 = vmatpush1.msra.mxu0 0.0
      %5463 = vmatprep.subr.mxu0 0.0
      %5464 = vmatpush1.msra.mxu0 0.0
      %5465 = vmatprep.subr.mxu0 0.0
      %5466 = vmatpush1.msra.mxu0 0.0
      %5467 = vmatprep.subr.mxu0 0.0
      %5468 = vmatpush1.msra.mxu0 0.0
      %5469 = vmatprep.subr.mxu0 0.0
      %5470 = vmatpush1.msra.mxu0 0.0
      %5471 = vmatprep.subr.mxu0 0.0
      %5472 = vmatpush1.msra.mxu0 0.0
      %5473 = vmatprep.subr.mxu0 0.0
      %5474 = vmatpush1.msra.mxu0 0.0
      %5475 = vmatprep.subr.mxu0 0.0
      %5476 = vmatpush1.msra.mxu0 0.0
      %5477 = vmatprep.subr.mxu0 0.0
      %5478 = vmatpush1.msra.mxu0 0.0
      %5479 = vmatprep.subr.mxu0 0.0
      %5480 = vmatpush1.msra.mxu0 0.0
      %5481 = vmatprep.subr.mxu0 0.0
      %v5482 = vand.u32 %v5063, 4294901760
      %v5483 = vsub.f32 %v5063, %v5482
      %v5484 = vand.u32 %v5483, 4294901760
      %v5485 = vsub.f32 %v5483, %v5484
      %v5486 = vand.u32 %v5485, 4294901760
      %5487 = vmatpush1.msra.mxu0 %v5486
      %5488 = vmatprep.subr.mxu0 0.0
      %5489 = vmatpush2.msra.mxu0 0.0
      %5490 = vmatprep.subr.mxu0 0.0
      %5491 = vmatpush2.msra.mxu0 0.0
      %5492 = vmatprep.subr.mxu0 0.0
      %5493 = vmatpush2.msra.mxu0 0.0
      %5494 = vmatprep.subr.mxu0 0.0
      %5495 = vmatpush2.msra.mxu0 0.0
      %5496 = vmatprep.subr.mxu0 0.0
      %5497 = vmatpush2.msra.mxu0 0.0
      %5498 = vmatprep.subr.mxu0 0.0
      %5499 = vmatpush2.msra.mxu0 0.0
      %5500 = vmatprep.subr.mxu0 0.0
      %5501 = vmatpush2.msra.mxu0 0.0
      %5502 = vmatprep.subr.mxu0 0.0
      %5503 = vmatpush2.msra.mxu0 0.0
      %5504 = vmatprep.subr.mxu0 0.0
      %5505 = vmatpush2.msra.mxu0 0.0
      %5506 = vmatprep.subr.mxu0 0.0
      %5507 = vmatpush2.msra.mxu0 0.0
      %5508 = vmatprep.subr.mxu0 0.0
      %5509 = vmatpush2.msra.mxu0 0.0
      %5510 = vmatprep.subr.mxu0 0.0
      %5511 = vmatpush2.msra.mxu0 0.0
      %5512 = vmatprep.subr.mxu0 0.0
      %5513 = vmatpush2.msra.mxu0 0.0
      %5514 = vmatprep.subr.mxu0 0.0
      %5515 = vmatpush2.msra.mxu0 0.0
      %5516 = vmatprep.subr.mxu0 0.0
      %5517 = vmatpush2.msra.mxu0 0.0
      %5518 = vmatprep.subr.mxu0 0.0
      %5519 = vmatpush2.msra.mxu0 0.0
      %5520 = vmatprep.mubr.f32.mxu0 0.0
      %v5521 = vand.u32 %v4968, 4294901760
      %5522 = vmatmul.mubr.f32.gmra.mxu0 %v5521
      %v5523 = vpop.f32.mrf.mxu0
      %v5524 = vadd.f32 %v5138, %v5523
      %v5525 = vpop.f32.mrf.mxu0
      %5526 = vmatprep.mubr.f32.mxu0 0.0
      %v5527 = vand.u32 %v4971, 4294901760
      %5528 = vmatmul.mubr.f32.gmra.mxu0 %v5527
      %v5529 = vpop.f32.mrf.mxu0
      %v5530 = vadd.f32 %v5148, %v5529
      %v5531 = vpop.f32.mrf.mxu0
      %5532 = vmatprep.mubr.f32.mxu0 0.0
      %v5533 = vand.u32 %v4974, 4294901760
      %5534 = vmatmul.mubr.f32.gmra.mxu0 %v5533
      %v5535 = vpop.f32.mrf.mxu0
      %v5536 = vadd.f32 %v5158, %v5535
      %v5537 = vpop.f32.mrf.mxu0
      %5538 = vmatprep.mubr.f32.mxu0 0.0
      %v5539 = vand.u32 %v4977, 4294901760
      %5540 = vmatmul.mubr.f32.gmra.mxu0 %v5539
      %v5541 = vpop.f32.mrf.mxu0
      %v5542 = vadd.f32 %v5168, %v5541
      %v5543 = vpop.f32.mrf.mxu0
      %5544 = vmatprep.mubr.f32.mxu0 0.0
      %v5545 = vand.u32 %v4980, 4294901760
      %5546 = vmatmul.mubr.f32.gmra.mxu0 %v5545
      %v5547 = vpop.f32.mrf.mxu0
      %v5548 = vadd.f32 %v5178, %v5547
      %v5549 = vpop.f32.mrf.mxu0
      %5550 = vmatprep.mubr.f32.mxu0 0.0
      %v5551 = vand.u32 %v4983, 4294901760
      %5552 = vmatmul.mubr.f32.gmra.mxu0 %v5551
      %v5553 = vpop.f32.mrf.mxu0
      %v5554 = vadd.f32 %v5188, %v5553
      %v5555 = vpop.f32.mrf.mxu0
      %5556 = vmatprep.mubr.f32.mxu0 0.0
      %v5557 = vand.u32 %v4986, 4294901760
      %5558 = vmatmul.mubr.f32.gmra.mxu0 %v5557
      %v5559 = vpop.f32.mrf.mxu0
      %v5560 = vadd.f32 %v5198, %v5559
      %v5561 = vpop.f32.mrf.mxu0
      %5562 = vmatprep.mubr.f32.mxu0 0.0
      %v5563 = vand.u32 %v4989, 4294901760
      %5564 = vmatmul.mubr.f32.gmra.mxu0 %v5563
      %v5565 = vpop.f32.mrf.mxu0
      %v5566 = vadd.f32 %v5208, %v5565
      %v5567 = vpop.f32.mrf.mxu0
      %5568 = vmatprep.mubr.f32.mxu0 0.0
      %v5569 = vand.u32 %v4992, 4294901760
      %5570 = vmatmul.mubr.f32.gmra.mxu0 %v5569
      %v5571 = vpop.f32.mrf.mxu0
      %v5572 = vadd.f32 %v5218, %v5571
      %v5573 = vpop.f32.mrf.mxu0
      %5574 = vmatprep.mubr.f32.mxu0 0.0
      %v5575 = vand.u32 %v4995, 4294901760
      %5576 = vmatmul.mubr.f32.gmra.mxu0 %v5575
      %v5577 = vpop.f32.mrf.mxu0
      %v5578 = vadd.f32 %v5228, %v5577
      %v5579 = vpop.f32.mrf.mxu0
      %5580 = vmatprep.mubr.f32.mxu0 0.0
      %v5581 = vand.u32 %v4998, 4294901760
      %5582 = vmatmul.mubr.f32.gmra.mxu0 %v5581
      %v5583 = vpop.f32.mrf.mxu0
      %v5584 = vadd.f32 %v5238, %v5583
      %v5585 = vpop.f32.mrf.mxu0
      %5586 = vmatprep.mubr.f32.mxu0 0.0
      %v5587 = vand.u32 %v5001, 4294901760
      %5588 = vmatmul.mubr.f32.gmra.mxu0 %v5587
      %v5589 = vpop.f32.mrf.mxu0
      %v5590 = vadd.f32 %v5248, %v5589
      %v5591 = vpop.f32.mrf.mxu0
      %5592 = vmatprep.mubr.f32.mxu0 0.0
      %v5593 = vand.u32 %v5004, 4294901760
      %5594 = vmatmul.mubr.f32.gmra.mxu0 %v5593
      %v5595 = vpop.f32.mrf.mxu0
      %v5596 = vadd.f32 %v5258, %v5595
      %v5597 = vpop.f32.mrf.mxu0
      %5598 = vmatprep.mubr.f32.mxu0 0.0
      %v5599 = vand.u32 %v5007, 4294901760
      %5600 = vmatmul.mubr.f32.gmra.mxu0 %v5599
      %v5601 = vpop.f32.mrf.mxu0
      %v5602 = vadd.f32 %v5268, %v5601
      %v5603 = vpop.f32.mrf.mxu0
      %5604 = vmatprep.mubr.f32.mxu0 0.0
      %v5605 = vand.u32 %v5010, 4294901760
      %5606 = vmatmul.mubr.f32.gmra.mxu0 %v5605
      %v5607 = vpop.f32.mrf.mxu0
      %v5608 = vadd.f32 %v5278, %v5607
      %v5609 = vpop.f32.mrf.mxu0
      %5610 = vmatprep.mubr.f32.mxu0 0.0
      %v5611 = vand.u32 %v5013, 4294901760
      %5612 = vmatmul.mubr.f32.gmra.mxu0 %v5611
      %v5613 = vpop.f32.mrf.mxu0
      %v5614 = vadd.f32 %v5288, %v5613
      %v5615 = vpop.f32.mrf.mxu0
      %5616 = vmatprep.mubr.f32.mxu0 0.0
      %v5617 = vand.u32 %v5016, 4294901760
      %5618 = vmatmul.mubr.f32.gmra.mxu0 %v5617
      %v5619 = vpop.f32.mrf.mxu0
      %v5620 = vadd.f32 %v5298, %v5619
      %v5621 = vpop.f32.mrf.mxu0
      %5622 = vmatprep.mubr.f32.mxu0 0.0
      %v5623 = vand.u32 %v5019, 4294901760
      %5624 = vmatmul.mubr.f32.gmra.mxu0 %v5623
      %v5625 = vpop.f32.mrf.mxu0
      %v5626 = vadd.f32 %v5308, %v5625
      %v5627 = vpop.f32.mrf.mxu0
      %5628 = vmatprep.mubr.f32.mxu0 0.0
      %v5629 = vand.u32 %v5022, 4294901760
      %5630 = vmatmul.mubr.f32.gmra.mxu0 %v5629
      %v5631 = vpop.f32.mrf.mxu0
      %v5632 = vadd.f32 %v5318, %v5631
      %v5633 = vpop.f32.mrf.mxu0
      %5634 = vmatprep.mubr.f32.mxu0 0.0
      %v5635 = vand.u32 %v5025, 4294901760
      %5636 = vmatmul.mubr.f32.gmra.mxu0 %v5635
      %v5637 = vpop.f32.mrf.mxu0
      %v5638 = vadd.f32 %v5328, %v5637
      %v5639 = vpop.f32.mrf.mxu0
      %5640 = vmatprep.mubr.f32.mxu0 0.0
      %v5641 = vand.u32 %v5028, 4294901760
      %5642 = vmatmul.mubr.f32.gmra.mxu0 %v5641
      %v5643 = vpop.f32.mrf.mxu0
      %v5644 = vadd.f32 %v5338, %v5643
      %v5645 = vpop.f32.mrf.mxu0
      %5646 = vmatprep.mubr.f32.mxu0 0.0
      %v5647 = vand.u32 %v5031, 4294901760
      %5648 = vmatmul.mubr.f32.gmra.mxu0 %v5647
      %v5649 = vpop.f32.mrf.mxu0
      %v5650 = vadd.f32 %v5348, %v5649
      %v5651 = vpop.f32.mrf.mxu0
      %5652 = vmatprep.mubr.f32.mxu0 0.0
      %v5653 = vand.u32 %v5034, 4294901760
      %5654 = vmatmul.mubr.f32.gmra.mxu0 %v5653
      %v5655 = vpop.f32.mrf.mxu0
      %v5656 = vadd.f32 %v5358, %v5655
      %v5657 = vpop.f32.mrf.mxu0
      %5658 = vmatprep.mubr.f32.mxu0 0.0
      %v5659 = vand.u32 %v5037, 4294901760
      %5660 = vmatmul.mubr.f32.gmra.mxu0 %v5659
      %v5661 = vpop.f32.mrf.mxu0
      %v5662 = vadd.f32 %v5368, %v5661
      %v5663 = vpop.f32.mrf.mxu0
      %5664 = vmatprep.mubr.f32.mxu0 0.0
      %v5665 = vand.u32 %v5040, 4294901760
      %5666 = vmatmul.mubr.f32.gmra.mxu0 %v5665
      %v5667 = vpop.f32.mrf.mxu0
      %v5668 = vadd.f32 %v5378, %v5667
      %v5669 = vpop.f32.mrf.mxu0
      %5670 = vmatprep.mubr.f32.mxu0 0.0
      %v5671 = vand.u32 %v5043, 4294901760
      %5672 = vmatmul.mubr.f32.gmra.mxu0 %v5671
      %v5673 = vpop.f32.mrf.mxu0
      %v5674 = vadd.f32 %v5388, %v5673
      %v5675 = vpop.f32.mrf.mxu0
      %5676 = vmatprep.mubr.f32.mxu0 0.0
      %v5677 = vand.u32 %v5046, 4294901760
      %5678 = vmatmul.mubr.f32.gmra.mxu0 %v5677
      %v5679 = vpop.f32.mrf.mxu0
      %v5680 = vadd.f32 %v5398, %v5679
      %v5681 = vpop.f32.mrf.mxu0
      %5682 = vmatprep.mubr.f32.mxu0 0.0
      %v5683 = vand.u32 %v5049, 4294901760
      %5684 = vmatmul.mubr.f32.gmra.mxu0 %v5683
      %v5685 = vpop.f32.mrf.mxu0
      %v5686 = vadd.f32 %v5408, %v5685
      %v5687 = vpop.f32.mrf.mxu0
      %5688 = vmatprep.mubr.f32.mxu0 0.0
      %v5689 = vand.u32 %v5052, 4294901760
      %5690 = vmatmul.mubr.f32.gmra.mxu0 %v5689
      %v5691 = vpop.f32.mrf.mxu0
      %v5692 = vadd.f32 %v5418, %v5691
      %v5693 = vpop.f32.mrf.mxu0
      %5694 = vmatprep.mubr.f32.mxu0 0.0
      %v5695 = vand.u32 %v5055, 4294901760
      %5696 = vmatmul.mubr.f32.gmra.mxu0 %v5695
      %v5697 = vpop.f32.mrf.mxu0
      %v5698 = vadd.f32 %v5428, %v5697
      %v5699 = vpop.f32.mrf.mxu0
      %5700 = vmatprep.mubr.f32.mxu0 0.0
      %v5701 = vand.u32 %v5058, 4294901760
      %5702 = vmatmul.mubr.f32.gmra.mxu0 %v5701
      %v5703 = vpop.f32.mrf.mxu0
      %v5704 = vadd.f32 %v5438, %v5703
      %v5705 = vpop.f32.mrf.mxu0
      %5706 = vmatprep.mubr.f32.mxu0 0.0
      %v5707 = vand.u32 %v5061, 4294901760
      %5708 = vmatmul.mubr.f32.gmra.mxu0 %v5707
      %v5709 = vpop.f32.mrf.mxu0
      %v5710 = vadd.f32 %v5448, %v5709
      %v5711 = vpop.f32.mrf.mxu0
      %5712 = vdwg.mxu0
      %5713 = vmatprep.subr.mxu0 0.0
      %5714 = vmatpush1.msra.mxu0 0.0
      %5715 = vmatprep.subr.mxu0 0.0
      %5716 = vmatpush1.msra.mxu0 0.0
      %5717 = vmatprep.subr.mxu0 0.0
      %5718 = vmatpush1.msra.mxu0 0.0
      %5719 = vmatprep.subr.mxu0 0.0
      %5720 = vmatpush1.msra.mxu0 0.0
      %5721 = vmatprep.subr.mxu0 0.0
      %5722 = vmatpush1.msra.mxu0 0.0
      %5723 = vmatprep.subr.mxu0 0.0
      %5724 = vmatpush1.msra.mxu0 0.0
      %5725 = vmatprep.subr.mxu0 0.0
      %5726 = vmatpush1.msra.mxu0 0.0
      %5727 = vmatprep.subr.mxu0 0.0
      %5728 = vmatpush1.msra.mxu0 0.0
      %5729 = vmatprep.subr.mxu0 0.0
      %5730 = vmatpush1.msra.mxu0 0.0
      %5731 = vmatprep.subr.mxu0 0.0
      %5732 = vmatpush1.msra.mxu0 0.0
      %5733 = vmatprep.subr.mxu0 0.0
      %5734 = vmatpush1.msra.mxu0 0.0
      %5735 = vmatprep.subr.mxu0 0.0
      %5736 = vmatpush1.msra.mxu0 0.0
      %5737 = vmatprep.subr.mxu0 0.0
      %5738 = vmatpush1.msra.mxu0 0.0
      %5739 = vmatprep.subr.mxu0 0.0
      %5740 = vmatpush1.msra.mxu0 0.0
      %5741 = vmatprep.subr.mxu0 0.0
      %5742 = vmatpush1.msra.mxu0 0.0
      %5743 = vmatprep.subr.mxu0 0.0
      %v5744 = vand.u32 %v5063, 4294901760
      %v5745 = vsub.f32 %v5063, %v5744
      %5746 = vmatpush1.msra.mxu0 %v5745
      %5747 = vmatprep.subr.mxu0 0.0
      %5748 = vmatpush2.msra.mxu0 0.0
      %5749 = vmatprep.subr.mxu0 0.0
      %5750 = vmatpush2.msra.mxu0 0.0
      %5751 = vmatprep.subr.mxu0 0.0
      %5752 = vmatpush2.msra.mxu0 0.0
      %5753 = vmatprep.subr.mxu0 0.0
      %5754 = vmatpush2.msra.mxu0 0.0
      %5755 = vmatprep.subr.mxu0 0.0
      %5756 = vmatpush2.msra.mxu0 0.0
      %5757 = vmatprep.subr.mxu0 0.0
      %5758 = vmatpush2.msra.mxu0 0.0
      %5759 = vmatprep.subr.mxu0 0.0
      %5760 = vmatpush2.msra.mxu0 0.0
      %5761 = vmatprep.subr.mxu0 0.0
      %5762 = vmatpush2.msra.mxu0 0.0
      %5763 = vmatprep.subr.mxu0 0.0
      %5764 = vmatpush2.msra.mxu0 0.0
      %5765 = vmatprep.subr.mxu0 0.0
      %5766 = vmatpush2.msra.mxu0 0.0
      %5767 = vmatprep.subr.mxu0 0.0
      %5768 = vmatpush2.msra.mxu0 0.0
      %5769 = vmatprep.subr.mxu0 0.0
      %5770 = vmatpush2.msra.mxu0 0.0
      %5771 = vmatprep.subr.mxu0 0.0
      %5772 = vmatpush2.msra.mxu0 0.0
      %5773 = vmatprep.subr.mxu0 0.0
      %5774 = vmatpush2.msra.mxu0 0.0
      %5775 = vmatprep.subr.mxu0 0.0
      %5776 = vmatpush2.msra.mxu0 0.0
      %5777 = vmatprep.subr.mxu0 0.0
      %5778 = vmatpush2.msra.mxu0 0.0
      %5779 = vmatprep.mubr.f32.mxu0 0.0
      %v5780 = vand.u32 %v4968, 4294901760
      %v5781 = vsub.f32 %v4968, %v5780
      %5782 = vmatmul.mubr.f32.gmra.mxu0 %v5781
      %v5783 = vpop.f32.mrf.mxu0
      %v5784 = vadd.f32 %v5524, %v5783
      %v5785 = vpop.f32.mrf.mxu0
      %5786 = vmatprep.mubr.f32.mxu0 0.0
      %v5787 = vand.u32 %v4971, 4294901760
      %v5788 = vsub.f32 %v4971, %v5787
      %5789 = vmatmul.mubr.f32.gmra.mxu0 %v5788
      %v5790 = vpop.f32.mrf.mxu0
      %v5791 = vadd.f32 %v5530, %v5790
      %v5792 = vpop.f32.mrf.mxu0
      %5793 = vmatprep.mubr.f32.mxu0 0.0
      %v5794 = vand.u32 %v4974, 4294901760
      %v5795 = vsub.f32 %v4974, %v5794
      %5796 = vmatmul.mubr.f32.gmra.mxu0 %v5795
      %v5797 = vpop.f32.mrf.mxu0
      %v5798 = vadd.f32 %v5536, %v5797
      %v5799 = vpop.f32.mrf.mxu0
      %5800 = vmatprep.mubr.f32.mxu0 0.0
      %v5801 = vand.u32 %v4977, 4294901760
      %v5802 = vsub.f32 %v4977, %v5801
      %5803 = vmatmul.mubr.f32.gmra.mxu0 %v5802
      %v5804 = vpop.f32.mrf.mxu0
      %v5805 = vadd.f32 %v5542, %v5804
      %v5806 = vpop.f32.mrf.mxu0
      %5807 = vmatprep.mubr.f32.mxu0 0.0
      %v5808 = vand.u32 %v4980, 4294901760
      %v5809 = vsub.f32 %v4980, %v5808
      %5810 = vmatmul.mubr.f32.gmra.mxu0 %v5809
      %v5811 = vpop.f32.mrf.mxu0
      %v5812 = vadd.f32 %v5548, %v5811
      %v5813 = vpop.f32.mrf.mxu0
      %5814 = vmatprep.mubr.f32.mxu0 0.0
      %v5815 = vand.u32 %v4983, 4294901760
      %v5816 = vsub.f32 %v4983, %v5815
      %5817 = vmatmul.mubr.f32.gmra.mxu0 %v5816
      %v5818 = vpop.f32.mrf.mxu0
      %v5819 = vadd.f32 %v5554, %v5818
      %v5820 = vpop.f32.mrf.mxu0
      %5821 = vmatprep.mubr.f32.mxu0 0.0
      %v5822 = vand.u32 %v4986, 4294901760
      %v5823 = vsub.f32 %v4986, %v5822
      %5824 = vmatmul.mubr.f32.gmra.mxu0 %v5823
      %v5825 = vpop.f32.mrf.mxu0
      %v5826 = vadd.f32 %v5560, %v5825
      %v5827 = vpop.f32.mrf.mxu0
      %5828 = vmatprep.mubr.f32.mxu0 0.0
      %v5829 = vand.u32 %v4989, 4294901760
      %v5830 = vsub.f32 %v4989, %v5829
      %5831 = vmatmul.mubr.f32.gmra.mxu0 %v5830
      %v5832 = vpop.f32.mrf.mxu0
      %v5833 = vadd.f32 %v5566, %v5832
      %v5834 = vpop.f32.mrf.mxu0
      %5835 = vmatprep.mubr.f32.mxu0 0.0
      %v5836 = vand.u32 %v4992, 4294901760
      %v5837 = vsub.f32 %v4992, %v5836
      %5838 = vmatmul.mubr.f32.gmra.mxu0 %v5837
      %v5839 = vpop.f32.mrf.mxu0
      %v5840 = vadd.f32 %v5572, %v5839
      %v5841 = vpop.f32.mrf.mxu0
      %5842 = vmatprep.mubr.f32.mxu0 0.0
      %v5843 = vand.u32 %v4995, 4294901760
      %v5844 = vsub.f32 %v4995, %v5843
      %5845 = vmatmul.mubr.f32.gmra.mxu0 %v5844
      %v5846 = vpop.f32.mrf.mxu0
      %v5847 = vadd.f32 %v5578, %v5846
      %v5848 = vpop.f32.mrf.mxu0
      %5849 = vmatprep.mubr.f32.mxu0 0.0
      %v5850 = vand.u32 %v4998, 4294901760
      %v5851 = vsub.f32 %v4998, %v5850
      %5852 = vmatmul.mubr.f32.gmra.mxu0 %v5851
      %v5853 = vpop.f32.mrf.mxu0
      %v5854 = vadd.f32 %v5584, %v5853
      %v5855 = vpop.f32.mrf.mxu0
      %5856 = vmatprep.mubr.f32.mxu0 0.0
      %v5857 = vand.u32 %v5001, 4294901760
      %v5858 = vsub.f32 %v5001, %v5857
      %5859 = vmatmul.mubr.f32.gmra.mxu0 %v5858
      %v5860 = vpop.f32.mrf.mxu0
      %v5861 = vadd.f32 %v5590, %v5860
      %v5862 = vpop.f32.mrf.mxu0
      %5863 = vmatprep.mubr.f32.mxu0 0.0
      %v5864 = vand.u32 %v5004, 4294901760
      %v5865 = vsub.f32 %v5004, %v5864
      %5866 = vmatmul.mubr.f32.gmra.mxu0 %v5865
      %v5867 = vpop.f32.mrf.mxu0
      %v5868 = vadd.f32 %v5596, %v5867
      %v5869 = vpop.f32.mrf.mxu0
      %5870 = vmatprep.mubr.f32.mxu0 0.0
      %v5871 = vand.u32 %v5007, 4294901760
      %v5872 = vsub.f32 %v5007, %v5871
      %5873 = vmatmul.mubr.f32.gmra.mxu0 %v5872
      %v5874 = vpop.f32.mrf.mxu0
      %v5875 = vadd.f32 %v5602, %v5874
      %v5876 = vpop.f32.mrf.mxu0
      %5877 = vmatprep.mubr.f32.mxu0 0.0
      %v5878 = vand.u32 %v5010, 4294901760
      %v5879 = vsub.f32 %v5010, %v5878
      %5880 = vmatmul.mubr.f32.gmra.mxu0 %v5879
      %v5881 = vpop.f32.mrf.mxu0
      %v5882 = vadd.f32 %v5608, %v5881
      %v5883 = vpop.f32.mrf.mxu0
      %5884 = vmatprep.mubr.f32.mxu0 0.0
      %v5885 = vand.u32 %v5013, 4294901760
      %v5886 = vsub.f32 %v5013, %v5885
      %5887 = vmatmul.mubr.f32.gmra.mxu0 %v5886
      %v5888 = vpop.f32.mrf.mxu0
      %v5889 = vadd.f32 %v5614, %v5888
      %v5890 = vpop.f32.mrf.mxu0
      %5891 = vmatprep.mubr.f32.mxu0 0.0
      %v5892 = vand.u32 %v5016, 4294901760
      %v5893 = vsub.f32 %v5016, %v5892
      %5894 = vmatmul.mubr.f32.gmra.mxu0 %v5893
      %v5895 = vpop.f32.mrf.mxu0
      %v5896 = vadd.f32 %v5620, %v5895
      %v5897 = vpop.f32.mrf.mxu0
      %5898 = vmatprep.mubr.f32.mxu0 0.0
      %v5899 = vand.u32 %v5019, 4294901760
      %v5900 = vsub.f32 %v5019, %v5899
      %5901 = vmatmul.mubr.f32.gmra.mxu0 %v5900
      %v5902 = vpop.f32.mrf.mxu0
      %v5903 = vadd.f32 %v5626, %v5902
      %v5904 = vpop.f32.mrf.mxu0
      %5905 = vmatprep.mubr.f32.mxu0 0.0
      %v5906 = vand.u32 %v5022, 4294901760
      %v5907 = vsub.f32 %v5022, %v5906
      %5908 = vmatmul.mubr.f32.gmra.mxu0 %v5907
      %v5909 = vpop.f32.mrf.mxu0
      %v5910 = vadd.f32 %v5632, %v5909
      %v5911 = vpop.f32.mrf.mxu0
      %5912 = vmatprep.mubr.f32.mxu0 0.0
      %v5913 = vand.u32 %v5025, 4294901760
      %v5914 = vsub.f32 %v5025, %v5913
      %5915 = vmatmul.mubr.f32.gmra.mxu0 %v5914
      %v5916 = vpop.f32.mrf.mxu0
      %v5917 = vadd.f32 %v5638, %v5916
      %v5918 = vpop.f32.mrf.mxu0
      %5919 = vmatprep.mubr.f32.mxu0 0.0
      %v5920 = vand.u32 %v5028, 4294901760
      %v5921 = vsub.f32 %v5028, %v5920
      %5922 = vmatmul.mubr.f32.gmra.mxu0 %v5921
      %v5923 = vpop.f32.mrf.mxu0
      %v5924 = vadd.f32 %v5644, %v5923
      %v5925 = vpop.f32.mrf.mxu0
      %5926 = vmatprep.mubr.f32.mxu0 0.0
      %v5927 = vand.u32 %v5031, 4294901760
      %v5928 = vsub.f32 %v5031, %v5927
      %5929 = vmatmul.mubr.f32.gmra.mxu0 %v5928
      %v5930 = vpop.f32.mrf.mxu0
      %v5931 = vadd.f32 %v5650, %v5930
      %v5932 = vpop.f32.mrf.mxu0
      %5933 = vmatprep.mubr.f32.mxu0 0.0
      %v5934 = vand.u32 %v5034, 4294901760
      %v5935 = vsub.f32 %v5034, %v5934
      %5936 = vmatmul.mubr.f32.gmra.mxu0 %v5935
      %v5937 = vpop.f32.mrf.mxu0
      %v5938 = vadd.f32 %v5656, %v5937
      %v5939 = vpop.f32.mrf.mxu0
      %5940 = vmatprep.mubr.f32.mxu0 0.0
      %v5941 = vand.u32 %v5037, 4294901760
      %v5942 = vsub.f32 %v5037, %v5941
      %5943 = vmatmul.mubr.f32.gmra.mxu0 %v5942
      %v5944 = vpop.f32.mrf.mxu0
      %v5945 = vadd.f32 %v5662, %v5944
      %v5946 = vpop.f32.mrf.mxu0
      %5947 = vmatprep.mubr.f32.mxu0 0.0
      %v5948 = vand.u32 %v5040, 4294901760
      %v5949 = vsub.f32 %v5040, %v5948
      %5950 = vmatmul.mubr.f32.gmra.mxu0 %v5949
      %v5951 = vpop.f32.mrf.mxu0
      %v5952 = vadd.f32 %v5668, %v5951
      %v5953 = vpop.f32.mrf.mxu0
      %5954 = vmatprep.mubr.f32.mxu0 0.0
      %v5955 = vand.u32 %v5043, 4294901760
      %v5956 = vsub.f32 %v5043, %v5955
      %5957 = vmatmul.mubr.f32.gmra.mxu0 %v5956
      %v5958 = vpop.f32.mrf.mxu0
      %v5959 = vadd.f32 %v5674, %v5958
      %v5960 = vpop.f32.mrf.mxu0
      %5961 = vmatprep.mubr.f32.mxu0 0.0
      %v5962 = vand.u32 %v5046, 4294901760
      %v5963 = vsub.f32 %v5046, %v5962
      %5964 = vmatmul.mubr.f32.gmra.mxu0 %v5963
      %v5965 = vpop.f32.mrf.mxu0
      %v5966 = vadd.f32 %v5680, %v5965
      %v5967 = vpop.f32.mrf.mxu0
      %5968 = vmatprep.mubr.f32.mxu0 0.0
      %v5969 = vand.u32 %v5049, 4294901760
      %v5970 = vsub.f32 %v5049, %v5969
      %5971 = vmatmul.mubr.f32.gmra.mxu0 %v5970
      %v5972 = vpop.f32.mrf.mxu0
      %v5973 = vadd.f32 %v5686, %v5972
      %v5974 = vpop.f32.mrf.mxu0
      %5975 = vmatprep.mubr.f32.mxu0 0.0
      %v5976 = vand.u32 %v5052, 4294901760
      %v5977 = vsub.f32 %v5052, %v5976
      %5978 = vmatmul.mubr.f32.gmra.mxu0 %v5977
      %v5979 = vpop.f32.mrf.mxu0
      %v5980 = vadd.f32 %v5692, %v5979
      %v5981 = vpop.f32.mrf.mxu0
      %5982 = vmatprep.mubr.f32.mxu0 0.0
      %v5983 = vand.u32 %v5055, 4294901760
      %v5984 = vsub.f32 %v5055, %v5983
      %5985 = vmatmul.mubr.f32.gmra.mxu0 %v5984
      %v5986 = vpop.f32.mrf.mxu0
      %v5987 = vadd.f32 %v5698, %v5986
      %v5988 = vpop.f32.mrf.mxu0
      %5989 = vmatprep.mubr.f32.mxu0 0.0
      %v5990 = vand.u32 %v5058, 4294901760
      %v5991 = vsub.f32 %v5058, %v5990
      %5992 = vmatmul.mubr.f32.gmra.mxu0 %v5991
      %v5993 = vpop.f32.mrf.mxu0
      %v5994 = vadd.f32 %v5704, %v5993
      %v5995 = vpop.f32.mrf.mxu0
      %5996 = vmatprep.mubr.f32.mxu0 0.0
      %v5997 = vand.u32 %v5061, 4294901760
      %v5998 = vsub.f32 %v5061, %v5997
      %5999 = vmatmul.mubr.f32.gmra.mxu0 %v5998
      %v6000 = vpop.f32.mrf.mxu0
      %v6001 = vadd.f32 %v5710, %v6000
      %v6002 = vpop.f32.mrf.mxu0
      %6003 = vdwg.mxu0
      %6004 = vmatprep.subr.mxu0 0.0
      %6005 = vmatpush1.msra.mxu0 0.0
      %6006 = vmatprep.subr.mxu0 0.0
      %6007 = vmatpush1.msra.mxu0 0.0
      %6008 = vmatprep.subr.mxu0 0.0
      %6009 = vmatpush1.msra.mxu0 0.0
      %6010 = vmatprep.subr.mxu0 0.0
      %6011 = vmatpush1.msra.mxu0 0.0
      %6012 = vmatprep.subr.mxu0 0.0
      %6013 = vmatpush1.msra.mxu0 0.0
      %6014 = vmatprep.subr.mxu0 0.0
      %6015 = vmatpush1.msra.mxu0 0.0
      %6016 = vmatprep.subr.mxu0 0.0
      %6017 = vmatpush1.msra.mxu0 0.0
      %6018 = vmatprep.subr.mxu0 0.0
      %6019 = vmatpush1.msra.mxu0 0.0
      %6020 = vmatprep.subr.mxu0 0.0
      %6021 = vmatpush1.msra.mxu0 0.0
      %6022 = vmatprep.subr.mxu0 0.0
      %6023 = vmatpush1.msra.mxu0 0.0
      %6024 = vmatprep.subr.mxu0 0.0
      %6025 = vmatpush1.msra.mxu0 0.0
      %6026 = vmatprep.subr.mxu0 0.0
      %6027 = vmatpush1.msra.mxu0 0.0
      %6028 = vmatprep.subr.mxu0 0.0
      %6029 = vmatpush1.msra.mxu0 0.0
      %6030 = vmatprep.subr.mxu0 0.0
      %6031 = vmatpush1.msra.mxu0 0.0
      %6032 = vmatprep.subr.mxu0 0.0
      %6033 = vmatpush1.msra.mxu0 0.0
      %6034 = vmatprep.subr.mxu0 0.0
      %v6035 = vand.u32 %v5063, 4294901760
      %6036 = vmatpush1.msra.mxu0 %v6035
      %6037 = vmatprep.subr.mxu0 0.0
      %6038 = vmatpush2.msra.mxu0 0.0
      %6039 = vmatprep.subr.mxu0 0.0
      %6040 = vmatpush2.msra.mxu0 0.0
      %6041 = vmatprep.subr.mxu0 0.0
      %6042 = vmatpush2.msra.mxu0 0.0
      %6043 = vmatprep.subr.mxu0 0.0
      %6044 = vmatpush2.msra.mxu0 0.0
      %6045 = vmatprep.subr.mxu0 0.0
      %6046 = vmatpush2.msra.mxu0 0.0
      %6047 = vmatprep.subr.mxu0 0.0
      %6048 = vmatpush2.msra.mxu0 0.0
      %6049 = vmatprep.subr.mxu0 0.0
      %6050 = vmatpush2.msra.mxu0 0.0
      %6051 = vmatprep.subr.mxu0 0.0
      %6052 = vmatpush2.msra.mxu0 0.0
      %6053 = vmatprep.subr.mxu0 0.0
      %6054 = vmatpush2.msra.mxu0 0.0
      %6055 = vmatprep.subr.mxu0 0.0
      %6056 = vmatpush2.msra.mxu0 0.0
      %6057 = vmatprep.subr.mxu0 0.0
      %6058 = vmatpush2.msra.mxu0 0.0
      %6059 = vmatprep.subr.mxu0 0.0
      %6060 = vmatpush2.msra.mxu0 0.0
      %6061 = vmatprep.subr.mxu0 0.0
      %6062 = vmatpush2.msra.mxu0 0.0
      %6063 = vmatprep.subr.mxu0 0.0
      %6064 = vmatpush2.msra.mxu0 0.0
      %6065 = vmatprep.subr.mxu0 0.0
      %6066 = vmatpush2.msra.mxu0 0.0
      %6067 = vmatprep.subr.mxu0 0.0
      %6068 = vmatpush2.msra.mxu0 0.0
      %6069 = vmatprep.mubr.f32.mxu0 0.0
      %v6070 = vand.u32 %v4968, 4294901760
      %v6071 = vsub.f32 %v4968, %v6070
      %v6072 = vand.u32 %v6071, 4294901760
      %6073 = vmatmul.mubr.f32.gmra.mxu0 %v6072
      %v6074 = vpop.f32.mrf.mxu0
      %v6075 = vadd.f32 %v5784, %v6074
      %v6076 = vpop.f32.mrf.mxu0
      %6077 = vmatprep.mubr.f32.mxu0 0.0
      %v6078 = vand.u32 %v4971, 4294901760
      %v6079 = vsub.f32 %v4971, %v6078
      %v6080 = vand.u32 %v6079, 4294901760
      %6081 = vmatmul.mubr.f32.gmra.mxu0 %v6080
      %v6082 = vpop.f32.mrf.mxu0
      %v6083 = vadd.f32 %v5791, %v6082
      %v6084 = vpop.f32.mrf.mxu0
      %6085 = vmatprep.mubr.f32.mxu0 0.0
      %v6086 = vand.u32 %v4974, 4294901760
      %v6087 = vsub.f32 %v4974, %v6086
      %v6088 = vand.u32 %v6087, 4294901760
      %6089 = vmatmul.mubr.f32.gmra.mxu0 %v6088
      %v6090 = vpop.f32.mrf.mxu0
      %v6091 = vadd.f32 %v5798, %v6090
      %v6092 = vpop.f32.mrf.mxu0
      %6093 = vmatprep.mubr.f32.mxu0 0.0
      %v6094 = vand.u32 %v4977, 4294901760
      %v6095 = vsub.f32 %v4977, %v6094
      %v6096 = vand.u32 %v6095, 4294901760
      %6097 = vmatmul.mubr.f32.gmra.mxu0 %v6096
      %v6098 = vpop.f32.mrf.mxu0
      %v6099 = vadd.f32 %v5805, %v6098
      %v6100 = vpop.f32.mrf.mxu0
      %6101 = vmatprep.mubr.f32.mxu0 0.0
      %v6102 = vand.u32 %v4980, 4294901760
      %v6103 = vsub.f32 %v4980, %v6102
      %v6104 = vand.u32 %v6103, 4294901760
      %6105 = vmatmul.mubr.f32.gmra.mxu0 %v6104
      %v6106 = vpop.f32.mrf.mxu0
      %v6107 = vadd.f32 %v5812, %v6106
      %v6108 = vpop.f32.mrf.mxu0
      %6109 = vmatprep.mubr.f32.mxu0 0.0
      %v6110 = vand.u32 %v4983, 4294901760
      %v6111 = vsub.f32 %v4983, %v6110
      %v6112 = vand.u32 %v6111, 4294901760
      %6113 = vmatmul.mubr.f32.gmra.mxu0 %v6112
      %v6114 = vpop.f32.mrf.mxu0
      %v6115 = vadd.f32 %v5819, %v6114
      %v6116 = vpop.f32.mrf.mxu0
      %6117 = vmatprep.mubr.f32.mxu0 0.0
      %v6118 = vand.u32 %v4986, 4294901760
      %v6119 = vsub.f32 %v4986, %v6118
      %v6120 = vand.u32 %v6119, 4294901760
      %6121 = vmatmul.mubr.f32.gmra.mxu0 %v6120
      %v6122 = vpop.f32.mrf.mxu0
      %v6123 = vadd.f32 %v5826, %v6122
      %v6124 = vpop.f32.mrf.mxu0
      %6125 = vmatprep.mubr.f32.mxu0 0.0
      %v6126 = vand.u32 %v4989, 4294901760
      %v6127 = vsub.f32 %v4989, %v6126
      %v6128 = vand.u32 %v6127, 4294901760
      %6129 = vmatmul.mubr.f32.gmra.mxu0 %v6128
      %v6130 = vpop.f32.mrf.mxu0
      %v6131 = vadd.f32 %v5833, %v6130
      %v6132 = vpop.f32.mrf.mxu0
      %6133 = vmatprep.mubr.f32.mxu0 0.0
      %v6134 = vand.u32 %v4992, 4294901760
      %v6135 = vsub.f32 %v4992, %v6134
      %v6136 = vand.u32 %v6135, 4294901760
      %6137 = vmatmul.mubr.f32.gmra.mxu0 %v6136
      %v6138 = vpop.f32.mrf.mxu0
      %v6139 = vadd.f32 %v5840, %v6138
      %v6140 = vpop.f32.mrf.mxu0
      %6141 = vmatprep.mubr.f32.mxu0 0.0
      %v6142 = vand.u32 %v4995, 4294901760
      %v6143 = vsub.f32 %v4995, %v6142
      %v6144 = vand.u32 %v6143, 4294901760
      %6145 = vmatmul.mubr.f32.gmra.mxu0 %v6144
      %v6146 = vpop.f32.mrf.mxu0
      %v6147 = vadd.f32 %v5847, %v6146
      %v6148 = vpop.f32.mrf.mxu0
      %6149 = vmatprep.mubr.f32.mxu0 0.0
      %v6150 = vand.u32 %v4998, 4294901760
      %v6151 = vsub.f32 %v4998, %v6150
      %v6152 = vand.u32 %v6151, 4294901760
      %6153 = vmatmul.mubr.f32.gmra.mxu0 %v6152
      %v6154 = vpop.f32.mrf.mxu0
      %v6155 = vadd.f32 %v5854, %v6154
      %v6156 = vpop.f32.mrf.mxu0
      %6157 = vmatprep.mubr.f32.mxu0 0.0
      %v6158 = vand.u32 %v5001, 4294901760
      %v6159 = vsub.f32 %v5001, %v6158
      %v6160 = vand.u32 %v6159, 4294901760
      %6161 = vmatmul.mubr.f32.gmra.mxu0 %v6160
      %v6162 = vpop.f32.mrf.mxu0
      %v6163 = vadd.f32 %v5861, %v6162
      %v6164 = vpop.f32.mrf.mxu0
      %6165 = vmatprep.mubr.f32.mxu0 0.0
      %v6166 = vand.u32 %v5004, 4294901760
      %v6167 = vsub.f32 %v5004, %v6166
      %v6168 = vand.u32 %v6167, 4294901760
      %6169 = vmatmul.mubr.f32.gmra.mxu0 %v6168
      %v6170 = vpop.f32.mrf.mxu0
      %v6171 = vadd.f32 %v5868, %v6170
      %v6172 = vpop.f32.mrf.mxu0
      %6173 = vmatprep.mubr.f32.mxu0 0.0
      %v6174 = vand.u32 %v5007, 4294901760
      %v6175 = vsub.f32 %v5007, %v6174
      %v6176 = vand.u32 %v6175, 4294901760
      %6177 = vmatmul.mubr.f32.gmra.mxu0 %v6176
      %v6178 = vpop.f32.mrf.mxu0
      %v6179 = vadd.f32 %v5875, %v6178
      %v6180 = vpop.f32.mrf.mxu0
      %6181 = vmatprep.mubr.f32.mxu0 0.0
      %v6182 = vand.u32 %v5010, 4294901760
      %v6183 = vsub.f32 %v5010, %v6182
      %v6184 = vand.u32 %v6183, 4294901760
      %6185 = vmatmul.mubr.f32.gmra.mxu0 %v6184
      %v6186 = vpop.f32.mrf.mxu0
      %v6187 = vadd.f32 %v5882, %v6186
      %v6188 = vpop.f32.mrf.mxu0
      %6189 = vmatprep.mubr.f32.mxu0 0.0
      %v6190 = vand.u32 %v5013, 4294901760
      %v6191 = vsub.f32 %v5013, %v6190
      %v6192 = vand.u32 %v6191, 4294901760
      %6193 = vmatmul.mubr.f32.gmra.mxu0 %v6192
      %v6194 = vpop.f32.mrf.mxu0
      %v6195 = vadd.f32 %v5889, %v6194
      %v6196 = vpop.f32.mrf.mxu0
      %6197 = vmatprep.mubr.f32.mxu0 0.0
      %v6198 = vand.u32 %v5016, 4294901760
      %v6199 = vsub.f32 %v5016, %v6198
      %v6200 = vand.u32 %v6199, 4294901760
      %6201 = vmatmul.mubr.f32.gmra.mxu0 %v6200
      %v6202 = vpop.f32.mrf.mxu0
      %v6203 = vadd.f32 %v5896, %v6202
      %v6204 = vpop.f32.mrf.mxu0
      %6205 = vmatprep.mubr.f32.mxu0 0.0
      %v6206 = vand.u32 %v5019, 4294901760
      %v6207 = vsub.f32 %v5019, %v6206
      %v6208 = vand.u32 %v6207, 4294901760
      %6209 = vmatmul.mubr.f32.gmra.mxu0 %v6208
      %v6210 = vpop.f32.mrf.mxu0
      %v6211 = vadd.f32 %v5903, %v6210
      %v6212 = vpop.f32.mrf.mxu0
      %6213 = vmatprep.mubr.f32.mxu0 0.0
      %v6214 = vand.u32 %v5022, 4294901760
      %v6215 = vsub.f32 %v5022, %v6214
      %v6216 = vand.u32 %v6215, 4294901760
      %6217 = vmatmul.mubr.f32.gmra.mxu0 %v6216
      %v6218 = vpop.f32.mrf.mxu0
      %v6219 = vadd.f32 %v5910, %v6218
      %v6220 = vpop.f32.mrf.mxu0
      %6221 = vmatprep.mubr.f32.mxu0 0.0
      %v6222 = vand.u32 %v5025, 4294901760
      %v6223 = vsub.f32 %v5025, %v6222
      %v6224 = vand.u32 %v6223, 4294901760
      %6225 = vmatmul.mubr.f32.gmra.mxu0 %v6224
      %v6226 = vpop.f32.mrf.mxu0
      %v6227 = vadd.f32 %v5917, %v6226
      %v6228 = vpop.f32.mrf.mxu0
      %6229 = vmatprep.mubr.f32.mxu0 0.0
      %v6230 = vand.u32 %v5028, 4294901760
      %v6231 = vsub.f32 %v5028, %v6230
      %v6232 = vand.u32 %v6231, 4294901760
      %6233 = vmatmul.mubr.f32.gmra.mxu0 %v6232
      %v6234 = vpop.f32.mrf.mxu0
      %v6235 = vadd.f32 %v5924, %v6234
      %v6236 = vpop.f32.mrf.mxu0
      %6237 = vmatprep.mubr.f32.mxu0 0.0
      %v6238 = vand.u32 %v5031, 4294901760
      %v6239 = vsub.f32 %v5031, %v6238
      %v6240 = vand.u32 %v6239, 4294901760
      %6241 = vmatmul.mubr.f32.gmra.mxu0 %v6240
      %v6242 = vpop.f32.mrf.mxu0
      %v6243 = vadd.f32 %v5931, %v6242
      %v6244 = vpop.f32.mrf.mxu0
      %6245 = vmatprep.mubr.f32.mxu0 0.0
      %v6246 = vand.u32 %v5034, 4294901760
      %v6247 = vsub.f32 %v5034, %v6246
      %v6248 = vand.u32 %v6247, 4294901760
      %6249 = vmatmul.mubr.f32.gmra.mxu0 %v6248
      %v6250 = vpop.f32.mrf.mxu0
      %v6251 = vadd.f32 %v5938, %v6250
      %v6252 = vpop.f32.mrf.mxu0
      %6253 = vmatprep.mubr.f32.mxu0 0.0
      %v6254 = vand.u32 %v5037, 4294901760
      %v6255 = vsub.f32 %v5037, %v6254
      %v6256 = vand.u32 %v6255, 4294901760
      %6257 = vmatmul.mubr.f32.gmra.mxu0 %v6256
      %v6258 = vpop.f32.mrf.mxu0
      %v6259 = vadd.f32 %v5945, %v6258
      %v6260 = vpop.f32.mrf.mxu0
      %6261 = vmatprep.mubr.f32.mxu0 0.0
      %v6262 = vand.u32 %v5040, 4294901760
      %v6263 = vsub.f32 %v5040, %v6262
      %v6264 = vand.u32 %v6263, 4294901760
      %6265 = vmatmul.mubr.f32.gmra.mxu0 %v6264
      %v6266 = vpop.f32.mrf.mxu0
      %v6267 = vadd.f32 %v5952, %v6266
      %v6268 = vpop.f32.mrf.mxu0
      %6269 = vmatprep.mubr.f32.mxu0 0.0
      %v6270 = vand.u32 %v5043, 4294901760
      %v6271 = vsub.f32 %v5043, %v6270
      %v6272 = vand.u32 %v6271, 4294901760
      %6273 = vmatmul.mubr.f32.gmra.mxu0 %v6272
      %v6274 = vpop.f32.mrf.mxu0
      %v6275 = vadd.f32 %v5959, %v6274
      %v6276 = vpop.f32.mrf.mxu0
      %6277 = vmatprep.mubr.f32.mxu0 0.0
      %v6278 = vand.u32 %v5046, 4294901760
      %v6279 = vsub.f32 %v5046, %v6278
      %v6280 = vand.u32 %v6279, 4294901760
      %6281 = vmatmul.mubr.f32.gmra.mxu0 %v6280
      %v6282 = vpop.f32.mrf.mxu0
      %v6283 = vadd.f32 %v5966, %v6282
      %v6284 = vpop.f32.mrf.mxu0
      %6285 = vmatprep.mubr.f32.mxu0 0.0
      %v6286 = vand.u32 %v5049, 4294901760
      %v6287 = vsub.f32 %v5049, %v6286
      %v6288 = vand.u32 %v6287, 4294901760
      %6289 = vmatmul.mubr.f32.gmra.mxu0 %v6288
      %v6290 = vpop.f32.mrf.mxu0
      %v6291 = vadd.f32 %v5973, %v6290
      %v6292 = vpop.f32.mrf.mxu0
      %6293 = vmatprep.mubr.f32.mxu0 0.0
      %v6294 = vand.u32 %v5052, 4294901760
      %v6295 = vsub.f32 %v5052, %v6294
      %v6296 = vand.u32 %v6295, 4294901760
      %6297 = vmatmul.mubr.f32.gmra.mxu0 %v6296
      %v6298 = vpop.f32.mrf.mxu0
      %v6299 = vadd.f32 %v5980, %v6298
      %v6300 = vpop.f32.mrf.mxu0
      %6301 = vmatprep.mubr.f32.mxu0 0.0
      %v6302 = vand.u32 %v5055, 4294901760
      %v6303 = vsub.f32 %v5055, %v6302
      %v6304 = vand.u32 %v6303, 4294901760
      %6305 = vmatmul.mubr.f32.gmra.mxu0 %v6304
      %v6306 = vpop.f32.mrf.mxu0
      %v6307 = vadd.f32 %v5987, %v6306
      %v6308 = vpop.f32.mrf.mxu0
      %6309 = vmatprep.mubr.f32.mxu0 0.0
      %v6310 = vand.u32 %v5058, 4294901760
      %v6311 = vsub.f32 %v5058, %v6310
      %v6312 = vand.u32 %v6311, 4294901760
      %6313 = vmatmul.mubr.f32.gmra.mxu0 %v6312
      %v6314 = vpop.f32.mrf.mxu0
      %v6315 = vadd.f32 %v5994, %v6314
      %v6316 = vpop.f32.mrf.mxu0
      %6317 = vmatprep.mubr.f32.mxu0 0.0
      %v6318 = vand.u32 %v5061, 4294901760
      %v6319 = vsub.f32 %v5061, %v6318
      %v6320 = vand.u32 %v6319, 4294901760
      %6321 = vmatmul.mubr.f32.gmra.mxu0 %v6320
      %v6322 = vpop.f32.mrf.mxu0
      %v6323 = vadd.f32 %v6001, %v6322
      %v6324 = vpop.f32.mrf.mxu0
      %6325 = vdwg.mxu0
      %6326 = vmatprep.subr.mxu0 0.0
      %6327 = vmatpush1.msra.mxu0 0.0
      %6328 = vmatprep.subr.mxu0 0.0
      %6329 = vmatpush1.msra.mxu0 0.0
      %6330 = vmatprep.subr.mxu0 0.0
      %6331 = vmatpush1.msra.mxu0 0.0
      %6332 = vmatprep.subr.mxu0 0.0
      %6333 = vmatpush1.msra.mxu0 0.0
      %6334 = vmatprep.subr.mxu0 0.0
      %6335 = vmatpush1.msra.mxu0 0.0
      %6336 = vmatprep.subr.mxu0 0.0
      %6337 = vmatpush1.msra.mxu0 0.0
      %6338 = vmatprep.subr.mxu0 0.0
      %6339 = vmatpush1.msra.mxu0 0.0
      %6340 = vmatprep.subr.mxu0 0.0
      %6341 = vmatpush1.msra.mxu0 0.0
      %6342 = vmatprep.subr.mxu0 0.0
      %6343 = vmatpush1.msra.mxu0 0.0
      %6344 = vmatprep.subr.mxu0 0.0
      %6345 = vmatpush1.msra.mxu0 0.0
      %6346 = vmatprep.subr.mxu0 0.0
      %6347 = vmatpush1.msra.mxu0 0.0
      %6348 = vmatprep.subr.mxu0 0.0
      %6349 = vmatpush1.msra.mxu0 0.0
      %6350 = vmatprep.subr.mxu0 0.0
      %6351 = vmatpush1.msra.mxu0 0.0
      %6352 = vmatprep.subr.mxu0 0.0
      %6353 = vmatpush1.msra.mxu0 0.0
      %6354 = vmatprep.subr.mxu0 0.0
      %6355 = vmatpush1.msra.mxu0 0.0
      %6356 = vmatprep.subr.mxu0 0.0
      %v6357 = vand.u32 %v5063, 4294901760
      %v6358 = vsub.f32 %v5063, %v6357
      %v6359 = vand.u32 %v6358, 4294901760
      %6360 = vmatpush1.msra.mxu0 %v6359
      %6361 = vmatprep.subr.mxu0 0.0
      %6362 = vmatpush2.msra.mxu0 0.0
      %6363 = vmatprep.subr.mxu0 0.0
      %6364 = vmatpush2.msra.mxu0 0.0
      %6365 = vmatprep.subr.mxu0 0.0
      %6366 = vmatpush2.msra.mxu0 0.0
      %6367 = vmatprep.subr.mxu0 0.0
      %6368 = vmatpush2.msra.mxu0 0.0
      %6369 = vmatprep.subr.mxu0 0.0
      %6370 = vmatpush2.msra.mxu0 0.0
      %6371 = vmatprep.subr.mxu0 0.0
      %6372 = vmatpush2.msra.mxu0 0.0
      %6373 = vmatprep.subr.mxu0 0.0
      %6374 = vmatpush2.msra.mxu0 0.0
      %6375 = vmatprep.subr.mxu0 0.0
      %6376 = vmatpush2.msra.mxu0 0.0
      %6377 = vmatprep.subr.mxu0 0.0
      %6378 = vmatpush2.msra.mxu0 0.0
      %6379 = vmatprep.subr.mxu0 0.0
      %6380 = vmatpush2.msra.mxu0 0.0
      %6381 = vmatprep.subr.mxu0 0.0
      %6382 = vmatpush2.msra.mxu0 0.0
      %6383 = vmatprep.subr.mxu0 0.0
      %6384 = vmatpush2.msra.mxu0 0.0
      %6385 = vmatprep.subr.mxu0 0.0
      %6386 = vmatpush2.msra.mxu0 0.0
      %6387 = vmatprep.subr.mxu0 0.0
      %6388 = vmatpush2.msra.mxu0 0.0
      %6389 = vmatprep.subr.mxu0 0.0
      %6390 = vmatpush2.msra.mxu0 0.0
      %6391 = vmatprep.subr.mxu0 0.0
      %6392 = vmatpush2.msra.mxu0 0.0
      %6393 = vmatprep.mubr.f32.mxu0 0.0
      %v6394 = vand.u32 %v4968, 4294901760
      %6395 = vmatmul.mubr.f32.gmra.mxu0 %v6394
      %v6396 = vpop.f32.mrf.mxu0
      %v6397 = vadd.f32 %v6075, %v6396
      %v6398 = vpop.f32.mrf.mxu0
      %6399 = vmatprep.mubr.f32.mxu0 0.0
      %v6400 = vand.u32 %v4971, 4294901760
      %6401 = vmatmul.mubr.f32.gmra.mxu0 %v6400
      %v6402 = vpop.f32.mrf.mxu0
      %v6403 = vadd.f32 %v6083, %v6402
      %v6404 = vpop.f32.mrf.mxu0
      %6405 = vmatprep.mubr.f32.mxu0 0.0
      %v6406 = vand.u32 %v4974, 4294901760
      %6407 = vmatmul.mubr.f32.gmra.mxu0 %v6406
      %v6408 = vpop.f32.mrf.mxu0
      %v6409 = vadd.f32 %v6091, %v6408
      %v6410 = vpop.f32.mrf.mxu0
      %6411 = vmatprep.mubr.f32.mxu0 0.0
      %v6412 = vand.u32 %v4977, 4294901760
      %6413 = vmatmul.mubr.f32.gmra.mxu0 %v6412
      %v6414 = vpop.f32.mrf.mxu0
      %v6415 = vadd.f32 %v6099, %v6414
      %v6416 = vpop.f32.mrf.mxu0
      %6417 = vmatprep.mubr.f32.mxu0 0.0
      %v6418 = vand.u32 %v4980, 4294901760
      %6419 = vmatmul.mubr.f32.gmra.mxu0 %v6418
      %v6420 = vpop.f32.mrf.mxu0
      %v6421 = vadd.f32 %v6107, %v6420
      %v6422 = vpop.f32.mrf.mxu0
      %6423 = vmatprep.mubr.f32.mxu0 0.0
      %v6424 = vand.u32 %v4983, 4294901760
      %6425 = vmatmul.mubr.f32.gmra.mxu0 %v6424
      %v6426 = vpop.f32.mrf.mxu0
      %v6427 = vadd.f32 %v6115, %v6426
      %v6428 = vpop.f32.mrf.mxu0
      %6429 = vmatprep.mubr.f32.mxu0 0.0
      %v6430 = vand.u32 %v4986, 4294901760
      %6431 = vmatmul.mubr.f32.gmra.mxu0 %v6430
      %v6432 = vpop.f32.mrf.mxu0
      %v6433 = vadd.f32 %v6123, %v6432
      %v6434 = vpop.f32.mrf.mxu0
      %6435 = vmatprep.mubr.f32.mxu0 0.0
      %v6436 = vand.u32 %v4989, 4294901760
      %6437 = vmatmul.mubr.f32.gmra.mxu0 %v6436
      %v6438 = vpop.f32.mrf.mxu0
      %v6439 = vadd.f32 %v6131, %v6438
      %v6440 = vpop.f32.mrf.mxu0
      %6441 = vmatprep.mubr.f32.mxu0 0.0
      %v6442 = vand.u32 %v4992, 4294901760
      %6443 = vmatmul.mubr.f32.gmra.mxu0 %v6442
      %v6444 = vpop.f32.mrf.mxu0
      %v6445 = vadd.f32 %v6139, %v6444
      %v6446 = vpop.f32.mrf.mxu0
      %6447 = vmatprep.mubr.f32.mxu0 0.0
      %v6448 = vand.u32 %v4995, 4294901760
      %6449 = vmatmul.mubr.f32.gmra.mxu0 %v6448
      %v6450 = vpop.f32.mrf.mxu0
      %v6451 = vadd.f32 %v6147, %v6450
      %v6452 = vpop.f32.mrf.mxu0
      %6453 = vmatprep.mubr.f32.mxu0 0.0
      %v6454 = vand.u32 %v4998, 4294901760
      %6455 = vmatmul.mubr.f32.gmra.mxu0 %v6454
      %v6456 = vpop.f32.mrf.mxu0
      %v6457 = vadd.f32 %v6155, %v6456
      %v6458 = vpop.f32.mrf.mxu0
      %6459 = vmatprep.mubr.f32.mxu0 0.0
      %v6460 = vand.u32 %v5001, 4294901760
      %6461 = vmatmul.mubr.f32.gmra.mxu0 %v6460
      %v6462 = vpop.f32.mrf.mxu0
      %v6463 = vadd.f32 %v6163, %v6462
      %v6464 = vpop.f32.mrf.mxu0
      %6465 = vmatprep.mubr.f32.mxu0 0.0
      %v6466 = vand.u32 %v5004, 4294901760
      %6467 = vmatmul.mubr.f32.gmra.mxu0 %v6466
      %v6468 = vpop.f32.mrf.mxu0
      %v6469 = vadd.f32 %v6171, %v6468
      %v6470 = vpop.f32.mrf.mxu0
      %6471 = vmatprep.mubr.f32.mxu0 0.0
      %v6472 = vand.u32 %v5007, 4294901760
      %6473 = vmatmul.mubr.f32.gmra.mxu0 %v6472
      %v6474 = vpop.f32.mrf.mxu0
      %v6475 = vadd.f32 %v6179, %v6474
      %v6476 = vpop.f32.mrf.mxu0
      %6477 = vmatprep.mubr.f32.mxu0 0.0
      %v6478 = vand.u32 %v5010, 4294901760
      %6479 = vmatmul.mubr.f32.gmra.mxu0 %v6478
      %v6480 = vpop.f32.mrf.mxu0
      %v6481 = vadd.f32 %v6187, %v6480
      %v6482 = vpop.f32.mrf.mxu0
      %6483 = vmatprep.mubr.f32.mxu0 0.0
      %v6484 = vand.u32 %v5013, 4294901760
      %6485 = vmatmul.mubr.f32.gmra.mxu0 %v6484
      %v6486 = vpop.f32.mrf.mxu0
      %v6487 = vadd.f32 %v6195, %v6486
      %v6488 = vpop.f32.mrf.mxu0
      %6489 = vmatprep.mubr.f32.mxu0 0.0
      %v6490 = vand.u32 %v5016, 4294901760
      %6491 = vmatmul.mubr.f32.gmra.mxu0 %v6490
      %v6492 = vpop.f32.mrf.mxu0
      %v6493 = vadd.f32 %v6203, %v6492
      %v6494 = vpop.f32.mrf.mxu0
      %6495 = vmatprep.mubr.f32.mxu0 0.0
      %v6496 = vand.u32 %v5019, 4294901760
      %6497 = vmatmul.mubr.f32.gmra.mxu0 %v6496
      %v6498 = vpop.f32.mrf.mxu0
      %v6499 = vadd.f32 %v6211, %v6498
      %v6500 = vpop.f32.mrf.mxu0
      %6501 = vmatprep.mubr.f32.mxu0 0.0
      %v6502 = vand.u32 %v5022, 4294901760
      %6503 = vmatmul.mubr.f32.gmra.mxu0 %v6502
      %v6504 = vpop.f32.mrf.mxu0
      %v6505 = vadd.f32 %v6219, %v6504
      %v6506 = vpop.f32.mrf.mxu0
      %6507 = vmatprep.mubr.f32.mxu0 0.0
      %v6508 = vand.u32 %v5025, 4294901760
      %6509 = vmatmul.mubr.f32.gmra.mxu0 %v6508
      %v6510 = vpop.f32.mrf.mxu0
      %v6511 = vadd.f32 %v6227, %v6510
      %v6512 = vpop.f32.mrf.mxu0
      %6513 = vmatprep.mubr.f32.mxu0 0.0
      %v6514 = vand.u32 %v5028, 4294901760
      %6515 = vmatmul.mubr.f32.gmra.mxu0 %v6514
      %v6516 = vpop.f32.mrf.mxu0
      %v6517 = vadd.f32 %v6235, %v6516
      %v6518 = vpop.f32.mrf.mxu0
      %6519 = vmatprep.mubr.f32.mxu0 0.0
      %v6520 = vand.u32 %v5031, 4294901760
      %6521 = vmatmul.mubr.f32.gmra.mxu0 %v6520
      %v6522 = vpop.f32.mrf.mxu0
      %v6523 = vadd.f32 %v6243, %v6522
      %v6524 = vpop.f32.mrf.mxu0
      %6525 = vmatprep.mubr.f32.mxu0 0.0
      %v6526 = vand.u32 %v5034, 4294901760
      %6527 = vmatmul.mubr.f32.gmra.mxu0 %v6526
      %v6528 = vpop.f32.mrf.mxu0
      %v6529 = vadd.f32 %v6251, %v6528
      %v6530 = vpop.f32.mrf.mxu0
      %6531 = vmatprep.mubr.f32.mxu0 0.0
      %v6532 = vand.u32 %v5037, 4294901760
      %6533 = vmatmul.mubr.f32.gmra.mxu0 %v6532
      %v6534 = vpop.f32.mrf.mxu0
      %v6535 = vadd.f32 %v6259, %v6534
      %v6536 = vpop.f32.mrf.mxu0
      %6537 = vmatprep.mubr.f32.mxu0 0.0
      %v6538 = vand.u32 %v5040, 4294901760
      %6539 = vmatmul.mubr.f32.gmra.mxu0 %v6538
      %v6540 = vpop.f32.mrf.mxu0
      %v6541 = vadd.f32 %v6267, %v6540
      %v6542 = vpop.f32.mrf.mxu0
      %6543 = vmatprep.mubr.f32.mxu0 0.0
      %v6544 = vand.u32 %v5043, 4294901760
      %6545 = vmatmul.mubr.f32.gmra.mxu0 %v6544
      %v6546 = vpop.f32.mrf.mxu0
      %v6547 = vadd.f32 %v6275, %v6546
      %v6548 = vpop.f32.mrf.mxu0
      %6549 = vmatprep.mubr.f32.mxu0 0.0
      %v6550 = vand.u32 %v5046, 4294901760
      %6551 = vmatmul.mubr.f32.gmra.mxu0 %v6550
      %v6552 = vpop.f32.mrf.mxu0
      %v6553 = vadd.f32 %v6283, %v6552
      %v6554 = vpop.f32.mrf.mxu0
      %6555 = vmatprep.mubr.f32.mxu0 0.0
      %v6556 = vand.u32 %v5049, 4294901760
      %6557 = vmatmul.mubr.f32.gmra.mxu0 %v6556
      %v6558 = vpop.f32.mrf.mxu0
      %v6559 = vadd.f32 %v6291, %v6558
      %v6560 = vpop.f32.mrf.mxu0
      %6561 = vmatprep.mubr.f32.mxu0 0.0
      %v6562 = vand.u32 %v5052, 4294901760
      %6563 = vmatmul.mubr.f32.gmra.mxu0 %v6562
      %v6564 = vpop.f32.mrf.mxu0
      %v6565 = vadd.f32 %v6299, %v6564
      %v6566 = vpop.f32.mrf.mxu0
      %6567 = vmatprep.mubr.f32.mxu0 0.0
      %v6568 = vand.u32 %v5055, 4294901760
      %6569 = vmatmul.mubr.f32.gmra.mxu0 %v6568
      %v6570 = vpop.f32.mrf.mxu0
      %v6571 = vadd.f32 %v6307, %v6570
      %v6572 = vpop.f32.mrf.mxu0
      %6573 = vmatprep.mubr.f32.mxu0 0.0
      %v6574 = vand.u32 %v5058, 4294901760
      %6575 = vmatmul.mubr.f32.gmra.mxu0 %v6574
      %v6576 = vpop.f32.mrf.mxu0
      %v6577 = vadd.f32 %v6315, %v6576
      %v6578 = vpop.f32.mrf.mxu0
      %6579 = vmatprep.mubr.f32.mxu0 0.0
      %v6580 = vand.u32 %v5061, 4294901760
      %6581 = vmatmul.mubr.f32.gmra.mxu0 %v6580
      %v6582 = vpop.f32.mrf.mxu0
      %v6583 = vadd.f32 %v6323, %v6582
      %v6584 = vpop.f32.mrf.mxu0
      %6585 = vdwg.mxu0
      %6586 = vmatprep.subr.mxu0 0.0
      %6587 = vmatpush1.msra.mxu0 0.0
      %6588 = vmatprep.subr.mxu0 0.0
      %6589 = vmatpush1.msra.mxu0 0.0
      %6590 = vmatprep.subr.mxu0 0.0
      %6591 = vmatpush1.msra.mxu0 0.0
      %6592 = vmatprep.subr.mxu0 0.0
      %6593 = vmatpush1.msra.mxu0 0.0
      %6594 = vmatprep.subr.mxu0 0.0
      %6595 = vmatpush1.msra.mxu0 0.0
      %6596 = vmatprep.subr.mxu0 0.0
      %6597 = vmatpush1.msra.mxu0 0.0
      %6598 = vmatprep.subr.mxu0 0.0
      %6599 = vmatpush1.msra.mxu0 0.0
      %6600 = vmatprep.subr.mxu0 0.0
      %6601 = vmatpush1.msra.mxu0 0.0
      %6602 = vmatprep.subr.mxu0 0.0
      %6603 = vmatpush1.msra.mxu0 0.0
      %6604 = vmatprep.subr.mxu0 0.0
      %6605 = vmatpush1.msra.mxu0 0.0
      %6606 = vmatprep.subr.mxu0 0.0
      %6607 = vmatpush1.msra.mxu0 0.0
      %6608 = vmatprep.subr.mxu0 0.0
      %6609 = vmatpush1.msra.mxu0 0.0
      %6610 = vmatprep.subr.mxu0 0.0
      %6611 = vmatpush1.msra.mxu0 0.0
      %6612 = vmatprep.subr.mxu0 0.0
      %6613 = vmatpush1.msra.mxu0 0.0
      %6614 = vmatprep.subr.mxu0 0.0
      %6615 = vmatpush1.msra.mxu0 0.0
      %6616 = vmatprep.subr.mxu0 0.0
      %v6617 = vand.u32 %v5063, 4294901760
      %6618 = vmatpush1.msra.mxu0 %v6617
      %6619 = vmatprep.subr.mxu0 0.0
      %6620 = vmatpush2.msra.mxu0 0.0
      %6621 = vmatprep.subr.mxu0 0.0
      %6622 = vmatpush2.msra.mxu0 0.0
      %6623 = vmatprep.subr.mxu0 0.0
      %6624 = vmatpush2.msra.mxu0 0.0
      %6625 = vmatprep.subr.mxu0 0.0
      %6626 = vmatpush2.msra.mxu0 0.0
      %6627 = vmatprep.subr.mxu0 0.0
      %6628 = vmatpush2.msra.mxu0 0.0
      %6629 = vmatprep.subr.mxu0 0.0
      %6630 = vmatpush2.msra.mxu0 0.0
      %6631 = vmatprep.subr.mxu0 0.0
      %6632 = vmatpush2.msra.mxu0 0.0
      %6633 = vmatprep.subr.mxu0 0.0
      %6634 = vmatpush2.msra.mxu0 0.0
      %6635 = vmatprep.subr.mxu0 0.0
      %6636 = vmatpush2.msra.mxu0 0.0
      %6637 = vmatprep.subr.mxu0 0.0
      %6638 = vmatpush2.msra.mxu0 0.0
      %6639 = vmatprep.subr.mxu0 0.0
      %6640 = vmatpush2.msra.mxu0 0.0
      %6641 = vmatprep.subr.mxu0 0.0
      %6642 = vmatpush2.msra.mxu0 0.0
      %6643 = vmatprep.subr.mxu0 0.0
      %6644 = vmatpush2.msra.mxu0 0.0
      %6645 = vmatprep.subr.mxu0 0.0
      %6646 = vmatpush2.msra.mxu0 0.0
      %6647 = vmatprep.subr.mxu0 0.0
      %6648 = vmatpush2.msra.mxu0 0.0
      %6649 = vmatprep.subr.mxu0 0.0
      %6650 = vmatpush2.msra.mxu0 0.0
      %6651 = vmatprep.mubr.f32.mxu0 0.0
      %v6652 = vand.u32 %v4968, 4294901760
      %6653 = vmatmul.mubr.f32.gmra.mxu0 %v6652
      %v6654 = vpop.f32.mrf.mxu0
      %v6655 = vadd.f32 %v6397, %v6654
      %v6656 = vpop.f32.mrf.mxu0
      %6657 = vmatprep.mubr.f32.mxu0 0.0
      %v6658 = vand.u32 %v4971, 4294901760
      %6659 = vmatmul.mubr.f32.gmra.mxu0 %v6658
      %v6660 = vpop.f32.mrf.mxu0
      %v6661 = vadd.f32 %v6403, %v6660
      %v6662 = vpop.f32.mrf.mxu0
      %6663 = vmatprep.mubr.f32.mxu0 0.0
      %v6664 = vand.u32 %v4974, 4294901760
      %6665 = vmatmul.mubr.f32.gmra.mxu0 %v6664
      %v6666 = vpop.f32.mrf.mxu0
      %v6667 = vadd.f32 %v6409, %v6666
      %v6668 = vpop.f32.mrf.mxu0
      %6669 = vmatprep.mubr.f32.mxu0 0.0
      %v6670 = vand.u32 %v4977, 4294901760
      %6671 = vmatmul.mubr.f32.gmra.mxu0 %v6670
      %v6672 = vpop.f32.mrf.mxu0
      %v6673 = vadd.f32 %v6415, %v6672
      %v6674 = vpop.f32.mrf.mxu0
      %6675 = vmatprep.mubr.f32.mxu0 0.0
      %v6676 = vand.u32 %v4980, 4294901760
      %6677 = vmatmul.mubr.f32.gmra.mxu0 %v6676
      %v6678 = vpop.f32.mrf.mxu0
      %v6679 = vadd.f32 %v6421, %v6678
      %v6680 = vpop.f32.mrf.mxu0
      %6681 = vmatprep.mubr.f32.mxu0 0.0
      %v6682 = vand.u32 %v4983, 4294901760
      %6683 = vmatmul.mubr.f32.gmra.mxu0 %v6682
      %v6684 = vpop.f32.mrf.mxu0
      %v6685 = vadd.f32 %v6427, %v6684
      %v6686 = vpop.f32.mrf.mxu0
      %6687 = vmatprep.mubr.f32.mxu0 0.0
      %v6688 = vand.u32 %v4986, 4294901760
      %6689 = vmatmul.mubr.f32.gmra.mxu0 %v6688
      %v6690 = vpop.f32.mrf.mxu0
      %v6691 = vadd.f32 %v6433, %v6690
      %v6692 = vpop.f32.mrf.mxu0
      %6693 = vmatprep.mubr.f32.mxu0 0.0
      %v6694 = vand.u32 %v4989, 4294901760
      %6695 = vmatmul.mubr.f32.gmra.mxu0 %v6694
      %v6696 = vpop.f32.mrf.mxu0
      %v6697 = vadd.f32 %v6439, %v6696
      %v6698 = vpop.f32.mrf.mxu0
      %6699 = vmatprep.mubr.f32.mxu0 0.0
      %v6700 = vand.u32 %v4992, 4294901760
      %6701 = vmatmul.mubr.f32.gmra.mxu0 %v6700
      %v6702 = vpop.f32.mrf.mxu0
      %v6703 = vadd.f32 %v6445, %v6702
      %v6704 = vpop.f32.mrf.mxu0
      %6705 = vmatprep.mubr.f32.mxu0 0.0
      %v6706 = vand.u32 %v4995, 4294901760
      %6707 = vmatmul.mubr.f32.gmra.mxu0 %v6706
      %v6708 = vpop.f32.mrf.mxu0
      %v6709 = vadd.f32 %v6451, %v6708
      %v6710 = vpop.f32.mrf.mxu0
      %6711 = vmatprep.mubr.f32.mxu0 0.0
      %v6712 = vand.u32 %v4998, 4294901760
      %6713 = vmatmul.mubr.f32.gmra.mxu0 %v6712
      %v6714 = vpop.f32.mrf.mxu0
      %v6715 = vadd.f32 %v6457, %v6714
      %v6716 = vpop.f32.mrf.mxu0
      %6717 = vmatprep.mubr.f32.mxu0 0.0
      %v6718 = vand.u32 %v5001, 4294901760
      %6719 = vmatmul.mubr.f32.gmra.mxu0 %v6718
      %v6720 = vpop.f32.mrf.mxu0
      %v6721 = vadd.f32 %v6463, %v6720
      %v6722 = vpop.f32.mrf.mxu0
      %6723 = vmatprep.mubr.f32.mxu0 0.0
      %v6724 = vand.u32 %v5004, 4294901760
      %6725 = vmatmul.mubr.f32.gmra.mxu0 %v6724
      %v6726 = vpop.f32.mrf.mxu0
      %v6727 = vadd.f32 %v6469, %v6726
      %v6728 = vpop.f32.mrf.mxu0
      %6729 = vmatprep.mubr.f32.mxu0 0.0
      %v6730 = vand.u32 %v5007, 4294901760
      %6731 = vmatmul.mubr.f32.gmra.mxu0 %v6730
      %v6732 = vpop.f32.mrf.mxu0
      %v6733 = vadd.f32 %v6475, %v6732
      %v6734 = vpop.f32.mrf.mxu0
      %6735 = vmatprep.mubr.f32.mxu0 0.0
      %v6736 = vand.u32 %v5010, 4294901760
      %6737 = vmatmul.mubr.f32.gmra.mxu0 %v6736
      %v6738 = vpop.f32.mrf.mxu0
      %v6739 = vadd.f32 %v6481, %v6738
      %v6740 = vpop.f32.mrf.mxu0
      %6741 = vmatprep.mubr.f32.mxu0 0.0
      %v6742 = vand.u32 %v5013, 4294901760
      %6743 = vmatmul.mubr.f32.gmra.mxu0 %v6742
      %v6744 = vpop.f32.mrf.mxu0
      %v6745 = vadd.f32 %v6487, %v6744
      %v6746 = vpop.f32.mrf.mxu0
      %6747 = vmatprep.mubr.f32.mxu0 0.0
      %v6748 = vand.u32 %v5016, 4294901760
      %6749 = vmatmul.mubr.f32.gmra.mxu0 %v6748
      %v6750 = vpop.f32.mrf.mxu0
      %v6751 = vadd.f32 %v6493, %v6750
      %v6752 = vpop.f32.mrf.mxu0
      %6753 = vmatprep.mubr.f32.mxu0 0.0
      %v6754 = vand.u32 %v5019, 4294901760
      %6755 = vmatmul.mubr.f32.gmra.mxu0 %v6754
      %v6756 = vpop.f32.mrf.mxu0
      %v6757 = vadd.f32 %v6499, %v6756
      %v6758 = vpop.f32.mrf.mxu0
      %6759 = vmatprep.mubr.f32.mxu0 0.0
      %v6760 = vand.u32 %v5022, 4294901760
      %6761 = vmatmul.mubr.f32.gmra.mxu0 %v6760
      %v6762 = vpop.f32.mrf.mxu0
      %v6763 = vadd.f32 %v6505, %v6762
      %v6764 = vpop.f32.mrf.mxu0
      %6765 = vmatprep.mubr.f32.mxu0 0.0
      %v6766 = vand.u32 %v5025, 4294901760
      %6767 = vmatmul.mubr.f32.gmra.mxu0 %v6766
      %v6768 = vpop.f32.mrf.mxu0
      %v6769 = vadd.f32 %v6511, %v6768
      %v6770 = vpop.f32.mrf.mxu0
      %6771 = vmatprep.mubr.f32.mxu0 0.0
      %v6772 = vand.u32 %v5028, 4294901760
      %6773 = vmatmul.mubr.f32.gmra.mxu0 %v6772
      %v6774 = vpop.f32.mrf.mxu0
      %v6775 = vadd.f32 %v6517, %v6774
      %v6776 = vpop.f32.mrf.mxu0
      %6777 = vmatprep.mubr.f32.mxu0 0.0
      %v6778 = vand.u32 %v5031, 4294901760
      %6779 = vmatmul.mubr.f32.gmra.mxu0 %v6778
      %v6780 = vpop.f32.mrf.mxu0
      %v6781 = vadd.f32 %v6523, %v6780
      %v6782 = vpop.f32.mrf.mxu0
      %6783 = vmatprep.mubr.f32.mxu0 0.0
      %v6784 = vand.u32 %v5034, 4294901760
      %6785 = vmatmul.mubr.f32.gmra.mxu0 %v6784
      %v6786 = vpop.f32.mrf.mxu0
      %v6787 = vadd.f32 %v6529, %v6786
      %v6788 = vpop.f32.mrf.mxu0
      %6789 = vmatprep.mubr.f32.mxu0 0.0
      %v6790 = vand.u32 %v5037, 4294901760
      %6791 = vmatmul.mubr.f32.gmra.mxu0 %v6790
      %v6792 = vpop.f32.mrf.mxu0
      %v6793 = vadd.f32 %v6535, %v6792
      %v6794 = vpop.f32.mrf.mxu0
      %6795 = vmatprep.mubr.f32.mxu0 0.0
      %v6796 = vand.u32 %v5040, 4294901760
      %6797 = vmatmul.mubr.f32.gmra.mxu0 %v6796
      %v6798 = vpop.f32.mrf.mxu0
      %v6799 = vadd.f32 %v6541, %v6798
      %v6800 = vpop.f32.mrf.mxu0
      %6801 = vmatprep.mubr.f32.mxu0 0.0
      %v6802 = vand.u32 %v5043, 4294901760
      %6803 = vmatmul.mubr.f32.gmra.mxu0 %v6802
      %v6804 = vpop.f32.mrf.mxu0
      %v6805 = vadd.f32 %v6547, %v6804
      %v6806 = vpop.f32.mrf.mxu0
      %6807 = vmatprep.mubr.f32.mxu0 0.0
      %v6808 = vand.u32 %v5046, 4294901760
      %6809 = vmatmul.mubr.f32.gmra.mxu0 %v6808
      %v6810 = vpop.f32.mrf.mxu0
      %v6811 = vadd.f32 %v6553, %v6810
      %v6812 = vpop.f32.mrf.mxu0
      %6813 = vmatprep.mubr.f32.mxu0 0.0
      %v6814 = vand.u32 %v5049, 4294901760
      %6815 = vmatmul.mubr.f32.gmra.mxu0 %v6814
      %v6816 = vpop.f32.mrf.mxu0
      %v6817 = vadd.f32 %v6559, %v6816
      %v6818 = vpop.f32.mrf.mxu0
      %6819 = vmatprep.mubr.f32.mxu0 0.0
      %v6820 = vand.u32 %v5052, 4294901760
      %6821 = vmatmul.mubr.f32.gmra.mxu0 %v6820
      %v6822 = vpop.f32.mrf.mxu0
      %v6823 = vadd.f32 %v6565, %v6822
      %v6824 = vpop.f32.mrf.mxu0
      %6825 = vmatprep.mubr.f32.mxu0 0.0
      %v6826 = vand.u32 %v5055, 4294901760
      %6827 = vmatmul.mubr.f32.gmra.mxu0 %v6826
      %v6828 = vpop.f32.mrf.mxu0
      %v6829 = vadd.f32 %v6571, %v6828
      %v6830 = vpop.f32.mrf.mxu0
      %6831 = vmatprep.mubr.f32.mxu0 0.0
      %v6832 = vand.u32 %v5058, 4294901760
      %6833 = vmatmul.mubr.f32.gmra.mxu0 %v6832
      %v6834 = vpop.f32.mrf.mxu0
      %v6835 = vadd.f32 %v6577, %v6834
      %v6836 = vpop.f32.mrf.mxu0
      %6837 = vmatprep.mubr.f32.mxu0 0.0
      %v6838 = vand.u32 %v5061, 4294901760
      %6839 = vmatmul.mubr.f32.gmra.mxu0 %v6838
      %v6840 = vpop.f32.mrf.mxu0
      %v6841 = vadd.f32 %v6583, %v6840
      %v6842 = vpop.f32.mrf.mxu0
      %6843 = vdwg.mxu0
      %v6845 = vsel %vm4966, %v2305, 0
      %v6848 = vsel %vm4966, %v2306, 0
      %v6851 = vsel %vm4966, %v2307, 0
      %v6854 = vsel %vm4966, %v2308, 0
      %v6857 = vsel %vm4966, %v2309, 0
      %v6860 = vsel %vm4966, %v2310, 0
      %v6863 = vsel %vm4966, %v2311, 0
      %v6866 = vsel %vm4966, %v2312, 0
      %v6869 = vsel %vm4966, %v2313, 0
      %v6872 = vsel %vm4966, %v2314, 0
      %v6875 = vsel %vm4966, %v2315, 0
      %v6878 = vsel %vm4966, %v2316, 0
      %v6881 = vsel %vm4966, %v2317, 0
      %v6884 = vsel %vm4966, %v2318, 0
      %v6887 = vsel %vm4966, %v2319, 0
      %v6890 = vsel %vm4966, %v2320, 0
      %v6893 = vsel %vm4966, %v2321, 0
      %v6896 = vsel %vm4966, %v2322, 0
      %v6899 = vsel %vm4966, %v2323, 0
      %v6902 = vsel %vm4966, %v2324, 0
      %v6905 = vsel %vm4966, %v2325, 0
      %v6908 = vsel %vm4966, %v2326, 0
      %v6911 = vsel %vm4966, %v2327, 0
      %v6914 = vsel %vm4966, %v2328, 0
      %v6917 = vsel %vm4966, %v2329, 0
      %v6920 = vsel %vm4966, %v2330, 0
      %v6923 = vsel %vm4966, %v2331, 0
      %v6926 = vsel %vm4966, %v2332, 0
      %v6929 = vsel %vm4966, %v2333, 0
      %v6932 = vsel %vm4966, %v2334, 0
      %v6935 = vsel %vm4966, %v2335, 0
      %v6938 = vsel %vm4966, %v2336, 0
      %v6940 = vsel %vm2475, %v4963, 0
      %6942 = vmatprep.subr.mxu0 0.0
      %6943 = vmatpush1.msra.mxu0 0.0
      %6944 = vmatprep.subr.mxu0 0.0
      %6945 = vmatpush1.msra.mxu0 0.0
      %6946 = vmatprep.subr.mxu0 0.0
      %6947 = vmatpush1.msra.mxu0 0.0
      %6948 = vmatprep.subr.mxu0 0.0
      %6949 = vmatpush1.msra.mxu0 0.0
      %6950 = vmatprep.subr.mxu0 0.0
      %6951 = vmatpush1.msra.mxu0 0.0
      %6952 = vmatprep.subr.mxu0 0.0
      %6953 = vmatpush1.msra.mxu0 0.0
      %6954 = vmatprep.subr.mxu0 0.0
      %6955 = vmatpush1.msra.mxu0 0.0
      %6956 = vmatprep.subr.mxu0 0.0
      %6957 = vmatpush1.msra.mxu0 0.0
      %6958 = vmatprep.subr.mxu0 0.0
      %6959 = vmatpush1.msra.mxu0 0.0
      %6960 = vmatprep.subr.mxu0 0.0
      %6961 = vmatpush1.msra.mxu0 0.0
      %6962 = vmatprep.subr.mxu0 0.0
      %6963 = vmatpush1.msra.mxu0 0.0
      %6964 = vmatprep.subr.mxu0 0.0
      %6965 = vmatpush1.msra.mxu0 0.0
      %6966 = vmatprep.subr.mxu0 0.0
      %6967 = vmatpush1.msra.mxu0 0.0
      %6968 = vmatprep.subr.mxu0 0.0
      %6969 = vmatpush1.msra.mxu0 0.0
      %6970 = vmatprep.subr.mxu0 0.0
      %6971 = vmatpush1.msra.mxu0 0.0
      %6972 = vmatprep.subr.mxu0 0.0
      %v6973 = vand.u32 %v6940, 4294901760
      %6974 = vmatpush1.msra.mxu0 %v6973
      %6975 = vmatprep.subr.mxu0 0.0
      %6976 = vmatpush2.msra.mxu0 0.0
      %6977 = vmatprep.subr.mxu0 0.0
      %6978 = vmatpush2.msra.mxu0 0.0
      %6979 = vmatprep.subr.mxu0 0.0
      %6980 = vmatpush2.msra.mxu0 0.0
      %6981 = vmatprep.subr.mxu0 0.0
      %6982 = vmatpush2.msra.mxu0 0.0
      %6983 = vmatprep.subr.mxu0 0.0
      %6984 = vmatpush2.msra.mxu0 0.0
      %6985 = vmatprep.subr.mxu0 0.0
      %6986 = vmatpush2.msra.mxu0 0.0
      %6987 = vmatprep.subr.mxu0 0.0
      %6988 = vmatpush2.msra.mxu0 0.0
      %6989 = vmatprep.subr.mxu0 0.0
      %6990 = vmatpush2.msra.mxu0 0.0
      %6991 = vmatprep.subr.mxu0 0.0
      %6992 = vmatpush2.msra.mxu0 0.0
      %6993 = vmatprep.subr.mxu0 0.0
      %6994 = vmatpush2.msra.mxu0 0.0
      %6995 = vmatprep.subr.mxu0 0.0
      %6996 = vmatpush2.msra.mxu0 0.0
      %6997 = vmatprep.subr.mxu0 0.0
      %6998 = vmatpush2.msra.mxu0 0.0
      %6999 = vmatprep.subr.mxu0 0.0
      %7000 = vmatpush2.msra.mxu0 0.0
      %7001 = vmatprep.subr.mxu0 0.0
      %7002 = vmatpush2.msra.mxu0 0.0
      %7003 = vmatprep.subr.mxu0 0.0
      %7004 = vmatpush2.msra.mxu0 0.0
      %7005 = vmatprep.subr.mxu0 0.0
      %7006 = vmatpush2.msra.mxu0 0.0
      %7007 = vmatprep.mubr.f32.mxu0 0.0
      %v7008 = vand.u32 %v6845, 4294901760
      %v7009 = vsub.f32 %v6845, %v7008
      %v7010 = vand.u32 %v7009, 4294901760
      %v7011 = vsub.f32 %v7009, %v7010
      %v7012 = vand.u32 %v7011, 4294901760
      %7013 = vmatmul.mubr.f32.gmra.mxu0 %v7012
      %v7014 = vpop.f32.mrf.mxu0
      %v7015 = vadd.f32 %v6655, %v7014
      %v7016 = vpop.f32.mrf.mxu0
      %7017 = vmatprep.mubr.f32.mxu0 0.0
      %v7018 = vand.u32 %v6848, 4294901760
      %v7019 = vsub.f32 %v6848, %v7018
      %v7020 = vand.u32 %v7019, 4294901760
      %v7021 = vsub.f32 %v7019, %v7020
      %v7022 = vand.u32 %v7021, 4294901760
      %7023 = vmatmul.mubr.f32.gmra.mxu0 %v7022
      %v7024 = vpop.f32.mrf.mxu0
      %v7025 = vadd.f32 %v6661, %v7024
      %v7026 = vpop.f32.mrf.mxu0
      %7027 = vmatprep.mubr.f32.mxu0 0.0
      %v7028 = vand.u32 %v6851, 4294901760
      %v7029 = vsub.f32 %v6851, %v7028
      %v7030 = vand.u32 %v7029, 4294901760
      %v7031 = vsub.f32 %v7029, %v7030
      %v7032 = vand.u32 %v7031, 4294901760
      %7033 = vmatmul.mubr.f32.gmra.mxu0 %v7032
      %v7034 = vpop.f32.mrf.mxu0
      %v7035 = vadd.f32 %v6667, %v7034
      %v7036 = vpop.f32.mrf.mxu0
      %7037 = vmatprep.mubr.f32.mxu0 0.0
      %v7038 = vand.u32 %v6854, 4294901760
      %v7039 = vsub.f32 %v6854, %v7038
      %v7040 = vand.u32 %v7039, 4294901760
      %v7041 = vsub.f32 %v7039, %v7040
      %v7042 = vand.u32 %v7041, 4294901760
      %7043 = vmatmul.mubr.f32.gmra.mxu0 %v7042
      %v7044 = vpop.f32.mrf.mxu0
      %v7045 = vadd.f32 %v6673, %v7044
      %v7046 = vpop.f32.mrf.mxu0
      %7047 = vmatprep.mubr.f32.mxu0 0.0
      %v7048 = vand.u32 %v6857, 4294901760
      %v7049 = vsub.f32 %v6857, %v7048
      %v7050 = vand.u32 %v7049, 4294901760
      %v7051 = vsub.f32 %v7049, %v7050
      %v7052 = vand.u32 %v7051, 4294901760
      %7053 = vmatmul.mubr.f32.gmra.mxu0 %v7052
      %v7054 = vpop.f32.mrf.mxu0
      %v7055 = vadd.f32 %v6679, %v7054
      %v7056 = vpop.f32.mrf.mxu0
      %7057 = vmatprep.mubr.f32.mxu0 0.0
      %v7058 = vand.u32 %v6860, 4294901760
      %v7059 = vsub.f32 %v6860, %v7058
      %v7060 = vand.u32 %v7059, 4294901760
      %v7061 = vsub.f32 %v7059, %v7060
      %v7062 = vand.u32 %v7061, 4294901760
      %7063 = vmatmul.mubr.f32.gmra.mxu0 %v7062
      %v7064 = vpop.f32.mrf.mxu0
      %v7065 = vadd.f32 %v6685, %v7064
      %v7066 = vpop.f32.mrf.mxu0
      %7067 = vmatprep.mubr.f32.mxu0 0.0
      %v7068 = vand.u32 %v6863, 4294901760
      %v7069 = vsub.f32 %v6863, %v7068
      %v7070 = vand.u32 %v7069, 4294901760
      %v7071 = vsub.f32 %v7069, %v7070
      %v7072 = vand.u32 %v7071, 4294901760
      %7073 = vmatmul.mubr.f32.gmra.mxu0 %v7072
      %v7074 = vpop.f32.mrf.mxu0
      %v7075 = vadd.f32 %v6691, %v7074
      %v7076 = vpop.f32.mrf.mxu0
      %7077 = vmatprep.mubr.f32.mxu0 0.0
      %v7078 = vand.u32 %v6866, 4294901760
      %v7079 = vsub.f32 %v6866, %v7078
      %v7080 = vand.u32 %v7079, 4294901760
      %v7081 = vsub.f32 %v7079, %v7080
      %v7082 = vand.u32 %v7081, 4294901760
      %7083 = vmatmul.mubr.f32.gmra.mxu0 %v7082
      %v7084 = vpop.f32.mrf.mxu0
      %v7085 = vadd.f32 %v6697, %v7084
      %v7086 = vpop.f32.mrf.mxu0
      %7087 = vmatprep.mubr.f32.mxu0 0.0
      %v7088 = vand.u32 %v6869, 4294901760
      %v7089 = vsub.f32 %v6869, %v7088
      %v7090 = vand.u32 %v7089, 4294901760
      %v7091 = vsub.f32 %v7089, %v7090
      %v7092 = vand.u32 %v7091, 4294901760
      %7093 = vmatmul.mubr.f32.gmra.mxu0 %v7092
      %v7094 = vpop.f32.mrf.mxu0
      %v7095 = vadd.f32 %v6703, %v7094
      %v7096 = vpop.f32.mrf.mxu0
      %7097 = vmatprep.mubr.f32.mxu0 0.0
      %v7098 = vand.u32 %v6872, 4294901760
      %v7099 = vsub.f32 %v6872, %v7098
      %v7100 = vand.u32 %v7099, 4294901760
      %v7101 = vsub.f32 %v7099, %v7100
      %v7102 = vand.u32 %v7101, 4294901760
      %7103 = vmatmul.mubr.f32.gmra.mxu0 %v7102
      %v7104 = vpop.f32.mrf.mxu0
      %v7105 = vadd.f32 %v6709, %v7104
      %v7106 = vpop.f32.mrf.mxu0
      %7107 = vmatprep.mubr.f32.mxu0 0.0
      %v7108 = vand.u32 %v6875, 4294901760
      %v7109 = vsub.f32 %v6875, %v7108
      %v7110 = vand.u32 %v7109, 4294901760
      %v7111 = vsub.f32 %v7109, %v7110
      %v7112 = vand.u32 %v7111, 4294901760
      %7113 = vmatmul.mubr.f32.gmra.mxu0 %v7112
      %v7114 = vpop.f32.mrf.mxu0
      %v7115 = vadd.f32 %v6715, %v7114
      %v7116 = vpop.f32.mrf.mxu0
      %7117 = vmatprep.mubr.f32.mxu0 0.0
      %v7118 = vand.u32 %v6878, 4294901760
      %v7119 = vsub.f32 %v6878, %v7118
      %v7120 = vand.u32 %v7119, 4294901760
      %v7121 = vsub.f32 %v7119, %v7120
      %v7122 = vand.u32 %v7121, 4294901760
      %7123 = vmatmul.mubr.f32.gmra.mxu0 %v7122
      %v7124 = vpop.f32.mrf.mxu0
      %v7125 = vadd.f32 %v6721, %v7124
      %v7126 = vpop.f32.mrf.mxu0
      %7127 = vmatprep.mubr.f32.mxu0 0.0
      %v7128 = vand.u32 %v6881, 4294901760
      %v7129 = vsub.f32 %v6881, %v7128
      %v7130 = vand.u32 %v7129, 4294901760
      %v7131 = vsub.f32 %v7129, %v7130
      %v7132 = vand.u32 %v7131, 4294901760
      %7133 = vmatmul.mubr.f32.gmra.mxu0 %v7132
      %v7134 = vpop.f32.mrf.mxu0
      %v7135 = vadd.f32 %v6727, %v7134
      %v7136 = vpop.f32.mrf.mxu0
      %7137 = vmatprep.mubr.f32.mxu0 0.0
      %v7138 = vand.u32 %v6884, 4294901760
      %v7139 = vsub.f32 %v6884, %v7138
      %v7140 = vand.u32 %v7139, 4294901760
      %v7141 = vsub.f32 %v7139, %v7140
      %v7142 = vand.u32 %v7141, 4294901760
      %7143 = vmatmul.mubr.f32.gmra.mxu0 %v7142
      %v7144 = vpop.f32.mrf.mxu0
      %v7145 = vadd.f32 %v6733, %v7144
      %v7146 = vpop.f32.mrf.mxu0
      %7147 = vmatprep.mubr.f32.mxu0 0.0
      %v7148 = vand.u32 %v6887, 4294901760
      %v7149 = vsub.f32 %v6887, %v7148
      %v7150 = vand.u32 %v7149, 4294901760
      %v7151 = vsub.f32 %v7149, %v7150
      %v7152 = vand.u32 %v7151, 4294901760
      %7153 = vmatmul.mubr.f32.gmra.mxu0 %v7152
      %v7154 = vpop.f32.mrf.mxu0
      %v7155 = vadd.f32 %v6739, %v7154
      %v7156 = vpop.f32.mrf.mxu0
      %7157 = vmatprep.mubr.f32.mxu0 0.0
      %v7158 = vand.u32 %v6890, 4294901760
      %v7159 = vsub.f32 %v6890, %v7158
      %v7160 = vand.u32 %v7159, 4294901760
      %v7161 = vsub.f32 %v7159, %v7160
      %v7162 = vand.u32 %v7161, 4294901760
      %7163 = vmatmul.mubr.f32.gmra.mxu0 %v7162
      %v7164 = vpop.f32.mrf.mxu0
      %v7165 = vadd.f32 %v6745, %v7164
      %v7166 = vpop.f32.mrf.mxu0
      %7167 = vmatprep.mubr.f32.mxu0 0.0
      %v7168 = vand.u32 %v6893, 4294901760
      %v7169 = vsub.f32 %v6893, %v7168
      %v7170 = vand.u32 %v7169, 4294901760
      %v7171 = vsub.f32 %v7169, %v7170
      %v7172 = vand.u32 %v7171, 4294901760
      %7173 = vmatmul.mubr.f32.gmra.mxu0 %v7172
      %v7174 = vpop.f32.mrf.mxu0
      %v7175 = vadd.f32 %v6751, %v7174
      %v7176 = vpop.f32.mrf.mxu0
      %7177 = vmatprep.mubr.f32.mxu0 0.0
      %v7178 = vand.u32 %v6896, 4294901760
      %v7179 = vsub.f32 %v6896, %v7178
      %v7180 = vand.u32 %v7179, 4294901760
      %v7181 = vsub.f32 %v7179, %v7180
      %v7182 = vand.u32 %v7181, 4294901760
      %7183 = vmatmul.mubr.f32.gmra.mxu0 %v7182
      %v7184 = vpop.f32.mrf.mxu0
      %v7185 = vadd.f32 %v6757, %v7184
      %v7186 = vpop.f32.mrf.mxu0
      %7187 = vmatprep.mubr.f32.mxu0 0.0
      %v7188 = vand.u32 %v6899, 4294901760
      %v7189 = vsub.f32 %v6899, %v7188
      %v7190 = vand.u32 %v7189, 4294901760
      %v7191 = vsub.f32 %v7189, %v7190
      %v7192 = vand.u32 %v7191, 4294901760
      %7193 = vmatmul.mubr.f32.gmra.mxu0 %v7192
      %v7194 = vpop.f32.mrf.mxu0
      %v7195 = vadd.f32 %v6763, %v7194
      %v7196 = vpop.f32.mrf.mxu0
      %7197 = vmatprep.mubr.f32.mxu0 0.0
      %v7198 = vand.u32 %v6902, 4294901760
      %v7199 = vsub.f32 %v6902, %v7198
      %v7200 = vand.u32 %v7199, 4294901760
      %v7201 = vsub.f32 %v7199, %v7200
      %v7202 = vand.u32 %v7201, 4294901760
      %7203 = vmatmul.mubr.f32.gmra.mxu0 %v7202
      %v7204 = vpop.f32.mrf.mxu0
      %v7205 = vadd.f32 %v6769, %v7204
      %v7206 = vpop.f32.mrf.mxu0
      %7207 = vmatprep.mubr.f32.mxu0 0.0
      %v7208 = vand.u32 %v6905, 4294901760
      %v7209 = vsub.f32 %v6905, %v7208
      %v7210 = vand.u32 %v7209, 4294901760
      %v7211 = vsub.f32 %v7209, %v7210
      %v7212 = vand.u32 %v7211, 4294901760
      %7213 = vmatmul.mubr.f32.gmra.mxu0 %v7212
      %v7214 = vpop.f32.mrf.mxu0
      %v7215 = vadd.f32 %v6775, %v7214
      %v7216 = vpop.f32.mrf.mxu0
      %7217 = vmatprep.mubr.f32.mxu0 0.0
      %v7218 = vand.u32 %v6908, 4294901760
      %v7219 = vsub.f32 %v6908, %v7218
      %v7220 = vand.u32 %v7219, 4294901760
      %v7221 = vsub.f32 %v7219, %v7220
      %v7222 = vand.u32 %v7221, 4294901760
      %7223 = vmatmul.mubr.f32.gmra.mxu0 %v7222
      %v7224 = vpop.f32.mrf.mxu0
      %v7225 = vadd.f32 %v6781, %v7224
      %v7226 = vpop.f32.mrf.mxu0
      %7227 = vmatprep.mubr.f32.mxu0 0.0
      %v7228 = vand.u32 %v6911, 4294901760
      %v7229 = vsub.f32 %v6911, %v7228
      %v7230 = vand.u32 %v7229, 4294901760
      %v7231 = vsub.f32 %v7229, %v7230
      %v7232 = vand.u32 %v7231, 4294901760
      %7233 = vmatmul.mubr.f32.gmra.mxu0 %v7232
      %v7234 = vpop.f32.mrf.mxu0
      %v7235 = vadd.f32 %v6787, %v7234
      %v7236 = vpop.f32.mrf.mxu0
      %7237 = vmatprep.mubr.f32.mxu0 0.0
      %v7238 = vand.u32 %v6914, 4294901760
      %v7239 = vsub.f32 %v6914, %v7238
      %v7240 = vand.u32 %v7239, 4294901760
      %v7241 = vsub.f32 %v7239, %v7240
      %v7242 = vand.u32 %v7241, 4294901760
      %7243 = vmatmul.mubr.f32.gmra.mxu0 %v7242
      %v7244 = vpop.f32.mrf.mxu0
      %v7245 = vadd.f32 %v6793, %v7244
      %v7246 = vpop.f32.mrf.mxu0
      %7247 = vmatprep.mubr.f32.mxu0 0.0
      %v7248 = vand.u32 %v6917, 4294901760
      %v7249 = vsub.f32 %v6917, %v7248
      %v7250 = vand.u32 %v7249, 4294901760
      %v7251 = vsub.f32 %v7249, %v7250
      %v7252 = vand.u32 %v7251, 4294901760
      %7253 = vmatmul.mubr.f32.gmra.mxu0 %v7252
      %v7254 = vpop.f32.mrf.mxu0
      %v7255 = vadd.f32 %v6799, %v7254
      %v7256 = vpop.f32.mrf.mxu0
      %7257 = vmatprep.mubr.f32.mxu0 0.0
      %v7258 = vand.u32 %v6920, 4294901760
      %v7259 = vsub.f32 %v6920, %v7258
      %v7260 = vand.u32 %v7259, 4294901760
      %v7261 = vsub.f32 %v7259, %v7260
      %v7262 = vand.u32 %v7261, 4294901760
      %7263 = vmatmul.mubr.f32.gmra.mxu0 %v7262
      %v7264 = vpop.f32.mrf.mxu0
      %v7265 = vadd.f32 %v6805, %v7264
      %v7266 = vpop.f32.mrf.mxu0
      %7267 = vmatprep.mubr.f32.mxu0 0.0
      %v7268 = vand.u32 %v6923, 4294901760
      %v7269 = vsub.f32 %v6923, %v7268
      %v7270 = vand.u32 %v7269, 4294901760
      %v7271 = vsub.f32 %v7269, %v7270
      %v7272 = vand.u32 %v7271, 4294901760
      %7273 = vmatmul.mubr.f32.gmra.mxu0 %v7272
      %v7274 = vpop.f32.mrf.mxu0
      %v7275 = vadd.f32 %v6811, %v7274
      %v7276 = vpop.f32.mrf.mxu0
      %7277 = vmatprep.mubr.f32.mxu0 0.0
      %v7278 = vand.u32 %v6926, 4294901760
      %v7279 = vsub.f32 %v6926, %v7278
      %v7280 = vand.u32 %v7279, 4294901760
      %v7281 = vsub.f32 %v7279, %v7280
      %v7282 = vand.u32 %v7281, 4294901760
      %7283 = vmatmul.mubr.f32.gmra.mxu0 %v7282
      %v7284 = vpop.f32.mrf.mxu0
      %v7285 = vadd.f32 %v6817, %v7284
      %v7286 = vpop.f32.mrf.mxu0
      %7287 = vmatprep.mubr.f32.mxu0 0.0
      %v7288 = vand.u32 %v6929, 4294901760
      %v7289 = vsub.f32 %v6929, %v7288
      %v7290 = vand.u32 %v7289, 4294901760
      %v7291 = vsub.f32 %v7289, %v7290
      %v7292 = vand.u32 %v7291, 4294901760
      %7293 = vmatmul.mubr.f32.gmra.mxu0 %v7292
      %v7294 = vpop.f32.mrf.mxu0
      %v7295 = vadd.f32 %v6823, %v7294
      %v7296 = vpop.f32.mrf.mxu0
      %7297 = vmatprep.mubr.f32.mxu0 0.0
      %v7298 = vand.u32 %v6932, 4294901760
      %v7299 = vsub.f32 %v6932, %v7298
      %v7300 = vand.u32 %v7299, 4294901760
      %v7301 = vsub.f32 %v7299, %v7300
      %v7302 = vand.u32 %v7301, 4294901760
      %7303 = vmatmul.mubr.f32.gmra.mxu0 %v7302
      %v7304 = vpop.f32.mrf.mxu0
      %v7305 = vadd.f32 %v6829, %v7304
      %v7306 = vpop.f32.mrf.mxu0
      %7307 = vmatprep.mubr.f32.mxu0 0.0
      %v7308 = vand.u32 %v6935, 4294901760
      %v7309 = vsub.f32 %v6935, %v7308
      %v7310 = vand.u32 %v7309, 4294901760
      %v7311 = vsub.f32 %v7309, %v7310
      %v7312 = vand.u32 %v7311, 4294901760
      %7313 = vmatmul.mubr.f32.gmra.mxu0 %v7312
      %v7314 = vpop.f32.mrf.mxu0
      %v7315 = vadd.f32 %v6835, %v7314
      %v7316 = vpop.f32.mrf.mxu0
      %7317 = vmatprep.mubr.f32.mxu0 0.0
      %v7318 = vand.u32 %v6938, 4294901760
      %v7319 = vsub.f32 %v6938, %v7318
      %v7320 = vand.u32 %v7319, 4294901760
      %v7321 = vsub.f32 %v7319, %v7320
      %v7322 = vand.u32 %v7321, 4294901760
      %7323 = vmatmul.mubr.f32.gmra.mxu0 %v7322
      %v7324 = vpop.f32.mrf.mxu0
      %v7325 = vadd.f32 %v6841, %v7324
      %v7326 = vpop.f32.mrf.mxu0
      %7327 = vdwg.mxu0
      %7328 = vmatprep.subr.mxu0 0.0
      %7329 = vmatpush1.msra.mxu0 0.0
      %7330 = vmatprep.subr.mxu0 0.0
      %7331 = vmatpush1.msra.mxu0 0.0
      %7332 = vmatprep.subr.mxu0 0.0
      %7333 = vmatpush1.msra.mxu0 0.0
      %7334 = vmatprep.subr.mxu0 0.0
      %7335 = vmatpush1.msra.mxu0 0.0
      %7336 = vmatprep.subr.mxu0 0.0
      %7337 = vmatpush1.msra.mxu0 0.0
      %7338 = vmatprep.subr.mxu0 0.0
      %7339 = vmatpush1.msra.mxu0 0.0
      %7340 = vmatprep.subr.mxu0 0.0
      %7341 = vmatpush1.msra.mxu0 0.0
      %7342 = vmatprep.subr.mxu0 0.0
      %7343 = vmatpush1.msra.mxu0 0.0
      %7344 = vmatprep.subr.mxu0 0.0
      %7345 = vmatpush1.msra.mxu0 0.0
      %7346 = vmatprep.subr.mxu0 0.0
      %7347 = vmatpush1.msra.mxu0 0.0
      %7348 = vmatprep.subr.mxu0 0.0
      %7349 = vmatpush1.msra.mxu0 0.0
      %7350 = vmatprep.subr.mxu0 0.0
      %7351 = vmatpush1.msra.mxu0 0.0
      %7352 = vmatprep.subr.mxu0 0.0
      %7353 = vmatpush1.msra.mxu0 0.0
      %7354 = vmatprep.subr.mxu0 0.0
      %7355 = vmatpush1.msra.mxu0 0.0
      %7356 = vmatprep.subr.mxu0 0.0
      %7357 = vmatpush1.msra.mxu0 0.0
      %7358 = vmatprep.subr.mxu0 0.0
      %v7359 = vand.u32 %v6940, 4294901760
      %v7360 = vsub.f32 %v6940, %v7359
      %v7361 = vand.u32 %v7360, 4294901760
      %v7362 = vsub.f32 %v7360, %v7361
      %v7363 = vand.u32 %v7362, 4294901760
      %7364 = vmatpush1.msra.mxu0 %v7363
      %7365 = vmatprep.subr.mxu0 0.0
      %7366 = vmatpush2.msra.mxu0 0.0
      %7367 = vmatprep.subr.mxu0 0.0
      %7368 = vmatpush2.msra.mxu0 0.0
      %7369 = vmatprep.subr.mxu0 0.0
      %7370 = vmatpush2.msra.mxu0 0.0
      %7371 = vmatprep.subr.mxu0 0.0
      %7372 = vmatpush2.msra.mxu0 0.0
      %7373 = vmatprep.subr.mxu0 0.0
      %7374 = vmatpush2.msra.mxu0 0.0
      %7375 = vmatprep.subr.mxu0 0.0
      %7376 = vmatpush2.msra.mxu0 0.0
      %7377 = vmatprep.subr.mxu0 0.0
      %7378 = vmatpush2.msra.mxu0 0.0
      %7379 = vmatprep.subr.mxu0 0.0
      %7380 = vmatpush2.msra.mxu0 0.0
      %7381 = vmatprep.subr.mxu0 0.0
      %7382 = vmatpush2.msra.mxu0 0.0
      %7383 = vmatprep.subr.mxu0 0.0
      %7384 = vmatpush2.msra.mxu0 0.0
      %7385 = vmatprep.subr.mxu0 0.0
      %7386 = vmatpush2.msra.mxu0 0.0
      %7387 = vmatprep.subr.mxu0 0.0
      %7388 = vmatpush2.msra.mxu0 0.0
      %7389 = vmatprep.subr.mxu0 0.0
      %7390 = vmatpush2.msra.mxu0 0.0
      %7391 = vmatprep.subr.mxu0 0.0
      %7392 = vmatpush2.msra.mxu0 0.0
      %7393 = vmatprep.subr.mxu0 0.0
      %7394 = vmatpush2.msra.mxu0 0.0
      %7395 = vmatprep.subr.mxu0 0.0
      %7396 = vmatpush2.msra.mxu0 0.0
      %7397 = vmatprep.mubr.f32.mxu0 0.0
      %v7398 = vand.u32 %v6845, 4294901760
      %7399 = vmatmul.mubr.f32.gmra.mxu0 %v7398
      %v7400 = vpop.f32.mrf.mxu0
      %v7401 = vadd.f32 %v7015, %v7400
      %v7402 = vpop.f32.mrf.mxu0
      %7403 = vmatprep.mubr.f32.mxu0 0.0
      %v7404 = vand.u32 %v6848, 4294901760
      %7405 = vmatmul.mubr.f32.gmra.mxu0 %v7404
      %v7406 = vpop.f32.mrf.mxu0
      %v7407 = vadd.f32 %v7025, %v7406
      %v7408 = vpop.f32.mrf.mxu0
      %7409 = vmatprep.mubr.f32.mxu0 0.0
      %v7410 = vand.u32 %v6851, 4294901760
      %7411 = vmatmul.mubr.f32.gmra.mxu0 %v7410
      %v7412 = vpop.f32.mrf.mxu0
      %v7413 = vadd.f32 %v7035, %v7412
      %v7414 = vpop.f32.mrf.mxu0
      %7415 = vmatprep.mubr.f32.mxu0 0.0
      %v7416 = vand.u32 %v6854, 4294901760
      %7417 = vmatmul.mubr.f32.gmra.mxu0 %v7416
      %v7418 = vpop.f32.mrf.mxu0
      %v7419 = vadd.f32 %v7045, %v7418
      %v7420 = vpop.f32.mrf.mxu0
      %7421 = vmatprep.mubr.f32.mxu0 0.0
      %v7422 = vand.u32 %v6857, 4294901760
      %7423 = vmatmul.mubr.f32.gmra.mxu0 %v7422
      %v7424 = vpop.f32.mrf.mxu0
      %v7425 = vadd.f32 %v7055, %v7424
      %v7426 = vpop.f32.mrf.mxu0
      %7427 = vmatprep.mubr.f32.mxu0 0.0
      %v7428 = vand.u32 %v6860, 4294901760
      %7429 = vmatmul.mubr.f32.gmra.mxu0 %v7428
      %v7430 = vpop.f32.mrf.mxu0
      %v7431 = vadd.f32 %v7065, %v7430
      %v7432 = vpop.f32.mrf.mxu0
      %7433 = vmatprep.mubr.f32.mxu0 0.0
      %v7434 = vand.u32 %v6863, 4294901760
      %7435 = vmatmul.mubr.f32.gmra.mxu0 %v7434
      %v7436 = vpop.f32.mrf.mxu0
      %v7437 = vadd.f32 %v7075, %v7436
      %v7438 = vpop.f32.mrf.mxu0
      %7439 = vmatprep.mubr.f32.mxu0 0.0
      %v7440 = vand.u32 %v6866, 4294901760
      %7441 = vmatmul.mubr.f32.gmra.mxu0 %v7440
      %v7442 = vpop.f32.mrf.mxu0
      %v7443 = vadd.f32 %v7085, %v7442
      %v7444 = vpop.f32.mrf.mxu0
      %7445 = vmatprep.mubr.f32.mxu0 0.0
      %v7446 = vand.u32 %v6869, 4294901760
      %7447 = vmatmul.mubr.f32.gmra.mxu0 %v7446
      %v7448 = vpop.f32.mrf.mxu0
      %v7449 = vadd.f32 %v7095, %v7448
      %v7450 = vpop.f32.mrf.mxu0
      %7451 = vmatprep.mubr.f32.mxu0 0.0
      %v7452 = vand.u32 %v6872, 4294901760
      %7453 = vmatmul.mubr.f32.gmra.mxu0 %v7452
      %v7454 = vpop.f32.mrf.mxu0
      %v7455 = vadd.f32 %v7105, %v7454
      %v7456 = vpop.f32.mrf.mxu0
      %7457 = vmatprep.mubr.f32.mxu0 0.0
      %v7458 = vand.u32 %v6875, 4294901760
      %7459 = vmatmul.mubr.f32.gmra.mxu0 %v7458
      %v7460 = vpop.f32.mrf.mxu0
      %v7461 = vadd.f32 %v7115, %v7460
      %v7462 = vpop.f32.mrf.mxu0
      %7463 = vmatprep.mubr.f32.mxu0 0.0
      %v7464 = vand.u32 %v6878, 4294901760
      %7465 = vmatmul.mubr.f32.gmra.mxu0 %v7464
      %v7466 = vpop.f32.mrf.mxu0
      %v7467 = vadd.f32 %v7125, %v7466
      %v7468 = vpop.f32.mrf.mxu0
      %7469 = vmatprep.mubr.f32.mxu0 0.0
      %v7470 = vand.u32 %v6881, 4294901760
      %7471 = vmatmul.mubr.f32.gmra.mxu0 %v7470
      %v7472 = vpop.f32.mrf.mxu0
      %v7473 = vadd.f32 %v7135, %v7472
      %v7474 = vpop.f32.mrf.mxu0
      %7475 = vmatprep.mubr.f32.mxu0 0.0
      %v7476 = vand.u32 %v6884, 4294901760
      %7477 = vmatmul.mubr.f32.gmra.mxu0 %v7476
      %v7478 = vpop.f32.mrf.mxu0
      %v7479 = vadd.f32 %v7145, %v7478
      %v7480 = vpop.f32.mrf.mxu0
      %7481 = vmatprep.mubr.f32.mxu0 0.0
      %v7482 = vand.u32 %v6887, 4294901760
      %7483 = vmatmul.mubr.f32.gmra.mxu0 %v7482
      %v7484 = vpop.f32.mrf.mxu0
      %v7485 = vadd.f32 %v7155, %v7484
      %v7486 = vpop.f32.mrf.mxu0
      %7487 = vmatprep.mubr.f32.mxu0 0.0
      %v7488 = vand.u32 %v6890, 4294901760
      %7489 = vmatmul.mubr.f32.gmra.mxu0 %v7488
      %v7490 = vpop.f32.mrf.mxu0
      %v7491 = vadd.f32 %v7165, %v7490
      %v7492 = vpop.f32.mrf.mxu0
      %7493 = vmatprep.mubr.f32.mxu0 0.0
      %v7494 = vand.u32 %v6893, 4294901760
      %7495 = vmatmul.mubr.f32.gmra.mxu0 %v7494
      %v7496 = vpop.f32.mrf.mxu0
      %v7497 = vadd.f32 %v7175, %v7496
      %v7498 = vpop.f32.mrf.mxu0
      %7499 = vmatprep.mubr.f32.mxu0 0.0
      %v7500 = vand.u32 %v6896, 4294901760
      %7501 = vmatmul.mubr.f32.gmra.mxu0 %v7500
      %v7502 = vpop.f32.mrf.mxu0
      %v7503 = vadd.f32 %v7185, %v7502
      %v7504 = vpop.f32.mrf.mxu0
      %7505 = vmatprep.mubr.f32.mxu0 0.0
      %v7506 = vand.u32 %v6899, 4294901760
      %7507 = vmatmul.mubr.f32.gmra.mxu0 %v7506
      %v7508 = vpop.f32.mrf.mxu0
      %v7509 = vadd.f32 %v7195, %v7508
      %v7510 = vpop.f32.mrf.mxu0
      %7511 = vmatprep.mubr.f32.mxu0 0.0
      %v7512 = vand.u32 %v6902, 4294901760
      %7513 = vmatmul.mubr.f32.gmra.mxu0 %v7512
      %v7514 = vpop.f32.mrf.mxu0
      %v7515 = vadd.f32 %v7205, %v7514
      %v7516 = vpop.f32.mrf.mxu0
      %7517 = vmatprep.mubr.f32.mxu0 0.0
      %v7518 = vand.u32 %v6905, 4294901760
      %7519 = vmatmul.mubr.f32.gmra.mxu0 %v7518
      %v7520 = vpop.f32.mrf.mxu0
      %v7521 = vadd.f32 %v7215, %v7520
      %v7522 = vpop.f32.mrf.mxu0
      %7523 = vmatprep.mubr.f32.mxu0 0.0
      %v7524 = vand.u32 %v6908, 4294901760
      %7525 = vmatmul.mubr.f32.gmra.mxu0 %v7524
      %v7526 = vpop.f32.mrf.mxu0
      %v7527 = vadd.f32 %v7225, %v7526
      %v7528 = vpop.f32.mrf.mxu0
      %7529 = vmatprep.mubr.f32.mxu0 0.0
      %v7530 = vand.u32 %v6911, 4294901760
      %7531 = vmatmul.mubr.f32.gmra.mxu0 %v7530
      %v7532 = vpop.f32.mrf.mxu0
      %v7533 = vadd.f32 %v7235, %v7532
      %v7534 = vpop.f32.mrf.mxu0
      %7535 = vmatprep.mubr.f32.mxu0 0.0
      %v7536 = vand.u32 %v6914, 4294901760
      %7537 = vmatmul.mubr.f32.gmra.mxu0 %v7536
      %v7538 = vpop.f32.mrf.mxu0
      %v7539 = vadd.f32 %v7245, %v7538
      %v7540 = vpop.f32.mrf.mxu0
      %7541 = vmatprep.mubr.f32.mxu0 0.0
      %v7542 = vand.u32 %v6917, 4294901760
      %7543 = vmatmul.mubr.f32.gmra.mxu0 %v7542
      %v7544 = vpop.f32.mrf.mxu0
      %v7545 = vadd.f32 %v7255, %v7544
      %v7546 = vpop.f32.mrf.mxu0
      %7547 = vmatprep.mubr.f32.mxu0 0.0
      %v7548 = vand.u32 %v6920, 4294901760
      %7549 = vmatmul.mubr.f32.gmra.mxu0 %v7548
      %v7550 = vpop.f32.mrf.mxu0
      %v7551 = vadd.f32 %v7265, %v7550
      %v7552 = vpop.f32.mrf.mxu0
      %7553 = vmatprep.mubr.f32.mxu0 0.0
      %v7554 = vand.u32 %v6923, 4294901760
      %7555 = vmatmul.mubr.f32.gmra.mxu0 %v7554
      %v7556 = vpop.f32.mrf.mxu0
      %v7557 = vadd.f32 %v7275, %v7556
      %v7558 = vpop.f32.mrf.mxu0
      %7559 = vmatprep.mubr.f32.mxu0 0.0
      %v7560 = vand.u32 %v6926, 4294901760
      %7561 = vmatmul.mubr.f32.gmra.mxu0 %v7560
      %v7562 = vpop.f32.mrf.mxu0
      %v7563 = vadd.f32 %v7285, %v7562
      %v7564 = vpop.f32.mrf.mxu0
      %7565 = vmatprep.mubr.f32.mxu0 0.0
      %v7566 = vand.u32 %v6929, 4294901760
      %7567 = vmatmul.mubr.f32.gmra.mxu0 %v7566
      %v7568 = vpop.f32.mrf.mxu0
      %v7569 = vadd.f32 %v7295, %v7568
      %v7570 = vpop.f32.mrf.mxu0
      %7571 = vmatprep.mubr.f32.mxu0 0.0
      %v7572 = vand.u32 %v6932, 4294901760
      %7573 = vmatmul.mubr.f32.gmra.mxu0 %v7572
      %v7574 = vpop.f32.mrf.mxu0
      %v7575 = vadd.f32 %v7305, %v7574
      %v7576 = vpop.f32.mrf.mxu0
      %7577 = vmatprep.mubr.f32.mxu0 0.0
      %v7578 = vand.u32 %v6935, 4294901760
      %7579 = vmatmul.mubr.f32.gmra.mxu0 %v7578
      %v7580 = vpop.f32.mrf.mxu0
      %v7581 = vadd.f32 %v7315, %v7580
      %v7582 = vpop.f32.mrf.mxu0
      %7583 = vmatprep.mubr.f32.mxu0 0.0
      %v7584 = vand.u32 %v6938, 4294901760
      %7585 = vmatmul.mubr.f32.gmra.mxu0 %v7584
      %v7586 = vpop.f32.mrf.mxu0
      %v7587 = vadd.f32 %v7325, %v7586
      %v7588 = vpop.f32.mrf.mxu0
      %7589 = vdwg.mxu0
      %7590 = vmatprep.subr.mxu0 0.0
      %7591 = vmatpush1.msra.mxu0 0.0
      %7592 = vmatprep.subr.mxu0 0.0
      %7593 = vmatpush1.msra.mxu0 0.0
      %7594 = vmatprep.subr.mxu0 0.0
      %7595 = vmatpush1.msra.mxu0 0.0
      %7596 = vmatprep.subr.mxu0 0.0
      %7597 = vmatpush1.msra.mxu0 0.0
      %7598 = vmatprep.subr.mxu0 0.0
      %7599 = vmatpush1.msra.mxu0 0.0
      %7600 = vmatprep.subr.mxu0 0.0
      %7601 = vmatpush1.msra.mxu0 0.0
      %7602 = vmatprep.subr.mxu0 0.0
      %7603 = vmatpush1.msra.mxu0 0.0
      %7604 = vmatprep.subr.mxu0 0.0
      %7605 = vmatpush1.msra.mxu0 0.0
      %7606 = vmatprep.subr.mxu0 0.0
      %7607 = vmatpush1.msra.mxu0 0.0
      %7608 = vmatprep.subr.mxu0 0.0
      %7609 = vmatpush1.msra.mxu0 0.0
      %7610 = vmatprep.subr.mxu0 0.0
      %7611 = vmatpush1.msra.mxu0 0.0
      %7612 = vmatprep.subr.mxu0 0.0
      %7613 = vmatpush1.msra.mxu0 0.0
      %7614 = vmatprep.subr.mxu0 0.0
      %7615 = vmatpush1.msra.mxu0 0.0
      %7616 = vmatprep.subr.mxu0 0.0
      %7617 = vmatpush1.msra.mxu0 0.0
      %7618 = vmatprep.subr.mxu0 0.0
      %7619 = vmatpush1.msra.mxu0 0.0
      %7620 = vmatprep.subr.mxu0 0.0
      %v7621 = vand.u32 %v6940, 4294901760
      %v7622 = vsub.f32 %v6940, %v7621
      %7623 = vmatpush1.msra.mxu0 %v7622
      %7624 = vmatprep.subr.mxu0 0.0
      %7625 = vmatpush2.msra.mxu0 0.0
      %7626 = vmatprep.subr.mxu0 0.0
      %7627 = vmatpush2.msra.mxu0 0.0
      %7628 = vmatprep.subr.mxu0 0.0
      %7629 = vmatpush2.msra.mxu0 0.0
      %7630 = vmatprep.subr.mxu0 0.0
      %7631 = vmatpush2.msra.mxu0 0.0
      %7632 = vmatprep.subr.mxu0 0.0
      %7633 = vmatpush2.msra.mxu0 0.0
      %7634 = vmatprep.subr.mxu0 0.0
      %7635 = vmatpush2.msra.mxu0 0.0
      %7636 = vmatprep.subr.mxu0 0.0
      %7637 = vmatpush2.msra.mxu0 0.0
      %7638 = vmatprep.subr.mxu0 0.0
      %7639 = vmatpush2.msra.mxu0 0.0
      %7640 = vmatprep.subr.mxu0 0.0
      %7641 = vmatpush2.msra.mxu0 0.0
      %7642 = vmatprep.subr.mxu0 0.0
      %7643 = vmatpush2.msra.mxu0 0.0
      %7644 = vmatprep.subr.mxu0 0.0
      %7645 = vmatpush2.msra.mxu0 0.0
      %7646 = vmatprep.subr.mxu0 0.0
      %7647 = vmatpush2.msra.mxu0 0.0
      %7648 = vmatprep.subr.mxu0 0.0
      %7649 = vmatpush2.msra.mxu0 0.0
      %7650 = vmatprep.subr.mxu0 0.0
      %7651 = vmatpush2.msra.mxu0 0.0
      %7652 = vmatprep.subr.mxu0 0.0
      %7653 = vmatpush2.msra.mxu0 0.0
      %7654 = vmatprep.subr.mxu0 0.0
      %7655 = vmatpush2.msra.mxu0 0.0
      %7656 = vmatprep.mubr.f32.mxu0 0.0
      %v7657 = vand.u32 %v6845, 4294901760
      %v7658 = vsub.f32 %v6845, %v7657
      %7659 = vmatmul.mubr.f32.gmra.mxu0 %v7658
      %v7660 = vpop.f32.mrf.mxu0
      %v7661 = vadd.f32 %v7401, %v7660
      %v7662 = vpop.f32.mrf.mxu0
      %7663 = vmatprep.mubr.f32.mxu0 0.0
      %v7664 = vand.u32 %v6848, 4294901760
      %v7665 = vsub.f32 %v6848, %v7664
      %7666 = vmatmul.mubr.f32.gmra.mxu0 %v7665
      %v7667 = vpop.f32.mrf.mxu0
      %v7668 = vadd.f32 %v7407, %v7667
      %v7669 = vpop.f32.mrf.mxu0
      %7670 = vmatprep.mubr.f32.mxu0 0.0
      %v7671 = vand.u32 %v6851, 4294901760
      %v7672 = vsub.f32 %v6851, %v7671
      %7673 = vmatmul.mubr.f32.gmra.mxu0 %v7672
      %v7674 = vpop.f32.mrf.mxu0
      %v7675 = vadd.f32 %v7413, %v7674
      %v7676 = vpop.f32.mrf.mxu0
      %7677 = vmatprep.mubr.f32.mxu0 0.0
      %v7678 = vand.u32 %v6854, 4294901760
      %v7679 = vsub.f32 %v6854, %v7678
      %7680 = vmatmul.mubr.f32.gmra.mxu0 %v7679
      %v7681 = vpop.f32.mrf.mxu0
      %v7682 = vadd.f32 %v7419, %v7681
      %v7683 = vpop.f32.mrf.mxu0
      %7684 = vmatprep.mubr.f32.mxu0 0.0
      %v7685 = vand.u32 %v6857, 4294901760
      %v7686 = vsub.f32 %v6857, %v7685
      %7687 = vmatmul.mubr.f32.gmra.mxu0 %v7686
      %v7688 = vpop.f32.mrf.mxu0
      %v7689 = vadd.f32 %v7425, %v7688
      %v7690 = vpop.f32.mrf.mxu0
      %7691 = vmatprep.mubr.f32.mxu0 0.0
      %v7692 = vand.u32 %v6860, 4294901760
      %v7693 = vsub.f32 %v6860, %v7692
      %7694 = vmatmul.mubr.f32.gmra.mxu0 %v7693
      %v7695 = vpop.f32.mrf.mxu0
      %v7696 = vadd.f32 %v7431, %v7695
      %v7697 = vpop.f32.mrf.mxu0
      %7698 = vmatprep.mubr.f32.mxu0 0.0
      %v7699 = vand.u32 %v6863, 4294901760
      %v7700 = vsub.f32 %v6863, %v7699
      %7701 = vmatmul.mubr.f32.gmra.mxu0 %v7700
      %v7702 = vpop.f32.mrf.mxu0
      %v7703 = vadd.f32 %v7437, %v7702
      %v7704 = vpop.f32.mrf.mxu0
      %7705 = vmatprep.mubr.f32.mxu0 0.0
      %v7706 = vand.u32 %v6866, 4294901760
      %v7707 = vsub.f32 %v6866, %v7706
      %7708 = vmatmul.mubr.f32.gmra.mxu0 %v7707
      %v7709 = vpop.f32.mrf.mxu0
      %v7710 = vadd.f32 %v7443, %v7709
      %v7711 = vpop.f32.mrf.mxu0
      %7712 = vmatprep.mubr.f32.mxu0 0.0
      %v7713 = vand.u32 %v6869, 4294901760
      %v7714 = vsub.f32 %v6869, %v7713
      %7715 = vmatmul.mubr.f32.gmra.mxu0 %v7714
      %v7716 = vpop.f32.mrf.mxu0
      %v7717 = vadd.f32 %v7449, %v7716
      %v7718 = vpop.f32.mrf.mxu0
      %7719 = vmatprep.mubr.f32.mxu0 0.0
      %v7720 = vand.u32 %v6872, 4294901760
      %v7721 = vsub.f32 %v6872, %v7720
      %7722 = vmatmul.mubr.f32.gmra.mxu0 %v7721
      %v7723 = vpop.f32.mrf.mxu0
      %v7724 = vadd.f32 %v7455, %v7723
      %v7725 = vpop.f32.mrf.mxu0
      %7726 = vmatprep.mubr.f32.mxu0 0.0
      %v7727 = vand.u32 %v6875, 4294901760
      %v7728 = vsub.f32 %v6875, %v7727
      %7729 = vmatmul.mubr.f32.gmra.mxu0 %v7728
      %v7730 = vpop.f32.mrf.mxu0
      %v7731 = vadd.f32 %v7461, %v7730
      %v7732 = vpop.f32.mrf.mxu0
      %7733 = vmatprep.mubr.f32.mxu0 0.0
      %v7734 = vand.u32 %v6878, 4294901760
      %v7735 = vsub.f32 %v6878, %v7734
      %7736 = vmatmul.mubr.f32.gmra.mxu0 %v7735
      %v7737 = vpop.f32.mrf.mxu0
      %v7738 = vadd.f32 %v7467, %v7737
      %v7739 = vpop.f32.mrf.mxu0
      %7740 = vmatprep.mubr.f32.mxu0 0.0
      %v7741 = vand.u32 %v6881, 4294901760
      %v7742 = vsub.f32 %v6881, %v7741
      %7743 = vmatmul.mubr.f32.gmra.mxu0 %v7742
      %v7744 = vpop.f32.mrf.mxu0
      %v7745 = vadd.f32 %v7473, %v7744
      %v7746 = vpop.f32.mrf.mxu0
      %7747 = vmatprep.mubr.f32.mxu0 0.0
      %v7748 = vand.u32 %v6884, 4294901760
      %v7749 = vsub.f32 %v6884, %v7748
      %7750 = vmatmul.mubr.f32.gmra.mxu0 %v7749
      %v7751 = vpop.f32.mrf.mxu0
      %v7752 = vadd.f32 %v7479, %v7751
      %v7753 = vpop.f32.mrf.mxu0
      %7754 = vmatprep.mubr.f32.mxu0 0.0
      %v7755 = vand.u32 %v6887, 4294901760
      %v7756 = vsub.f32 %v6887, %v7755
      %7757 = vmatmul.mubr.f32.gmra.mxu0 %v7756
      %v7758 = vpop.f32.mrf.mxu0
      %v7759 = vadd.f32 %v7485, %v7758
      %v7760 = vpop.f32.mrf.mxu0
      %7761 = vmatprep.mubr.f32.mxu0 0.0
      %v7762 = vand.u32 %v6890, 4294901760
      %v7763 = vsub.f32 %v6890, %v7762
      %7764 = vmatmul.mubr.f32.gmra.mxu0 %v7763
      %v7765 = vpop.f32.mrf.mxu0
      %v7766 = vadd.f32 %v7491, %v7765
      %v7767 = vpop.f32.mrf.mxu0
      %7768 = vmatprep.mubr.f32.mxu0 0.0
      %v7769 = vand.u32 %v6893, 4294901760
      %v7770 = vsub.f32 %v6893, %v7769
      %7771 = vmatmul.mubr.f32.gmra.mxu0 %v7770
      %v7772 = vpop.f32.mrf.mxu0
      %v7773 = vadd.f32 %v7497, %v7772
      %v7774 = vpop.f32.mrf.mxu0
      %7775 = vmatprep.mubr.f32.mxu0 0.0
      %v7776 = vand.u32 %v6896, 4294901760
      %v7777 = vsub.f32 %v6896, %v7776
      %7778 = vmatmul.mubr.f32.gmra.mxu0 %v7777
      %v7779 = vpop.f32.mrf.mxu0
      %v7780 = vadd.f32 %v7503, %v7779
      %v7781 = vpop.f32.mrf.mxu0
      %7782 = vmatprep.mubr.f32.mxu0 0.0
      %v7783 = vand.u32 %v6899, 4294901760
      %v7784 = vsub.f32 %v6899, %v7783
      %7785 = vmatmul.mubr.f32.gmra.mxu0 %v7784
      %v7786 = vpop.f32.mrf.mxu0
      %v7787 = vadd.f32 %v7509, %v7786
      %v7788 = vpop.f32.mrf.mxu0
      %7789 = vmatprep.mubr.f32.mxu0 0.0
      %v7790 = vand.u32 %v6902, 4294901760
      %v7791 = vsub.f32 %v6902, %v7790
      %7792 = vmatmul.mubr.f32.gmra.mxu0 %v7791
      %v7793 = vpop.f32.mrf.mxu0
      %v7794 = vadd.f32 %v7515, %v7793
      %v7795 = vpop.f32.mrf.mxu0
      %7796 = vmatprep.mubr.f32.mxu0 0.0
      %v7797 = vand.u32 %v6905, 4294901760
      %v7798 = vsub.f32 %v6905, %v7797
      %7799 = vmatmul.mubr.f32.gmra.mxu0 %v7798
      %v7800 = vpop.f32.mrf.mxu0
      %v7801 = vadd.f32 %v7521, %v7800
      %v7802 = vpop.f32.mrf.mxu0
      %7803 = vmatprep.mubr.f32.mxu0 0.0
      %v7804 = vand.u32 %v6908, 4294901760
      %v7805 = vsub.f32 %v6908, %v7804
      %7806 = vmatmul.mubr.f32.gmra.mxu0 %v7805
      %v7807 = vpop.f32.mrf.mxu0
      %v7808 = vadd.f32 %v7527, %v7807
      %v7809 = vpop.f32.mrf.mxu0
      %7810 = vmatprep.mubr.f32.mxu0 0.0
      %v7811 = vand.u32 %v6911, 4294901760
      %v7812 = vsub.f32 %v6911, %v7811
      %7813 = vmatmul.mubr.f32.gmra.mxu0 %v7812
      %v7814 = vpop.f32.mrf.mxu0
      %v7815 = vadd.f32 %v7533, %v7814
      %v7816 = vpop.f32.mrf.mxu0
      %7817 = vmatprep.mubr.f32.mxu0 0.0
      %v7818 = vand.u32 %v6914, 4294901760
      %v7819 = vsub.f32 %v6914, %v7818
      %7820 = vmatmul.mubr.f32.gmra.mxu0 %v7819
      %v7821 = vpop.f32.mrf.mxu0
      %v7822 = vadd.f32 %v7539, %v7821
      %v7823 = vpop.f32.mrf.mxu0
      %7824 = vmatprep.mubr.f32.mxu0 0.0
      %v7825 = vand.u32 %v6917, 4294901760
      %v7826 = vsub.f32 %v6917, %v7825
      %7827 = vmatmul.mubr.f32.gmra.mxu0 %v7826
      %v7828 = vpop.f32.mrf.mxu0
      %v7829 = vadd.f32 %v7545, %v7828
      %v7830 = vpop.f32.mrf.mxu0
      %7831 = vmatprep.mubr.f32.mxu0 0.0
      %v7832 = vand.u32 %v6920, 4294901760
      %v7833 = vsub.f32 %v6920, %v7832
      %7834 = vmatmul.mubr.f32.gmra.mxu0 %v7833
      %v7835 = vpop.f32.mrf.mxu0
      %v7836 = vadd.f32 %v7551, %v7835
      %v7837 = vpop.f32.mrf.mxu0
      %7838 = vmatprep.mubr.f32.mxu0 0.0
      %v7839 = vand.u32 %v6923, 4294901760
      %v7840 = vsub.f32 %v6923, %v7839
      %7841 = vmatmul.mubr.f32.gmra.mxu0 %v7840
      %v7842 = vpop.f32.mrf.mxu0
      %v7843 = vadd.f32 %v7557, %v7842
      %v7844 = vpop.f32.mrf.mxu0
      %7845 = vmatprep.mubr.f32.mxu0 0.0
      %v7846 = vand.u32 %v6926, 4294901760
      %v7847 = vsub.f32 %v6926, %v7846
      %7848 = vmatmul.mubr.f32.gmra.mxu0 %v7847
      %v7849 = vpop.f32.mrf.mxu0
      %v7850 = vadd.f32 %v7563, %v7849
      %v7851 = vpop.f32.mrf.mxu0
      %7852 = vmatprep.mubr.f32.mxu0 0.0
      %v7853 = vand.u32 %v6929, 4294901760
      %v7854 = vsub.f32 %v6929, %v7853
      %7855 = vmatmul.mubr.f32.gmra.mxu0 %v7854
      %v7856 = vpop.f32.mrf.mxu0
      %v7857 = vadd.f32 %v7569, %v7856
      %v7858 = vpop.f32.mrf.mxu0
      %7859 = vmatprep.mubr.f32.mxu0 0.0
      %v7860 = vand.u32 %v6932, 4294901760
      %v7861 = vsub.f32 %v6932, %v7860
      %7862 = vmatmul.mubr.f32.gmra.mxu0 %v7861
      %v7863 = vpop.f32.mrf.mxu0
      %v7864 = vadd.f32 %v7575, %v7863
      %v7865 = vpop.f32.mrf.mxu0
      %7866 = vmatprep.mubr.f32.mxu0 0.0
      %v7867 = vand.u32 %v6935, 4294901760
      %v7868 = vsub.f32 %v6935, %v7867
      %7869 = vmatmul.mubr.f32.gmra.mxu0 %v7868
      %v7870 = vpop.f32.mrf.mxu0
      %v7871 = vadd.f32 %v7581, %v7870
      %v7872 = vpop.f32.mrf.mxu0
      %7873 = vmatprep.mubr.f32.mxu0 0.0
      %v7874 = vand.u32 %v6938, 4294901760
      %v7875 = vsub.f32 %v6938, %v7874
      %7876 = vmatmul.mubr.f32.gmra.mxu0 %v7875
      %v7877 = vpop.f32.mrf.mxu0
      %v7878 = vadd.f32 %v7587, %v7877
      %v7879 = vpop.f32.mrf.mxu0
      %7880 = vdwg.mxu0
      %7881 = vmatprep.subr.mxu0 0.0
      %7882 = vmatpush1.msra.mxu0 0.0
      %7883 = vmatprep.subr.mxu0 0.0
      %7884 = vmatpush1.msra.mxu0 0.0
      %7885 = vmatprep.subr.mxu0 0.0
      %7886 = vmatpush1.msra.mxu0 0.0
      %7887 = vmatprep.subr.mxu0 0.0
      %7888 = vmatpush1.msra.mxu0 0.0
      %7889 = vmatprep.subr.mxu0 0.0
      %7890 = vmatpush1.msra.mxu0 0.0
      %7891 = vmatprep.subr.mxu0 0.0
      %7892 = vmatpush1.msra.mxu0 0.0
      %7893 = vmatprep.subr.mxu0 0.0
      %7894 = vmatpush1.msra.mxu0 0.0
      %7895 = vmatprep.subr.mxu0 0.0
      %7896 = vmatpush1.msra.mxu0 0.0
      %7897 = vmatprep.subr.mxu0 0.0
      %7898 = vmatpush1.msra.mxu0 0.0
      %7899 = vmatprep.subr.mxu0 0.0
      %7900 = vmatpush1.msra.mxu0 0.0
      %7901 = vmatprep.subr.mxu0 0.0
      %7902 = vmatpush1.msra.mxu0 0.0
      %7903 = vmatprep.subr.mxu0 0.0
      %7904 = vmatpush1.msra.mxu0 0.0
      %7905 = vmatprep.subr.mxu0 0.0
      %7906 = vmatpush1.msra.mxu0 0.0
      %7907 = vmatprep.subr.mxu0 0.0
      %7908 = vmatpush1.msra.mxu0 0.0
      %7909 = vmatprep.subr.mxu0 0.0
      %7910 = vmatpush1.msra.mxu0 0.0
      %7911 = vmatprep.subr.mxu0 0.0
      %v7912 = vand.u32 %v6940, 4294901760
      %7913 = vmatpush1.msra.mxu0 %v7912
      %7914 = vmatprep.subr.mxu0 0.0
      %7915 = vmatpush2.msra.mxu0 0.0
      %7916 = vmatprep.subr.mxu0 0.0
      %7917 = vmatpush2.msra.mxu0 0.0
      %7918 = vmatprep.subr.mxu0 0.0
      %7919 = vmatpush2.msra.mxu0 0.0
      %7920 = vmatprep.subr.mxu0 0.0
      %7921 = vmatpush2.msra.mxu0 0.0
      %7922 = vmatprep.subr.mxu0 0.0
      %7923 = vmatpush2.msra.mxu0 0.0
      %7924 = vmatprep.subr.mxu0 0.0
      %7925 = vmatpush2.msra.mxu0 0.0
      %7926 = vmatprep.subr.mxu0 0.0
      %7927 = vmatpush2.msra.mxu0 0.0
      %7928 = vmatprep.subr.mxu0 0.0
      %7929 = vmatpush2.msra.mxu0 0.0
      %7930 = vmatprep.subr.mxu0 0.0
      %7931 = vmatpush2.msra.mxu0 0.0
      %7932 = vmatprep.subr.mxu0 0.0
      %7933 = vmatpush2.msra.mxu0 0.0
      %7934 = vmatprep.subr.mxu0 0.0
      %7935 = vmatpush2.msra.mxu0 0.0
      %7936 = vmatprep.subr.mxu0 0.0
      %7937 = vmatpush2.msra.mxu0 0.0
      %7938 = vmatprep.subr.mxu0 0.0
      %7939 = vmatpush2.msra.mxu0 0.0
      %7940 = vmatprep.subr.mxu0 0.0
      %7941 = vmatpush2.msra.mxu0 0.0
      %7942 = vmatprep.subr.mxu0 0.0
      %7943 = vmatpush2.msra.mxu0 0.0
      %7944 = vmatprep.subr.mxu0 0.0
      %7945 = vmatpush2.msra.mxu0 0.0
      %7946 = vmatprep.mubr.f32.mxu0 0.0
      %v7947 = vand.u32 %v6845, 4294901760
      %v7948 = vsub.f32 %v6845, %v7947
      %v7949 = vand.u32 %v7948, 4294901760
      %7950 = vmatmul.mubr.f32.gmra.mxu0 %v7949
      %v7951 = vpop.f32.mrf.mxu0
      %v7952 = vadd.f32 %v7661, %v7951
      %v7953 = vpop.f32.mrf.mxu0
      %7954 = vmatprep.mubr.f32.mxu0 0.0
      %v7955 = vand.u32 %v6848, 4294901760
      %v7956 = vsub.f32 %v6848, %v7955
      %v7957 = vand.u32 %v7956, 4294901760
      %7958 = vmatmul.mubr.f32.gmra.mxu0 %v7957
      %v7959 = vpop.f32.mrf.mxu0
      %v7960 = vadd.f32 %v7668, %v7959
      %v7961 = vpop.f32.mrf.mxu0
      %7962 = vmatprep.mubr.f32.mxu0 0.0
      %v7963 = vand.u32 %v6851, 4294901760
      %v7964 = vsub.f32 %v6851, %v7963
      %v7965 = vand.u32 %v7964, 4294901760
      %7966 = vmatmul.mubr.f32.gmra.mxu0 %v7965
      %v7967 = vpop.f32.mrf.mxu0
      %v7968 = vadd.f32 %v7675, %v7967
      %v7969 = vpop.f32.mrf.mxu0
      %7970 = vmatprep.mubr.f32.mxu0 0.0
      %v7971 = vand.u32 %v6854, 4294901760
      %v7972 = vsub.f32 %v6854, %v7971
      %v7973 = vand.u32 %v7972, 4294901760
      %7974 = vmatmul.mubr.f32.gmra.mxu0 %v7973
      %v7975 = vpop.f32.mrf.mxu0
      %v7976 = vadd.f32 %v7682, %v7975
      %v7977 = vpop.f32.mrf.mxu0
      %7978 = vmatprep.mubr.f32.mxu0 0.0
      %v7979 = vand.u32 %v6857, 4294901760
      %v7980 = vsub.f32 %v6857, %v7979
      %v7981 = vand.u32 %v7980, 4294901760
      %7982 = vmatmul.mubr.f32.gmra.mxu0 %v7981
      %v7983 = vpop.f32.mrf.mxu0
      %v7984 = vadd.f32 %v7689, %v7983
      %v7985 = vpop.f32.mrf.mxu0
      %7986 = vmatprep.mubr.f32.mxu0 0.0
      %v7987 = vand.u32 %v6860, 4294901760
      %v7988 = vsub.f32 %v6860, %v7987
      %v7989 = vand.u32 %v7988, 4294901760
      %7990 = vmatmul.mubr.f32.gmra.mxu0 %v7989
      %v7991 = vpop.f32.mrf.mxu0
      %v7992 = vadd.f32 %v7696, %v7991
      %v7993 = vpop.f32.mrf.mxu0
      %7994 = vmatprep.mubr.f32.mxu0 0.0
      %v7995 = vand.u32 %v6863, 4294901760
      %v7996 = vsub.f32 %v6863, %v7995
      %v7997 = vand.u32 %v7996, 4294901760
      %7998 = vmatmul.mubr.f32.gmra.mxu0 %v7997
      %v7999 = vpop.f32.mrf.mxu0
      %v8000 = vadd.f32 %v7703, %v7999
      %v8001 = vpop.f32.mrf.mxu0
      %8002 = vmatprep.mubr.f32.mxu0 0.0
      %v8003 = vand.u32 %v6866, 4294901760
      %v8004 = vsub.f32 %v6866, %v8003
      %v8005 = vand.u32 %v8004, 4294901760
      %8006 = vmatmul.mubr.f32.gmra.mxu0 %v8005
      %v8007 = vpop.f32.mrf.mxu0
      %v8008 = vadd.f32 %v7710, %v8007
      %v8009 = vpop.f32.mrf.mxu0
      %8010 = vmatprep.mubr.f32.mxu0 0.0
      %v8011 = vand.u32 %v6869, 4294901760
      %v8012 = vsub.f32 %v6869, %v8011
      %v8013 = vand.u32 %v8012, 4294901760
      %8014 = vmatmul.mubr.f32.gmra.mxu0 %v8013
      %v8015 = vpop.f32.mrf.mxu0
      %v8016 = vadd.f32 %v7717, %v8015
      %v8017 = vpop.f32.mrf.mxu0
      %8018 = vmatprep.mubr.f32.mxu0 0.0
      %v8019 = vand.u32 %v6872, 4294901760
      %v8020 = vsub.f32 %v6872, %v8019
      %v8021 = vand.u32 %v8020, 4294901760
      %8022 = vmatmul.mubr.f32.gmra.mxu0 %v8021
      %v8023 = vpop.f32.mrf.mxu0
      %v8024 = vadd.f32 %v7724, %v8023
      %v8025 = vpop.f32.mrf.mxu0
      %8026 = vmatprep.mubr.f32.mxu0 0.0
      %v8027 = vand.u32 %v6875, 4294901760
      %v8028 = vsub.f32 %v6875, %v8027
      %v8029 = vand.u32 %v8028, 4294901760
      %8030 = vmatmul.mubr.f32.gmra.mxu0 %v8029
      %v8031 = vpop.f32.mrf.mxu0
      %v8032 = vadd.f32 %v7731, %v8031
      %v8033 = vpop.f32.mrf.mxu0
      %8034 = vmatprep.mubr.f32.mxu0 0.0
      %v8035 = vand.u32 %v6878, 4294901760
      %v8036 = vsub.f32 %v6878, %v8035
      %v8037 = vand.u32 %v8036, 4294901760
      %8038 = vmatmul.mubr.f32.gmra.mxu0 %v8037
      %v8039 = vpop.f32.mrf.mxu0
      %v8040 = vadd.f32 %v7738, %v8039
      %v8041 = vpop.f32.mrf.mxu0
      %8042 = vmatprep.mubr.f32.mxu0 0.0
      %v8043 = vand.u32 %v6881, 4294901760
      %v8044 = vsub.f32 %v6881, %v8043
      %v8045 = vand.u32 %v8044, 4294901760
      %8046 = vmatmul.mubr.f32.gmra.mxu0 %v8045
      %v8047 = vpop.f32.mrf.mxu0
      %v8048 = vadd.f32 %v7745, %v8047
      %v8049 = vpop.f32.mrf.mxu0
      %8050 = vmatprep.mubr.f32.mxu0 0.0
      %v8051 = vand.u32 %v6884, 4294901760
      %v8052 = vsub.f32 %v6884, %v8051
      %v8053 = vand.u32 %v8052, 4294901760
      %8054 = vmatmul.mubr.f32.gmra.mxu0 %v8053
      %v8055 = vpop.f32.mrf.mxu0
      %v8056 = vadd.f32 %v7752, %v8055
      %v8057 = vpop.f32.mrf.mxu0
      %8058 = vmatprep.mubr.f32.mxu0 0.0
      %v8059 = vand.u32 %v6887, 4294901760
      %v8060 = vsub.f32 %v6887, %v8059
      %v8061 = vand.u32 %v8060, 4294901760
      %8062 = vmatmul.mubr.f32.gmra.mxu0 %v8061
      %v8063 = vpop.f32.mrf.mxu0
      %v8064 = vadd.f32 %v7759, %v8063
      %v8065 = vpop.f32.mrf.mxu0
      %8066 = vmatprep.mubr.f32.mxu0 0.0
      %v8067 = vand.u32 %v6890, 4294901760
      %v8068 = vsub.f32 %v6890, %v8067
      %v8069 = vand.u32 %v8068, 4294901760
      %8070 = vmatmul.mubr.f32.gmra.mxu0 %v8069
      %v8071 = vpop.f32.mrf.mxu0
      %v8072 = vadd.f32 %v7766, %v8071
      %v8073 = vpop.f32.mrf.mxu0
      %8074 = vmatprep.mubr.f32.mxu0 0.0
      %v8075 = vand.u32 %v6893, 4294901760
      %v8076 = vsub.f32 %v6893, %v8075
      %v8077 = vand.u32 %v8076, 4294901760
      %8078 = vmatmul.mubr.f32.gmra.mxu0 %v8077
      %v8079 = vpop.f32.mrf.mxu0
      %v8080 = vadd.f32 %v7773, %v8079
      %v8081 = vpop.f32.mrf.mxu0
      %8082 = vmatprep.mubr.f32.mxu0 0.0
      %v8083 = vand.u32 %v6896, 4294901760
      %v8084 = vsub.f32 %v6896, %v8083
      %v8085 = vand.u32 %v8084, 4294901760
      %8086 = vmatmul.mubr.f32.gmra.mxu0 %v8085
      %v8087 = vpop.f32.mrf.mxu0
      %v8088 = vadd.f32 %v7780, %v8087
      %v8089 = vpop.f32.mrf.mxu0
      %8090 = vmatprep.mubr.f32.mxu0 0.0
      %v8091 = vand.u32 %v6899, 4294901760
      %v8092 = vsub.f32 %v6899, %v8091
      %v8093 = vand.u32 %v8092, 4294901760
      %8094 = vmatmul.mubr.f32.gmra.mxu0 %v8093
      %v8095 = vpop.f32.mrf.mxu0
      %v8096 = vadd.f32 %v7787, %v8095
      %v8097 = vpop.f32.mrf.mxu0
      %8098 = vmatprep.mubr.f32.mxu0 0.0
      %v8099 = vand.u32 %v6902, 4294901760
      %v8100 = vsub.f32 %v6902, %v8099
      %v8101 = vand.u32 %v8100, 4294901760
      %8102 = vmatmul.mubr.f32.gmra.mxu0 %v8101
      %v8103 = vpop.f32.mrf.mxu0
      %v8104 = vadd.f32 %v7794, %v8103
      %v8105 = vpop.f32.mrf.mxu0
      %8106 = vmatprep.mubr.f32.mxu0 0.0
      %v8107 = vand.u32 %v6905, 4294901760
      %v8108 = vsub.f32 %v6905, %v8107
      %v8109 = vand.u32 %v8108, 4294901760
      %8110 = vmatmul.mubr.f32.gmra.mxu0 %v8109
      %v8111 = vpop.f32.mrf.mxu0
      %v8112 = vadd.f32 %v7801, %v8111
      %v8113 = vpop.f32.mrf.mxu0
      %8114 = vmatprep.mubr.f32.mxu0 0.0
      %v8115 = vand.u32 %v6908, 4294901760
      %v8116 = vsub.f32 %v6908, %v8115
      %v8117 = vand.u32 %v8116, 4294901760
      %8118 = vmatmul.mubr.f32.gmra.mxu0 %v8117
      %v8119 = vpop.f32.mrf.mxu0
      %v8120 = vadd.f32 %v7808, %v8119
      %v8121 = vpop.f32.mrf.mxu0
      %8122 = vmatprep.mubr.f32.mxu0 0.0
      %v8123 = vand.u32 %v6911, 4294901760
      %v8124 = vsub.f32 %v6911, %v8123
      %v8125 = vand.u32 %v8124, 4294901760
      %8126 = vmatmul.mubr.f32.gmra.mxu0 %v8125
      %v8127 = vpop.f32.mrf.mxu0
      %v8128 = vadd.f32 %v7815, %v8127
      %v8129 = vpop.f32.mrf.mxu0
      %8130 = vmatprep.mubr.f32.mxu0 0.0
      %v8131 = vand.u32 %v6914, 4294901760
      %v8132 = vsub.f32 %v6914, %v8131
      %v8133 = vand.u32 %v8132, 4294901760
      %8134 = vmatmul.mubr.f32.gmra.mxu0 %v8133
      %v8135 = vpop.f32.mrf.mxu0
      %v8136 = vadd.f32 %v7822, %v8135
      %v8137 = vpop.f32.mrf.mxu0
      %8138 = vmatprep.mubr.f32.mxu0 0.0
      %v8139 = vand.u32 %v6917, 4294901760
      %v8140 = vsub.f32 %v6917, %v8139
      %v8141 = vand.u32 %v8140, 4294901760
      %8142 = vmatmul.mubr.f32.gmra.mxu0 %v8141
      %v8143 = vpop.f32.mrf.mxu0
      %v8144 = vadd.f32 %v7829, %v8143
      %v8145 = vpop.f32.mrf.mxu0
      %8146 = vmatprep.mubr.f32.mxu0 0.0
      %v8147 = vand.u32 %v6920, 4294901760
      %v8148 = vsub.f32 %v6920, %v8147
      %v8149 = vand.u32 %v8148, 4294901760
      %8150 = vmatmul.mubr.f32.gmra.mxu0 %v8149
      %v8151 = vpop.f32.mrf.mxu0
      %v8152 = vadd.f32 %v7836, %v8151
      %v8153 = vpop.f32.mrf.mxu0
      %8154 = vmatprep.mubr.f32.mxu0 0.0
      %v8155 = vand.u32 %v6923, 4294901760
      %v8156 = vsub.f32 %v6923, %v8155
      %v8157 = vand.u32 %v8156, 4294901760
      %8158 = vmatmul.mubr.f32.gmra.mxu0 %v8157
      %v8159 = vpop.f32.mrf.mxu0
      %v8160 = vadd.f32 %v7843, %v8159
      %v8161 = vpop.f32.mrf.mxu0
      %8162 = vmatprep.mubr.f32.mxu0 0.0
      %v8163 = vand.u32 %v6926, 4294901760
      %v8164 = vsub.f32 %v6926, %v8163
      %v8165 = vand.u32 %v8164, 4294901760
      %8166 = vmatmul.mubr.f32.gmra.mxu0 %v8165
      %v8167 = vpop.f32.mrf.mxu0
      %v8168 = vadd.f32 %v7850, %v8167
      %v8169 = vpop.f32.mrf.mxu0
      %8170 = vmatprep.mubr.f32.mxu0 0.0
      %v8171 = vand.u32 %v6929, 4294901760
      %v8172 = vsub.f32 %v6929, %v8171
      %v8173 = vand.u32 %v8172, 4294901760
      %8174 = vmatmul.mubr.f32.gmra.mxu0 %v8173
      %v8175 = vpop.f32.mrf.mxu0
      %v8176 = vadd.f32 %v7857, %v8175
      %v8177 = vpop.f32.mrf.mxu0
      %8178 = vmatprep.mubr.f32.mxu0 0.0
      %v8179 = vand.u32 %v6932, 4294901760
      %v8180 = vsub.f32 %v6932, %v8179
      %v8181 = vand.u32 %v8180, 4294901760
      %8182 = vmatmul.mubr.f32.gmra.mxu0 %v8181
      %v8183 = vpop.f32.mrf.mxu0
      %v8184 = vadd.f32 %v7864, %v8183
      %v8185 = vpop.f32.mrf.mxu0
      %8186 = vmatprep.mubr.f32.mxu0 0.0
      %v8187 = vand.u32 %v6935, 4294901760
      %v8188 = vsub.f32 %v6935, %v8187
      %v8189 = vand.u32 %v8188, 4294901760
      %8190 = vmatmul.mubr.f32.gmra.mxu0 %v8189
      %v8191 = vpop.f32.mrf.mxu0
      %v8192 = vadd.f32 %v7871, %v8191
      %v8193 = vpop.f32.mrf.mxu0
      %8194 = vmatprep.mubr.f32.mxu0 0.0
      %v8195 = vand.u32 %v6938, 4294901760
      %v8196 = vsub.f32 %v6938, %v8195
      %v8197 = vand.u32 %v8196, 4294901760
      %8198 = vmatmul.mubr.f32.gmra.mxu0 %v8197
      %v8199 = vpop.f32.mrf.mxu0
      %v8200 = vadd.f32 %v7878, %v8199
      %v8201 = vpop.f32.mrf.mxu0
      %8202 = vdwg.mxu0
      %8203 = vmatprep.subr.mxu0 0.0
      %8204 = vmatpush1.msra.mxu0 0.0
      %8205 = vmatprep.subr.mxu0 0.0
      %8206 = vmatpush1.msra.mxu0 0.0
      %8207 = vmatprep.subr.mxu0 0.0
      %8208 = vmatpush1.msra.mxu0 0.0
      %8209 = vmatprep.subr.mxu0 0.0
      %8210 = vmatpush1.msra.mxu0 0.0
      %8211 = vmatprep.subr.mxu0 0.0
      %8212 = vmatpush1.msra.mxu0 0.0
      %8213 = vmatprep.subr.mxu0 0.0
      %8214 = vmatpush1.msra.mxu0 0.0
      %8215 = vmatprep.subr.mxu0 0.0
      %8216 = vmatpush1.msra.mxu0 0.0
      %8217 = vmatprep.subr.mxu0 0.0
      %8218 = vmatpush1.msra.mxu0 0.0
      %8219 = vmatprep.subr.mxu0 0.0
      %8220 = vmatpush1.msra.mxu0 0.0
      %8221 = vmatprep.subr.mxu0 0.0
      %8222 = vmatpush1.msra.mxu0 0.0
      %8223 = vmatprep.subr.mxu0 0.0
      %8224 = vmatpush1.msra.mxu0 0.0
      %8225 = vmatprep.subr.mxu0 0.0
      %8226 = vmatpush1.msra.mxu0 0.0
      %8227 = vmatprep.subr.mxu0 0.0
      %8228 = vmatpush1.msra.mxu0 0.0
      %8229 = vmatprep.subr.mxu0 0.0
      %8230 = vmatpush1.msra.mxu0 0.0
      %8231 = vmatprep.subr.mxu0 0.0
      %8232 = vmatpush1.msra.mxu0 0.0
      %8233 = vmatprep.subr.mxu0 0.0
      %v8234 = vand.u32 %v6940, 4294901760
      %v8235 = vsub.f32 %v6940, %v8234
      %v8236 = vand.u32 %v8235, 4294901760
      %8237 = vmatpush1.msra.mxu0 %v8236
      %8238 = vmatprep.subr.mxu0 0.0
      %8239 = vmatpush2.msra.mxu0 0.0
      %8240 = vmatprep.subr.mxu0 0.0
      %8241 = vmatpush2.msra.mxu0 0.0
      %8242 = vmatprep.subr.mxu0 0.0
      %8243 = vmatpush2.msra.mxu0 0.0
      %8244 = vmatprep.subr.mxu0 0.0
      %8245 = vmatpush2.msra.mxu0 0.0
      %8246 = vmatprep.subr.mxu0 0.0
      %8247 = vmatpush2.msra.mxu0 0.0
      %8248 = vmatprep.subr.mxu0 0.0
      %8249 = vmatpush2.msra.mxu0 0.0
      %8250 = vmatprep.subr.mxu0 0.0
      %8251 = vmatpush2.msra.mxu0 0.0
      %8252 = vmatprep.subr.mxu0 0.0
      %8253 = vmatpush2.msra.mxu0 0.0
      %8254 = vmatprep.subr.mxu0 0.0
      %8255 = vmatpush2.msra.mxu0 0.0
      %8256 = vmatprep.subr.mxu0 0.0
      %8257 = vmatpush2.msra.mxu0 0.0
      %8258 = vmatprep.subr.mxu0 0.0
      %8259 = vmatpush2.msra.mxu0 0.0
      %8260 = vmatprep.subr.mxu0 0.0
      %8261 = vmatpush2.msra.mxu0 0.0
      %8262 = vmatprep.subr.mxu0 0.0
      %8263 = vmatpush2.msra.mxu0 0.0
      %8264 = vmatprep.subr.mxu0 0.0
      %8265 = vmatpush2.msra.mxu0 0.0
      %8266 = vmatprep.subr.mxu0 0.0
      %8267 = vmatpush2.msra.mxu0 0.0
      %8268 = vmatprep.subr.mxu0 0.0
      %8269 = vmatpush2.msra.mxu0 0.0
      %8270 = vmatprep.mubr.f32.mxu0 0.0
      %v8271 = vand.u32 %v6845, 4294901760
      %8272 = vmatmul.mubr.f32.gmra.mxu0 %v8271
      %v8273 = vpop.f32.mrf.mxu0
      %v8274 = vadd.f32 %v7952, %v8273
      %v8275 = vpop.f32.mrf.mxu0
      %8276 = vmatprep.mubr.f32.mxu0 0.0
      %v8277 = vand.u32 %v6848, 4294901760
      %8278 = vmatmul.mubr.f32.gmra.mxu0 %v8277
      %v8279 = vpop.f32.mrf.mxu0
      %v8280 = vadd.f32 %v7960, %v8279
      %v8281 = vpop.f32.mrf.mxu0
      %8282 = vmatprep.mubr.f32.mxu0 0.0
      %v8283 = vand.u32 %v6851, 4294901760
      %8284 = vmatmul.mubr.f32.gmra.mxu0 %v8283
      %v8285 = vpop.f32.mrf.mxu0
      %v8286 = vadd.f32 %v7968, %v8285
      %v8287 = vpop.f32.mrf.mxu0
      %8288 = vmatprep.mubr.f32.mxu0 0.0
      %v8289 = vand.u32 %v6854, 4294901760
      %8290 = vmatmul.mubr.f32.gmra.mxu0 %v8289
      %v8291 = vpop.f32.mrf.mxu0
      %v8292 = vadd.f32 %v7976, %v8291
      %v8293 = vpop.f32.mrf.mxu0
      %8294 = vmatprep.mubr.f32.mxu0 0.0
      %v8295 = vand.u32 %v6857, 4294901760
      %8296 = vmatmul.mubr.f32.gmra.mxu0 %v8295
      %v8297 = vpop.f32.mrf.mxu0
      %v8298 = vadd.f32 %v7984, %v8297
      %v8299 = vpop.f32.mrf.mxu0
      %8300 = vmatprep.mubr.f32.mxu0 0.0
      %v8301 = vand.u32 %v6860, 4294901760
      %8302 = vmatmul.mubr.f32.gmra.mxu0 %v8301
      %v8303 = vpop.f32.mrf.mxu0
      %v8304 = vadd.f32 %v7992, %v8303
      %v8305 = vpop.f32.mrf.mxu0
      %8306 = vmatprep.mubr.f32.mxu0 0.0
      %v8307 = vand.u32 %v6863, 4294901760
      %8308 = vmatmul.mubr.f32.gmra.mxu0 %v8307
      %v8309 = vpop.f32.mrf.mxu0
      %v8310 = vadd.f32 %v8000, %v8309
      %v8311 = vpop.f32.mrf.mxu0
      %8312 = vmatprep.mubr.f32.mxu0 0.0
      %v8313 = vand.u32 %v6866, 4294901760
      %8314 = vmatmul.mubr.f32.gmra.mxu0 %v8313
      %v8315 = vpop.f32.mrf.mxu0
      %v8316 = vadd.f32 %v8008, %v8315
      %v8317 = vpop.f32.mrf.mxu0
      %8318 = vmatprep.mubr.f32.mxu0 0.0
      %v8319 = vand.u32 %v6869, 4294901760
      %8320 = vmatmul.mubr.f32.gmra.mxu0 %v8319
      %v8321 = vpop.f32.mrf.mxu0
      %v8322 = vadd.f32 %v8016, %v8321
      %v8323 = vpop.f32.mrf.mxu0
      %8324 = vmatprep.mubr.f32.mxu0 0.0
      %v8325 = vand.u32 %v6872, 4294901760
      %8326 = vmatmul.mubr.f32.gmra.mxu0 %v8325
      %v8327 = vpop.f32.mrf.mxu0
      %v8328 = vadd.f32 %v8024, %v8327
      %v8329 = vpop.f32.mrf.mxu0
      %8330 = vmatprep.mubr.f32.mxu0 0.0
      %v8331 = vand.u32 %v6875, 4294901760
      %8332 = vmatmul.mubr.f32.gmra.mxu0 %v8331
      %v8333 = vpop.f32.mrf.mxu0
      %v8334 = vadd.f32 %v8032, %v8333
      %v8335 = vpop.f32.mrf.mxu0
      %8336 = vmatprep.mubr.f32.mxu0 0.0
      %v8337 = vand.u32 %v6878, 4294901760
      %8338 = vmatmul.mubr.f32.gmra.mxu0 %v8337
      %v8339 = vpop.f32.mrf.mxu0
      %v8340 = vadd.f32 %v8040, %v8339
      %v8341 = vpop.f32.mrf.mxu0
      %8342 = vmatprep.mubr.f32.mxu0 0.0
      %v8343 = vand.u32 %v6881, 4294901760
      %8344 = vmatmul.mubr.f32.gmra.mxu0 %v8343
      %v8345 = vpop.f32.mrf.mxu0
      %v8346 = vadd.f32 %v8048, %v8345
      %v8347 = vpop.f32.mrf.mxu0
      %8348 = vmatprep.mubr.f32.mxu0 0.0
      %v8349 = vand.u32 %v6884, 4294901760
      %8350 = vmatmul.mubr.f32.gmra.mxu0 %v8349
      %v8351 = vpop.f32.mrf.mxu0
      %v8352 = vadd.f32 %v8056, %v8351
      %v8353 = vpop.f32.mrf.mxu0
      %8354 = vmatprep.mubr.f32.mxu0 0.0
      %v8355 = vand.u32 %v6887, 4294901760
      %8356 = vmatmul.mubr.f32.gmra.mxu0 %v8355
      %v8357 = vpop.f32.mrf.mxu0
      %v8358 = vadd.f32 %v8064, %v8357
      %v8359 = vpop.f32.mrf.mxu0
      %8360 = vmatprep.mubr.f32.mxu0 0.0
      %v8361 = vand.u32 %v6890, 4294901760
      %8362 = vmatmul.mubr.f32.gmra.mxu0 %v8361
      %v8363 = vpop.f32.mrf.mxu0
      %v8364 = vadd.f32 %v8072, %v8363
      %v8365 = vpop.f32.mrf.mxu0
      %8366 = vmatprep.mubr.f32.mxu0 0.0
      %v8367 = vand.u32 %v6893, 4294901760
      %8368 = vmatmul.mubr.f32.gmra.mxu0 %v8367
      %v8369 = vpop.f32.mrf.mxu0
      %v8370 = vadd.f32 %v8080, %v8369
      %v8371 = vpop.f32.mrf.mxu0
      %8372 = vmatprep.mubr.f32.mxu0 0.0
      %v8373 = vand.u32 %v6896, 4294901760
      %8374 = vmatmul.mubr.f32.gmra.mxu0 %v8373
      %v8375 = vpop.f32.mrf.mxu0
      %v8376 = vadd.f32 %v8088, %v8375
      %v8377 = vpop.f32.mrf.mxu0
      %8378 = vmatprep.mubr.f32.mxu0 0.0
      %v8379 = vand.u32 %v6899, 4294901760
      %8380 = vmatmul.mubr.f32.gmra.mxu0 %v8379
      %v8381 = vpop.f32.mrf.mxu0
      %v8382 = vadd.f32 %v8096, %v8381
      %v8383 = vpop.f32.mrf.mxu0
      %8384 = vmatprep.mubr.f32.mxu0 0.0
      %v8385 = vand.u32 %v6902, 4294901760
      %8386 = vmatmul.mubr.f32.gmra.mxu0 %v8385
      %v8387 = vpop.f32.mrf.mxu0
      %v8388 = vadd.f32 %v8104, %v8387
      %v8389 = vpop.f32.mrf.mxu0
      %8390 = vmatprep.mubr.f32.mxu0 0.0
      %v8391 = vand.u32 %v6905, 4294901760
      %8392 = vmatmul.mubr.f32.gmra.mxu0 %v8391
      %v8393 = vpop.f32.mrf.mxu0
      %v8394 = vadd.f32 %v8112, %v8393
      %v8395 = vpop.f32.mrf.mxu0
      %8396 = vmatprep.mubr.f32.mxu0 0.0
      %v8397 = vand.u32 %v6908, 4294901760
      %8398 = vmatmul.mubr.f32.gmra.mxu0 %v8397
      %v8399 = vpop.f32.mrf.mxu0
      %v8400 = vadd.f32 %v8120, %v8399
      %v8401 = vpop.f32.mrf.mxu0
      %8402 = vmatprep.mubr.f32.mxu0 0.0
      %v8403 = vand.u32 %v6911, 4294901760
      %8404 = vmatmul.mubr.f32.gmra.mxu0 %v8403
      %v8405 = vpop.f32.mrf.mxu0
      %v8406 = vadd.f32 %v8128, %v8405
      %v8407 = vpop.f32.mrf.mxu0
      %8408 = vmatprep.mubr.f32.mxu0 0.0
      %v8409 = vand.u32 %v6914, 4294901760
      %8410 = vmatmul.mubr.f32.gmra.mxu0 %v8409
      %v8411 = vpop.f32.mrf.mxu0
      %v8412 = vadd.f32 %v8136, %v8411
      %v8413 = vpop.f32.mrf.mxu0
      %8414 = vmatprep.mubr.f32.mxu0 0.0
      %v8415 = vand.u32 %v6917, 4294901760
      %8416 = vmatmul.mubr.f32.gmra.mxu0 %v8415
      %v8417 = vpop.f32.mrf.mxu0
      %v8418 = vadd.f32 %v8144, %v8417
      %v8419 = vpop.f32.mrf.mxu0
      %8420 = vmatprep.mubr.f32.mxu0 0.0
      %v8421 = vand.u32 %v6920, 4294901760
      %8422 = vmatmul.mubr.f32.gmra.mxu0 %v8421
      %v8423 = vpop.f32.mrf.mxu0
      %v8424 = vadd.f32 %v8152, %v8423
      %v8425 = vpop.f32.mrf.mxu0
      %8426 = vmatprep.mubr.f32.mxu0 0.0
      %v8427 = vand.u32 %v6923, 4294901760
      %8428 = vmatmul.mubr.f32.gmra.mxu0 %v8427
      %v8429 = vpop.f32.mrf.mxu0
      %v8430 = vadd.f32 %v8160, %v8429
      %v8431 = vpop.f32.mrf.mxu0
      %8432 = vmatprep.mubr.f32.mxu0 0.0
      %v8433 = vand.u32 %v6926, 4294901760
      %8434 = vmatmul.mubr.f32.gmra.mxu0 %v8433
      %v8435 = vpop.f32.mrf.mxu0
      %v8436 = vadd.f32 %v8168, %v8435
      %v8437 = vpop.f32.mrf.mxu0
      %8438 = vmatprep.mubr.f32.mxu0 0.0
      %v8439 = vand.u32 %v6929, 4294901760
      %8440 = vmatmul.mubr.f32.gmra.mxu0 %v8439
      %v8441 = vpop.f32.mrf.mxu0
      %v8442 = vadd.f32 %v8176, %v8441
      %v8443 = vpop.f32.mrf.mxu0
      %8444 = vmatprep.mubr.f32.mxu0 0.0
      %v8445 = vand.u32 %v6932, 4294901760
      %8446 = vmatmul.mubr.f32.gmra.mxu0 %v8445
      %v8447 = vpop.f32.mrf.mxu0
      %v8448 = vadd.f32 %v8184, %v8447
      %v8449 = vpop.f32.mrf.mxu0
      %8450 = vmatprep.mubr.f32.mxu0 0.0
      %v8451 = vand.u32 %v6935, 4294901760
      %8452 = vmatmul.mubr.f32.gmra.mxu0 %v8451
      %v8453 = vpop.f32.mrf.mxu0
      %v8454 = vadd.f32 %v8192, %v8453
      %v8455 = vpop.f32.mrf.mxu0
      %8456 = vmatprep.mubr.f32.mxu0 0.0
      %v8457 = vand.u32 %v6938, 4294901760
      %8458 = vmatmul.mubr.f32.gmra.mxu0 %v8457
      %v8459 = vpop.f32.mrf.mxu0
      %v8460 = vadd.f32 %v8200, %v8459
      %v8461 = vpop.f32.mrf.mxu0
      %8462 = vdwg.mxu0
      %8463 = vmatprep.subr.mxu0 0.0
      %8464 = vmatpush1.msra.mxu0 0.0
      %8465 = vmatprep.subr.mxu0 0.0
      %8466 = vmatpush1.msra.mxu0 0.0
      %8467 = vmatprep.subr.mxu0 0.0
      %8468 = vmatpush1.msra.mxu0 0.0
      %8469 = vmatprep.subr.mxu0 0.0
      %8470 = vmatpush1.msra.mxu0 0.0
      %8471 = vmatprep.subr.mxu0 0.0
      %8472 = vmatpush1.msra.mxu0 0.0
      %8473 = vmatprep.subr.mxu0 0.0
      %8474 = vmatpush1.msra.mxu0 0.0
      %8475 = vmatprep.subr.mxu0 0.0
      %8476 = vmatpush1.msra.mxu0 0.0
      %8477 = vmatprep.subr.mxu0 0.0
      %8478 = vmatpush1.msra.mxu0 0.0
      %8479 = vmatprep.subr.mxu0 0.0
      %8480 = vmatpush1.msra.mxu0 0.0
      %8481 = vmatprep.subr.mxu0 0.0
      %8482 = vmatpush1.msra.mxu0 0.0
      %8483 = vmatprep.subr.mxu0 0.0
      %8484 = vmatpush1.msra.mxu0 0.0
      %8485 = vmatprep.subr.mxu0 0.0
      %8486 = vmatpush1.msra.mxu0 0.0
      %8487 = vmatprep.subr.mxu0 0.0
      %8488 = vmatpush1.msra.mxu0 0.0
      %8489 = vmatprep.subr.mxu0 0.0
      %8490 = vmatpush1.msra.mxu0 0.0
      %8491 = vmatprep.subr.mxu0 0.0
      %8492 = vmatpush1.msra.mxu0 0.0
      %8493 = vmatprep.subr.mxu0 0.0
      %v8494 = vand.u32 %v6940, 4294901760
      %8495 = vmatpush1.msra.mxu0 %v8494
      %8496 = vmatprep.subr.mxu0 0.0
      %8497 = vmatpush2.msra.mxu0 0.0
      %8498 = vmatprep.subr.mxu0 0.0
      %8499 = vmatpush2.msra.mxu0 0.0
      %8500 = vmatprep.subr.mxu0 0.0
      %8501 = vmatpush2.msra.mxu0 0.0
      %8502 = vmatprep.subr.mxu0 0.0
      %8503 = vmatpush2.msra.mxu0 0.0
      %8504 = vmatprep.subr.mxu0 0.0
      %8505 = vmatpush2.msra.mxu0 0.0
      %8506 = vmatprep.subr.mxu0 0.0
      %8507 = vmatpush2.msra.mxu0 0.0
      %8508 = vmatprep.subr.mxu0 0.0
      %8509 = vmatpush2.msra.mxu0 0.0
      %8510 = vmatprep.subr.mxu0 0.0
      %8511 = vmatpush2.msra.mxu0 0.0
      %8512 = vmatprep.subr.mxu0 0.0
      %8513 = vmatpush2.msra.mxu0 0.0
      %8514 = vmatprep.subr.mxu0 0.0
      %8515 = vmatpush2.msra.mxu0 0.0
      %8516 = vmatprep.subr.mxu0 0.0
      %8517 = vmatpush2.msra.mxu0 0.0
      %8518 = vmatprep.subr.mxu0 0.0
      %8519 = vmatpush2.msra.mxu0 0.0
      %8520 = vmatprep.subr.mxu0 0.0
      %8521 = vmatpush2.msra.mxu0 0.0
      %8522 = vmatprep.subr.mxu0 0.0
      %8523 = vmatpush2.msra.mxu0 0.0
      %8524 = vmatprep.subr.mxu0 0.0
      %8525 = vmatpush2.msra.mxu0 0.0
      %8526 = vmatprep.subr.mxu0 0.0
      %8527 = vmatpush2.msra.mxu0 0.0
      %8528 = vmatprep.mubr.f32.mxu0 0.0
      %v8529 = vand.u32 %v6845, 4294901760
      %8530 = vmatmul.mubr.f32.gmra.mxu0 %v8529
      %v8531 = vpop.f32.mrf.mxu0
      %v8532 = vadd.f32 %v8274, %v8531
      %v8533 = vpop.f32.mrf.mxu0
      %8534 = vmatprep.mubr.f32.mxu0 0.0
      %v8535 = vand.u32 %v6848, 4294901760
      %8536 = vmatmul.mubr.f32.gmra.mxu0 %v8535
      %v8537 = vpop.f32.mrf.mxu0
      %v8538 = vadd.f32 %v8280, %v8537
      %v8539 = vpop.f32.mrf.mxu0
      %8540 = vmatprep.mubr.f32.mxu0 0.0
      %v8541 = vand.u32 %v6851, 4294901760
      %8542 = vmatmul.mubr.f32.gmra.mxu0 %v8541
      %v8543 = vpop.f32.mrf.mxu0
      %v8544 = vadd.f32 %v8286, %v8543
      %v8545 = vpop.f32.mrf.mxu0
      %8546 = vmatprep.mubr.f32.mxu0 0.0
      %v8547 = vand.u32 %v6854, 4294901760
      %8548 = vmatmul.mubr.f32.gmra.mxu0 %v8547
      %v8549 = vpop.f32.mrf.mxu0
      %v8550 = vadd.f32 %v8292, %v8549
      %v8551 = vpop.f32.mrf.mxu0
      %8552 = vmatprep.mubr.f32.mxu0 0.0
      %v8553 = vand.u32 %v6857, 4294901760
      %8554 = vmatmul.mubr.f32.gmra.mxu0 %v8553
      %v8555 = vpop.f32.mrf.mxu0
      %v8556 = vadd.f32 %v8298, %v8555
      %v8557 = vpop.f32.mrf.mxu0
      %8558 = vmatprep.mubr.f32.mxu0 0.0
      %v8559 = vand.u32 %v6860, 4294901760
      %8560 = vmatmul.mubr.f32.gmra.mxu0 %v8559
      %v8561 = vpop.f32.mrf.mxu0
      %v8562 = vadd.f32 %v8304, %v8561
      %v8563 = vpop.f32.mrf.mxu0
      %8564 = vmatprep.mubr.f32.mxu0 0.0
      %v8565 = vand.u32 %v6863, 4294901760
      %8566 = vmatmul.mubr.f32.gmra.mxu0 %v8565
      %v8567 = vpop.f32.mrf.mxu0
      %v8568 = vadd.f32 %v8310, %v8567
      %v8569 = vpop.f32.mrf.mxu0
      %8570 = vmatprep.mubr.f32.mxu0 0.0
      %v8571 = vand.u32 %v6866, 4294901760
      %8572 = vmatmul.mubr.f32.gmra.mxu0 %v8571
      %v8573 = vpop.f32.mrf.mxu0
      %v8574 = vadd.f32 %v8316, %v8573
      %v8575 = vpop.f32.mrf.mxu0
      %8576 = vmatprep.mubr.f32.mxu0 0.0
      %v8577 = vand.u32 %v6869, 4294901760
      %8578 = vmatmul.mubr.f32.gmra.mxu0 %v8577
      %v8579 = vpop.f32.mrf.mxu0
      %v8580 = vadd.f32 %v8322, %v8579
      %v8581 = vpop.f32.mrf.mxu0
      %8582 = vmatprep.mubr.f32.mxu0 0.0
      %v8583 = vand.u32 %v6872, 4294901760
      %8584 = vmatmul.mubr.f32.gmra.mxu0 %v8583
      %v8585 = vpop.f32.mrf.mxu0
      %v8586 = vadd.f32 %v8328, %v8585
      %v8587 = vpop.f32.mrf.mxu0
      %8588 = vmatprep.mubr.f32.mxu0 0.0
      %v8589 = vand.u32 %v6875, 4294901760
      %8590 = vmatmul.mubr.f32.gmra.mxu0 %v8589
      %v8591 = vpop.f32.mrf.mxu0
      %v8592 = vadd.f32 %v8334, %v8591
      %v8593 = vpop.f32.mrf.mxu0
      %8594 = vmatprep.mubr.f32.mxu0 0.0
      %v8595 = vand.u32 %v6878, 4294901760
      %8596 = vmatmul.mubr.f32.gmra.mxu0 %v8595
      %v8597 = vpop.f32.mrf.mxu0
      %v8598 = vadd.f32 %v8340, %v8597
      %v8599 = vpop.f32.mrf.mxu0
      %8600 = vmatprep.mubr.f32.mxu0 0.0
      %v8601 = vand.u32 %v6881, 4294901760
      %8602 = vmatmul.mubr.f32.gmra.mxu0 %v8601
      %v8603 = vpop.f32.mrf.mxu0
      %v8604 = vadd.f32 %v8346, %v8603
      %v8605 = vpop.f32.mrf.mxu0
      %8606 = vmatprep.mubr.f32.mxu0 0.0
      %v8607 = vand.u32 %v6884, 4294901760
      %8608 = vmatmul.mubr.f32.gmra.mxu0 %v8607
      %v8609 = vpop.f32.mrf.mxu0
      %v8610 = vadd.f32 %v8352, %v8609
      %v8611 = vpop.f32.mrf.mxu0
      %8612 = vmatprep.mubr.f32.mxu0 0.0
      %v8613 = vand.u32 %v6887, 4294901760
      %8614 = vmatmul.mubr.f32.gmra.mxu0 %v8613
      %v8615 = vpop.f32.mrf.mxu0
      %v8616 = vadd.f32 %v8358, %v8615
      %v8617 = vpop.f32.mrf.mxu0
      %8618 = vmatprep.mubr.f32.mxu0 0.0
      %v8619 = vand.u32 %v6890, 4294901760
      %8620 = vmatmul.mubr.f32.gmra.mxu0 %v8619
      %v8621 = vpop.f32.mrf.mxu0
      %v8622 = vadd.f32 %v8364, %v8621
      %v8623 = vpop.f32.mrf.mxu0
      %8624 = vmatprep.mubr.f32.mxu0 0.0
      %v8625 = vand.u32 %v6893, 4294901760
      %8626 = vmatmul.mubr.f32.gmra.mxu0 %v8625
      %v8627 = vpop.f32.mrf.mxu0
      %v8628 = vadd.f32 %v8370, %v8627
      %v8629 = vpop.f32.mrf.mxu0
      %8630 = vmatprep.mubr.f32.mxu0 0.0
      %v8631 = vand.u32 %v6896, 4294901760
      %8632 = vmatmul.mubr.f32.gmra.mxu0 %v8631
      %v8633 = vpop.f32.mrf.mxu0
      %v8634 = vadd.f32 %v8376, %v8633
      %v8635 = vpop.f32.mrf.mxu0
      %8636 = vmatprep.mubr.f32.mxu0 0.0
      %v8637 = vand.u32 %v6899, 4294901760
      %8638 = vmatmul.mubr.f32.gmra.mxu0 %v8637
      %v8639 = vpop.f32.mrf.mxu0
      %v8640 = vadd.f32 %v8382, %v8639
      %v8641 = vpop.f32.mrf.mxu0
      %8642 = vmatprep.mubr.f32.mxu0 0.0
      %v8643 = vand.u32 %v6902, 4294901760
      %8644 = vmatmul.mubr.f32.gmra.mxu0 %v8643
      %v8645 = vpop.f32.mrf.mxu0
      %v8646 = vadd.f32 %v8388, %v8645
      %v8647 = vpop.f32.mrf.mxu0
      %8648 = vmatprep.mubr.f32.mxu0 0.0
      %v8649 = vand.u32 %v6905, 4294901760
      %8650 = vmatmul.mubr.f32.gmra.mxu0 %v8649
      %v8651 = vpop.f32.mrf.mxu0
      %v8652 = vadd.f32 %v8394, %v8651
      %v8653 = vpop.f32.mrf.mxu0
      %8654 = vmatprep.mubr.f32.mxu0 0.0
      %v8655 = vand.u32 %v6908, 4294901760
      %8656 = vmatmul.mubr.f32.gmra.mxu0 %v8655
      %v8657 = vpop.f32.mrf.mxu0
      %v8658 = vadd.f32 %v8400, %v8657
      %v8659 = vpop.f32.mrf.mxu0
      %8660 = vmatprep.mubr.f32.mxu0 0.0
      %v8661 = vand.u32 %v6911, 4294901760
      %8662 = vmatmul.mubr.f32.gmra.mxu0 %v8661
      %v8663 = vpop.f32.mrf.mxu0
      %v8664 = vadd.f32 %v8406, %v8663
      %v8665 = vpop.f32.mrf.mxu0
      %8666 = vmatprep.mubr.f32.mxu0 0.0
      %v8667 = vand.u32 %v6914, 4294901760
      %8668 = vmatmul.mubr.f32.gmra.mxu0 %v8667
      %v8669 = vpop.f32.mrf.mxu0
      %v8670 = vadd.f32 %v8412, %v8669
      %v8671 = vpop.f32.mrf.mxu0
      %8672 = vmatprep.mubr.f32.mxu0 0.0
      %v8673 = vand.u32 %v6917, 4294901760
      %8674 = vmatmul.mubr.f32.gmra.mxu0 %v8673
      %v8675 = vpop.f32.mrf.mxu0
      %v8676 = vadd.f32 %v8418, %v8675
      %v8677 = vpop.f32.mrf.mxu0
      %8678 = vmatprep.mubr.f32.mxu0 0.0
      %v8679 = vand.u32 %v6920, 4294901760
      %8680 = vmatmul.mubr.f32.gmra.mxu0 %v8679
      %v8681 = vpop.f32.mrf.mxu0
      %v8682 = vadd.f32 %v8424, %v8681
      %v8683 = vpop.f32.mrf.mxu0
      %8684 = vmatprep.mubr.f32.mxu0 0.0
      %v8685 = vand.u32 %v6923, 4294901760
      %8686 = vmatmul.mubr.f32.gmra.mxu0 %v8685
      %v8687 = vpop.f32.mrf.mxu0
      %v8688 = vadd.f32 %v8430, %v8687
      %v8689 = vpop.f32.mrf.mxu0
      %8690 = vmatprep.mubr.f32.mxu0 0.0
      %v8691 = vand.u32 %v6926, 4294901760
      %8692 = vmatmul.mubr.f32.gmra.mxu0 %v8691
      %v8693 = vpop.f32.mrf.mxu0
      %v8694 = vadd.f32 %v8436, %v8693
      %v8695 = vpop.f32.mrf.mxu0
      %8696 = vmatprep.mubr.f32.mxu0 0.0
      %v8697 = vand.u32 %v6929, 4294901760
      %8698 = vmatmul.mubr.f32.gmra.mxu0 %v8697
      %v8699 = vpop.f32.mrf.mxu0
      %v8700 = vadd.f32 %v8442, %v8699
      %v8701 = vpop.f32.mrf.mxu0
      %8702 = vmatprep.mubr.f32.mxu0 0.0
      %v8703 = vand.u32 %v6932, 4294901760
      %8704 = vmatmul.mubr.f32.gmra.mxu0 %v8703
      %v8705 = vpop.f32.mrf.mxu0
      %v8706 = vadd.f32 %v8448, %v8705
      %v8707 = vpop.f32.mrf.mxu0
      %8708 = vmatprep.mubr.f32.mxu0 0.0
      %v8709 = vand.u32 %v6935, 4294901760
      %8710 = vmatmul.mubr.f32.gmra.mxu0 %v8709
      %v8711 = vpop.f32.mrf.mxu0
      %v8712 = vadd.f32 %v8454, %v8711
      %v8713 = vpop.f32.mrf.mxu0
      %8714 = vmatprep.mubr.f32.mxu0 0.0
      %v8715 = vand.u32 %v6938, 4294901760
      %8716 = vmatmul.mubr.f32.gmra.mxu0 %v8715
      %v8717 = vpop.f32.mrf.mxu0
      %v8718 = vadd.f32 %v8460, %v8717
      %v8719 = vpop.f32.mrf.mxu0
      %8720 = vdwg.mxu0
      %v8721 = vrot.slane %v4963, 4
      %v8723 = vsel %vm4966, %v4057, 0
      %v8726 = vsel %vm4966, %v4058, 0
      %v8729 = vsel %vm4966, %v4059, 0
      %v8732 = vsel %vm4966, %v4060, 0
      %v8735 = vsel %vm4966, %v4061, 0
      %v8738 = vsel %vm4966, %v4062, 0
      %v8741 = vsel %vm4966, %v4063, 0
      %v8744 = vsel %vm4966, %v4064, 0
      %v8747 = vsel %vm4966, %v4065, 0
      %v8750 = vsel %vm4966, %v4066, 0
      %v8753 = vsel %vm4966, %v4067, 0
      %v8756 = vsel %vm4966, %v4068, 0
      %v8759 = vsel %vm4966, %v4069, 0
      %v8762 = vsel %vm4966, %v4070, 0
      %v8765 = vsel %vm4966, %v4071, 0
      %v8768 = vsel %vm4966, %v4072, 0
      %v8771 = vsel %vm4966, %v4073, 0
      %v8774 = vsel %vm4966, %v4074, 0
      %v8777 = vsel %vm4966, %v4075, 0
      %v8780 = vsel %vm4966, %v4076, 0
      %v8783 = vsel %vm4966, %v4077, 0
      %v8786 = vsel %vm4966, %v4078, 0
      %v8789 = vsel %vm4966, %v4079, 0
      %v8792 = vsel %vm4966, %v4080, 0
      %v8795 = vsel %vm4966, %v4081, 0
      %v8798 = vsel %vm4966, %v4082, 0
      %v8801 = vsel %vm4966, %v4083, 0
      %v8804 = vsel %vm4966, %v4084, 0
      %v8807 = vsel %vm4966, %v4085, 0
      %v8810 = vsel %vm4966, %v4086, 0
      %v8813 = vsel %vm4966, %v4087, 0
      %v8816 = vsel %vm4966, %v4088, 0
      %v8818 = vsel %vm2475, %v8721, 0
      %8820 = vmatprep.subr.mxu0 0.0
      %8821 = vmatpush1.msra.mxu0 0.0
      %8822 = vmatprep.subr.mxu0 0.0
      %8823 = vmatpush1.msra.mxu0 0.0
      %8824 = vmatprep.subr.mxu0 0.0
      %8825 = vmatpush1.msra.mxu0 0.0
      %8826 = vmatprep.subr.mxu0 0.0
      %8827 = vmatpush1.msra.mxu0 0.0
      %8828 = vmatprep.subr.mxu0 0.0
      %8829 = vmatpush1.msra.mxu0 0.0
      %8830 = vmatprep.subr.mxu0 0.0
      %8831 = vmatpush1.msra.mxu0 0.0
      %8832 = vmatprep.subr.mxu0 0.0
      %8833 = vmatpush1.msra.mxu0 0.0
      %8834 = vmatprep.subr.mxu0 0.0
      %8835 = vmatpush1.msra.mxu0 0.0
      %8836 = vmatprep.subr.mxu0 0.0
      %8837 = vmatpush1.msra.mxu0 0.0
      %8838 = vmatprep.subr.mxu0 0.0
      %8839 = vmatpush1.msra.mxu0 0.0
      %8840 = vmatprep.subr.mxu0 0.0
      %8841 = vmatpush1.msra.mxu0 0.0
      %8842 = vmatprep.subr.mxu0 0.0
      %8843 = vmatpush1.msra.mxu0 0.0
      %8844 = vmatprep.subr.mxu0 0.0
      %8845 = vmatpush1.msra.mxu0 0.0
      %8846 = vmatprep.subr.mxu0 0.0
      %8847 = vmatpush1.msra.mxu0 0.0
      %8848 = vmatprep.subr.mxu0 0.0
      %8849 = vmatpush1.msra.mxu0 0.0
      %8850 = vmatprep.subr.mxu0 0.0
      %v8851 = vand.u32 %v8818, 4294901760
      %8852 = vmatpush1.msra.mxu0 %v8851
      %8853 = vmatprep.subr.mxu0 0.0
      %8854 = vmatpush2.msra.mxu0 0.0
      %8855 = vmatprep.subr.mxu0 0.0
      %8856 = vmatpush2.msra.mxu0 0.0
      %8857 = vmatprep.subr.mxu0 0.0
      %8858 = vmatpush2.msra.mxu0 0.0
      %8859 = vmatprep.subr.mxu0 0.0
      %8860 = vmatpush2.msra.mxu0 0.0
      %8861 = vmatprep.subr.mxu0 0.0
      %8862 = vmatpush2.msra.mxu0 0.0
      %8863 = vmatprep.subr.mxu0 0.0
      %8864 = vmatpush2.msra.mxu0 0.0
      %8865 = vmatprep.subr.mxu0 0.0
      %8866 = vmatpush2.msra.mxu0 0.0
      %8867 = vmatprep.subr.mxu0 0.0
      %8868 = vmatpush2.msra.mxu0 0.0
      %8869 = vmatprep.subr.mxu0 0.0
      %8870 = vmatpush2.msra.mxu0 0.0
      %8871 = vmatprep.subr.mxu0 0.0
      %8872 = vmatpush2.msra.mxu0 0.0
      %8873 = vmatprep.subr.mxu0 0.0
      %8874 = vmatpush2.msra.mxu0 0.0
      %8875 = vmatprep.subr.mxu0 0.0
      %8876 = vmatpush2.msra.mxu0 0.0
      %8877 = vmatprep.subr.mxu0 0.0
      %8878 = vmatpush2.msra.mxu0 0.0
      %8879 = vmatprep.subr.mxu0 0.0
      %8880 = vmatpush2.msra.mxu0 0.0
      %8881 = vmatprep.subr.mxu0 0.0
      %8882 = vmatpush2.msra.mxu0 0.0
      %8883 = vmatprep.subr.mxu0 0.0
      %8884 = vmatpush2.msra.mxu0 0.0
      %8885 = vmatprep.mubr.f32.mxu0 0.0
      %v8886 = vand.u32 %v8723, 4294901760
      %v8887 = vsub.f32 %v8723, %v8886
      %v8888 = vand.u32 %v8887, 4294901760
      %v8889 = vsub.f32 %v8887, %v8888
      %v8890 = vand.u32 %v8889, 4294901760
      %8891 = vmatmul.mubr.f32.gmra.mxu0 %v8890
      %v8892 = vpop.f32.mrf.mxu0
      %v8893 = vadd.f32 0.0, %v8892
      %v8894 = vpop.f32.mrf.mxu0
      %8895 = vmatprep.mubr.f32.mxu0 0.0
      %v8896 = vand.u32 %v8726, 4294901760
      %v8897 = vsub.f32 %v8726, %v8896
      %v8898 = vand.u32 %v8897, 4294901760
      %v8899 = vsub.f32 %v8897, %v8898
      %v8900 = vand.u32 %v8899, 4294901760
      %8901 = vmatmul.mubr.f32.gmra.mxu0 %v8900
      %v8902 = vpop.f32.mrf.mxu0
      %v8903 = vadd.f32 0.0, %v8902
      %v8904 = vpop.f32.mrf.mxu0
      %8905 = vmatprep.mubr.f32.mxu0 0.0
      %v8906 = vand.u32 %v8729, 4294901760
      %v8907 = vsub.f32 %v8729, %v8906
      %v8908 = vand.u32 %v8907, 4294901760
      %v8909 = vsub.f32 %v8907, %v8908
      %v8910 = vand.u32 %v8909, 4294901760
      %8911 = vmatmul.mubr.f32.gmra.mxu0 %v8910
      %v8912 = vpop.f32.mrf.mxu0
      %v8913 = vadd.f32 0.0, %v8912
      %v8914 = vpop.f32.mrf.mxu0
      %8915 = vmatprep.mubr.f32.mxu0 0.0
      %v8916 = vand.u32 %v8732, 4294901760
      %v8917 = vsub.f32 %v8732, %v8916
      %v8918 = vand.u32 %v8917, 4294901760
      %v8919 = vsub.f32 %v8917, %v8918
      %v8920 = vand.u32 %v8919, 4294901760
      %8921 = vmatmul.mubr.f32.gmra.mxu0 %v8920
      %v8922 = vpop.f32.mrf.mxu0
      %v8923 = vadd.f32 0.0, %v8922
      %v8924 = vpop.f32.mrf.mxu0
      %8925 = vmatprep.mubr.f32.mxu0 0.0
      %v8926 = vand.u32 %v8735, 4294901760
      %v8927 = vsub.f32 %v8735, %v8926
      %v8928 = vand.u32 %v8927, 4294901760
      %v8929 = vsub.f32 %v8927, %v8928
      %v8930 = vand.u32 %v8929, 4294901760
      %8931 = vmatmul.mubr.f32.gmra.mxu0 %v8930
      %v8932 = vpop.f32.mrf.mxu0
      %v8933 = vadd.f32 0.0, %v8932
      %v8934 = vpop.f32.mrf.mxu0
      %8935 = vmatprep.mubr.f32.mxu0 0.0
      %v8936 = vand.u32 %v8738, 4294901760
      %v8937 = vsub.f32 %v8738, %v8936
      %v8938 = vand.u32 %v8937, 4294901760
      %v8939 = vsub.f32 %v8937, %v8938
      %v8940 = vand.u32 %v8939, 4294901760
      %8941 = vmatmul.mubr.f32.gmra.mxu0 %v8940
      %v8942 = vpop.f32.mrf.mxu0
      %v8943 = vadd.f32 0.0, %v8942
      %v8944 = vpop.f32.mrf.mxu0
      %8945 = vmatprep.mubr.f32.mxu0 0.0
      %v8946 = vand.u32 %v8741, 4294901760
      %v8947 = vsub.f32 %v8741, %v8946
      %v8948 = vand.u32 %v8947, 4294901760
      %v8949 = vsub.f32 %v8947, %v8948
      %v8950 = vand.u32 %v8949, 4294901760
      %8951 = vmatmul.mubr.f32.gmra.mxu0 %v8950
      %v8952 = vpop.f32.mrf.mxu0
      %v8953 = vadd.f32 0.0, %v8952
      %v8954 = vpop.f32.mrf.mxu0
      %8955 = vmatprep.mubr.f32.mxu0 0.0
      %v8956 = vand.u32 %v8744, 4294901760
      %v8957 = vsub.f32 %v8744, %v8956
      %v8958 = vand.u32 %v8957, 4294901760
      %v8959 = vsub.f32 %v8957, %v8958
      %v8960 = vand.u32 %v8959, 4294901760
      %8961 = vmatmul.mubr.f32.gmra.mxu0 %v8960
      %v8962 = vpop.f32.mrf.mxu0
      %v8963 = vadd.f32 0.0, %v8962
      %v8964 = vpop.f32.mrf.mxu0
      %8965 = vmatprep.mubr.f32.mxu0 0.0
      %v8966 = vand.u32 %v8747, 4294901760
      %v8967 = vsub.f32 %v8747, %v8966
      %v8968 = vand.u32 %v8967, 4294901760
      %v8969 = vsub.f32 %v8967, %v8968
      %v8970 = vand.u32 %v8969, 4294901760
      %8971 = vmatmul.mubr.f32.gmra.mxu0 %v8970
      %v8972 = vpop.f32.mrf.mxu0
      %v8973 = vadd.f32 0.0, %v8972
      %v8974 = vpop.f32.mrf.mxu0
      %8975 = vmatprep.mubr.f32.mxu0 0.0
      %v8976 = vand.u32 %v8750, 4294901760
      %v8977 = vsub.f32 %v8750, %v8976
      %v8978 = vand.u32 %v8977, 4294901760
      %v8979 = vsub.f32 %v8977, %v8978
      %v8980 = vand.u32 %v8979, 4294901760
      %8981 = vmatmul.mubr.f32.gmra.mxu0 %v8980
      %v8982 = vpop.f32.mrf.mxu0
      %v8983 = vadd.f32 0.0, %v8982
      %v8984 = vpop.f32.mrf.mxu0
      %8985 = vmatprep.mubr.f32.mxu0 0.0
      %v8986 = vand.u32 %v8753, 4294901760
      %v8987 = vsub.f32 %v8753, %v8986
      %v8988 = vand.u32 %v8987, 4294901760
      %v8989 = vsub.f32 %v8987, %v8988
      %v8990 = vand.u32 %v8989, 4294901760
      %8991 = vmatmul.mubr.f32.gmra.mxu0 %v8990
      %v8992 = vpop.f32.mrf.mxu0
      %v8993 = vadd.f32 0.0, %v8992
      %v8994 = vpop.f32.mrf.mxu0
      %8995 = vmatprep.mubr.f32.mxu0 0.0
      %v8996 = vand.u32 %v8756, 4294901760
      %v8997 = vsub.f32 %v8756, %v8996
      %v8998 = vand.u32 %v8997, 4294901760
      %v8999 = vsub.f32 %v8997, %v8998
      %v9000 = vand.u32 %v8999, 4294901760
      %9001 = vmatmul.mubr.f32.gmra.mxu0 %v9000
      %v9002 = vpop.f32.mrf.mxu0
      %v9003 = vadd.f32 0.0, %v9002
      %v9004 = vpop.f32.mrf.mxu0
      %9005 = vmatprep.mubr.f32.mxu0 0.0
      %v9006 = vand.u32 %v8759, 4294901760
      %v9007 = vsub.f32 %v8759, %v9006
      %v9008 = vand.u32 %v9007, 4294901760
      %v9009 = vsub.f32 %v9007, %v9008
      %v9010 = vand.u32 %v9009, 4294901760
      %9011 = vmatmul.mubr.f32.gmra.mxu0 %v9010
      %v9012 = vpop.f32.mrf.mxu0
      %v9013 = vadd.f32 0.0, %v9012
      %v9014 = vpop.f32.mrf.mxu0
      %9015 = vmatprep.mubr.f32.mxu0 0.0
      %v9016 = vand.u32 %v8762, 4294901760
      %v9017 = vsub.f32 %v8762, %v9016
      %v9018 = vand.u32 %v9017, 4294901760
      %v9019 = vsub.f32 %v9017, %v9018
      %v9020 = vand.u32 %v9019, 4294901760
      %9021 = vmatmul.mubr.f32.gmra.mxu0 %v9020
      %v9022 = vpop.f32.mrf.mxu0
      %v9023 = vadd.f32 0.0, %v9022
      %v9024 = vpop.f32.mrf.mxu0
      %9025 = vmatprep.mubr.f32.mxu0 0.0
      %v9026 = vand.u32 %v8765, 4294901760
      %v9027 = vsub.f32 %v8765, %v9026
      %v9028 = vand.u32 %v9027, 4294901760
      %v9029 = vsub.f32 %v9027, %v9028
      %v9030 = vand.u32 %v9029, 4294901760
      %9031 = vmatmul.mubr.f32.gmra.mxu0 %v9030
      %v9032 = vpop.f32.mrf.mxu0
      %v9033 = vadd.f32 0.0, %v9032
      %v9034 = vpop.f32.mrf.mxu0
      %9035 = vmatprep.mubr.f32.mxu0 0.0
      %v9036 = vand.u32 %v8768, 4294901760
      %v9037 = vsub.f32 %v8768, %v9036
      %v9038 = vand.u32 %v9037, 4294901760
      %v9039 = vsub.f32 %v9037, %v9038
      %v9040 = vand.u32 %v9039, 4294901760
      %9041 = vmatmul.mubr.f32.gmra.mxu0 %v9040
      %v9042 = vpop.f32.mrf.mxu0
      %v9043 = vadd.f32 0.0, %v9042
      %v9044 = vpop.f32.mrf.mxu0
      %9045 = vmatprep.mubr.f32.mxu0 0.0
      %v9046 = vand.u32 %v8771, 4294901760
      %v9047 = vsub.f32 %v8771, %v9046
      %v9048 = vand.u32 %v9047, 4294901760
      %v9049 = vsub.f32 %v9047, %v9048
      %v9050 = vand.u32 %v9049, 4294901760
      %9051 = vmatmul.mubr.f32.gmra.mxu0 %v9050
      %v9052 = vpop.f32.mrf.mxu0
      %v9053 = vadd.f32 0.0, %v9052
      %v9054 = vpop.f32.mrf.mxu0
      %9055 = vmatprep.mubr.f32.mxu0 0.0
      %v9056 = vand.u32 %v8774, 4294901760
      %v9057 = vsub.f32 %v8774, %v9056
      %v9058 = vand.u32 %v9057, 4294901760
      %v9059 = vsub.f32 %v9057, %v9058
      %v9060 = vand.u32 %v9059, 4294901760
      %9061 = vmatmul.mubr.f32.gmra.mxu0 %v9060
      %v9062 = vpop.f32.mrf.mxu0
      %v9063 = vadd.f32 0.0, %v9062
      %v9064 = vpop.f32.mrf.mxu0
      %9065 = vmatprep.mubr.f32.mxu0 0.0
      %v9066 = vand.u32 %v8777, 4294901760
      %v9067 = vsub.f32 %v8777, %v9066
      %v9068 = vand.u32 %v9067, 4294901760
      %v9069 = vsub.f32 %v9067, %v9068
      %v9070 = vand.u32 %v9069, 4294901760
      %9071 = vmatmul.mubr.f32.gmra.mxu0 %v9070
      %v9072 = vpop.f32.mrf.mxu0
      %v9073 = vadd.f32 0.0, %v9072
      %v9074 = vpop.f32.mrf.mxu0
      %9075 = vmatprep.mubr.f32.mxu0 0.0
      %v9076 = vand.u32 %v8780, 4294901760
      %v9077 = vsub.f32 %v8780, %v9076
      %v9078 = vand.u32 %v9077, 4294901760
      %v9079 = vsub.f32 %v9077, %v9078
      %v9080 = vand.u32 %v9079, 4294901760
      %9081 = vmatmul.mubr.f32.gmra.mxu0 %v9080
      %v9082 = vpop.f32.mrf.mxu0
      %v9083 = vadd.f32 0.0, %v9082
      %v9084 = vpop.f32.mrf.mxu0
      %9085 = vmatprep.mubr.f32.mxu0 0.0
      %v9086 = vand.u32 %v8783, 4294901760
      %v9087 = vsub.f32 %v8783, %v9086
      %v9088 = vand.u32 %v9087, 4294901760
      %v9089 = vsub.f32 %v9087, %v9088
      %v9090 = vand.u32 %v9089, 4294901760
      %9091 = vmatmul.mubr.f32.gmra.mxu0 %v9090
      %v9092 = vpop.f32.mrf.mxu0
      %v9093 = vadd.f32 0.0, %v9092
      %v9094 = vpop.f32.mrf.mxu0
      %9095 = vmatprep.mubr.f32.mxu0 0.0
      %v9096 = vand.u32 %v8786, 4294901760
      %v9097 = vsub.f32 %v8786, %v9096
      %v9098 = vand.u32 %v9097, 4294901760
      %v9099 = vsub.f32 %v9097, %v9098
      %v9100 = vand.u32 %v9099, 4294901760
      %9101 = vmatmul.mubr.f32.gmra.mxu0 %v9100
      %v9102 = vpop.f32.mrf.mxu0
      %v9103 = vadd.f32 0.0, %v9102
      %v9104 = vpop.f32.mrf.mxu0
      %9105 = vmatprep.mubr.f32.mxu0 0.0
      %v9106 = vand.u32 %v8789, 4294901760
      %v9107 = vsub.f32 %v8789, %v9106
      %v9108 = vand.u32 %v9107, 4294901760
      %v9109 = vsub.f32 %v9107, %v9108
      %v9110 = vand.u32 %v9109, 4294901760
      %9111 = vmatmul.mubr.f32.gmra.mxu0 %v9110
      %v9112 = vpop.f32.mrf.mxu0
      %v9113 = vadd.f32 0.0, %v9112
      %v9114 = vpop.f32.mrf.mxu0
      %9115 = vmatprep.mubr.f32.mxu0 0.0
      %v9116 = vand.u32 %v8792, 4294901760
      %v9117 = vsub.f32 %v8792, %v9116
      %v9118 = vand.u32 %v9117, 4294901760
      %v9119 = vsub.f32 %v9117, %v9118
      %v9120 = vand.u32 %v9119, 4294901760
      %9121 = vmatmul.mubr.f32.gmra.mxu0 %v9120
      %v9122 = vpop.f32.mrf.mxu0
      %v9123 = vadd.f32 0.0, %v9122
      %v9124 = vpop.f32.mrf.mxu0
      %9125 = vmatprep.mubr.f32.mxu0 0.0
      %v9126 = vand.u32 %v8795, 4294901760
      %v9127 = vsub.f32 %v8795, %v9126
      %v9128 = vand.u32 %v9127, 4294901760
      %v9129 = vsub.f32 %v9127, %v9128
      %v9130 = vand.u32 %v9129, 4294901760
      %9131 = vmatmul.mubr.f32.gmra.mxu0 %v9130
      %v9132 = vpop.f32.mrf.mxu0
      %v9133 = vadd.f32 0.0, %v9132
      %v9134 = vpop.f32.mrf.mxu0
      %9135 = vmatprep.mubr.f32.mxu0 0.0
      %v9136 = vand.u32 %v8798, 4294901760
      %v9137 = vsub.f32 %v8798, %v9136
      %v9138 = vand.u32 %v9137, 4294901760
      %v9139 = vsub.f32 %v9137, %v9138
      %v9140 = vand.u32 %v9139, 4294901760
      %9141 = vmatmul.mubr.f32.gmra.mxu0 %v9140
      %v9142 = vpop.f32.mrf.mxu0
      %v9143 = vadd.f32 0.0, %v9142
      %v9144 = vpop.f32.mrf.mxu0
      %9145 = vmatprep.mubr.f32.mxu0 0.0
      %v9146 = vand.u32 %v8801, 4294901760
      %v9147 = vsub.f32 %v8801, %v9146
      %v9148 = vand.u32 %v9147, 4294901760
      %v9149 = vsub.f32 %v9147, %v9148
      %v9150 = vand.u32 %v9149, 4294901760
      %9151 = vmatmul.mubr.f32.gmra.mxu0 %v9150
      %v9152 = vpop.f32.mrf.mxu0
      %v9153 = vadd.f32 0.0, %v9152
      %v9154 = vpop.f32.mrf.mxu0
      %9155 = vmatprep.mubr.f32.mxu0 0.0
      %v9156 = vand.u32 %v8804, 4294901760
      %v9157 = vsub.f32 %v8804, %v9156
      %v9158 = vand.u32 %v9157, 4294901760
      %v9159 = vsub.f32 %v9157, %v9158
      %v9160 = vand.u32 %v9159, 4294901760
      %9161 = vmatmul.mubr.f32.gmra.mxu0 %v9160
      %v9162 = vpop.f32.mrf.mxu0
      %v9163 = vadd.f32 0.0, %v9162
      %v9164 = vpop.f32.mrf.mxu0
      %9165 = vmatprep.mubr.f32.mxu0 0.0
      %v9166 = vand.u32 %v8807, 4294901760
      %v9167 = vsub.f32 %v8807, %v9166
      %v9168 = vand.u32 %v9167, 4294901760
      %v9169 = vsub.f32 %v9167, %v9168
      %v9170 = vand.u32 %v9169, 4294901760
      %9171 = vmatmul.mubr.f32.gmra.mxu0 %v9170
      %v9172 = vpop.f32.mrf.mxu0
      %v9173 = vadd.f32 0.0, %v9172
      %v9174 = vpop.f32.mrf.mxu0
      %9175 = vmatprep.mubr.f32.mxu0 0.0
      %v9176 = vand.u32 %v8810, 4294901760
      %v9177 = vsub.f32 %v8810, %v9176
      %v9178 = vand.u32 %v9177, 4294901760
      %v9179 = vsub.f32 %v9177, %v9178
      %v9180 = vand.u32 %v9179, 4294901760
      %9181 = vmatmul.mubr.f32.gmra.mxu0 %v9180
      %v9182 = vpop.f32.mrf.mxu0
      %v9183 = vadd.f32 0.0, %v9182
      %v9184 = vpop.f32.mrf.mxu0
      %9185 = vmatprep.mubr.f32.mxu0 0.0
      %v9186 = vand.u32 %v8813, 4294901760
      %v9187 = vsub.f32 %v8813, %v9186
      %v9188 = vand.u32 %v9187, 4294901760
      %v9189 = vsub.f32 %v9187, %v9188
      %v9190 = vand.u32 %v9189, 4294901760
      %9191 = vmatmul.mubr.f32.gmra.mxu0 %v9190
      %v9192 = vpop.f32.mrf.mxu0
      %v9193 = vadd.f32 0.0, %v9192
      %v9194 = vpop.f32.mrf.mxu0
      %9195 = vmatprep.mubr.f32.mxu0 0.0
      %v9196 = vand.u32 %v8816, 4294901760
      %v9197 = vsub.f32 %v8816, %v9196
      %v9198 = vand.u32 %v9197, 4294901760
      %v9199 = vsub.f32 %v9197, %v9198
      %v9200 = vand.u32 %v9199, 4294901760
      %9201 = vmatmul.mubr.f32.gmra.mxu0 %v9200
      %v9202 = vpop.f32.mrf.mxu0
      %v9203 = vadd.f32 0.0, %v9202
      %v9204 = vpop.f32.mrf.mxu0
      %9205 = vdwg.mxu0
      %9206 = vmatprep.subr.mxu0 0.0
      %9207 = vmatpush1.msra.mxu0 0.0
      %9208 = vmatprep.subr.mxu0 0.0
      %9209 = vmatpush1.msra.mxu0 0.0
      %9210 = vmatprep.subr.mxu0 0.0
      %9211 = vmatpush1.msra.mxu0 0.0
      %9212 = vmatprep.subr.mxu0 0.0
      %9213 = vmatpush1.msra.mxu0 0.0
      %9214 = vmatprep.subr.mxu0 0.0
      %9215 = vmatpush1.msra.mxu0 0.0
      %9216 = vmatprep.subr.mxu0 0.0
      %9217 = vmatpush1.msra.mxu0 0.0
      %9218 = vmatprep.subr.mxu0 0.0
      %9219 = vmatpush1.msra.mxu0 0.0
      %9220 = vmatprep.subr.mxu0 0.0
      %9221 = vmatpush1.msra.mxu0 0.0
      %9222 = vmatprep.subr.mxu0 0.0
      %9223 = vmatpush1.msra.mxu0 0.0
      %9224 = vmatprep.subr.mxu0 0.0
      %9225 = vmatpush1.msra.mxu0 0.0
      %9226 = vmatprep.subr.mxu0 0.0
      %9227 = vmatpush1.msra.mxu0 0.0
      %9228 = vmatprep.subr.mxu0 0.0
      %9229 = vmatpush1.msra.mxu0 0.0
      %9230 = vmatprep.subr.mxu0 0.0
      %9231 = vmatpush1.msra.mxu0 0.0
      %9232 = vmatprep.subr.mxu0 0.0
      %9233 = vmatpush1.msra.mxu0 0.0
      %9234 = vmatprep.subr.mxu0 0.0
      %9235 = vmatpush1.msra.mxu0 0.0
      %9236 = vmatprep.subr.mxu0 0.0
      %v9237 = vand.u32 %v8818, 4294901760
      %v9238 = vsub.f32 %v8818, %v9237
      %v9239 = vand.u32 %v9238, 4294901760
      %v9240 = vsub.f32 %v9238, %v9239
      %v9241 = vand.u32 %v9240, 4294901760
      %9242 = vmatpush1.msra.mxu0 %v9241
      %9243 = vmatprep.subr.mxu0 0.0
      %9244 = vmatpush2.msra.mxu0 0.0
      %9245 = vmatprep.subr.mxu0 0.0
      %9246 = vmatpush2.msra.mxu0 0.0
      %9247 = vmatprep.subr.mxu0 0.0
      %9248 = vmatpush2.msra.mxu0 0.0
      %9249 = vmatprep.subr.mxu0 0.0
      %9250 = vmatpush2.msra.mxu0 0.0
      %9251 = vmatprep.subr.mxu0 0.0
      %9252 = vmatpush2.msra.mxu0 0.0
      %9253 = vmatprep.subr.mxu0 0.0
      %9254 = vmatpush2.msra.mxu0 0.0
      %9255 = vmatprep.subr.mxu0 0.0
      %9256 = vmatpush2.msra.mxu0 0.0
      %9257 = vmatprep.subr.mxu0 0.0
      %9258 = vmatpush2.msra.mxu0 0.0
      %9259 = vmatprep.subr.mxu0 0.0
      %9260 = vmatpush2.msra.mxu0 0.0
      %9261 = vmatprep.subr.mxu0 0.0
      %9262 = vmatpush2.msra.mxu0 0.0
      %9263 = vmatprep.subr.mxu0 0.0
      %9264 = vmatpush2.msra.mxu0 0.0
      %9265 = vmatprep.subr.mxu0 0.0
      %9266 = vmatpush2.msra.mxu0 0.0
      %9267 = vmatprep.subr.mxu0 0.0
      %9268 = vmatpush2.msra.mxu0 0.0
      %9269 = vmatprep.subr.mxu0 0.0
      %9270 = vmatpush2.msra.mxu0 0.0
      %9271 = vmatprep.subr.mxu0 0.0
      %9272 = vmatpush2.msra.mxu0 0.0
      %9273 = vmatprep.subr.mxu0 0.0
      %9274 = vmatpush2.msra.mxu0 0.0
      %9275 = vmatprep.mubr.f32.mxu0 0.0
      %v9276 = vand.u32 %v8723, 4294901760
      %9277 = vmatmul.mubr.f32.gmra.mxu0 %v9276
      %v9278 = vpop.f32.mrf.mxu0
      %v9279 = vadd.f32 %v8893, %v9278
      %v9280 = vpop.f32.mrf.mxu0
      %9281 = vmatprep.mubr.f32.mxu0 0.0
      %v9282 = vand.u32 %v8726, 4294901760
      %9283 = vmatmul.mubr.f32.gmra.mxu0 %v9282
      %v9284 = vpop.f32.mrf.mxu0
      %v9285 = vadd.f32 %v8903, %v9284
      %v9286 = vpop.f32.mrf.mxu0
      %9287 = vmatprep.mubr.f32.mxu0 0.0
      %v9288 = vand.u32 %v8729, 4294901760
      %9289 = vmatmul.mubr.f32.gmra.mxu0 %v9288
      %v9290 = vpop.f32.mrf.mxu0
      %v9291 = vadd.f32 %v8913, %v9290
      %v9292 = vpop.f32.mrf.mxu0
      %9293 = vmatprep.mubr.f32.mxu0 0.0
      %v9294 = vand.u32 %v8732, 4294901760
      %9295 = vmatmul.mubr.f32.gmra.mxu0 %v9294
      %v9296 = vpop.f32.mrf.mxu0
      %v9297 = vadd.f32 %v8923, %v9296
      %v9298 = vpop.f32.mrf.mxu0
      %9299 = vmatprep.mubr.f32.mxu0 0.0
      %v9300 = vand.u32 %v8735, 4294901760
      %9301 = vmatmul.mubr.f32.gmra.mxu0 %v9300
      %v9302 = vpop.f32.mrf.mxu0
      %v9303 = vadd.f32 %v8933, %v9302
      %v9304 = vpop.f32.mrf.mxu0
      %9305 = vmatprep.mubr.f32.mxu0 0.0
      %v9306 = vand.u32 %v8738, 4294901760
      %9307 = vmatmul.mubr.f32.gmra.mxu0 %v9306
      %v9308 = vpop.f32.mrf.mxu0
      %v9309 = vadd.f32 %v8943, %v9308
      %v9310 = vpop.f32.mrf.mxu0
      %9311 = vmatprep.mubr.f32.mxu0 0.0
      %v9312 = vand.u32 %v8741, 4294901760
      %9313 = vmatmul.mubr.f32.gmra.mxu0 %v9312
      %v9314 = vpop.f32.mrf.mxu0
      %v9315 = vadd.f32 %v8953, %v9314
      %v9316 = vpop.f32.mrf.mxu0
      %9317 = vmatprep.mubr.f32.mxu0 0.0
      %v9318 = vand.u32 %v8744, 4294901760
      %9319 = vmatmul.mubr.f32.gmra.mxu0 %v9318
      %v9320 = vpop.f32.mrf.mxu0
      %v9321 = vadd.f32 %v8963, %v9320
      %v9322 = vpop.f32.mrf.mxu0
      %9323 = vmatprep.mubr.f32.mxu0 0.0
      %v9324 = vand.u32 %v8747, 4294901760
      %9325 = vmatmul.mubr.f32.gmra.mxu0 %v9324
      %v9326 = vpop.f32.mrf.mxu0
      %v9327 = vadd.f32 %v8973, %v9326
      %v9328 = vpop.f32.mrf.mxu0
      %9329 = vmatprep.mubr.f32.mxu0 0.0
      %v9330 = vand.u32 %v8750, 4294901760
      %9331 = vmatmul.mubr.f32.gmra.mxu0 %v9330
      %v9332 = vpop.f32.mrf.mxu0
      %v9333 = vadd.f32 %v8983, %v9332
      %v9334 = vpop.f32.mrf.mxu0
      %9335 = vmatprep.mubr.f32.mxu0 0.0
      %v9336 = vand.u32 %v8753, 4294901760
      %9337 = vmatmul.mubr.f32.gmra.mxu0 %v9336
      %v9338 = vpop.f32.mrf.mxu0
      %v9339 = vadd.f32 %v8993, %v9338
      %v9340 = vpop.f32.mrf.mxu0
      %9341 = vmatprep.mubr.f32.mxu0 0.0
      %v9342 = vand.u32 %v8756, 4294901760
      %9343 = vmatmul.mubr.f32.gmra.mxu0 %v9342
      %v9344 = vpop.f32.mrf.mxu0
      %v9345 = vadd.f32 %v9003, %v9344
      %v9346 = vpop.f32.mrf.mxu0
      %9347 = vmatprep.mubr.f32.mxu0 0.0
      %v9348 = vand.u32 %v8759, 4294901760
      %9349 = vmatmul.mubr.f32.gmra.mxu0 %v9348
      %v9350 = vpop.f32.mrf.mxu0
      %v9351 = vadd.f32 %v9013, %v9350
      %v9352 = vpop.f32.mrf.mxu0
      %9353 = vmatprep.mubr.f32.mxu0 0.0
      %v9354 = vand.u32 %v8762, 4294901760
      %9355 = vmatmul.mubr.f32.gmra.mxu0 %v9354
      %v9356 = vpop.f32.mrf.mxu0
      %v9357 = vadd.f32 %v9023, %v9356
      %v9358 = vpop.f32.mrf.mxu0
      %9359 = vmatprep.mubr.f32.mxu0 0.0
      %v9360 = vand.u32 %v8765, 4294901760
      %9361 = vmatmul.mubr.f32.gmra.mxu0 %v9360
      %v9362 = vpop.f32.mrf.mxu0
      %v9363 = vadd.f32 %v9033, %v9362
      %v9364 = vpop.f32.mrf.mxu0
      %9365 = vmatprep.mubr.f32.mxu0 0.0
      %v9366 = vand.u32 %v8768, 4294901760
      %9367 = vmatmul.mubr.f32.gmra.mxu0 %v9366
      %v9368 = vpop.f32.mrf.mxu0
      %v9369 = vadd.f32 %v9043, %v9368
      %v9370 = vpop.f32.mrf.mxu0
      %9371 = vmatprep.mubr.f32.mxu0 0.0
      %v9372 = vand.u32 %v8771, 4294901760
      %9373 = vmatmul.mubr.f32.gmra.mxu0 %v9372
      %v9374 = vpop.f32.mrf.mxu0
      %v9375 = vadd.f32 %v9053, %v9374
      %v9376 = vpop.f32.mrf.mxu0
      %9377 = vmatprep.mubr.f32.mxu0 0.0
      %v9378 = vand.u32 %v8774, 4294901760
      %9379 = vmatmul.mubr.f32.gmra.mxu0 %v9378
      %v9380 = vpop.f32.mrf.mxu0
      %v9381 = vadd.f32 %v9063, %v9380
      %v9382 = vpop.f32.mrf.mxu0
      %9383 = vmatprep.mubr.f32.mxu0 0.0
      %v9384 = vand.u32 %v8777, 4294901760
      %9385 = vmatmul.mubr.f32.gmra.mxu0 %v9384
      %v9386 = vpop.f32.mrf.mxu0
      %v9387 = vadd.f32 %v9073, %v9386
      %v9388 = vpop.f32.mrf.mxu0
      %9389 = vmatprep.mubr.f32.mxu0 0.0
      %v9390 = vand.u32 %v8780, 4294901760
      %9391 = vmatmul.mubr.f32.gmra.mxu0 %v9390
      %v9392 = vpop.f32.mrf.mxu0
      %v9393 = vadd.f32 %v9083, %v9392
      %v9394 = vpop.f32.mrf.mxu0
      %9395 = vmatprep.mubr.f32.mxu0 0.0
      %v9396 = vand.u32 %v8783, 4294901760
      %9397 = vmatmul.mubr.f32.gmra.mxu0 %v9396
      %v9398 = vpop.f32.mrf.mxu0
      %v9399 = vadd.f32 %v9093, %v9398
      %v9400 = vpop.f32.mrf.mxu0
      %9401 = vmatprep.mubr.f32.mxu0 0.0
      %v9402 = vand.u32 %v8786, 4294901760
      %9403 = vmatmul.mubr.f32.gmra.mxu0 %v9402
      %v9404 = vpop.f32.mrf.mxu0
      %v9405 = vadd.f32 %v9103, %v9404
      %v9406 = vpop.f32.mrf.mxu0
      %9407 = vmatprep.mubr.f32.mxu0 0.0
      %v9408 = vand.u32 %v8789, 4294901760
      %9409 = vmatmul.mubr.f32.gmra.mxu0 %v9408
      %v9410 = vpop.f32.mrf.mxu0
      %v9411 = vadd.f32 %v9113, %v9410
      %v9412 = vpop.f32.mrf.mxu0
      %9413 = vmatprep.mubr.f32.mxu0 0.0
      %v9414 = vand.u32 %v8792, 4294901760
      %9415 = vmatmul.mubr.f32.gmra.mxu0 %v9414
      %v9416 = vpop.f32.mrf.mxu0
      %v9417 = vadd.f32 %v9123, %v9416
      %v9418 = vpop.f32.mrf.mxu0
      %9419 = vmatprep.mubr.f32.mxu0 0.0
      %v9420 = vand.u32 %v8795, 4294901760
      %9421 = vmatmul.mubr.f32.gmra.mxu0 %v9420
      %v9422 = vpop.f32.mrf.mxu0
      %v9423 = vadd.f32 %v9133, %v9422
      %v9424 = vpop.f32.mrf.mxu0
      %9425 = vmatprep.mubr.f32.mxu0 0.0
      %v9426 = vand.u32 %v8798, 4294901760
      %9427 = vmatmul.mubr.f32.gmra.mxu0 %v9426
      %v9428 = vpop.f32.mrf.mxu0
      %v9429 = vadd.f32 %v9143, %v9428
      %v9430 = vpop.f32.mrf.mxu0
      %9431 = vmatprep.mubr.f32.mxu0 0.0
      %v9432 = vand.u32 %v8801, 4294901760
      %9433 = vmatmul.mubr.f32.gmra.mxu0 %v9432
      %v9434 = vpop.f32.mrf.mxu0
      %v9435 = vadd.f32 %v9153, %v9434
      %v9436 = vpop.f32.mrf.mxu0
      %9437 = vmatprep.mubr.f32.mxu0 0.0
      %v9438 = vand.u32 %v8804, 4294901760
      %9439 = vmatmul.mubr.f32.gmra.mxu0 %v9438
      %v9440 = vpop.f32.mrf.mxu0
      %v9441 = vadd.f32 %v9163, %v9440
      %v9442 = vpop.f32.mrf.mxu0
      %9443 = vmatprep.mubr.f32.mxu0 0.0
      %v9444 = vand.u32 %v8807, 4294901760
      %9445 = vmatmul.mubr.f32.gmra.mxu0 %v9444
      %v9446 = vpop.f32.mrf.mxu0
      %v9447 = vadd.f32 %v9173, %v9446
      %v9448 = vpop.f32.mrf.mxu0
      %9449 = vmatprep.mubr.f32.mxu0 0.0
      %v9450 = vand.u32 %v8810, 4294901760
      %9451 = vmatmul.mubr.f32.gmra.mxu0 %v9450
      %v9452 = vpop.f32.mrf.mxu0
      %v9453 = vadd.f32 %v9183, %v9452
      %v9454 = vpop.f32.mrf.mxu0
      %9455 = vmatprep.mubr.f32.mxu0 0.0
      %v9456 = vand.u32 %v8813, 4294901760
      %9457 = vmatmul.mubr.f32.gmra.mxu0 %v9456
      %v9458 = vpop.f32.mrf.mxu0
      %v9459 = vadd.f32 %v9193, %v9458
      %v9460 = vpop.f32.mrf.mxu0
      %9461 = vmatprep.mubr.f32.mxu0 0.0
      %v9462 = vand.u32 %v8816, 4294901760
      %9463 = vmatmul.mubr.f32.gmra.mxu0 %v9462
      %v9464 = vpop.f32.mrf.mxu0
      %v9465 = vadd.f32 %v9203, %v9464
      %v9466 = vpop.f32.mrf.mxu0
      %9467 = vdwg.mxu0
      %9468 = vmatprep.subr.mxu0 0.0
      %9469 = vmatpush1.msra.mxu0 0.0
      %9470 = vmatprep.subr.mxu0 0.0
      %9471 = vmatpush1.msra.mxu0 0.0
      %9472 = vmatprep.subr.mxu0 0.0
      %9473 = vmatpush1.msra.mxu0 0.0
      %9474 = vmatprep.subr.mxu0 0.0
      %9475 = vmatpush1.msra.mxu0 0.0
      %9476 = vmatprep.subr.mxu0 0.0
      %9477 = vmatpush1.msra.mxu0 0.0
      %9478 = vmatprep.subr.mxu0 0.0
      %9479 = vmatpush1.msra.mxu0 0.0
      %9480 = vmatprep.subr.mxu0 0.0
      %9481 = vmatpush1.msra.mxu0 0.0
      %9482 = vmatprep.subr.mxu0 0.0
      %9483 = vmatpush1.msra.mxu0 0.0
      %9484 = vmatprep.subr.mxu0 0.0
      %9485 = vmatpush1.msra.mxu0 0.0
      %9486 = vmatprep.subr.mxu0 0.0
      %9487 = vmatpush1.msra.mxu0 0.0
      %9488 = vmatprep.subr.mxu0 0.0
      %9489 = vmatpush1.msra.mxu0 0.0
      %9490 = vmatprep.subr.mxu0 0.0
      %9491 = vmatpush1.msra.mxu0 0.0
      %9492 = vmatprep.subr.mxu0 0.0
      %9493 = vmatpush1.msra.mxu0 0.0
      %9494 = vmatprep.subr.mxu0 0.0
      %9495 = vmatpush1.msra.mxu0 0.0
      %9496 = vmatprep.subr.mxu0 0.0
      %9497 = vmatpush1.msra.mxu0 0.0
      %9498 = vmatprep.subr.mxu0 0.0
      %v9499 = vand.u32 %v8818, 4294901760
      %v9500 = vsub.f32 %v8818, %v9499
      %9501 = vmatpush1.msra.mxu0 %v9500
      %9502 = vmatprep.subr.mxu0 0.0
      %9503 = vmatpush2.msra.mxu0 0.0
      %9504 = vmatprep.subr.mxu0 0.0
      %9505 = vmatpush2.msra.mxu0 0.0
      %9506 = vmatprep.subr.mxu0 0.0
      %9507 = vmatpush2.msra.mxu0 0.0
      %9508 = vmatprep.subr.mxu0 0.0
      %9509 = vmatpush2.msra.mxu0 0.0
      %9510 = vmatprep.subr.mxu0 0.0
      %9511 = vmatpush2.msra.mxu0 0.0
      %9512 = vmatprep.subr.mxu0 0.0
      %9513 = vmatpush2.msra.mxu0 0.0
      %9514 = vmatprep.subr.mxu0 0.0
      %9515 = vmatpush2.msra.mxu0 0.0
      %9516 = vmatprep.subr.mxu0 0.0
      %9517 = vmatpush2.msra.mxu0 0.0
      %9518 = vmatprep.subr.mxu0 0.0
      %9519 = vmatpush2.msra.mxu0 0.0
      %9520 = vmatprep.subr.mxu0 0.0
      %9521 = vmatpush2.msra.mxu0 0.0
      %9522 = vmatprep.subr.mxu0 0.0
      %9523 = vmatpush2.msra.mxu0 0.0
      %9524 = vmatprep.subr.mxu0 0.0
      %9525 = vmatpush2.msra.mxu0 0.0
      %9526 = vmatprep.subr.mxu0 0.0
      %9527 = vmatpush2.msra.mxu0 0.0
      %9528 = vmatprep.subr.mxu0 0.0
      %9529 = vmatpush2.msra.mxu0 0.0
      %9530 = vmatprep.subr.mxu0 0.0
      %9531 = vmatpush2.msra.mxu0 0.0
      %9532 = vmatprep.subr.mxu0 0.0
      %9533 = vmatpush2.msra.mxu0 0.0
      %9534 = vmatprep.mubr.f32.mxu0 0.0
      %v9535 = vand.u32 %v8723, 4294901760
      %v9536 = vsub.f32 %v8723, %v9535
      %9537 = vmatmul.mubr.f32.gmra.mxu0 %v9536
      %v9538 = vpop.f32.mrf.mxu0
      %v9539 = vadd.f32 %v9279, %v9538
      %v9540 = vpop.f32.mrf.mxu0
      %9541 = vmatprep.mubr.f32.mxu0 0.0
      %v9542 = vand.u32 %v8726, 4294901760
      %v9543 = vsub.f32 %v8726, %v9542
      %9544 = vmatmul.mubr.f32.gmra.mxu0 %v9543
      %v9545 = vpop.f32.mrf.mxu0
      %v9546 = vadd.f32 %v9285, %v9545
      %v9547 = vpop.f32.mrf.mxu0
      %9548 = vmatprep.mubr.f32.mxu0 0.0
      %v9549 = vand.u32 %v8729, 4294901760
      %v9550 = vsub.f32 %v8729, %v9549
      %9551 = vmatmul.mubr.f32.gmra.mxu0 %v9550
      %v9552 = vpop.f32.mrf.mxu0
      %v9553 = vadd.f32 %v9291, %v9552
      %v9554 = vpop.f32.mrf.mxu0
      %9555 = vmatprep.mubr.f32.mxu0 0.0
      %v9556 = vand.u32 %v8732, 4294901760
      %v9557 = vsub.f32 %v8732, %v9556
      %9558 = vmatmul.mubr.f32.gmra.mxu0 %v9557
      %v9559 = vpop.f32.mrf.mxu0
      %v9560 = vadd.f32 %v9297, %v9559
      %v9561 = vpop.f32.mrf.mxu0
      %9562 = vmatprep.mubr.f32.mxu0 0.0
      %v9563 = vand.u32 %v8735, 4294901760
      %v9564 = vsub.f32 %v8735, %v9563
      %9565 = vmatmul.mubr.f32.gmra.mxu0 %v9564
      %v9566 = vpop.f32.mrf.mxu0
      %v9567 = vadd.f32 %v9303, %v9566
      %v9568 = vpop.f32.mrf.mxu0
      %9569 = vmatprep.mubr.f32.mxu0 0.0
      %v9570 = vand.u32 %v8738, 4294901760
      %v9571 = vsub.f32 %v8738, %v9570
      %9572 = vmatmul.mubr.f32.gmra.mxu0 %v9571
      %v9573 = vpop.f32.mrf.mxu0
      %v9574 = vadd.f32 %v9309, %v9573
      %v9575 = vpop.f32.mrf.mxu0
      %9576 = vmatprep.mubr.f32.mxu0 0.0
      %v9577 = vand.u32 %v8741, 4294901760
      %v9578 = vsub.f32 %v8741, %v9577
      %9579 = vmatmul.mubr.f32.gmra.mxu0 %v9578
      %v9580 = vpop.f32.mrf.mxu0
      %v9581 = vadd.f32 %v9315, %v9580
      %v9582 = vpop.f32.mrf.mxu0
      %9583 = vmatprep.mubr.f32.mxu0 0.0
      %v9584 = vand.u32 %v8744, 4294901760
      %v9585 = vsub.f32 %v8744, %v9584
      %9586 = vmatmul.mubr.f32.gmra.mxu0 %v9585
      %v9587 = vpop.f32.mrf.mxu0
      %v9588 = vadd.f32 %v9321, %v9587
      %v9589 = vpop.f32.mrf.mxu0
      %9590 = vmatprep.mubr.f32.mxu0 0.0
      %v9591 = vand.u32 %v8747, 4294901760
      %v9592 = vsub.f32 %v8747, %v9591
      %9593 = vmatmul.mubr.f32.gmra.mxu0 %v9592
      %v9594 = vpop.f32.mrf.mxu0
      %v9595 = vadd.f32 %v9327, %v9594
      %v9596 = vpop.f32.mrf.mxu0
      %9597 = vmatprep.mubr.f32.mxu0 0.0
      %v9598 = vand.u32 %v8750, 4294901760
      %v9599 = vsub.f32 %v8750, %v9598
      %9600 = vmatmul.mubr.f32.gmra.mxu0 %v9599
      %v9601 = vpop.f32.mrf.mxu0
      %v9602 = vadd.f32 %v9333, %v9601
      %v9603 = vpop.f32.mrf.mxu0
      %9604 = vmatprep.mubr.f32.mxu0 0.0
      %v9605 = vand.u32 %v8753, 4294901760
      %v9606 = vsub.f32 %v8753, %v9605
      %9607 = vmatmul.mubr.f32.gmra.mxu0 %v9606
      %v9608 = vpop.f32.mrf.mxu0
      %v9609 = vadd.f32 %v9339, %v9608
      %v9610 = vpop.f32.mrf.mxu0
      %9611 = vmatprep.mubr.f32.mxu0 0.0
      %v9612 = vand.u32 %v8756, 4294901760
      %v9613 = vsub.f32 %v8756, %v9612
      %9614 = vmatmul.mubr.f32.gmra.mxu0 %v9613
      %v9615 = vpop.f32.mrf.mxu0
      %v9616 = vadd.f32 %v9345, %v9615
      %v9617 = vpop.f32.mrf.mxu0
      %9618 = vmatprep.mubr.f32.mxu0 0.0
      %v9619 = vand.u32 %v8759, 4294901760
      %v9620 = vsub.f32 %v8759, %v9619
      %9621 = vmatmul.mubr.f32.gmra.mxu0 %v9620
      %v9622 = vpop.f32.mrf.mxu0
      %v9623 = vadd.f32 %v9351, %v9622
      %v9624 = vpop.f32.mrf.mxu0
      %9625 = vmatprep.mubr.f32.mxu0 0.0
      %v9626 = vand.u32 %v8762, 4294901760
      %v9627 = vsub.f32 %v8762, %v9626
      %9628 = vmatmul.mubr.f32.gmra.mxu0 %v9627
      %v9629 = vpop.f32.mrf.mxu0
      %v9630 = vadd.f32 %v9357, %v9629
      %v9631 = vpop.f32.mrf.mxu0
      %9632 = vmatprep.mubr.f32.mxu0 0.0
      %v9633 = vand.u32 %v8765, 4294901760
      %v9634 = vsub.f32 %v8765, %v9633
      %9635 = vmatmul.mubr.f32.gmra.mxu0 %v9634
      %v9636 = vpop.f32.mrf.mxu0
      %v9637 = vadd.f32 %v9363, %v9636
      %v9638 = vpop.f32.mrf.mxu0
      %9639 = vmatprep.mubr.f32.mxu0 0.0
      %v9640 = vand.u32 %v8768, 4294901760
      %v9641 = vsub.f32 %v8768, %v9640
      %9642 = vmatmul.mubr.f32.gmra.mxu0 %v9641
      %v9643 = vpop.f32.mrf.mxu0
      %v9644 = vadd.f32 %v9369, %v9643
      %v9645 = vpop.f32.mrf.mxu0
      %9646 = vmatprep.mubr.f32.mxu0 0.0
      %v9647 = vand.u32 %v8771, 4294901760
      %v9648 = vsub.f32 %v8771, %v9647
      %9649 = vmatmul.mubr.f32.gmra.mxu0 %v9648
      %v9650 = vpop.f32.mrf.mxu0
      %v9651 = vadd.f32 %v9375, %v9650
      %v9652 = vpop.f32.mrf.mxu0
      %9653 = vmatprep.mubr.f32.mxu0 0.0
      %v9654 = vand.u32 %v8774, 4294901760
      %v9655 = vsub.f32 %v8774, %v9654
      %9656 = vmatmul.mubr.f32.gmra.mxu0 %v9655
      %v9657 = vpop.f32.mrf.mxu0
      %v9658 = vadd.f32 %v9381, %v9657
      %v9659 = vpop.f32.mrf.mxu0
      %9660 = vmatprep.mubr.f32.mxu0 0.0
      %v9661 = vand.u32 %v8777, 4294901760
      %v9662 = vsub.f32 %v8777, %v9661
      %9663 = vmatmul.mubr.f32.gmra.mxu0 %v9662
      %v9664 = vpop.f32.mrf.mxu0
      %v9665 = vadd.f32 %v9387, %v9664
      %v9666 = vpop.f32.mrf.mxu0
      %9667 = vmatprep.mubr.f32.mxu0 0.0
      %v9668 = vand.u32 %v8780, 4294901760
      %v9669 = vsub.f32 %v8780, %v9668
      %9670 = vmatmul.mubr.f32.gmra.mxu0 %v9669
      %v9671 = vpop.f32.mrf.mxu0
      %v9672 = vadd.f32 %v9393, %v9671
      %v9673 = vpop.f32.mrf.mxu0
      %9674 = vmatprep.mubr.f32.mxu0 0.0
      %v9675 = vand.u32 %v8783, 4294901760
      %v9676 = vsub.f32 %v8783, %v9675
      %9677 = vmatmul.mubr.f32.gmra.mxu0 %v9676
      %v9678 = vpop.f32.mrf.mxu0
      %v9679 = vadd.f32 %v9399, %v9678
      %v9680 = vpop.f32.mrf.mxu0
      %9681 = vmatprep.mubr.f32.mxu0 0.0
      %v9682 = vand.u32 %v8786, 4294901760
      %v9683 = vsub.f32 %v8786, %v9682
      %9684 = vmatmul.mubr.f32.gmra.mxu0 %v9683
      %v9685 = vpop.f32.mrf.mxu0
      %v9686 = vadd.f32 %v9405, %v9685
      %v9687 = vpop.f32.mrf.mxu0
      %9688 = vmatprep.mubr.f32.mxu0 0.0
      %v9689 = vand.u32 %v8789, 4294901760
      %v9690 = vsub.f32 %v8789, %v9689
      %9691 = vmatmul.mubr.f32.gmra.mxu0 %v9690
      %v9692 = vpop.f32.mrf.mxu0
      %v9693 = vadd.f32 %v9411, %v9692
      %v9694 = vpop.f32.mrf.mxu0
      %9695 = vmatprep.mubr.f32.mxu0 0.0
      %v9696 = vand.u32 %v8792, 4294901760
      %v9697 = vsub.f32 %v8792, %v9696
      %9698 = vmatmul.mubr.f32.gmra.mxu0 %v9697
      %v9699 = vpop.f32.mrf.mxu0
      %v9700 = vadd.f32 %v9417, %v9699
      %v9701 = vpop.f32.mrf.mxu0
      %9702 = vmatprep.mubr.f32.mxu0 0.0
      %v9703 = vand.u32 %v8795, 4294901760
      %v9704 = vsub.f32 %v8795, %v9703
      %9705 = vmatmul.mubr.f32.gmra.mxu0 %v9704
      %v9706 = vpop.f32.mrf.mxu0
      %v9707 = vadd.f32 %v9423, %v9706
      %v9708 = vpop.f32.mrf.mxu0
      %9709 = vmatprep.mubr.f32.mxu0 0.0
      %v9710 = vand.u32 %v8798, 4294901760
      %v9711 = vsub.f32 %v8798, %v9710
      %9712 = vmatmul.mubr.f32.gmra.mxu0 %v9711
      %v9713 = vpop.f32.mrf.mxu0
      %v9714 = vadd.f32 %v9429, %v9713
      %v9715 = vpop.f32.mrf.mxu0
      %9716 = vmatprep.mubr.f32.mxu0 0.0
      %v9717 = vand.u32 %v8801, 4294901760
      %v9718 = vsub.f32 %v8801, %v9717
      %9719 = vmatmul.mubr.f32.gmra.mxu0 %v9718
      %v9720 = vpop.f32.mrf.mxu0
      %v9721 = vadd.f32 %v9435, %v9720
      %v9722 = vpop.f32.mrf.mxu0
      %9723 = vmatprep.mubr.f32.mxu0 0.0
      %v9724 = vand.u32 %v8804, 4294901760
      %v9725 = vsub.f32 %v8804, %v9724
      %9726 = vmatmul.mubr.f32.gmra.mxu0 %v9725
      %v9727 = vpop.f32.mrf.mxu0
      %v9728 = vadd.f32 %v9441, %v9727
      %v9729 = vpop.f32.mrf.mxu0
      %9730 = vmatprep.mubr.f32.mxu0 0.0
      %v9731 = vand.u32 %v8807, 4294901760
      %v9732 = vsub.f32 %v8807, %v9731
      %9733 = vmatmul.mubr.f32.gmra.mxu0 %v9732
      %v9734 = vpop.f32.mrf.mxu0
      %v9735 = vadd.f32 %v9447, %v9734
      %v9736 = vpop.f32.mrf.mxu0
      %9737 = vmatprep.mubr.f32.mxu0 0.0
      %v9738 = vand.u32 %v8810, 4294901760
      %v9739 = vsub.f32 %v8810, %v9738
      %9740 = vmatmul.mubr.f32.gmra.mxu0 %v9739
      %v9741 = vpop.f32.mrf.mxu0
      %v9742 = vadd.f32 %v9453, %v9741
      %v9743 = vpop.f32.mrf.mxu0
      %9744 = vmatprep.mubr.f32.mxu0 0.0
      %v9745 = vand.u32 %v8813, 4294901760
      %v9746 = vsub.f32 %v8813, %v9745
      %9747 = vmatmul.mubr.f32.gmra.mxu0 %v9746
      %v9748 = vpop.f32.mrf.mxu0
      %v9749 = vadd.f32 %v9459, %v9748
      %v9750 = vpop.f32.mrf.mxu0
      %9751 = vmatprep.mubr.f32.mxu0 0.0
      %v9752 = vand.u32 %v8816, 4294901760
      %v9753 = vsub.f32 %v8816, %v9752
      %9754 = vmatmul.mubr.f32.gmra.mxu0 %v9753
      %v9755 = vpop.f32.mrf.mxu0
      %v9756 = vadd.f32 %v9465, %v9755
      %v9757 = vpop.f32.mrf.mxu0
      %9758 = vdwg.mxu0
      %9759 = vmatprep.subr.mxu0 0.0
      %9760 = vmatpush1.msra.mxu0 0.0
      %9761 = vmatprep.subr.mxu0 0.0
      %9762 = vmatpush1.msra.mxu0 0.0
      %9763 = vmatprep.subr.mxu0 0.0
      %9764 = vmatpush1.msra.mxu0 0.0
      %9765 = vmatprep.subr.mxu0 0.0
      %9766 = vmatpush1.msra.mxu0 0.0
      %9767 = vmatprep.subr.mxu0 0.0
      %9768 = vmatpush1.msra.mxu0 0.0
      %9769 = vmatprep.subr.mxu0 0.0
      %9770 = vmatpush1.msra.mxu0 0.0
      %9771 = vmatprep.subr.mxu0 0.0
      %9772 = vmatpush1.msra.mxu0 0.0
      %9773 = vmatprep.subr.mxu0 0.0
      %9774 = vmatpush1.msra.mxu0 0.0
      %9775 = vmatprep.subr.mxu0 0.0
      %9776 = vmatpush1.msra.mxu0 0.0
      %9777 = vmatprep.subr.mxu0 0.0
      %9778 = vmatpush1.msra.mxu0 0.0
      %9779 = vmatprep.subr.mxu0 0.0
      %9780 = vmatpush1.msra.mxu0 0.0
      %9781 = vmatprep.subr.mxu0 0.0
      %9782 = vmatpush1.msra.mxu0 0.0
      %9783 = vmatprep.subr.mxu0 0.0
      %9784 = vmatpush1.msra.mxu0 0.0
      %9785 = vmatprep.subr.mxu0 0.0
      %9786 = vmatpush1.msra.mxu0 0.0
      %9787 = vmatprep.subr.mxu0 0.0
      %9788 = vmatpush1.msra.mxu0 0.0
      %9789 = vmatprep.subr.mxu0 0.0
      %v9790 = vand.u32 %v8818, 4294901760
      %9791 = vmatpush1.msra.mxu0 %v9790
      %9792 = vmatprep.subr.mxu0 0.0
      %9793 = vmatpush2.msra.mxu0 0.0
      %9794 = vmatprep.subr.mxu0 0.0
      %9795 = vmatpush2.msra.mxu0 0.0
      %9796 = vmatprep.subr.mxu0 0.0
      %9797 = vmatpush2.msra.mxu0 0.0
      %9798 = vmatprep.subr.mxu0 0.0
      %9799 = vmatpush2.msra.mxu0 0.0
      %9800 = vmatprep.subr.mxu0 0.0
      %9801 = vmatpush2.msra.mxu0 0.0
      %9802 = vmatprep.subr.mxu0 0.0
      %9803 = vmatpush2.msra.mxu0 0.0
      %9804 = vmatprep.subr.mxu0 0.0
      %9805 = vmatpush2.msra.mxu0 0.0
      %9806 = vmatprep.subr.mxu0 0.0
      %9807 = vmatpush2.msra.mxu0 0.0
      %9808 = vmatprep.subr.mxu0 0.0
      %9809 = vmatpush2.msra.mxu0 0.0
      %9810 = vmatprep.subr.mxu0 0.0
      %9811 = vmatpush2.msra.mxu0 0.0
      %9812 = vmatprep.subr.mxu0 0.0
      %9813 = vmatpush2.msra.mxu0 0.0
      %9814 = vmatprep.subr.mxu0 0.0
      %9815 = vmatpush2.msra.mxu0 0.0
      %9816 = vmatprep.subr.mxu0 0.0
      %9817 = vmatpush2.msra.mxu0 0.0
      %9818 = vmatprep.subr.mxu0 0.0
      %9819 = vmatpush2.msra.mxu0 0.0
      %9820 = vmatprep.subr.mxu0 0.0
      %9821 = vmatpush2.msra.mxu0 0.0
      %9822 = vmatprep.subr.mxu0 0.0
      %9823 = vmatpush2.msra.mxu0 0.0
      %9824 = vmatprep.mubr.f32.mxu0 0.0
      %v9825 = vand.u32 %v8723, 4294901760
      %v9826 = vsub.f32 %v8723, %v9825
      %v9827 = vand.u32 %v9826, 4294901760
      %9828 = vmatmul.mubr.f32.gmra.mxu0 %v9827
      %v9829 = vpop.f32.mrf.mxu0
      %v9830 = vadd.f32 %v9539, %v9829
      %v9831 = vpop.f32.mrf.mxu0
      %9832 = vmatprep.mubr.f32.mxu0 0.0
      %v9833 = vand.u32 %v8726, 4294901760
      %v9834 = vsub.f32 %v8726, %v9833
      %v9835 = vand.u32 %v9834, 4294901760
      %9836 = vmatmul.mubr.f32.gmra.mxu0 %v9835
      %v9837 = vpop.f32.mrf.mxu0
      %v9838 = vadd.f32 %v9546, %v9837
      %v9839 = vpop.f32.mrf.mxu0
      %9840 = vmatprep.mubr.f32.mxu0 0.0
      %v9841 = vand.u32 %v8729, 4294901760
      %v9842 = vsub.f32 %v8729, %v9841
      %v9843 = vand.u32 %v9842, 4294901760
      %9844 = vmatmul.mubr.f32.gmra.mxu0 %v9843
      %v9845 = vpop.f32.mrf.mxu0
      %v9846 = vadd.f32 %v9553, %v9845
      %v9847 = vpop.f32.mrf.mxu0
      %9848 = vmatprep.mubr.f32.mxu0 0.0
      %v9849 = vand.u32 %v8732, 4294901760
      %v9850 = vsub.f32 %v8732, %v9849
      %v9851 = vand.u32 %v9850, 4294901760
      %9852 = vmatmul.mubr.f32.gmra.mxu0 %v9851
      %v9853 = vpop.f32.mrf.mxu0
      %v9854 = vadd.f32 %v9560, %v9853
      %v9855 = vpop.f32.mrf.mxu0
      %9856 = vmatprep.mubr.f32.mxu0 0.0
      %v9857 = vand.u32 %v8735, 4294901760
      %v9858 = vsub.f32 %v8735, %v9857
      %v9859 = vand.u32 %v9858, 4294901760
      %9860 = vmatmul.mubr.f32.gmra.mxu0 %v9859
      %v9861 = vpop.f32.mrf.mxu0
      %v9862 = vadd.f32 %v9567, %v9861
      %v9863 = vpop.f32.mrf.mxu0
      %9864 = vmatprep.mubr.f32.mxu0 0.0
      %v9865 = vand.u32 %v8738, 4294901760
      %v9866 = vsub.f32 %v8738, %v9865
      %v9867 = vand.u32 %v9866, 4294901760
      %9868 = vmatmul.mubr.f32.gmra.mxu0 %v9867
      %v9869 = vpop.f32.mrf.mxu0
      %v9870 = vadd.f32 %v9574, %v9869
      %v9871 = vpop.f32.mrf.mxu0
      %9872 = vmatprep.mubr.f32.mxu0 0.0
      %v9873 = vand.u32 %v8741, 4294901760
      %v9874 = vsub.f32 %v8741, %v9873
      %v9875 = vand.u32 %v9874, 4294901760
      %9876 = vmatmul.mubr.f32.gmra.mxu0 %v9875
      %v9877 = vpop.f32.mrf.mxu0
      %v9878 = vadd.f32 %v9581, %v9877
      %v9879 = vpop.f32.mrf.mxu0
      %9880 = vmatprep.mubr.f32.mxu0 0.0
      %v9881 = vand.u32 %v8744, 4294901760
      %v9882 = vsub.f32 %v8744, %v9881
      %v9883 = vand.u32 %v9882, 4294901760
      %9884 = vmatmul.mubr.f32.gmra.mxu0 %v9883
      %v9885 = vpop.f32.mrf.mxu0
      %v9886 = vadd.f32 %v9588, %v9885
      %v9887 = vpop.f32.mrf.mxu0
      %9888 = vmatprep.mubr.f32.mxu0 0.0
      %v9889 = vand.u32 %v8747, 4294901760
      %v9890 = vsub.f32 %v8747, %v9889
      %v9891 = vand.u32 %v9890, 4294901760
      %9892 = vmatmul.mubr.f32.gmra.mxu0 %v9891
      %v9893 = vpop.f32.mrf.mxu0
      %v9894 = vadd.f32 %v9595, %v9893
      %v9895 = vpop.f32.mrf.mxu0
      %9896 = vmatprep.mubr.f32.mxu0 0.0
      %v9897 = vand.u32 %v8750, 4294901760
      %v9898 = vsub.f32 %v8750, %v9897
      %v9899 = vand.u32 %v9898, 4294901760
      %9900 = vmatmul.mubr.f32.gmra.mxu0 %v9899
      %v9901 = vpop.f32.mrf.mxu0
      %v9902 = vadd.f32 %v9602, %v9901
      %v9903 = vpop.f32.mrf.mxu0
      %9904 = vmatprep.mubr.f32.mxu0 0.0
      %v9905 = vand.u32 %v8753, 4294901760
      %v9906 = vsub.f32 %v8753, %v9905
      %v9907 = vand.u32 %v9906, 4294901760
      %9908 = vmatmul.mubr.f32.gmra.mxu0 %v9907
      %v9909 = vpop.f32.mrf.mxu0
      %v9910 = vadd.f32 %v9609, %v9909
      %v9911 = vpop.f32.mrf.mxu0
      %9912 = vmatprep.mubr.f32.mxu0 0.0
      %v9913 = vand.u32 %v8756, 4294901760
      %v9914 = vsub.f32 %v8756, %v9913
      %v9915 = vand.u32 %v9914, 4294901760
      %9916 = vmatmul.mubr.f32.gmra.mxu0 %v9915
      %v9917 = vpop.f32.mrf.mxu0
      %v9918 = vadd.f32 %v9616, %v9917
      %v9919 = vpop.f32.mrf.mxu0
      %9920 = vmatprep.mubr.f32.mxu0 0.0
      %v9921 = vand.u32 %v8759, 4294901760
      %v9922 = vsub.f32 %v8759, %v9921
      %v9923 = vand.u32 %v9922, 4294901760
      %9924 = vmatmul.mubr.f32.gmra.mxu0 %v9923
      %v9925 = vpop.f32.mrf.mxu0
      %v9926 = vadd.f32 %v9623, %v9925
      %v9927 = vpop.f32.mrf.mxu0
      %9928 = vmatprep.mubr.f32.mxu0 0.0
      %v9929 = vand.u32 %v8762, 4294901760
      %v9930 = vsub.f32 %v8762, %v9929
      %v9931 = vand.u32 %v9930, 4294901760
      %9932 = vmatmul.mubr.f32.gmra.mxu0 %v9931
      %v9933 = vpop.f32.mrf.mxu0
      %v9934 = vadd.f32 %v9630, %v9933
      %v9935 = vpop.f32.mrf.mxu0
      %9936 = vmatprep.mubr.f32.mxu0 0.0
      %v9937 = vand.u32 %v8765, 4294901760
      %v9938 = vsub.f32 %v8765, %v9937
      %v9939 = vand.u32 %v9938, 4294901760
      %9940 = vmatmul.mubr.f32.gmra.mxu0 %v9939
      %v9941 = vpop.f32.mrf.mxu0
      %v9942 = vadd.f32 %v9637, %v9941
      %v9943 = vpop.f32.mrf.mxu0
      %9944 = vmatprep.mubr.f32.mxu0 0.0
      %v9945 = vand.u32 %v8768, 4294901760
      %v9946 = vsub.f32 %v8768, %v9945
      %v9947 = vand.u32 %v9946, 4294901760
      %9948 = vmatmul.mubr.f32.gmra.mxu0 %v9947
      %v9949 = vpop.f32.mrf.mxu0
      %v9950 = vadd.f32 %v9644, %v9949
      %v9951 = vpop.f32.mrf.mxu0
      %9952 = vmatprep.mubr.f32.mxu0 0.0
      %v9953 = vand.u32 %v8771, 4294901760
      %v9954 = vsub.f32 %v8771, %v9953
      %v9955 = vand.u32 %v9954, 4294901760
      %9956 = vmatmul.mubr.f32.gmra.mxu0 %v9955
      %v9957 = vpop.f32.mrf.mxu0
      %v9958 = vadd.f32 %v9651, %v9957
      %v9959 = vpop.f32.mrf.mxu0
      %9960 = vmatprep.mubr.f32.mxu0 0.0
      %v9961 = vand.u32 %v8774, 4294901760
      %v9962 = vsub.f32 %v8774, %v9961
      %v9963 = vand.u32 %v9962, 4294901760
      %9964 = vmatmul.mubr.f32.gmra.mxu0 %v9963
      %v9965 = vpop.f32.mrf.mxu0
      %v9966 = vadd.f32 %v9658, %v9965
      %v9967 = vpop.f32.mrf.mxu0
      %9968 = vmatprep.mubr.f32.mxu0 0.0
      %v9969 = vand.u32 %v8777, 4294901760
      %v9970 = vsub.f32 %v8777, %v9969
      %v9971 = vand.u32 %v9970, 4294901760
      %9972 = vmatmul.mubr.f32.gmra.mxu0 %v9971
      %v9973 = vpop.f32.mrf.mxu0
      %v9974 = vadd.f32 %v9665, %v9973
      %v9975 = vpop.f32.mrf.mxu0
      %9976 = vmatprep.mubr.f32.mxu0 0.0
      %v9977 = vand.u32 %v8780, 4294901760
      %v9978 = vsub.f32 %v8780, %v9977
      %v9979 = vand.u32 %v9978, 4294901760
      %9980 = vmatmul.mubr.f32.gmra.mxu0 %v9979
      %v9981 = vpop.f32.mrf.mxu0
      %v9982 = vadd.f32 %v9672, %v9981
      %v9983 = vpop.f32.mrf.mxu0
      %9984 = vmatprep.mubr.f32.mxu0 0.0
      %v9985 = vand.u32 %v8783, 4294901760
      %v9986 = vsub.f32 %v8783, %v9985
      %v9987 = vand.u32 %v9986, 4294901760
      %9988 = vmatmul.mubr.f32.gmra.mxu0 %v9987
      %v9989 = vpop.f32.mrf.mxu0
      %v9990 = vadd.f32 %v9679, %v9989
      %v9991 = vpop.f32.mrf.mxu0
      %9992 = vmatprep.mubr.f32.mxu0 0.0
      %v9993 = vand.u32 %v8786, 4294901760
      %v9994 = vsub.f32 %v8786, %v9993
      %v9995 = vand.u32 %v9994, 4294901760
      %9996 = vmatmul.mubr.f32.gmra.mxu0 %v9995
      %v9997 = vpop.f32.mrf.mxu0
      %v9998 = vadd.f32 %v9686, %v9997
      %v9999 = vpop.f32.mrf.mxu0
      %10000 = vmatprep.mubr.f32.mxu0 0.0
      %v10001 = vand.u32 %v8789, 4294901760
      %v10002 = vsub.f32 %v8789, %v10001
      %v10003 = vand.u32 %v10002, 4294901760
      %10004 = vmatmul.mubr.f32.gmra.mxu0 %v10003
      %v10005 = vpop.f32.mrf.mxu0
      %v10006 = vadd.f32 %v9693, %v10005
      %v10007 = vpop.f32.mrf.mxu0
      %10008 = vmatprep.mubr.f32.mxu0 0.0
      %v10009 = vand.u32 %v8792, 4294901760
      %v10010 = vsub.f32 %v8792, %v10009
      %v10011 = vand.u32 %v10010, 4294901760
      %10012 = vmatmul.mubr.f32.gmra.mxu0 %v10011
      %v10013 = vpop.f32.mrf.mxu0
      %v10014 = vadd.f32 %v9700, %v10013
      %v10015 = vpop.f32.mrf.mxu0
      %10016 = vmatprep.mubr.f32.mxu0 0.0
      %v10017 = vand.u32 %v8795, 4294901760
      %v10018 = vsub.f32 %v8795, %v10017
      %v10019 = vand.u32 %v10018, 4294901760
      %10020 = vmatmul.mubr.f32.gmra.mxu0 %v10019
      %v10021 = vpop.f32.mrf.mxu0
      %v10022 = vadd.f32 %v9707, %v10021
      %v10023 = vpop.f32.mrf.mxu0
      %10024 = vmatprep.mubr.f32.mxu0 0.0
      %v10025 = vand.u32 %v8798, 4294901760
      %v10026 = vsub.f32 %v8798, %v10025
      %v10027 = vand.u32 %v10026, 4294901760
      %10028 = vmatmul.mubr.f32.gmra.mxu0 %v10027
      %v10029 = vpop.f32.mrf.mxu0
      %v10030 = vadd.f32 %v9714, %v10029
      %v10031 = vpop.f32.mrf.mxu0
      %10032 = vmatprep.mubr.f32.mxu0 0.0
      %v10033 = vand.u32 %v8801, 4294901760
      %v10034 = vsub.f32 %v8801, %v10033
      %v10035 = vand.u32 %v10034, 4294901760
      %10036 = vmatmul.mubr.f32.gmra.mxu0 %v10035
      %v10037 = vpop.f32.mrf.mxu0
      %v10038 = vadd.f32 %v9721, %v10037
      %v10039 = vpop.f32.mrf.mxu0
      %10040 = vmatprep.mubr.f32.mxu0 0.0
      %v10041 = vand.u32 %v8804, 4294901760
      %v10042 = vsub.f32 %v8804, %v10041
      %v10043 = vand.u32 %v10042, 4294901760
      %10044 = vmatmul.mubr.f32.gmra.mxu0 %v10043
      %v10045 = vpop.f32.mrf.mxu0
      %v10046 = vadd.f32 %v9728, %v10045
      %v10047 = vpop.f32.mrf.mxu0
      %10048 = vmatprep.mubr.f32.mxu0 0.0
      %v10049 = vand.u32 %v8807, 4294901760
      %v10050 = vsub.f32 %v8807, %v10049
      %v10051 = vand.u32 %v10050, 4294901760
      %10052 = vmatmul.mubr.f32.gmra.mxu0 %v10051
      %v10053 = vpop.f32.mrf.mxu0
      %v10054 = vadd.f32 %v9735, %v10053
      %v10055 = vpop.f32.mrf.mxu0
      %10056 = vmatprep.mubr.f32.mxu0 0.0
      %v10057 = vand.u32 %v8810, 4294901760
      %v10058 = vsub.f32 %v8810, %v10057
      %v10059 = vand.u32 %v10058, 4294901760
      %10060 = vmatmul.mubr.f32.gmra.mxu0 %v10059
      %v10061 = vpop.f32.mrf.mxu0
      %v10062 = vadd.f32 %v9742, %v10061
      %v10063 = vpop.f32.mrf.mxu0
      %10064 = vmatprep.mubr.f32.mxu0 0.0
      %v10065 = vand.u32 %v8813, 4294901760
      %v10066 = vsub.f32 %v8813, %v10065
      %v10067 = vand.u32 %v10066, 4294901760
      %10068 = vmatmul.mubr.f32.gmra.mxu0 %v10067
      %v10069 = vpop.f32.mrf.mxu0
      %v10070 = vadd.f32 %v9749, %v10069
      %v10071 = vpop.f32.mrf.mxu0
      %10072 = vmatprep.mubr.f32.mxu0 0.0
      %v10073 = vand.u32 %v8816, 4294901760
      %v10074 = vsub.f32 %v8816, %v10073
      %v10075 = vand.u32 %v10074, 4294901760
      %10076 = vmatmul.mubr.f32.gmra.mxu0 %v10075
      %v10077 = vpop.f32.mrf.mxu0
      %v10078 = vadd.f32 %v9756, %v10077
      %v10079 = vpop.f32.mrf.mxu0
      %10080 = vdwg.mxu0
      %10081 = vmatprep.subr.mxu0 0.0
      %10082 = vmatpush1.msra.mxu0 0.0
      %10083 = vmatprep.subr.mxu0 0.0
      %10084 = vmatpush1.msra.mxu0 0.0
      %10085 = vmatprep.subr.mxu0 0.0
      %10086 = vmatpush1.msra.mxu0 0.0
      %10087 = vmatprep.subr.mxu0 0.0
      %10088 = vmatpush1.msra.mxu0 0.0
      %10089 = vmatprep.subr.mxu0 0.0
      %10090 = vmatpush1.msra.mxu0 0.0
      %10091 = vmatprep.subr.mxu0 0.0
      %10092 = vmatpush1.msra.mxu0 0.0
      %10093 = vmatprep.subr.mxu0 0.0
      %10094 = vmatpush1.msra.mxu0 0.0
      %10095 = vmatprep.subr.mxu0 0.0
      %10096 = vmatpush1.msra.mxu0 0.0
      %10097 = vmatprep.subr.mxu0 0.0
      %10098 = vmatpush1.msra.mxu0 0.0
      %10099 = vmatprep.subr.mxu0 0.0
      %10100 = vmatpush1.msra.mxu0 0.0
      %10101 = vmatprep.subr.mxu0 0.0
      %10102 = vmatpush1.msra.mxu0 0.0
      %10103 = vmatprep.subr.mxu0 0.0
      %10104 = vmatpush1.msra.mxu0 0.0
      %10105 = vmatprep.subr.mxu0 0.0
      %10106 = vmatpush1.msra.mxu0 0.0
      %10107 = vmatprep.subr.mxu0 0.0
      %10108 = vmatpush1.msra.mxu0 0.0
      %10109 = vmatprep.subr.mxu0 0.0
      %10110 = vmatpush1.msra.mxu0 0.0
      %10111 = vmatprep.subr.mxu0 0.0
      %v10112 = vand.u32 %v8818, 4294901760
      %v10113 = vsub.f32 %v8818, %v10112
      %v10114 = vand.u32 %v10113, 4294901760
      %10115 = vmatpush1.msra.mxu0 %v10114
      %10116 = vmatprep.subr.mxu0 0.0
      %10117 = vmatpush2.msra.mxu0 0.0
      %10118 = vmatprep.subr.mxu0 0.0
      %10119 = vmatpush2.msra.mxu0 0.0
      %10120 = vmatprep.subr.mxu0 0.0
      %10121 = vmatpush2.msra.mxu0 0.0
      %10122 = vmatprep.subr.mxu0 0.0
      %10123 = vmatpush2.msra.mxu0 0.0
      %10124 = vmatprep.subr.mxu0 0.0
      %10125 = vmatpush2.msra.mxu0 0.0
      %10126 = vmatprep.subr.mxu0 0.0
      %10127 = vmatpush2.msra.mxu0 0.0
      %10128 = vmatprep.subr.mxu0 0.0
      %10129 = vmatpush2.msra.mxu0 0.0
      %10130 = vmatprep.subr.mxu0 0.0
      %10131 = vmatpush2.msra.mxu0 0.0
      %10132 = vmatprep.subr.mxu0 0.0
      %10133 = vmatpush2.msra.mxu0 0.0
      %10134 = vmatprep.subr.mxu0 0.0
      %10135 = vmatpush2.msra.mxu0 0.0
      %10136 = vmatprep.subr.mxu0 0.0
      %10137 = vmatpush2.msra.mxu0 0.0
      %10138 = vmatprep.subr.mxu0 0.0
      %10139 = vmatpush2.msra.mxu0 0.0
      %10140 = vmatprep.subr.mxu0 0.0
      %10141 = vmatpush2.msra.mxu0 0.0
      %10142 = vmatprep.subr.mxu0 0.0
      %10143 = vmatpush2.msra.mxu0 0.0
      %10144 = vmatprep.subr.mxu0 0.0
      %10145 = vmatpush2.msra.mxu0 0.0
      %10146 = vmatprep.subr.mxu0 0.0
      %10147 = vmatpush2.msra.mxu0 0.0
      %10148 = vmatprep.mubr.f32.mxu0 0.0
      %v10149 = vand.u32 %v8723, 4294901760
      %10150 = vmatmul.mubr.f32.gmra.mxu0 %v10149
      %v10151 = vpop.f32.mrf.mxu0
      %v10152 = vadd.f32 %v9830, %v10151
      %v10153 = vpop.f32.mrf.mxu0
      %10154 = vmatprep.mubr.f32.mxu0 0.0
      %v10155 = vand.u32 %v8726, 4294901760
      %10156 = vmatmul.mubr.f32.gmra.mxu0 %v10155
      %v10157 = vpop.f32.mrf.mxu0
      %v10158 = vadd.f32 %v9838, %v10157
      %v10159 = vpop.f32.mrf.mxu0
      %10160 = vmatprep.mubr.f32.mxu0 0.0
      %v10161 = vand.u32 %v8729, 4294901760
      %10162 = vmatmul.mubr.f32.gmra.mxu0 %v10161
      %v10163 = vpop.f32.mrf.mxu0
      %v10164 = vadd.f32 %v9846, %v10163
      %v10165 = vpop.f32.mrf.mxu0
      %10166 = vmatprep.mubr.f32.mxu0 0.0
      %v10167 = vand.u32 %v8732, 4294901760
      %10168 = vmatmul.mubr.f32.gmra.mxu0 %v10167
      %v10169 = vpop.f32.mrf.mxu0
      %v10170 = vadd.f32 %v9854, %v10169
      %v10171 = vpop.f32.mrf.mxu0
      %10172 = vmatprep.mubr.f32.mxu0 0.0
      %v10173 = vand.u32 %v8735, 4294901760
      %10174 = vmatmul.mubr.f32.gmra.mxu0 %v10173
      %v10175 = vpop.f32.mrf.mxu0
      %v10176 = vadd.f32 %v9862, %v10175
      %v10177 = vpop.f32.mrf.mxu0
      %10178 = vmatprep.mubr.f32.mxu0 0.0
      %v10179 = vand.u32 %v8738, 4294901760
      %10180 = vmatmul.mubr.f32.gmra.mxu0 %v10179
      %v10181 = vpop.f32.mrf.mxu0
      %v10182 = vadd.f32 %v9870, %v10181
      %v10183 = vpop.f32.mrf.mxu0
      %10184 = vmatprep.mubr.f32.mxu0 0.0
      %v10185 = vand.u32 %v8741, 4294901760
      %10186 = vmatmul.mubr.f32.gmra.mxu0 %v10185
      %v10187 = vpop.f32.mrf.mxu0
      %v10188 = vadd.f32 %v9878, %v10187
      %v10189 = vpop.f32.mrf.mxu0
      %10190 = vmatprep.mubr.f32.mxu0 0.0
      %v10191 = vand.u32 %v8744, 4294901760
      %10192 = vmatmul.mubr.f32.gmra.mxu0 %v10191
      %v10193 = vpop.f32.mrf.mxu0
      %v10194 = vadd.f32 %v9886, %v10193
      %v10195 = vpop.f32.mrf.mxu0
      %10196 = vmatprep.mubr.f32.mxu0 0.0
      %v10197 = vand.u32 %v8747, 4294901760
      %10198 = vmatmul.mubr.f32.gmra.mxu0 %v10197
      %v10199 = vpop.f32.mrf.mxu0
      %v10200 = vadd.f32 %v9894, %v10199
      %v10201 = vpop.f32.mrf.mxu0
      %10202 = vmatprep.mubr.f32.mxu0 0.0
      %v10203 = vand.u32 %v8750, 4294901760
      %10204 = vmatmul.mubr.f32.gmra.mxu0 %v10203
      %v10205 = vpop.f32.mrf.mxu0
      %v10206 = vadd.f32 %v9902, %v10205
      %v10207 = vpop.f32.mrf.mxu0
      %10208 = vmatprep.mubr.f32.mxu0 0.0
      %v10209 = vand.u32 %v8753, 4294901760
      %10210 = vmatmul.mubr.f32.gmra.mxu0 %v10209
      %v10211 = vpop.f32.mrf.mxu0
      %v10212 = vadd.f32 %v9910, %v10211
      %v10213 = vpop.f32.mrf.mxu0
      %10214 = vmatprep.mubr.f32.mxu0 0.0
      %v10215 = vand.u32 %v8756, 4294901760
      %10216 = vmatmul.mubr.f32.gmra.mxu0 %v10215
      %v10217 = vpop.f32.mrf.mxu0
      %v10218 = vadd.f32 %v9918, %v10217
      %v10219 = vpop.f32.mrf.mxu0
      %10220 = vmatprep.mubr.f32.mxu0 0.0
      %v10221 = vand.u32 %v8759, 4294901760
      %10222 = vmatmul.mubr.f32.gmra.mxu0 %v10221
      %v10223 = vpop.f32.mrf.mxu0
      %v10224 = vadd.f32 %v9926, %v10223
      %v10225 = vpop.f32.mrf.mxu0
      %10226 = vmatprep.mubr.f32.mxu0 0.0
      %v10227 = vand.u32 %v8762, 4294901760
      %10228 = vmatmul.mubr.f32.gmra.mxu0 %v10227
      %v10229 = vpop.f32.mrf.mxu0
      %v10230 = vadd.f32 %v9934, %v10229
      %v10231 = vpop.f32.mrf.mxu0
      %10232 = vmatprep.mubr.f32.mxu0 0.0
      %v10233 = vand.u32 %v8765, 4294901760
      %10234 = vmatmul.mubr.f32.gmra.mxu0 %v10233
      %v10235 = vpop.f32.mrf.mxu0
      %v10236 = vadd.f32 %v9942, %v10235
      %v10237 = vpop.f32.mrf.mxu0
      %10238 = vmatprep.mubr.f32.mxu0 0.0
      %v10239 = vand.u32 %v8768, 4294901760
      %10240 = vmatmul.mubr.f32.gmra.mxu0 %v10239
      %v10241 = vpop.f32.mrf.mxu0
      %v10242 = vadd.f32 %v9950, %v10241
      %v10243 = vpop.f32.mrf.mxu0
      %10244 = vmatprep.mubr.f32.mxu0 0.0
      %v10245 = vand.u32 %v8771, 4294901760
      %10246 = vmatmul.mubr.f32.gmra.mxu0 %v10245
      %v10247 = vpop.f32.mrf.mxu0
      %v10248 = vadd.f32 %v9958, %v10247
      %v10249 = vpop.f32.mrf.mxu0
      %10250 = vmatprep.mubr.f32.mxu0 0.0
      %v10251 = vand.u32 %v8774, 4294901760
      %10252 = vmatmul.mubr.f32.gmra.mxu0 %v10251
      %v10253 = vpop.f32.mrf.mxu0
      %v10254 = vadd.f32 %v9966, %v10253
      %v10255 = vpop.f32.mrf.mxu0
      %10256 = vmatprep.mubr.f32.mxu0 0.0
      %v10257 = vand.u32 %v8777, 4294901760
      %10258 = vmatmul.mubr.f32.gmra.mxu0 %v10257
      %v10259 = vpop.f32.mrf.mxu0
      %v10260 = vadd.f32 %v9974, %v10259
      %v10261 = vpop.f32.mrf.mxu0
      %10262 = vmatprep.mubr.f32.mxu0 0.0
      %v10263 = vand.u32 %v8780, 4294901760
      %10264 = vmatmul.mubr.f32.gmra.mxu0 %v10263
      %v10265 = vpop.f32.mrf.mxu0
      %v10266 = vadd.f32 %v9982, %v10265
      %v10267 = vpop.f32.mrf.mxu0
      %10268 = vmatprep.mubr.f32.mxu0 0.0
      %v10269 = vand.u32 %v8783, 4294901760
      %10270 = vmatmul.mubr.f32.gmra.mxu0 %v10269
      %v10271 = vpop.f32.mrf.mxu0
      %v10272 = vadd.f32 %v9990, %v10271
      %v10273 = vpop.f32.mrf.mxu0
      %10274 = vmatprep.mubr.f32.mxu0 0.0
      %v10275 = vand.u32 %v8786, 4294901760
      %10276 = vmatmul.mubr.f32.gmra.mxu0 %v10275
      %v10277 = vpop.f32.mrf.mxu0
      %v10278 = vadd.f32 %v9998, %v10277
      %v10279 = vpop.f32.mrf.mxu0
      %10280 = vmatprep.mubr.f32.mxu0 0.0
      %v10281 = vand.u32 %v8789, 4294901760
      %10282 = vmatmul.mubr.f32.gmra.mxu0 %v10281
      %v10283 = vpop.f32.mrf.mxu0
      %v10284 = vadd.f32 %v10006, %v10283
      %v10285 = vpop.f32.mrf.mxu0
      %10286 = vmatprep.mubr.f32.mxu0 0.0
      %v10287 = vand.u32 %v8792, 4294901760
      %10288 = vmatmul.mubr.f32.gmra.mxu0 %v10287
      %v10289 = vpop.f32.mrf.mxu0
      %v10290 = vadd.f32 %v10014, %v10289
      %v10291 = vpop.f32.mrf.mxu0
      %10292 = vmatprep.mubr.f32.mxu0 0.0
      %v10293 = vand.u32 %v8795, 4294901760
      %10294 = vmatmul.mubr.f32.gmra.mxu0 %v10293
      %v10295 = vpop.f32.mrf.mxu0
      %v10296 = vadd.f32 %v10022, %v10295
      %v10297 = vpop.f32.mrf.mxu0
      %10298 = vmatprep.mubr.f32.mxu0 0.0
      %v10299 = vand.u32 %v8798, 4294901760
      %10300 = vmatmul.mubr.f32.gmra.mxu0 %v10299
      %v10301 = vpop.f32.mrf.mxu0
      %v10302 = vadd.f32 %v10030, %v10301
      %v10303 = vpop.f32.mrf.mxu0
      %10304 = vmatprep.mubr.f32.mxu0 0.0
      %v10305 = vand.u32 %v8801, 4294901760
      %10306 = vmatmul.mubr.f32.gmra.mxu0 %v10305
      %v10307 = vpop.f32.mrf.mxu0
      %v10308 = vadd.f32 %v10038, %v10307
      %v10309 = vpop.f32.mrf.mxu0
      %10310 = vmatprep.mubr.f32.mxu0 0.0
      %v10311 = vand.u32 %v8804, 4294901760
      %10312 = vmatmul.mubr.f32.gmra.mxu0 %v10311
      %v10313 = vpop.f32.mrf.mxu0
      %v10314 = vadd.f32 %v10046, %v10313
      %v10315 = vpop.f32.mrf.mxu0
      %10316 = vmatprep.mubr.f32.mxu0 0.0
      %v10317 = vand.u32 %v8807, 4294901760
      %10318 = vmatmul.mubr.f32.gmra.mxu0 %v10317
      %v10319 = vpop.f32.mrf.mxu0
      %v10320 = vadd.f32 %v10054, %v10319
      %v10321 = vpop.f32.mrf.mxu0
      %10322 = vmatprep.mubr.f32.mxu0 0.0
      %v10323 = vand.u32 %v8810, 4294901760
      %10324 = vmatmul.mubr.f32.gmra.mxu0 %v10323
      %v10325 = vpop.f32.mrf.mxu0
      %v10326 = vadd.f32 %v10062, %v10325
      %v10327 = vpop.f32.mrf.mxu0
      %10328 = vmatprep.mubr.f32.mxu0 0.0
      %v10329 = vand.u32 %v8813, 4294901760
      %10330 = vmatmul.mubr.f32.gmra.mxu0 %v10329
      %v10331 = vpop.f32.mrf.mxu0
      %v10332 = vadd.f32 %v10070, %v10331
      %v10333 = vpop.f32.mrf.mxu0
      %10334 = vmatprep.mubr.f32.mxu0 0.0
      %v10335 = vand.u32 %v8816, 4294901760
      %10336 = vmatmul.mubr.f32.gmra.mxu0 %v10335
      %v10337 = vpop.f32.mrf.mxu0
      %v10338 = vadd.f32 %v10078, %v10337
      %v10339 = vpop.f32.mrf.mxu0
      %10340 = vdwg.mxu0
      %10341 = vmatprep.subr.mxu0 0.0
      %10342 = vmatpush1.msra.mxu0 0.0
      %10343 = vmatprep.subr.mxu0 0.0
      %10344 = vmatpush1.msra.mxu0 0.0
      %10345 = vmatprep.subr.mxu0 0.0
      %10346 = vmatpush1.msra.mxu0 0.0
      %10347 = vmatprep.subr.mxu0 0.0
      %10348 = vmatpush1.msra.mxu0 0.0
      %10349 = vmatprep.subr.mxu0 0.0
      %10350 = vmatpush1.msra.mxu0 0.0
      %10351 = vmatprep.subr.mxu0 0.0
      %10352 = vmatpush1.msra.mxu0 0.0
      %10353 = vmatprep.subr.mxu0 0.0
      %10354 = vmatpush1.msra.mxu0 0.0
      %10355 = vmatprep.subr.mxu0 0.0
      %10356 = vmatpush1.msra.mxu0 0.0
      %10357 = vmatprep.subr.mxu0 0.0
      %10358 = vmatpush1.msra.mxu0 0.0
      %10359 = vmatprep.subr.mxu0 0.0
      %10360 = vmatpush1.msra.mxu0 0.0
      %10361 = vmatprep.subr.mxu0 0.0
      %10362 = vmatpush1.msra.mxu0 0.0
      %10363 = vmatprep.subr.mxu0 0.0
      %10364 = vmatpush1.msra.mxu0 0.0
      %10365 = vmatprep.subr.mxu0 0.0
      %10366 = vmatpush1.msra.mxu0 0.0
      %10367 = vmatprep.subr.mxu0 0.0
      %10368 = vmatpush1.msra.mxu0 0.0
      %10369 = vmatprep.subr.mxu0 0.0
      %10370 = vmatpush1.msra.mxu0 0.0
      %10371 = vmatprep.subr.mxu0 0.0
      %v10372 = vand.u32 %v8818, 4294901760
      %10373 = vmatpush1.msra.mxu0 %v10372
      %10374 = vmatprep.subr.mxu0 0.0
      %10375 = vmatpush2.msra.mxu0 0.0
      %10376 = vmatprep.subr.mxu0 0.0
      %10377 = vmatpush2.msra.mxu0 0.0
      %10378 = vmatprep.subr.mxu0 0.0
      %10379 = vmatpush2.msra.mxu0 0.0
      %10380 = vmatprep.subr.mxu0 0.0
      %10381 = vmatpush2.msra.mxu0 0.0
      %10382 = vmatprep.subr.mxu0 0.0
      %10383 = vmatpush2.msra.mxu0 0.0
      %10384 = vmatprep.subr.mxu0 0.0
      %10385 = vmatpush2.msra.mxu0 0.0
      %10386 = vmatprep.subr.mxu0 0.0
      %10387 = vmatpush2.msra.mxu0 0.0
      %10388 = vmatprep.subr.mxu0 0.0
      %10389 = vmatpush2.msra.mxu0 0.0
      %10390 = vmatprep.subr.mxu0 0.0
      %10391 = vmatpush2.msra.mxu0 0.0
      %10392 = vmatprep.subr.mxu0 0.0
      %10393 = vmatpush2.msra.mxu0 0.0
      %10394 = vmatprep.subr.mxu0 0.0
      %10395 = vmatpush2.msra.mxu0 0.0
      %10396 = vmatprep.subr.mxu0 0.0
      %10397 = vmatpush2.msra.mxu0 0.0
      %10398 = vmatprep.subr.mxu0 0.0
      %10399 = vmatpush2.msra.mxu0 0.0
      %10400 = vmatprep.subr.mxu0 0.0
      %10401 = vmatpush2.msra.mxu0 0.0
      %10402 = vmatprep.subr.mxu0 0.0
      %10403 = vmatpush2.msra.mxu0 0.0
      %10404 = vmatprep.subr.mxu0 0.0
      %10405 = vmatpush2.msra.mxu0 0.0
      %10406 = vmatprep.mubr.f32.mxu0 0.0
      %v10407 = vand.u32 %v8723, 4294901760
      %10408 = vmatmul.mubr.f32.gmra.mxu0 %v10407
      %v10409 = vpop.f32.mrf.mxu0
      %v10410 = vadd.f32 %v10152, %v10409
      %v10411 = vpop.f32.mrf.mxu0
      %10412 = vmatprep.mubr.f32.mxu0 0.0
      %v10413 = vand.u32 %v8726, 4294901760
      %10414 = vmatmul.mubr.f32.gmra.mxu0 %v10413
      %v10415 = vpop.f32.mrf.mxu0
      %v10416 = vadd.f32 %v10158, %v10415
      %v10417 = vpop.f32.mrf.mxu0
      %10418 = vmatprep.mubr.f32.mxu0 0.0
      %v10419 = vand.u32 %v8729, 4294901760
      %10420 = vmatmul.mubr.f32.gmra.mxu0 %v10419
      %v10421 = vpop.f32.mrf.mxu0
      %v10422 = vadd.f32 %v10164, %v10421
      %v10423 = vpop.f32.mrf.mxu0
      %10424 = vmatprep.mubr.f32.mxu0 0.0
      %v10425 = vand.u32 %v8732, 4294901760
      %10426 = vmatmul.mubr.f32.gmra.mxu0 %v10425
      %v10427 = vpop.f32.mrf.mxu0
      %v10428 = vadd.f32 %v10170, %v10427
      %v10429 = vpop.f32.mrf.mxu0
      %10430 = vmatprep.mubr.f32.mxu0 0.0
      %v10431 = vand.u32 %v8735, 4294901760
      %10432 = vmatmul.mubr.f32.gmra.mxu0 %v10431
      %v10433 = vpop.f32.mrf.mxu0
      %v10434 = vadd.f32 %v10176, %v10433
      %v10435 = vpop.f32.mrf.mxu0
      %10436 = vmatprep.mubr.f32.mxu0 0.0
      %v10437 = vand.u32 %v8738, 4294901760
      %10438 = vmatmul.mubr.f32.gmra.mxu0 %v10437
      %v10439 = vpop.f32.mrf.mxu0
      %v10440 = vadd.f32 %v10182, %v10439
      %v10441 = vpop.f32.mrf.mxu0
      %10442 = vmatprep.mubr.f32.mxu0 0.0
      %v10443 = vand.u32 %v8741, 4294901760
      %10444 = vmatmul.mubr.f32.gmra.mxu0 %v10443
      %v10445 = vpop.f32.mrf.mxu0
      %v10446 = vadd.f32 %v10188, %v10445
      %v10447 = vpop.f32.mrf.mxu0
      %10448 = vmatprep.mubr.f32.mxu0 0.0
      %v10449 = vand.u32 %v8744, 4294901760
      %10450 = vmatmul.mubr.f32.gmra.mxu0 %v10449
      %v10451 = vpop.f32.mrf.mxu0
      %v10452 = vadd.f32 %v10194, %v10451
      %v10453 = vpop.f32.mrf.mxu0
      %10454 = vmatprep.mubr.f32.mxu0 0.0
      %v10455 = vand.u32 %v8747, 4294901760
      %10456 = vmatmul.mubr.f32.gmra.mxu0 %v10455
      %v10457 = vpop.f32.mrf.mxu0
      %v10458 = vadd.f32 %v10200, %v10457
      %v10459 = vpop.f32.mrf.mxu0
      %10460 = vmatprep.mubr.f32.mxu0 0.0
      %v10461 = vand.u32 %v8750, 4294901760
      %10462 = vmatmul.mubr.f32.gmra.mxu0 %v10461
      %v10463 = vpop.f32.mrf.mxu0
      %v10464 = vadd.f32 %v10206, %v10463
      %v10465 = vpop.f32.mrf.mxu0
      %10466 = vmatprep.mubr.f32.mxu0 0.0
      %v10467 = vand.u32 %v8753, 4294901760
      %10468 = vmatmul.mubr.f32.gmra.mxu0 %v10467
      %v10469 = vpop.f32.mrf.mxu0
      %v10470 = vadd.f32 %v10212, %v10469
      %v10471 = vpop.f32.mrf.mxu0
      %10472 = vmatprep.mubr.f32.mxu0 0.0
      %v10473 = vand.u32 %v8756, 4294901760
      %10474 = vmatmul.mubr.f32.gmra.mxu0 %v10473
      %v10475 = vpop.f32.mrf.mxu0
      %v10476 = vadd.f32 %v10218, %v10475
      %v10477 = vpop.f32.mrf.mxu0
      %10478 = vmatprep.mubr.f32.mxu0 0.0
      %v10479 = vand.u32 %v8759, 4294901760
      %10480 = vmatmul.mubr.f32.gmra.mxu0 %v10479
      %v10481 = vpop.f32.mrf.mxu0
      %v10482 = vadd.f32 %v10224, %v10481
      %v10483 = vpop.f32.mrf.mxu0
      %10484 = vmatprep.mubr.f32.mxu0 0.0
      %v10485 = vand.u32 %v8762, 4294901760
      %10486 = vmatmul.mubr.f32.gmra.mxu0 %v10485
      %v10487 = vpop.f32.mrf.mxu0
      %v10488 = vadd.f32 %v10230, %v10487
      %v10489 = vpop.f32.mrf.mxu0
      %10490 = vmatprep.mubr.f32.mxu0 0.0
      %v10491 = vand.u32 %v8765, 4294901760
      %10492 = vmatmul.mubr.f32.gmra.mxu0 %v10491
      %v10493 = vpop.f32.mrf.mxu0
      %v10494 = vadd.f32 %v10236, %v10493
      %v10495 = vpop.f32.mrf.mxu0
      %10496 = vmatprep.mubr.f32.mxu0 0.0
      %v10497 = vand.u32 %v8768, 4294901760
      %10498 = vmatmul.mubr.f32.gmra.mxu0 %v10497
      %v10499 = vpop.f32.mrf.mxu0
      %v10500 = vadd.f32 %v10242, %v10499
      %v10501 = vpop.f32.mrf.mxu0
      %10502 = vmatprep.mubr.f32.mxu0 0.0
      %v10503 = vand.u32 %v8771, 4294901760
      %10504 = vmatmul.mubr.f32.gmra.mxu0 %v10503
      %v10505 = vpop.f32.mrf.mxu0
      %v10506 = vadd.f32 %v10248, %v10505
      %v10507 = vpop.f32.mrf.mxu0
      %10508 = vmatprep.mubr.f32.mxu0 0.0
      %v10509 = vand.u32 %v8774, 4294901760
      %10510 = vmatmul.mubr.f32.gmra.mxu0 %v10509
      %v10511 = vpop.f32.mrf.mxu0
      %v10512 = vadd.f32 %v10254, %v10511
      %v10513 = vpop.f32.mrf.mxu0
      %10514 = vmatprep.mubr.f32.mxu0 0.0
      %v10515 = vand.u32 %v8777, 4294901760
      %10516 = vmatmul.mubr.f32.gmra.mxu0 %v10515
      %v10517 = vpop.f32.mrf.mxu0
      %v10518 = vadd.f32 %v10260, %v10517
      %v10519 = vpop.f32.mrf.mxu0
      %10520 = vmatprep.mubr.f32.mxu0 0.0
      %v10521 = vand.u32 %v8780, 4294901760
      %10522 = vmatmul.mubr.f32.gmra.mxu0 %v10521
      %v10523 = vpop.f32.mrf.mxu0
      %v10524 = vadd.f32 %v10266, %v10523
      %v10525 = vpop.f32.mrf.mxu0
      %10526 = vmatprep.mubr.f32.mxu0 0.0
      %v10527 = vand.u32 %v8783, 4294901760
      %10528 = vmatmul.mubr.f32.gmra.mxu0 %v10527
      %v10529 = vpop.f32.mrf.mxu0
      %v10530 = vadd.f32 %v10272, %v10529
      %v10531 = vpop.f32.mrf.mxu0
      %10532 = vmatprep.mubr.f32.mxu0 0.0
      %v10533 = vand.u32 %v8786, 4294901760
      %10534 = vmatmul.mubr.f32.gmra.mxu0 %v10533
      %v10535 = vpop.f32.mrf.mxu0
      %v10536 = vadd.f32 %v10278, %v10535
      %v10537 = vpop.f32.mrf.mxu0
      %10538 = vmatprep.mubr.f32.mxu0 0.0
      %v10539 = vand.u32 %v8789, 4294901760
      %10540 = vmatmul.mubr.f32.gmra.mxu0 %v10539
      %v10541 = vpop.f32.mrf.mxu0
      %v10542 = vadd.f32 %v10284, %v10541
      %v10543 = vpop.f32.mrf.mxu0
      %10544 = vmatprep.mubr.f32.mxu0 0.0
      %v10545 = vand.u32 %v8792, 4294901760
      %10546 = vmatmul.mubr.f32.gmra.mxu0 %v10545
      %v10547 = vpop.f32.mrf.mxu0
      %v10548 = vadd.f32 %v10290, %v10547
      %v10549 = vpop.f32.mrf.mxu0
      %10550 = vmatprep.mubr.f32.mxu0 0.0
      %v10551 = vand.u32 %v8795, 4294901760
      %10552 = vmatmul.mubr.f32.gmra.mxu0 %v10551
      %v10553 = vpop.f32.mrf.mxu0
      %v10554 = vadd.f32 %v10296, %v10553
      %v10555 = vpop.f32.mrf.mxu0
      %10556 = vmatprep.mubr.f32.mxu0 0.0
      %v10557 = vand.u32 %v8798, 4294901760
      %10558 = vmatmul.mubr.f32.gmra.mxu0 %v10557
      %v10559 = vpop.f32.mrf.mxu0
      %v10560 = vadd.f32 %v10302, %v10559
      %v10561 = vpop.f32.mrf.mxu0
      %10562 = vmatprep.mubr.f32.mxu0 0.0
      %v10563 = vand.u32 %v8801, 4294901760
      %10564 = vmatmul.mubr.f32.gmra.mxu0 %v10563
      %v10565 = vpop.f32.mrf.mxu0
      %v10566 = vadd.f32 %v10308, %v10565
      %v10567 = vpop.f32.mrf.mxu0
      %10568 = vmatprep.mubr.f32.mxu0 0.0
      %v10569 = vand.u32 %v8804, 4294901760
      %10570 = vmatmul.mubr.f32.gmra.mxu0 %v10569
      %v10571 = vpop.f32.mrf.mxu0
      %v10572 = vadd.f32 %v10314, %v10571
      %v10573 = vpop.f32.mrf.mxu0
      %10574 = vmatprep.mubr.f32.mxu0 0.0
      %v10575 = vand.u32 %v8807, 4294901760
      %10576 = vmatmul.mubr.f32.gmra.mxu0 %v10575
      %v10577 = vpop.f32.mrf.mxu0
      %v10578 = vadd.f32 %v10320, %v10577
      %v10579 = vpop.f32.mrf.mxu0
      %10580 = vmatprep.mubr.f32.mxu0 0.0
      %v10581 = vand.u32 %v8810, 4294901760
      %10582 = vmatmul.mubr.f32.gmra.mxu0 %v10581
      %v10583 = vpop.f32.mrf.mxu0
      %v10584 = vadd.f32 %v10326, %v10583
      %v10585 = vpop.f32.mrf.mxu0
      %10586 = vmatprep.mubr.f32.mxu0 0.0
      %v10587 = vand.u32 %v8813, 4294901760
      %10588 = vmatmul.mubr.f32.gmra.mxu0 %v10587
      %v10589 = vpop.f32.mrf.mxu0
      %v10590 = vadd.f32 %v10332, %v10589
      %v10591 = vpop.f32.mrf.mxu0
      %10592 = vmatprep.mubr.f32.mxu0 0.0
      %v10593 = vand.u32 %v8816, 4294901760
      %10594 = vmatmul.mubr.f32.gmra.mxu0 %v10593
      %v10595 = vpop.f32.mrf.mxu0
      %v10596 = vadd.f32 %v10338, %v10595
      %v10597 = vpop.f32.mrf.mxu0
      %10598 = vdwg.mxu0
      %v10599 = vadd.f32 %v8532, %v10410
      %v10600 = vadd.f32 %v8538, %v10416
      %v10601 = vadd.f32 %v8544, %v10422
      %v10602 = vadd.f32 %v8550, %v10428
      %v10603 = vadd.f32 %v8556, %v10434
      %v10604 = vadd.f32 %v8562, %v10440
      %v10605 = vadd.f32 %v8568, %v10446
      %v10606 = vadd.f32 %v8574, %v10452
      %v10607 = vadd.f32 %v8580, %v10458
      %v10608 = vadd.f32 %v8586, %v10464
      %v10609 = vadd.f32 %v8592, %v10470
      %v10610 = vadd.f32 %v8598, %v10476
      %v10611 = vadd.f32 %v8604, %v10482
      %v10612 = vadd.f32 %v8610, %v10488
      %v10613 = vadd.f32 %v8616, %v10494
      %v10614 = vadd.f32 %v8622, %v10500
      %v10615 = vadd.f32 %v8628, %v10506
      %v10616 = vadd.f32 %v8634, %v10512
      %v10617 = vadd.f32 %v8640, %v10518
      %v10618 = vadd.f32 %v8646, %v10524
      %v10619 = vadd.f32 %v8652, %v10530
      %v10620 = vadd.f32 %v8658, %v10536
      %v10621 = vadd.f32 %v8664, %v10542
      %v10622 = vadd.f32 %v8670, %v10548
      %v10623 = vadd.f32 %v8676, %v10554
      %v10624 = vadd.f32 %v8682, %v10560
      %v10625 = vadd.f32 %v8688, %v10566
      %v10626 = vadd.f32 %v8694, %v10572
      %v10627 = vadd.f32 %v8700, %v10578
      %v10628 = vadd.f32 %v8706, %v10584
      %v10629 = vadd.f32 %v8712, %v10590
      %v10630 = vadd.f32 %v8718, %v10596
      %v10631 = vrot.slane %v4963, 6
      %v10633 = vsel %vm4966, %v4931, 0
      %v10636 = vsel %vm4966, %v4932, 0
      %v10639 = vsel %vm4966, %v4933, 0
      %v10642 = vsel %vm4966, %v4934, 0
      %v10645 = vsel %vm4966, %v4935, 0
      %v10648 = vsel %vm4966, %v4936, 0
      %v10651 = vsel %vm4966, %v4937, 0
      %v10654 = vsel %vm4966, %v4938, 0
      %v10657 = vsel %vm4966, %v4939, 0
      %v10660 = vsel %vm4966, %v4940, 0
      %v10663 = vsel %vm4966, %v4941, 0
      %v10666 = vsel %vm4966, %v4942, 0
      %v10669 = vsel %vm4966, %v4943, 0
      %v10672 = vsel %vm4966, %v4944, 0
      %v10675 = vsel %vm4966, %v4945, 0
      %v10678 = vsel %vm4966, %v4946, 0
      %v10681 = vsel %vm4966, %v4947, 0
      %v10684 = vsel %vm4966, %v4948, 0
      %v10687 = vsel %vm4966, %v4949, 0
      %v10690 = vsel %vm4966, %v4950, 0
      %v10693 = vsel %vm4966, %v4951, 0
      %v10696 = vsel %vm4966, %v4952, 0
      %v10699 = vsel %vm4966, %v4953, 0
      %v10702 = vsel %vm4966, %v4954, 0
      %v10705 = vsel %vm4966, %v4955, 0
      %v10708 = vsel %vm4966, %v4956, 0
      %v10711 = vsel %vm4966, %v4957, 0
      %v10714 = vsel %vm4966, %v4958, 0
      %v10717 = vsel %vm4966, %v4959, 0
      %v10720 = vsel %vm4966, %v4960, 0
      %v10723 = vsel %vm4966, %v4961, 0
      %v10726 = vsel %vm4966, %v4962, 0
      %v10728 = vsel %vm2475, %v10631, 0
      %10730 = vmatprep.subr.mxu0 0.0
      %10731 = vmatpush1.msra.mxu0 0.0
      %10732 = vmatprep.subr.mxu0 0.0
      %10733 = vmatpush1.msra.mxu0 0.0
      %10734 = vmatprep.subr.mxu0 0.0
      %10735 = vmatpush1.msra.mxu0 0.0
      %10736 = vmatprep.subr.mxu0 0.0
      %10737 = vmatpush1.msra.mxu0 0.0
      %10738 = vmatprep.subr.mxu0 0.0
      %10739 = vmatpush1.msra.mxu0 0.0
      %10740 = vmatprep.subr.mxu0 0.0
      %10741 = vmatpush1.msra.mxu0 0.0
      %10742 = vmatprep.subr.mxu0 0.0
      %10743 = vmatpush1.msra.mxu0 0.0
      %10744 = vmatprep.subr.mxu0 0.0
      %10745 = vmatpush1.msra.mxu0 0.0
      %10746 = vmatprep.subr.mxu0 0.0
      %10747 = vmatpush1.msra.mxu0 0.0
      %10748 = vmatprep.subr.mxu0 0.0
      %10749 = vmatpush1.msra.mxu0 0.0
      %10750 = vmatprep.subr.mxu0 0.0
      %10751 = vmatpush1.msra.mxu0 0.0
      %10752 = vmatprep.subr.mxu0 0.0
      %10753 = vmatpush1.msra.mxu0 0.0
      %10754 = vmatprep.subr.mxu0 0.0
      %10755 = vmatpush1.msra.mxu0 0.0
      %10756 = vmatprep.subr.mxu0 0.0
      %10757 = vmatpush1.msra.mxu0 0.0
      %10758 = vmatprep.subr.mxu0 0.0
      %10759 = vmatpush1.msra.mxu0 0.0
      %10760 = vmatprep.subr.mxu0 0.0
      %v10761 = vand.u32 %v10728, 4294901760
      %10762 = vmatpush1.msra.mxu0 %v10761
      %10763 = vmatprep.subr.mxu0 0.0
      %10764 = vmatpush2.msra.mxu0 0.0
      %10765 = vmatprep.subr.mxu0 0.0
      %10766 = vmatpush2.msra.mxu0 0.0
      %10767 = vmatprep.subr.mxu0 0.0
      %10768 = vmatpush2.msra.mxu0 0.0
      %10769 = vmatprep.subr.mxu0 0.0
      %10770 = vmatpush2.msra.mxu0 0.0
      %10771 = vmatprep.subr.mxu0 0.0
      %10772 = vmatpush2.msra.mxu0 0.0
      %10773 = vmatprep.subr.mxu0 0.0
      %10774 = vmatpush2.msra.mxu0 0.0
      %10775 = vmatprep.subr.mxu0 0.0
      %10776 = vmatpush2.msra.mxu0 0.0
      %10777 = vmatprep.subr.mxu0 0.0
      %10778 = vmatpush2.msra.mxu0 0.0
      %10779 = vmatprep.subr.mxu0 0.0
      %10780 = vmatpush2.msra.mxu0 0.0
      %10781 = vmatprep.subr.mxu0 0.0
      %10782 = vmatpush2.msra.mxu0 0.0
      %10783 = vmatprep.subr.mxu0 0.0
      %10784 = vmatpush2.msra.mxu0 0.0
      %10785 = vmatprep.subr.mxu0 0.0
      %10786 = vmatpush2.msra.mxu0 0.0
      %10787 = vmatprep.subr.mxu0 0.0
      %10788 = vmatpush2.msra.mxu0 0.0
      %10789 = vmatprep.subr.mxu0 0.0
      %10790 = vmatpush2.msra.mxu0 0.0
      %10791 = vmatprep.subr.mxu0 0.0
      %10792 = vmatpush2.msra.mxu0 0.0
      %10793 = vmatprep.subr.mxu0 0.0
      %10794 = vmatpush2.msra.mxu0 0.0
      %10795 = vmatprep.mubr.f32.mxu0 0.0
      %v10796 = vand.u32 %v10633, 4294901760
      %v10797 = vsub.f32 %v10633, %v10796
      %v10798 = vand.u32 %v10797, 4294901760
      %v10799 = vsub.f32 %v10797, %v10798
      %v10800 = vand.u32 %v10799, 4294901760
      %10801 = vmatmul.mubr.f32.gmra.mxu0 %v10800
      %v10802 = vpop.f32.mrf.mxu0
      %v10803 = vadd.f32 0.0, %v10802
      %v10804 = vpop.f32.mrf.mxu0
      %10805 = vmatprep.mubr.f32.mxu0 0.0
      %v10806 = vand.u32 %v10636, 4294901760
      %v10807 = vsub.f32 %v10636, %v10806
      %v10808 = vand.u32 %v10807, 4294901760
      %v10809 = vsub.f32 %v10807, %v10808
      %v10810 = vand.u32 %v10809, 4294901760
      %10811 = vmatmul.mubr.f32.gmra.mxu0 %v10810
      %v10812 = vpop.f32.mrf.mxu0
      %v10813 = vadd.f32 0.0, %v10812
      %v10814 = vpop.f32.mrf.mxu0
      %10815 = vmatprep.mubr.f32.mxu0 0.0
      %v10816 = vand.u32 %v10639, 4294901760
      %v10817 = vsub.f32 %v10639, %v10816
      %v10818 = vand.u32 %v10817, 4294901760
      %v10819 = vsub.f32 %v10817, %v10818
      %v10820 = vand.u32 %v10819, 4294901760
      %10821 = vmatmul.mubr.f32.gmra.mxu0 %v10820
      %v10822 = vpop.f32.mrf.mxu0
      %v10823 = vadd.f32 0.0, %v10822
      %v10824 = vpop.f32.mrf.mxu0
      %10825 = vmatprep.mubr.f32.mxu0 0.0
      %v10826 = vand.u32 %v10642, 4294901760
      %v10827 = vsub.f32 %v10642, %v10826
      %v10828 = vand.u32 %v10827, 4294901760
      %v10829 = vsub.f32 %v10827, %v10828
      %v10830 = vand.u32 %v10829, 4294901760
      %10831 = vmatmul.mubr.f32.gmra.mxu0 %v10830
      %v10832 = vpop.f32.mrf.mxu0
      %v10833 = vadd.f32 0.0, %v10832
      %v10834 = vpop.f32.mrf.mxu0
      %10835 = vmatprep.mubr.f32.mxu0 0.0
      %v10836 = vand.u32 %v10645, 4294901760
      %v10837 = vsub.f32 %v10645, %v10836
      %v10838 = vand.u32 %v10837, 4294901760
      %v10839 = vsub.f32 %v10837, %v10838
      %v10840 = vand.u32 %v10839, 4294901760
      %10841 = vmatmul.mubr.f32.gmra.mxu0 %v10840
      %v10842 = vpop.f32.mrf.mxu0
      %v10843 = vadd.f32 0.0, %v10842
      %v10844 = vpop.f32.mrf.mxu0
      %10845 = vmatprep.mubr.f32.mxu0 0.0
      %v10846 = vand.u32 %v10648, 4294901760
      %v10847 = vsub.f32 %v10648, %v10846
      %v10848 = vand.u32 %v10847, 4294901760
      %v10849 = vsub.f32 %v10847, %v10848
      %v10850 = vand.u32 %v10849, 4294901760
      %10851 = vmatmul.mubr.f32.gmra.mxu0 %v10850
      %v10852 = vpop.f32.mrf.mxu0
      %v10853 = vadd.f32 0.0, %v10852
      %v10854 = vpop.f32.mrf.mxu0
      %10855 = vmatprep.mubr.f32.mxu0 0.0
      %v10856 = vand.u32 %v10651, 4294901760
      %v10857 = vsub.f32 %v10651, %v10856
      %v10858 = vand.u32 %v10857, 4294901760
      %v10859 = vsub.f32 %v10857, %v10858
      %v10860 = vand.u32 %v10859, 4294901760
      %10861 = vmatmul.mubr.f32.gmra.mxu0 %v10860
      %v10862 = vpop.f32.mrf.mxu0
      %v10863 = vadd.f32 0.0, %v10862
      %v10864 = vpop.f32.mrf.mxu0
      %10865 = vmatprep.mubr.f32.mxu0 0.0
      %v10866 = vand.u32 %v10654, 4294901760
      %v10867 = vsub.f32 %v10654, %v10866
      %v10868 = vand.u32 %v10867, 4294901760
      %v10869 = vsub.f32 %v10867, %v10868
      %v10870 = vand.u32 %v10869, 4294901760
      %10871 = vmatmul.mubr.f32.gmra.mxu0 %v10870
      %v10872 = vpop.f32.mrf.mxu0
      %v10873 = vadd.f32 0.0, %v10872
      %v10874 = vpop.f32.mrf.mxu0
      %10875 = vmatprep.mubr.f32.mxu0 0.0
      %v10876 = vand.u32 %v10657, 4294901760
      %v10877 = vsub.f32 %v10657, %v10876
      %v10878 = vand.u32 %v10877, 4294901760
      %v10879 = vsub.f32 %v10877, %v10878
      %v10880 = vand.u32 %v10879, 4294901760
      %10881 = vmatmul.mubr.f32.gmra.mxu0 %v10880
      %v10882 = vpop.f32.mrf.mxu0
      %v10883 = vadd.f32 0.0, %v10882
      %v10884 = vpop.f32.mrf.mxu0
      %10885 = vmatprep.mubr.f32.mxu0 0.0
      %v10886 = vand.u32 %v10660, 4294901760
      %v10887 = vsub.f32 %v10660, %v10886
      %v10888 = vand.u32 %v10887, 4294901760
      %v10889 = vsub.f32 %v10887, %v10888
      %v10890 = vand.u32 %v10889, 4294901760
      %10891 = vmatmul.mubr.f32.gmra.mxu0 %v10890
      %v10892 = vpop.f32.mrf.mxu0
      %v10893 = vadd.f32 0.0, %v10892
      %v10894 = vpop.f32.mrf.mxu0
      %10895 = vmatprep.mubr.f32.mxu0 0.0
      %v10896 = vand.u32 %v10663, 4294901760
      %v10897 = vsub.f32 %v10663, %v10896
      %v10898 = vand.u32 %v10897, 4294901760
      %v10899 = vsub.f32 %v10897, %v10898
      %v10900 = vand.u32 %v10899, 4294901760
      %10901 = vmatmul.mubr.f32.gmra.mxu0 %v10900
      %v10902 = vpop.f32.mrf.mxu0
      %v10903 = vadd.f32 0.0, %v10902
      %v10904 = vpop.f32.mrf.mxu0
      %10905 = vmatprep.mubr.f32.mxu0 0.0
      %v10906 = vand.u32 %v10666, 4294901760
      %v10907 = vsub.f32 %v10666, %v10906
      %v10908 = vand.u32 %v10907, 4294901760
      %v10909 = vsub.f32 %v10907, %v10908
      %v10910 = vand.u32 %v10909, 4294901760
      %10911 = vmatmul.mubr.f32.gmra.mxu0 %v10910
      %v10912 = vpop.f32.mrf.mxu0
      %v10913 = vadd.f32 0.0, %v10912
      %v10914 = vpop.f32.mrf.mxu0
      %10915 = vmatprep.mubr.f32.mxu0 0.0
      %v10916 = vand.u32 %v10669, 4294901760
      %v10917 = vsub.f32 %v10669, %v10916
      %v10918 = vand.u32 %v10917, 4294901760
      %v10919 = vsub.f32 %v10917, %v10918
      %v10920 = vand.u32 %v10919, 4294901760
      %10921 = vmatmul.mubr.f32.gmra.mxu0 %v10920
      %v10922 = vpop.f32.mrf.mxu0
      %v10923 = vadd.f32 0.0, %v10922
      %v10924 = vpop.f32.mrf.mxu0
      %10925 = vmatprep.mubr.f32.mxu0 0.0
      %v10926 = vand.u32 %v10672, 4294901760
      %v10927 = vsub.f32 %v10672, %v10926
      %v10928 = vand.u32 %v10927, 4294901760
      %v10929 = vsub.f32 %v10927, %v10928
      %v10930 = vand.u32 %v10929, 4294901760
      %10931 = vmatmul.mubr.f32.gmra.mxu0 %v10930
      %v10932 = vpop.f32.mrf.mxu0
      %v10933 = vadd.f32 0.0, %v10932
      %v10934 = vpop.f32.mrf.mxu0
      %10935 = vmatprep.mubr.f32.mxu0 0.0
      %v10936 = vand.u32 %v10675, 4294901760
      %v10937 = vsub.f32 %v10675, %v10936
      %v10938 = vand.u32 %v10937, 4294901760
      %v10939 = vsub.f32 %v10937, %v10938
      %v10940 = vand.u32 %v10939, 4294901760
      %10941 = vmatmul.mubr.f32.gmra.mxu0 %v10940
      %v10942 = vpop.f32.mrf.mxu0
      %v10943 = vadd.f32 0.0, %v10942
      %v10944 = vpop.f32.mrf.mxu0
      %10945 = vmatprep.mubr.f32.mxu0 0.0
      %v10946 = vand.u32 %v10678, 4294901760
      %v10947 = vsub.f32 %v10678, %v10946
      %v10948 = vand.u32 %v10947, 4294901760
      %v10949 = vsub.f32 %v10947, %v10948
      %v10950 = vand.u32 %v10949, 4294901760
      %10951 = vmatmul.mubr.f32.gmra.mxu0 %v10950
      %v10952 = vpop.f32.mrf.mxu0
      %v10953 = vadd.f32 0.0, %v10952
      %v10954 = vpop.f32.mrf.mxu0
      %10955 = vmatprep.mubr.f32.mxu0 0.0
      %v10956 = vand.u32 %v10681, 4294901760
      %v10957 = vsub.f32 %v10681, %v10956
      %v10958 = vand.u32 %v10957, 4294901760
      %v10959 = vsub.f32 %v10957, %v10958
      %v10960 = vand.u32 %v10959, 4294901760
      %10961 = vmatmul.mubr.f32.gmra.mxu0 %v10960
      %v10962 = vpop.f32.mrf.mxu0
      %v10963 = vadd.f32 0.0, %v10962
      %v10964 = vpop.f32.mrf.mxu0
      %10965 = vmatprep.mubr.f32.mxu0 0.0
      %v10966 = vand.u32 %v10684, 4294901760
      %v10967 = vsub.f32 %v10684, %v10966
      %v10968 = vand.u32 %v10967, 4294901760
      %v10969 = vsub.f32 %v10967, %v10968
      %v10970 = vand.u32 %v10969, 4294901760
      %10971 = vmatmul.mubr.f32.gmra.mxu0 %v10970
      %v10972 = vpop.f32.mrf.mxu0
      %v10973 = vadd.f32 0.0, %v10972
      %v10974 = vpop.f32.mrf.mxu0
      %10975 = vmatprep.mubr.f32.mxu0 0.0
      %v10976 = vand.u32 %v10687, 4294901760
      %v10977 = vsub.f32 %v10687, %v10976
      %v10978 = vand.u32 %v10977, 4294901760
      %v10979 = vsub.f32 %v10977, %v10978
      %v10980 = vand.u32 %v10979, 4294901760
      %10981 = vmatmul.mubr.f32.gmra.mxu0 %v10980
      %v10982 = vpop.f32.mrf.mxu0
      %v10983 = vadd.f32 0.0, %v10982
      %v10984 = vpop.f32.mrf.mxu0
      %10985 = vmatprep.mubr.f32.mxu0 0.0
      %v10986 = vand.u32 %v10690, 4294901760
      %v10987 = vsub.f32 %v10690, %v10986
      %v10988 = vand.u32 %v10987, 4294901760
      %v10989 = vsub.f32 %v10987, %v10988
      %v10990 = vand.u32 %v10989, 4294901760
      %10991 = vmatmul.mubr.f32.gmra.mxu0 %v10990
      %v10992 = vpop.f32.mrf.mxu0
      %v10993 = vadd.f32 0.0, %v10992
      %v10994 = vpop.f32.mrf.mxu0
      %10995 = vmatprep.mubr.f32.mxu0 0.0
      %v10996 = vand.u32 %v10693, 4294901760
      %v10997 = vsub.f32 %v10693, %v10996
      %v10998 = vand.u32 %v10997, 4294901760
      %v10999 = vsub.f32 %v10997, %v10998
      %v11000 = vand.u32 %v10999, 4294901760
      %11001 = vmatmul.mubr.f32.gmra.mxu0 %v11000
      %v11002 = vpop.f32.mrf.mxu0
      %v11003 = vadd.f32 0.0, %v11002
      %v11004 = vpop.f32.mrf.mxu0
      %11005 = vmatprep.mubr.f32.mxu0 0.0
      %v11006 = vand.u32 %v10696, 4294901760
      %v11007 = vsub.f32 %v10696, %v11006
      %v11008 = vand.u32 %v11007, 4294901760
      %v11009 = vsub.f32 %v11007, %v11008
      %v11010 = vand.u32 %v11009, 4294901760
      %11011 = vmatmul.mubr.f32.gmra.mxu0 %v11010
      %v11012 = vpop.f32.mrf.mxu0
      %v11013 = vadd.f32 0.0, %v11012
      %v11014 = vpop.f32.mrf.mxu0
      %11015 = vmatprep.mubr.f32.mxu0 0.0
      %v11016 = vand.u32 %v10699, 4294901760
      %v11017 = vsub.f32 %v10699, %v11016
      %v11018 = vand.u32 %v11017, 4294901760
      %v11019 = vsub.f32 %v11017, %v11018
      %v11020 = vand.u32 %v11019, 4294901760
      %11021 = vmatmul.mubr.f32.gmra.mxu0 %v11020
      %v11022 = vpop.f32.mrf.mxu0
      %v11023 = vadd.f32 0.0, %v11022
      %v11024 = vpop.f32.mrf.mxu0
      %11025 = vmatprep.mubr.f32.mxu0 0.0
      %v11026 = vand.u32 %v10702, 4294901760
      %v11027 = vsub.f32 %v10702, %v11026
      %v11028 = vand.u32 %v11027, 4294901760
      %v11029 = vsub.f32 %v11027, %v11028
      %v11030 = vand.u32 %v11029, 4294901760
      %11031 = vmatmul.mubr.f32.gmra.mxu0 %v11030
      %v11032 = vpop.f32.mrf.mxu0
      %v11033 = vadd.f32 0.0, %v11032
      %v11034 = vpop.f32.mrf.mxu0
      %11035 = vmatprep.mubr.f32.mxu0 0.0
      %v11036 = vand.u32 %v10705, 4294901760
      %v11037 = vsub.f32 %v10705, %v11036
      %v11038 = vand.u32 %v11037, 4294901760
      %v11039 = vsub.f32 %v11037, %v11038
      %v11040 = vand.u32 %v11039, 4294901760
      %11041 = vmatmul.mubr.f32.gmra.mxu0 %v11040
      %v11042 = vpop.f32.mrf.mxu0
      %v11043 = vadd.f32 0.0, %v11042
      %v11044 = vpop.f32.mrf.mxu0
      %11045 = vmatprep.mubr.f32.mxu0 0.0
      %v11046 = vand.u32 %v10708, 4294901760
      %v11047 = vsub.f32 %v10708, %v11046
      %v11048 = vand.u32 %v11047, 4294901760
      %v11049 = vsub.f32 %v11047, %v11048
      %v11050 = vand.u32 %v11049, 4294901760
      %11051 = vmatmul.mubr.f32.gmra.mxu0 %v11050
      %v11052 = vpop.f32.mrf.mxu0
      %v11053 = vadd.f32 0.0, %v11052
      %v11054 = vpop.f32.mrf.mxu0
      %11055 = vmatprep.mubr.f32.mxu0 0.0
      %v11056 = vand.u32 %v10711, 4294901760
      %v11057 = vsub.f32 %v10711, %v11056
      %v11058 = vand.u32 %v11057, 4294901760
      %v11059 = vsub.f32 %v11057, %v11058
      %v11060 = vand.u32 %v11059, 4294901760
      %11061 = vmatmul.mubr.f32.gmra.mxu0 %v11060
      %v11062 = vpop.f32.mrf.mxu0
      %v11063 = vadd.f32 0.0, %v11062
      %v11064 = vpop.f32.mrf.mxu0
      %11065 = vmatprep.mubr.f32.mxu0 0.0
      %v11066 = vand.u32 %v10714, 4294901760
      %v11067 = vsub.f32 %v10714, %v11066
      %v11068 = vand.u32 %v11067, 4294901760
      %v11069 = vsub.f32 %v11067, %v11068
      %v11070 = vand.u32 %v11069, 4294901760
      %11071 = vmatmul.mubr.f32.gmra.mxu0 %v11070
      %v11072 = vpop.f32.mrf.mxu0
      %v11073 = vadd.f32 0.0, %v11072
      %v11074 = vpop.f32.mrf.mxu0
      %11075 = vmatprep.mubr.f32.mxu0 0.0
      %v11076 = vand.u32 %v10717, 4294901760
      %v11077 = vsub.f32 %v10717, %v11076
      %v11078 = vand.u32 %v11077, 4294901760
      %v11079 = vsub.f32 %v11077, %v11078
      %v11080 = vand.u32 %v11079, 4294901760
      %11081 = vmatmul.mubr.f32.gmra.mxu0 %v11080
      %v11082 = vpop.f32.mrf.mxu0
      %v11083 = vadd.f32 0.0, %v11082
      %v11084 = vpop.f32.mrf.mxu0
      %11085 = vmatprep.mubr.f32.mxu0 0.0
      %v11086 = vand.u32 %v10720, 4294901760
      %v11087 = vsub.f32 %v10720, %v11086
      %v11088 = vand.u32 %v11087, 4294901760
      %v11089 = vsub.f32 %v11087, %v11088
      %v11090 = vand.u32 %v11089, 4294901760
      %11091 = vmatmul.mubr.f32.gmra.mxu0 %v11090
      %v11092 = vpop.f32.mrf.mxu0
      %v11093 = vadd.f32 0.0, %v11092
      %v11094 = vpop.f32.mrf.mxu0
      %11095 = vmatprep.mubr.f32.mxu0 0.0
      %v11096 = vand.u32 %v10723, 4294901760
      %v11097 = vsub.f32 %v10723, %v11096
      %v11098 = vand.u32 %v11097, 4294901760
      %v11099 = vsub.f32 %v11097, %v11098
      %v11100 = vand.u32 %v11099, 4294901760
      %11101 = vmatmul.mubr.f32.gmra.mxu0 %v11100
      %v11102 = vpop.f32.mrf.mxu0
      %v11103 = vadd.f32 0.0, %v11102
      %v11104 = vpop.f32.mrf.mxu0
      %11105 = vmatprep.mubr.f32.mxu0 0.0
      %v11106 = vand.u32 %v10726, 4294901760
      %v11107 = vsub.f32 %v10726, %v11106
      %v11108 = vand.u32 %v11107, 4294901760
      %v11109 = vsub.f32 %v11107, %v11108
      %v11110 = vand.u32 %v11109, 4294901760
      %11111 = vmatmul.mubr.f32.gmra.mxu0 %v11110
      %v11112 = vpop.f32.mrf.mxu0
      %v11113 = vadd.f32 0.0, %v11112
      %v11114 = vpop.f32.mrf.mxu0
      %11115 = vdwg.mxu0
      %11116 = vmatprep.subr.mxu0 0.0
      %11117 = vmatpush1.msra.mxu0 0.0
      %11118 = vmatprep.subr.mxu0 0.0
      %11119 = vmatpush1.msra.mxu0 0.0
      %11120 = vmatprep.subr.mxu0 0.0
      %11121 = vmatpush1.msra.mxu0 0.0
      %11122 = vmatprep.subr.mxu0 0.0
      %11123 = vmatpush1.msra.mxu0 0.0
      %11124 = vmatprep.subr.mxu0 0.0
      %11125 = vmatpush1.msra.mxu0 0.0
      %11126 = vmatprep.subr.mxu0 0.0
      %11127 = vmatpush1.msra.mxu0 0.0
      %11128 = vmatprep.subr.mxu0 0.0
      %11129 = vmatpush1.msra.mxu0 0.0
      %11130 = vmatprep.subr.mxu0 0.0
      %11131 = vmatpush1.msra.mxu0 0.0
      %11132 = vmatprep.subr.mxu0 0.0
      %11133 = vmatpush1.msra.mxu0 0.0
      %11134 = vmatprep.subr.mxu0 0.0
      %11135 = vmatpush1.msra.mxu0 0.0
      %11136 = vmatprep.subr.mxu0 0.0
      %11137 = vmatpush1.msra.mxu0 0.0
      %11138 = vmatprep.subr.mxu0 0.0
      %11139 = vmatpush1.msra.mxu0 0.0
      %11140 = vmatprep.subr.mxu0 0.0
      %11141 = vmatpush1.msra.mxu0 0.0
      %11142 = vmatprep.subr.mxu0 0.0
      %11143 = vmatpush1.msra.mxu0 0.0
      %11144 = vmatprep.subr.mxu0 0.0
      %11145 = vmatpush1.msra.mxu0 0.0
      %11146 = vmatprep.subr.mxu0 0.0
      %v11147 = vand.u32 %v10728, 4294901760
      %v11148 = vsub.f32 %v10728, %v11147
      %v11149 = vand.u32 %v11148, 4294901760
      %v11150 = vsub.f32 %v11148, %v11149
      %v11151 = vand.u32 %v11150, 4294901760
      %11152 = vmatpush1.msra.mxu0 %v11151
      %11153 = vmatprep.subr.mxu0 0.0
      %11154 = vmatpush2.msra.mxu0 0.0
      %11155 = vmatprep.subr.mxu0 0.0
      %11156 = vmatpush2.msra.mxu0 0.0
      %11157 = vmatprep.subr.mxu0 0.0
      %11158 = vmatpush2.msra.mxu0 0.0
      %11159 = vmatprep.subr.mxu0 0.0
      %11160 = vmatpush2.msra.mxu0 0.0
      %11161 = vmatprep.subr.mxu0 0.0
      %11162 = vmatpush2.msra.mxu0 0.0
      %11163 = vmatprep.subr.mxu0 0.0
      %11164 = vmatpush2.msra.mxu0 0.0
      %11165 = vmatprep.subr.mxu0 0.0
      %11166 = vmatpush2.msra.mxu0 0.0
      %11167 = vmatprep.subr.mxu0 0.0
      %11168 = vmatpush2.msra.mxu0 0.0
      %11169 = vmatprep.subr.mxu0 0.0
      %11170 = vmatpush2.msra.mxu0 0.0
      %11171 = vmatprep.subr.mxu0 0.0
      %11172 = vmatpush2.msra.mxu0 0.0
      %11173 = vmatprep.subr.mxu0 0.0
      %11174 = vmatpush2.msra.mxu0 0.0
      %11175 = vmatprep.subr.mxu0 0.0
      %11176 = vmatpush2.msra.mxu0 0.0
      %11177 = vmatprep.subr.mxu0 0.0
      %11178 = vmatpush2.msra.mxu0 0.0
      %11179 = vmatprep.subr.mxu0 0.0
      %11180 = vmatpush2.msra.mxu0 0.0
      %11181 = vmatprep.subr.mxu0 0.0
      %11182 = vmatpush2.msra.mxu0 0.0
      %11183 = vmatprep.subr.mxu0 0.0
      %11184 = vmatpush2.msra.mxu0 0.0
      %11185 = vmatprep.mubr.f32.mxu0 0.0
      %v11186 = vand.u32 %v10633, 4294901760
      %11187 = vmatmul.mubr.f32.gmra.mxu0 %v11186
      %v11188 = vpop.f32.mrf.mxu0
      %v11189 = vadd.f32 %v10803, %v11188
      %v11190 = vpop.f32.mrf.mxu0
      %11191 = vmatprep.mubr.f32.mxu0 0.0
      %v11192 = vand.u32 %v10636, 4294901760
      %11193 = vmatmul.mubr.f32.gmra.mxu0 %v11192
      %v11194 = vpop.f32.mrf.mxu0
      %v11195 = vadd.f32 %v10813, %v11194
      %v11196 = vpop.f32.mrf.mxu0
      %11197 = vmatprep.mubr.f32.mxu0 0.0
      %v11198 = vand.u32 %v10639, 4294901760
      %11199 = vmatmul.mubr.f32.gmra.mxu0 %v11198
      %v11200 = vpop.f32.mrf.mxu0
      %v11201 = vadd.f32 %v10823, %v11200
      %v11202 = vpop.f32.mrf.mxu0
      %11203 = vmatprep.mubr.f32.mxu0 0.0
      %v11204 = vand.u32 %v10642, 4294901760
      %11205 = vmatmul.mubr.f32.gmra.mxu0 %v11204
      %v11206 = vpop.f32.mrf.mxu0
      %v11207 = vadd.f32 %v10833, %v11206
      %v11208 = vpop.f32.mrf.mxu0
      %11209 = vmatprep.mubr.f32.mxu0 0.0
      %v11210 = vand.u32 %v10645, 4294901760
      %11211 = vmatmul.mubr.f32.gmra.mxu0 %v11210
      %v11212 = vpop.f32.mrf.mxu0
      %v11213 = vadd.f32 %v10843, %v11212
      %v11214 = vpop.f32.mrf.mxu0
      %11215 = vmatprep.mubr.f32.mxu0 0.0
      %v11216 = vand.u32 %v10648, 4294901760
      %11217 = vmatmul.mubr.f32.gmra.mxu0 %v11216
      %v11218 = vpop.f32.mrf.mxu0
      %v11219 = vadd.f32 %v10853, %v11218
      %v11220 = vpop.f32.mrf.mxu0
      %11221 = vmatprep.mubr.f32.mxu0 0.0
      %v11222 = vand.u32 %v10651, 4294901760
      %11223 = vmatmul.mubr.f32.gmra.mxu0 %v11222
      %v11224 = vpop.f32.mrf.mxu0
      %v11225 = vadd.f32 %v10863, %v11224
      %v11226 = vpop.f32.mrf.mxu0
      %11227 = vmatprep.mubr.f32.mxu0 0.0
      %v11228 = vand.u32 %v10654, 4294901760
      %11229 = vmatmul.mubr.f32.gmra.mxu0 %v11228
      %v11230 = vpop.f32.mrf.mxu0
      %v11231 = vadd.f32 %v10873, %v11230
      %v11232 = vpop.f32.mrf.mxu0
      %11233 = vmatprep.mubr.f32.mxu0 0.0
      %v11234 = vand.u32 %v10657, 4294901760
      %11235 = vmatmul.mubr.f32.gmra.mxu0 %v11234
      %v11236 = vpop.f32.mrf.mxu0
      %v11237 = vadd.f32 %v10883, %v11236
      %v11238 = vpop.f32.mrf.mxu0
      %11239 = vmatprep.mubr.f32.mxu0 0.0
      %v11240 = vand.u32 %v10660, 4294901760
      %11241 = vmatmul.mubr.f32.gmra.mxu0 %v11240
      %v11242 = vpop.f32.mrf.mxu0
      %v11243 = vadd.f32 %v10893, %v11242
      %v11244 = vpop.f32.mrf.mxu0
      %11245 = vmatprep.mubr.f32.mxu0 0.0
      %v11246 = vand.u32 %v10663, 4294901760
      %11247 = vmatmul.mubr.f32.gmra.mxu0 %v11246
      %v11248 = vpop.f32.mrf.mxu0
      %v11249 = vadd.f32 %v10903, %v11248
      %v11250 = vpop.f32.mrf.mxu0
      %11251 = vmatprep.mubr.f32.mxu0 0.0
      %v11252 = vand.u32 %v10666, 4294901760
      %11253 = vmatmul.mubr.f32.gmra.mxu0 %v11252
      %v11254 = vpop.f32.mrf.mxu0
      %v11255 = vadd.f32 %v10913, %v11254
      %v11256 = vpop.f32.mrf.mxu0
      %11257 = vmatprep.mubr.f32.mxu0 0.0
      %v11258 = vand.u32 %v10669, 4294901760
      %11259 = vmatmul.mubr.f32.gmra.mxu0 %v11258
      %v11260 = vpop.f32.mrf.mxu0
      %v11261 = vadd.f32 %v10923, %v11260
      %v11262 = vpop.f32.mrf.mxu0
      %11263 = vmatprep.mubr.f32.mxu0 0.0
      %v11264 = vand.u32 %v10672, 4294901760
      %11265 = vmatmul.mubr.f32.gmra.mxu0 %v11264
      %v11266 = vpop.f32.mrf.mxu0
      %v11267 = vadd.f32 %v10933, %v11266
      %v11268 = vpop.f32.mrf.mxu0
      %11269 = vmatprep.mubr.f32.mxu0 0.0
      %v11270 = vand.u32 %v10675, 4294901760
      %11271 = vmatmul.mubr.f32.gmra.mxu0 %v11270
      %v11272 = vpop.f32.mrf.mxu0
      %v11273 = vadd.f32 %v10943, %v11272
      %v11274 = vpop.f32.mrf.mxu0
      %11275 = vmatprep.mubr.f32.mxu0 0.0
      %v11276 = vand.u32 %v10678, 4294901760
      %11277 = vmatmul.mubr.f32.gmra.mxu0 %v11276
      %v11278 = vpop.f32.mrf.mxu0
      %v11279 = vadd.f32 %v10953, %v11278
      %v11280 = vpop.f32.mrf.mxu0
      %11281 = vmatprep.mubr.f32.mxu0 0.0
      %v11282 = vand.u32 %v10681, 4294901760
      %11283 = vmatmul.mubr.f32.gmra.mxu0 %v11282
      %v11284 = vpop.f32.mrf.mxu0
      %v11285 = vadd.f32 %v10963, %v11284
      %v11286 = vpop.f32.mrf.mxu0
      %11287 = vmatprep.mubr.f32.mxu0 0.0
      %v11288 = vand.u32 %v10684, 4294901760
      %11289 = vmatmul.mubr.f32.gmra.mxu0 %v11288
      %v11290 = vpop.f32.mrf.mxu0
      %v11291 = vadd.f32 %v10973, %v11290
      %v11292 = vpop.f32.mrf.mxu0
      %11293 = vmatprep.mubr.f32.mxu0 0.0
      %v11294 = vand.u32 %v10687, 4294901760
      %11295 = vmatmul.mubr.f32.gmra.mxu0 %v11294
      %v11296 = vpop.f32.mrf.mxu0
      %v11297 = vadd.f32 %v10983, %v11296
      %v11298 = vpop.f32.mrf.mxu0
      %11299 = vmatprep.mubr.f32.mxu0 0.0
      %v11300 = vand.u32 %v10690, 4294901760
      %11301 = vmatmul.mubr.f32.gmra.mxu0 %v11300
      %v11302 = vpop.f32.mrf.mxu0
      %v11303 = vadd.f32 %v10993, %v11302
      %v11304 = vpop.f32.mrf.mxu0
      %11305 = vmatprep.mubr.f32.mxu0 0.0
      %v11306 = vand.u32 %v10693, 4294901760
      %11307 = vmatmul.mubr.f32.gmra.mxu0 %v11306
      %v11308 = vpop.f32.mrf.mxu0
      %v11309 = vadd.f32 %v11003, %v11308
      %v11310 = vpop.f32.mrf.mxu0
      %11311 = vmatprep.mubr.f32.mxu0 0.0
      %v11312 = vand.u32 %v10696, 4294901760
      %11313 = vmatmul.mubr.f32.gmra.mxu0 %v11312
      %v11314 = vpop.f32.mrf.mxu0
      %v11315 = vadd.f32 %v11013, %v11314
      %v11316 = vpop.f32.mrf.mxu0
      %11317 = vmatprep.mubr.f32.mxu0 0.0
      %v11318 = vand.u32 %v10699, 4294901760
      %11319 = vmatmul.mubr.f32.gmra.mxu0 %v11318
      %v11320 = vpop.f32.mrf.mxu0
      %v11321 = vadd.f32 %v11023, %v11320
      %v11322 = vpop.f32.mrf.mxu0
      %11323 = vmatprep.mubr.f32.mxu0 0.0
      %v11324 = vand.u32 %v10702, 4294901760
      %11325 = vmatmul.mubr.f32.gmra.mxu0 %v11324
      %v11326 = vpop.f32.mrf.mxu0
      %v11327 = vadd.f32 %v11033, %v11326
      %v11328 = vpop.f32.mrf.mxu0
      %11329 = vmatprep.mubr.f32.mxu0 0.0
      %v11330 = vand.u32 %v10705, 4294901760
      %11331 = vmatmul.mubr.f32.gmra.mxu0 %v11330
      %v11332 = vpop.f32.mrf.mxu0
      %v11333 = vadd.f32 %v11043, %v11332
      %v11334 = vpop.f32.mrf.mxu0
      %11335 = vmatprep.mubr.f32.mxu0 0.0
      %v11336 = vand.u32 %v10708, 4294901760
      %11337 = vmatmul.mubr.f32.gmra.mxu0 %v11336
      %v11338 = vpop.f32.mrf.mxu0
      %v11339 = vadd.f32 %v11053, %v11338
      %v11340 = vpop.f32.mrf.mxu0
      %11341 = vmatprep.mubr.f32.mxu0 0.0
      %v11342 = vand.u32 %v10711, 4294901760
      %11343 = vmatmul.mubr.f32.gmra.mxu0 %v11342
      %v11344 = vpop.f32.mrf.mxu0
      %v11345 = vadd.f32 %v11063, %v11344
      %v11346 = vpop.f32.mrf.mxu0
      %11347 = vmatprep.mubr.f32.mxu0 0.0
      %v11348 = vand.u32 %v10714, 4294901760
      %11349 = vmatmul.mubr.f32.gmra.mxu0 %v11348
      %v11350 = vpop.f32.mrf.mxu0
      %v11351 = vadd.f32 %v11073, %v11350
      %v11352 = vpop.f32.mrf.mxu0
      %11353 = vmatprep.mubr.f32.mxu0 0.0
      %v11354 = vand.u32 %v10717, 4294901760
      %11355 = vmatmul.mubr.f32.gmra.mxu0 %v11354
      %v11356 = vpop.f32.mrf.mxu0
      %v11357 = vadd.f32 %v11083, %v11356
      %v11358 = vpop.f32.mrf.mxu0
      %11359 = vmatprep.mubr.f32.mxu0 0.0
      %v11360 = vand.u32 %v10720, 4294901760
      %11361 = vmatmul.mubr.f32.gmra.mxu0 %v11360
      %v11362 = vpop.f32.mrf.mxu0
      %v11363 = vadd.f32 %v11093, %v11362
      %v11364 = vpop.f32.mrf.mxu0
      %11365 = vmatprep.mubr.f32.mxu0 0.0
      %v11366 = vand.u32 %v10723, 4294901760
      %11367 = vmatmul.mubr.f32.gmra.mxu0 %v11366
      %v11368 = vpop.f32.mrf.mxu0
      %v11369 = vadd.f32 %v11103, %v11368
      %v11370 = vpop.f32.mrf.mxu0
      %11371 = vmatprep.mubr.f32.mxu0 0.0
      %v11372 = vand.u32 %v10726, 4294901760
      %11373 = vmatmul.mubr.f32.gmra.mxu0 %v11372
      %v11374 = vpop.f32.mrf.mxu0
      %v11375 = vadd.f32 %v11113, %v11374
      %v11376 = vpop.f32.mrf.mxu0
      %11377 = vdwg.mxu0
      %11378 = vmatprep.subr.mxu0 0.0
      %11379 = vmatpush1.msra.mxu0 0.0
      %11380 = vmatprep.subr.mxu0 0.0
      %11381 = vmatpush1.msra.mxu0 0.0
      %11382 = vmatprep.subr.mxu0 0.0
      %11383 = vmatpush1.msra.mxu0 0.0
      %11384 = vmatprep.subr.mxu0 0.0
      %11385 = vmatpush1.msra.mxu0 0.0
      %11386 = vmatprep.subr.mxu0 0.0
      %11387 = vmatpush1.msra.mxu0 0.0
      %11388 = vmatprep.subr.mxu0 0.0
      %11389 = vmatpush1.msra.mxu0 0.0
      %11390 = vmatprep.subr.mxu0 0.0
      %11391 = vmatpush1.msra.mxu0 0.0
      %11392 = vmatprep.subr.mxu0 0.0
      %11393 = vmatpush1.msra.mxu0 0.0
      %11394 = vmatprep.subr.mxu0 0.0
      %11395 = vmatpush1.msra.mxu0 0.0
      %11396 = vmatprep.subr.mxu0 0.0
      %11397 = vmatpush1.msra.mxu0 0.0
      %11398 = vmatprep.subr.mxu0 0.0
      %11399 = vmatpush1.msra.mxu0 0.0
      %11400 = vmatprep.subr.mxu0 0.0
      %11401 = vmatpush1.msra.mxu0 0.0
      %11402 = vmatprep.subr.mxu0 0.0
      %11403 = vmatpush1.msra.mxu0 0.0
      %11404 = vmatprep.subr.mxu0 0.0
      %11405 = vmatpush1.msra.mxu0 0.0
      %11406 = vmatprep.subr.mxu0 0.0
      %11407 = vmatpush1.msra.mxu0 0.0
      %11408 = vmatprep.subr.mxu0 0.0
      %v11409 = vand.u32 %v10728, 4294901760
      %v11410 = vsub.f32 %v10728, %v11409
      %11411 = vmatpush1.msra.mxu0 %v11410
      %11412 = vmatprep.subr.mxu0 0.0
      %11413 = vmatpush2.msra.mxu0 0.0
      %11414 = vmatprep.subr.mxu0 0.0
      %11415 = vmatpush2.msra.mxu0 0.0
      %11416 = vmatprep.subr.mxu0 0.0
      %11417 = vmatpush2.msra.mxu0 0.0
      %11418 = vmatprep.subr.mxu0 0.0
      %11419 = vmatpush2.msra.mxu0 0.0
      %11420 = vmatprep.subr.mxu0 0.0
      %11421 = vmatpush2.msra.mxu0 0.0
      %11422 = vmatprep.subr.mxu0 0.0
      %11423 = vmatpush2.msra.mxu0 0.0
      %11424 = vmatprep.subr.mxu0 0.0
      %11425 = vmatpush2.msra.mxu0 0.0
      %11426 = vmatprep.subr.mxu0 0.0
      %11427 = vmatpush2.msra.mxu0 0.0
      %11428 = vmatprep.subr.mxu0 0.0
      %11429 = vmatpush2.msra.mxu0 0.0
      %11430 = vmatprep.subr.mxu0 0.0
      %11431 = vmatpush2.msra.mxu0 0.0
      %11432 = vmatprep.subr.mxu0 0.0
      %11433 = vmatpush2.msra.mxu0 0.0
      %11434 = vmatprep.subr.mxu0 0.0
      %11435 = vmatpush2.msra.mxu0 0.0
      %11436 = vmatprep.subr.mxu0 0.0
      %11437 = vmatpush2.msra.mxu0 0.0
      %11438 = vmatprep.subr.mxu0 0.0
      %11439 = vmatpush2.msra.mxu0 0.0
      %11440 = vmatprep.subr.mxu0 0.0
      %11441 = vmatpush2.msra.mxu0 0.0
      %11442 = vmatprep.subr.mxu0 0.0
      %11443 = vmatpush2.msra.mxu0 0.0
      %11444 = vmatprep.mubr.f32.mxu0 0.0
      %v11445 = vand.u32 %v10633, 4294901760
      %v11446 = vsub.f32 %v10633, %v11445
      %11447 = vmatmul.mubr.f32.gmra.mxu0 %v11446
      %v11448 = vpop.f32.mrf.mxu0
      %v11449 = vadd.f32 %v11189, %v11448
      %v11450 = vpop.f32.mrf.mxu0
      %11451 = vmatprep.mubr.f32.mxu0 0.0
      %v11452 = vand.u32 %v10636, 4294901760
      %v11453 = vsub.f32 %v10636, %v11452
      %11454 = vmatmul.mubr.f32.gmra.mxu0 %v11453
      %v11455 = vpop.f32.mrf.mxu0
      %v11456 = vadd.f32 %v11195, %v11455
      %v11457 = vpop.f32.mrf.mxu0
      %11458 = vmatprep.mubr.f32.mxu0 0.0
      %v11459 = vand.u32 %v10639, 4294901760
      %v11460 = vsub.f32 %v10639, %v11459
      %11461 = vmatmul.mubr.f32.gmra.mxu0 %v11460
      %v11462 = vpop.f32.mrf.mxu0
      %v11463 = vadd.f32 %v11201, %v11462
      %v11464 = vpop.f32.mrf.mxu0
      %11465 = vmatprep.mubr.f32.mxu0 0.0
      %v11466 = vand.u32 %v10642, 4294901760
      %v11467 = vsub.f32 %v10642, %v11466
      %11468 = vmatmul.mubr.f32.gmra.mxu0 %v11467
      %v11469 = vpop.f32.mrf.mxu0
      %v11470 = vadd.f32 %v11207, %v11469
      %v11471 = vpop.f32.mrf.mxu0
      %11472 = vmatprep.mubr.f32.mxu0 0.0
      %v11473 = vand.u32 %v10645, 4294901760
      %v11474 = vsub.f32 %v10645, %v11473
      %11475 = vmatmul.mubr.f32.gmra.mxu0 %v11474
      %v11476 = vpop.f32.mrf.mxu0
      %v11477 = vadd.f32 %v11213, %v11476
      %v11478 = vpop.f32.mrf.mxu0
      %11479 = vmatprep.mubr.f32.mxu0 0.0
      %v11480 = vand.u32 %v10648, 4294901760
      %v11481 = vsub.f32 %v10648, %v11480
      %11482 = vmatmul.mubr.f32.gmra.mxu0 %v11481
      %v11483 = vpop.f32.mrf.mxu0
      %v11484 = vadd.f32 %v11219, %v11483
      %v11485 = vpop.f32.mrf.mxu0
      %11486 = vmatprep.mubr.f32.mxu0 0.0
      %v11487 = vand.u32 %v10651, 4294901760
      %v11488 = vsub.f32 %v10651, %v11487
      %11489 = vmatmul.mubr.f32.gmra.mxu0 %v11488
      %v11490 = vpop.f32.mrf.mxu0
      %v11491 = vadd.f32 %v11225, %v11490
      %v11492 = vpop.f32.mrf.mxu0
      %11493 = vmatprep.mubr.f32.mxu0 0.0
      %v11494 = vand.u32 %v10654, 4294901760
      %v11495 = vsub.f32 %v10654, %v11494
      %11496 = vmatmul.mubr.f32.gmra.mxu0 %v11495
      %v11497 = vpop.f32.mrf.mxu0
      %v11498 = vadd.f32 %v11231, %v11497
      %v11499 = vpop.f32.mrf.mxu0
      %11500 = vmatprep.mubr.f32.mxu0 0.0
      %v11501 = vand.u32 %v10657, 4294901760
      %v11502 = vsub.f32 %v10657, %v11501
      %11503 = vmatmul.mubr.f32.gmra.mxu0 %v11502
      %v11504 = vpop.f32.mrf.mxu0
      %v11505 = vadd.f32 %v11237, %v11504
      %v11506 = vpop.f32.mrf.mxu0
      %11507 = vmatprep.mubr.f32.mxu0 0.0
      %v11508 = vand.u32 %v10660, 4294901760
      %v11509 = vsub.f32 %v10660, %v11508
      %11510 = vmatmul.mubr.f32.gmra.mxu0 %v11509
      %v11511 = vpop.f32.mrf.mxu0
      %v11512 = vadd.f32 %v11243, %v11511
      %v11513 = vpop.f32.mrf.mxu0
      %11514 = vmatprep.mubr.f32.mxu0 0.0
      %v11515 = vand.u32 %v10663, 4294901760
      %v11516 = vsub.f32 %v10663, %v11515
      %11517 = vmatmul.mubr.f32.gmra.mxu0 %v11516
      %v11518 = vpop.f32.mrf.mxu0
      %v11519 = vadd.f32 %v11249, %v11518
      %v11520 = vpop.f32.mrf.mxu0
      %11521 = vmatprep.mubr.f32.mxu0 0.0
      %v11522 = vand.u32 %v10666, 4294901760
      %v11523 = vsub.f32 %v10666, %v11522
      %11524 = vmatmul.mubr.f32.gmra.mxu0 %v11523
      %v11525 = vpop.f32.mrf.mxu0
      %v11526 = vadd.f32 %v11255, %v11525
      %v11527 = vpop.f32.mrf.mxu0
      %11528 = vmatprep.mubr.f32.mxu0 0.0
      %v11529 = vand.u32 %v10669, 4294901760
      %v11530 = vsub.f32 %v10669, %v11529
      %11531 = vmatmul.mubr.f32.gmra.mxu0 %v11530
      %v11532 = vpop.f32.mrf.mxu0
      %v11533 = vadd.f32 %v11261, %v11532
      %v11534 = vpop.f32.mrf.mxu0
      %11535 = vmatprep.mubr.f32.mxu0 0.0
      %v11536 = vand.u32 %v10672, 4294901760
      %v11537 = vsub.f32 %v10672, %v11536
      %11538 = vmatmul.mubr.f32.gmra.mxu0 %v11537
      %v11539 = vpop.f32.mrf.mxu0
      %v11540 = vadd.f32 %v11267, %v11539
      %v11541 = vpop.f32.mrf.mxu0
      %11542 = vmatprep.mubr.f32.mxu0 0.0
      %v11543 = vand.u32 %v10675, 4294901760
      %v11544 = vsub.f32 %v10675, %v11543
      %11545 = vmatmul.mubr.f32.gmra.mxu0 %v11544
      %v11546 = vpop.f32.mrf.mxu0
      %v11547 = vadd.f32 %v11273, %v11546
      %v11548 = vpop.f32.mrf.mxu0
      %11549 = vmatprep.mubr.f32.mxu0 0.0
      %v11550 = vand.u32 %v10678, 4294901760
      %v11551 = vsub.f32 %v10678, %v11550
      %11552 = vmatmul.mubr.f32.gmra.mxu0 %v11551
      %v11553 = vpop.f32.mrf.mxu0
      %v11554 = vadd.f32 %v11279, %v11553
      %v11555 = vpop.f32.mrf.mxu0
      %11556 = vmatprep.mubr.f32.mxu0 0.0
      %v11557 = vand.u32 %v10681, 4294901760
      %v11558 = vsub.f32 %v10681, %v11557
      %11559 = vmatmul.mubr.f32.gmra.mxu0 %v11558
      %v11560 = vpop.f32.mrf.mxu0
      %v11561 = vadd.f32 %v11285, %v11560
      %v11562 = vpop.f32.mrf.mxu0
      %11563 = vmatprep.mubr.f32.mxu0 0.0
      %v11564 = vand.u32 %v10684, 4294901760
      %v11565 = vsub.f32 %v10684, %v11564
      %11566 = vmatmul.mubr.f32.gmra.mxu0 %v11565
      %v11567 = vpop.f32.mrf.mxu0
      %v11568 = vadd.f32 %v11291, %v11567
      %v11569 = vpop.f32.mrf.mxu0
      %11570 = vmatprep.mubr.f32.mxu0 0.0
      %v11571 = vand.u32 %v10687, 4294901760
      %v11572 = vsub.f32 %v10687, %v11571
      %11573 = vmatmul.mubr.f32.gmra.mxu0 %v11572
      %v11574 = vpop.f32.mrf.mxu0
      %v11575 = vadd.f32 %v11297, %v11574
      %v11576 = vpop.f32.mrf.mxu0
      %11577 = vmatprep.mubr.f32.mxu0 0.0
      %v11578 = vand.u32 %v10690, 4294901760
      %v11579 = vsub.f32 %v10690, %v11578
      %11580 = vmatmul.mubr.f32.gmra.mxu0 %v11579
      %v11581 = vpop.f32.mrf.mxu0
      %v11582 = vadd.f32 %v11303, %v11581
      %v11583 = vpop.f32.mrf.mxu0
      %11584 = vmatprep.mubr.f32.mxu0 0.0
      %v11585 = vand.u32 %v10693, 4294901760
      %v11586 = vsub.f32 %v10693, %v11585
      %11587 = vmatmul.mubr.f32.gmra.mxu0 %v11586
      %v11588 = vpop.f32.mrf.mxu0
      %v11589 = vadd.f32 %v11309, %v11588
      %v11590 = vpop.f32.mrf.mxu0
      %11591 = vmatprep.mubr.f32.mxu0 0.0
      %v11592 = vand.u32 %v10696, 4294901760
      %v11593 = vsub.f32 %v10696, %v11592
      %11594 = vmatmul.mubr.f32.gmra.mxu0 %v11593
      %v11595 = vpop.f32.mrf.mxu0
      %v11596 = vadd.f32 %v11315, %v11595
      %v11597 = vpop.f32.mrf.mxu0
      %11598 = vmatprep.mubr.f32.mxu0 0.0
      %v11599 = vand.u32 %v10699, 4294901760
      %v11600 = vsub.f32 %v10699, %v11599
      %11601 = vmatmul.mubr.f32.gmra.mxu0 %v11600
      %v11602 = vpop.f32.mrf.mxu0
      %v11603 = vadd.f32 %v11321, %v11602
      %v11604 = vpop.f32.mrf.mxu0
      %11605 = vmatprep.mubr.f32.mxu0 0.0
      %v11606 = vand.u32 %v10702, 4294901760
      %v11607 = vsub.f32 %v10702, %v11606
      %11608 = vmatmul.mubr.f32.gmra.mxu0 %v11607
      %v11609 = vpop.f32.mrf.mxu0
      %v11610 = vadd.f32 %v11327, %v11609
      %v11611 = vpop.f32.mrf.mxu0
      %11612 = vmatprep.mubr.f32.mxu0 0.0
      %v11613 = vand.u32 %v10705, 4294901760
      %v11614 = vsub.f32 %v10705, %v11613
      %11615 = vmatmul.mubr.f32.gmra.mxu0 %v11614
      %v11616 = vpop.f32.mrf.mxu0
      %v11617 = vadd.f32 %v11333, %v11616
      %v11618 = vpop.f32.mrf.mxu0
      %11619 = vmatprep.mubr.f32.mxu0 0.0
      %v11620 = vand.u32 %v10708, 4294901760
      %v11621 = vsub.f32 %v10708, %v11620
      %11622 = vmatmul.mubr.f32.gmra.mxu0 %v11621
      %v11623 = vpop.f32.mrf.mxu0
      %v11624 = vadd.f32 %v11339, %v11623
      %v11625 = vpop.f32.mrf.mxu0
      %11626 = vmatprep.mubr.f32.mxu0 0.0
      %v11627 = vand.u32 %v10711, 4294901760
      %v11628 = vsub.f32 %v10711, %v11627
      %11629 = vmatmul.mubr.f32.gmra.mxu0 %v11628
      %v11630 = vpop.f32.mrf.mxu0
      %v11631 = vadd.f32 %v11345, %v11630
      %v11632 = vpop.f32.mrf.mxu0
      %11633 = vmatprep.mubr.f32.mxu0 0.0
      %v11634 = vand.u32 %v10714, 4294901760
      %v11635 = vsub.f32 %v10714, %v11634
      %11636 = vmatmul.mubr.f32.gmra.mxu0 %v11635
      %v11637 = vpop.f32.mrf.mxu0
      %v11638 = vadd.f32 %v11351, %v11637
      %v11639 = vpop.f32.mrf.mxu0
      %11640 = vmatprep.mubr.f32.mxu0 0.0
      %v11641 = vand.u32 %v10717, 4294901760
      %v11642 = vsub.f32 %v10717, %v11641
      %11643 = vmatmul.mubr.f32.gmra.mxu0 %v11642
      %v11644 = vpop.f32.mrf.mxu0
      %v11645 = vadd.f32 %v11357, %v11644
      %v11646 = vpop.f32.mrf.mxu0
      %11647 = vmatprep.mubr.f32.mxu0 0.0
      %v11648 = vand.u32 %v10720, 4294901760
      %v11649 = vsub.f32 %v10720, %v11648
      %11650 = vmatmul.mubr.f32.gmra.mxu0 %v11649
      %v11651 = vpop.f32.mrf.mxu0
      %v11652 = vadd.f32 %v11363, %v11651
      %v11653 = vpop.f32.mrf.mxu0
      %11654 = vmatprep.mubr.f32.mxu0 0.0
      %v11655 = vand.u32 %v10723, 4294901760
      %v11656 = vsub.f32 %v10723, %v11655
      %11657 = vmatmul.mubr.f32.gmra.mxu0 %v11656
      %v11658 = vpop.f32.mrf.mxu0
      %v11659 = vadd.f32 %v11369, %v11658
      %v11660 = vpop.f32.mrf.mxu0
      %11661 = vmatprep.mubr.f32.mxu0 0.0
      %v11662 = vand.u32 %v10726, 4294901760
      %v11663 = vsub.f32 %v10726, %v11662
      %11664 = vmatmul.mubr.f32.gmra.mxu0 %v11663
      %v11665 = vpop.f32.mrf.mxu0
      %v11666 = vadd.f32 %v11375, %v11665
      %v11667 = vpop.f32.mrf.mxu0
      %11668 = vdwg.mxu0
      %11669 = vmatprep.subr.mxu0 0.0
      %11670 = vmatpush1.msra.mxu0 0.0
      %11671 = vmatprep.subr.mxu0 0.0
      %11672 = vmatpush1.msra.mxu0 0.0
      %11673 = vmatprep.subr.mxu0 0.0
      %11674 = vmatpush1.msra.mxu0 0.0
      %11675 = vmatprep.subr.mxu0 0.0
      %11676 = vmatpush1.msra.mxu0 0.0
      %11677 = vmatprep.subr.mxu0 0.0
      %11678 = vmatpush1.msra.mxu0 0.0
      %11679 = vmatprep.subr.mxu0 0.0
      %11680 = vmatpush1.msra.mxu0 0.0
      %11681 = vmatprep.subr.mxu0 0.0
      %11682 = vmatpush1.msra.mxu0 0.0
      %11683 = vmatprep.subr.mxu0 0.0
      %11684 = vmatpush1.msra.mxu0 0.0
      %11685 = vmatprep.subr.mxu0 0.0
      %11686 = vmatpush1.msra.mxu0 0.0
      %11687 = vmatprep.subr.mxu0 0.0
      %11688 = vmatpush1.msra.mxu0 0.0
      %11689 = vmatprep.subr.mxu0 0.0
      %11690 = vmatpush1.msra.mxu0 0.0
      %11691 = vmatprep.subr.mxu0 0.0
      %11692 = vmatpush1.msra.mxu0 0.0
      %11693 = vmatprep.subr.mxu0 0.0
      %11694 = vmatpush1.msra.mxu0 0.0
      %11695 = vmatprep.subr.mxu0 0.0
      %11696 = vmatpush1.msra.mxu0 0.0
      %11697 = vmatprep.subr.mxu0 0.0
      %11698 = vmatpush1.msra.mxu0 0.0
      %11699 = vmatprep.subr.mxu0 0.0
      %v11700 = vand.u32 %v10728, 4294901760
      %11701 = vmatpush1.msra.mxu0 %v11700
      %11702 = vmatprep.subr.mxu0 0.0
      %11703 = vmatpush2.msra.mxu0 0.0
      %11704 = vmatprep.subr.mxu0 0.0
      %11705 = vmatpush2.msra.mxu0 0.0
      %11706 = vmatprep.subr.mxu0 0.0
      %11707 = vmatpush2.msra.mxu0 0.0
      %11708 = vmatprep.subr.mxu0 0.0
      %11709 = vmatpush2.msra.mxu0 0.0
      %11710 = vmatprep.subr.mxu0 0.0
      %11711 = vmatpush2.msra.mxu0 0.0
      %11712 = vmatprep.subr.mxu0 0.0
      %11713 = vmatpush2.msra.mxu0 0.0
      %11714 = vmatprep.subr.mxu0 0.0
      %11715 = vmatpush2.msra.mxu0 0.0
      %11716 = vmatprep.subr.mxu0 0.0
      %11717 = vmatpush2.msra.mxu0 0.0
      %11718 = vmatprep.subr.mxu0 0.0
      %11719 = vmatpush2.msra.mxu0 0.0
      %11720 = vmatprep.subr.mxu0 0.0
      %11721 = vmatpush2.msra.mxu0 0.0
      %11722 = vmatprep.subr.mxu0 0.0
      %11723 = vmatpush2.msra.mxu0 0.0
      %11724 = vmatprep.subr.mxu0 0.0
      %11725 = vmatpush2.msra.mxu0 0.0
      %11726 = vmatprep.subr.mxu0 0.0
      %11727 = vmatpush2.msra.mxu0 0.0
      %11728 = vmatprep.subr.mxu0 0.0
      %11729 = vmatpush2.msra.mxu0 0.0
      %11730 = vmatprep.subr.mxu0 0.0
      %11731 = vmatpush2.msra.mxu0 0.0
      %11732 = vmatprep.subr.mxu0 0.0
      %11733 = vmatpush2.msra.mxu0 0.0
      %11734 = vmatprep.mubr.f32.mxu0 0.0
      %v11735 = vand.u32 %v10633, 4294901760
      %v11736 = vsub.f32 %v10633, %v11735
      %v11737 = vand.u32 %v11736, 4294901760
      %11738 = vmatmul.mubr.f32.gmra.mxu0 %v11737
      %v11739 = vpop.f32.mrf.mxu0
      %v11740 = vadd.f32 %v11449, %v11739
      %v11741 = vpop.f32.mrf.mxu0
      %11742 = vmatprep.mubr.f32.mxu0 0.0
      %v11743 = vand.u32 %v10636, 4294901760
      %v11744 = vsub.f32 %v10636, %v11743
      %v11745 = vand.u32 %v11744, 4294901760
      %11746 = vmatmul.mubr.f32.gmra.mxu0 %v11745
      %v11747 = vpop.f32.mrf.mxu0
      %v11748 = vadd.f32 %v11456, %v11747
      %v11749 = vpop.f32.mrf.mxu0
      %11750 = vmatprep.mubr.f32.mxu0 0.0
      %v11751 = vand.u32 %v10639, 4294901760
      %v11752 = vsub.f32 %v10639, %v11751
      %v11753 = vand.u32 %v11752, 4294901760
      %11754 = vmatmul.mubr.f32.gmra.mxu0 %v11753
      %v11755 = vpop.f32.mrf.mxu0
      %v11756 = vadd.f32 %v11463, %v11755
      %v11757 = vpop.f32.mrf.mxu0
      %11758 = vmatprep.mubr.f32.mxu0 0.0
      %v11759 = vand.u32 %v10642, 4294901760
      %v11760 = vsub.f32 %v10642, %v11759
      %v11761 = vand.u32 %v11760, 4294901760
      %11762 = vmatmul.mubr.f32.gmra.mxu0 %v11761
      %v11763 = vpop.f32.mrf.mxu0
      %v11764 = vadd.f32 %v11470, %v11763
      %v11765 = vpop.f32.mrf.mxu0
      %11766 = vmatprep.mubr.f32.mxu0 0.0
      %v11767 = vand.u32 %v10645, 4294901760
      %v11768 = vsub.f32 %v10645, %v11767
      %v11769 = vand.u32 %v11768, 4294901760
      %11770 = vmatmul.mubr.f32.gmra.mxu0 %v11769
      %v11771 = vpop.f32.mrf.mxu0
      %v11772 = vadd.f32 %v11477, %v11771
      %v11773 = vpop.f32.mrf.mxu0
      %11774 = vmatprep.mubr.f32.mxu0 0.0
      %v11775 = vand.u32 %v10648, 4294901760
      %v11776 = vsub.f32 %v10648, %v11775
      %v11777 = vand.u32 %v11776, 4294901760
      %11778 = vmatmul.mubr.f32.gmra.mxu0 %v11777
      %v11779 = vpop.f32.mrf.mxu0
      %v11780 = vadd.f32 %v11484, %v11779
      %v11781 = vpop.f32.mrf.mxu0
      %11782 = vmatprep.mubr.f32.mxu0 0.0
      %v11783 = vand.u32 %v10651, 4294901760
      %v11784 = vsub.f32 %v10651, %v11783
      %v11785 = vand.u32 %v11784, 4294901760
      %11786 = vmatmul.mubr.f32.gmra.mxu0 %v11785
      %v11787 = vpop.f32.mrf.mxu0
      %v11788 = vadd.f32 %v11491, %v11787
      %v11789 = vpop.f32.mrf.mxu0
      %11790 = vmatprep.mubr.f32.mxu0 0.0
      %v11791 = vand.u32 %v10654, 4294901760
      %v11792 = vsub.f32 %v10654, %v11791
      %v11793 = vand.u32 %v11792, 4294901760
      %11794 = vmatmul.mubr.f32.gmra.mxu0 %v11793
      %v11795 = vpop.f32.mrf.mxu0
      %v11796 = vadd.f32 %v11498, %v11795
      %v11797 = vpop.f32.mrf.mxu0
      %11798 = vmatprep.mubr.f32.mxu0 0.0
      %v11799 = vand.u32 %v10657, 4294901760
      %v11800 = vsub.f32 %v10657, %v11799
      %v11801 = vand.u32 %v11800, 4294901760
      %11802 = vmatmul.mubr.f32.gmra.mxu0 %v11801
      %v11803 = vpop.f32.mrf.mxu0
      %v11804 = vadd.f32 %v11505, %v11803
      %v11805 = vpop.f32.mrf.mxu0
      %11806 = vmatprep.mubr.f32.mxu0 0.0
      %v11807 = vand.u32 %v10660, 4294901760
      %v11808 = vsub.f32 %v10660, %v11807
      %v11809 = vand.u32 %v11808, 4294901760
      %11810 = vmatmul.mubr.f32.gmra.mxu0 %v11809
      %v11811 = vpop.f32.mrf.mxu0
      %v11812 = vadd.f32 %v11512, %v11811
      %v11813 = vpop.f32.mrf.mxu0
      %11814 = vmatprep.mubr.f32.mxu0 0.0
      %v11815 = vand.u32 %v10663, 4294901760
      %v11816 = vsub.f32 %v10663, %v11815
      %v11817 = vand.u32 %v11816, 4294901760
      %11818 = vmatmul.mubr.f32.gmra.mxu0 %v11817
      %v11819 = vpop.f32.mrf.mxu0
      %v11820 = vadd.f32 %v11519, %v11819
      %v11821 = vpop.f32.mrf.mxu0
      %11822 = vmatprep.mubr.f32.mxu0 0.0
      %v11823 = vand.u32 %v10666, 4294901760
      %v11824 = vsub.f32 %v10666, %v11823
      %v11825 = vand.u32 %v11824, 4294901760
      %11826 = vmatmul.mubr.f32.gmra.mxu0 %v11825
      %v11827 = vpop.f32.mrf.mxu0
      %v11828 = vadd.f32 %v11526, %v11827
      %v11829 = vpop.f32.mrf.mxu0
      %11830 = vmatprep.mubr.f32.mxu0 0.0
      %v11831 = vand.u32 %v10669, 4294901760
      %v11832 = vsub.f32 %v10669, %v11831
      %v11833 = vand.u32 %v11832, 4294901760
      %11834 = vmatmul.mubr.f32.gmra.mxu0 %v11833
      %v11835 = vpop.f32.mrf.mxu0
      %v11836 = vadd.f32 %v11533, %v11835
      %v11837 = vpop.f32.mrf.mxu0
      %11838 = vmatprep.mubr.f32.mxu0 0.0
      %v11839 = vand.u32 %v10672, 4294901760
      %v11840 = vsub.f32 %v10672, %v11839
      %v11841 = vand.u32 %v11840, 4294901760
      %11842 = vmatmul.mubr.f32.gmra.mxu0 %v11841
      %v11843 = vpop.f32.mrf.mxu0
      %v11844 = vadd.f32 %v11540, %v11843
      %v11845 = vpop.f32.mrf.mxu0
      %11846 = vmatprep.mubr.f32.mxu0 0.0
      %v11847 = vand.u32 %v10675, 4294901760
      %v11848 = vsub.f32 %v10675, %v11847
      %v11849 = vand.u32 %v11848, 4294901760
      %11850 = vmatmul.mubr.f32.gmra.mxu0 %v11849
      %v11851 = vpop.f32.mrf.mxu0
      %v11852 = vadd.f32 %v11547, %v11851
      %v11853 = vpop.f32.mrf.mxu0
      %11854 = vmatprep.mubr.f32.mxu0 0.0
      %v11855 = vand.u32 %v10678, 4294901760
      %v11856 = vsub.f32 %v10678, %v11855
      %v11857 = vand.u32 %v11856, 4294901760
      %11858 = vmatmul.mubr.f32.gmra.mxu0 %v11857
      %v11859 = vpop.f32.mrf.mxu0
      %v11860 = vadd.f32 %v11554, %v11859
      %v11861 = vpop.f32.mrf.mxu0
      %11862 = vmatprep.mubr.f32.mxu0 0.0
      %v11863 = vand.u32 %v10681, 4294901760
      %v11864 = vsub.f32 %v10681, %v11863
      %v11865 = vand.u32 %v11864, 4294901760
      %11866 = vmatmul.mubr.f32.gmra.mxu0 %v11865
      %v11867 = vpop.f32.mrf.mxu0
      %v11868 = vadd.f32 %v11561, %v11867
      %v11869 = vpop.f32.mrf.mxu0
      %11870 = vmatprep.mubr.f32.mxu0 0.0
      %v11871 = vand.u32 %v10684, 4294901760
      %v11872 = vsub.f32 %v10684, %v11871
      %v11873 = vand.u32 %v11872, 4294901760
      %11874 = vmatmul.mubr.f32.gmra.mxu0 %v11873
      %v11875 = vpop.f32.mrf.mxu0
      %v11876 = vadd.f32 %v11568, %v11875
      %v11877 = vpop.f32.mrf.mxu0
      %11878 = vmatprep.mubr.f32.mxu0 0.0
      %v11879 = vand.u32 %v10687, 4294901760
      %v11880 = vsub.f32 %v10687, %v11879
      %v11881 = vand.u32 %v11880, 4294901760
      %11882 = vmatmul.mubr.f32.gmra.mxu0 %v11881
      %v11883 = vpop.f32.mrf.mxu0
      %v11884 = vadd.f32 %v11575, %v11883
      %v11885 = vpop.f32.mrf.mxu0
      %11886 = vmatprep.mubr.f32.mxu0 0.0
      %v11887 = vand.u32 %v10690, 4294901760
      %v11888 = vsub.f32 %v10690, %v11887
      %v11889 = vand.u32 %v11888, 4294901760
      %11890 = vmatmul.mubr.f32.gmra.mxu0 %v11889
      %v11891 = vpop.f32.mrf.mxu0
      %v11892 = vadd.f32 %v11582, %v11891
      %v11893 = vpop.f32.mrf.mxu0
      %11894 = vmatprep.mubr.f32.mxu0 0.0
      %v11895 = vand.u32 %v10693, 4294901760
      %v11896 = vsub.f32 %v10693, %v11895
      %v11897 = vand.u32 %v11896, 4294901760
      %11898 = vmatmul.mubr.f32.gmra.mxu0 %v11897
      %v11899 = vpop.f32.mrf.mxu0
      %v11900 = vadd.f32 %v11589, %v11899
      %v11901 = vpop.f32.mrf.mxu0
      %11902 = vmatprep.mubr.f32.mxu0 0.0
      %v11903 = vand.u32 %v10696, 4294901760
      %v11904 = vsub.f32 %v10696, %v11903
      %v11905 = vand.u32 %v11904, 4294901760
      %11906 = vmatmul.mubr.f32.gmra.mxu0 %v11905
      %v11907 = vpop.f32.mrf.mxu0
      %v11908 = vadd.f32 %v11596, %v11907
      %v11909 = vpop.f32.mrf.mxu0
      %11910 = vmatprep.mubr.f32.mxu0 0.0
      %v11911 = vand.u32 %v10699, 4294901760
      %v11912 = vsub.f32 %v10699, %v11911
      %v11913 = vand.u32 %v11912, 4294901760
      %11914 = vmatmul.mubr.f32.gmra.mxu0 %v11913
      %v11915 = vpop.f32.mrf.mxu0
      %v11916 = vadd.f32 %v11603, %v11915
      %v11917 = vpop.f32.mrf.mxu0
      %11918 = vmatprep.mubr.f32.mxu0 0.0
      %v11919 = vand.u32 %v10702, 4294901760
      %v11920 = vsub.f32 %v10702, %v11919
      %v11921 = vand.u32 %v11920, 4294901760
      %11922 = vmatmul.mubr.f32.gmra.mxu0 %v11921
      %v11923 = vpop.f32.mrf.mxu0
      %v11924 = vadd.f32 %v11610, %v11923
      %v11925 = vpop.f32.mrf.mxu0
      %11926 = vmatprep.mubr.f32.mxu0 0.0
      %v11927 = vand.u32 %v10705, 4294901760
      %v11928 = vsub.f32 %v10705, %v11927
      %v11929 = vand.u32 %v11928, 4294901760
      %11930 = vmatmul.mubr.f32.gmra.mxu0 %v11929
      %v11931 = vpop.f32.mrf.mxu0
      %v11932 = vadd.f32 %v11617, %v11931
      %v11933 = vpop.f32.mrf.mxu0
      %11934 = vmatprep.mubr.f32.mxu0 0.0
      %v11935 = vand.u32 %v10708, 4294901760
      %v11936 = vsub.f32 %v10708, %v11935
      %v11937 = vand.u32 %v11936, 4294901760
      %11938 = vmatmul.mubr.f32.gmra.mxu0 %v11937
      %v11939 = vpop.f32.mrf.mxu0
      %v11940 = vadd.f32 %v11624, %v11939
      %v11941 = vpop.f32.mrf.mxu0
      %11942 = vmatprep.mubr.f32.mxu0 0.0
      %v11943 = vand.u32 %v10711, 4294901760
      %v11944 = vsub.f32 %v10711, %v11943
      %v11945 = vand.u32 %v11944, 4294901760
      %11946 = vmatmul.mubr.f32.gmra.mxu0 %v11945
      %v11947 = vpop.f32.mrf.mxu0
      %v11948 = vadd.f32 %v11631, %v11947
      %v11949 = vpop.f32.mrf.mxu0
      %11950 = vmatprep.mubr.f32.mxu0 0.0
      %v11951 = vand.u32 %v10714, 4294901760
      %v11952 = vsub.f32 %v10714, %v11951
      %v11953 = vand.u32 %v11952, 4294901760
      %11954 = vmatmul.mubr.f32.gmra.mxu0 %v11953
      %v11955 = vpop.f32.mrf.mxu0
      %v11956 = vadd.f32 %v11638, %v11955
      %v11957 = vpop.f32.mrf.mxu0
      %11958 = vmatprep.mubr.f32.mxu0 0.0
      %v11959 = vand.u32 %v10717, 4294901760
      %v11960 = vsub.f32 %v10717, %v11959
      %v11961 = vand.u32 %v11960, 4294901760
      %11962 = vmatmul.mubr.f32.gmra.mxu0 %v11961
      %v11963 = vpop.f32.mrf.mxu0
      %v11964 = vadd.f32 %v11645, %v11963
      %v11965 = vpop.f32.mrf.mxu0
      %11966 = vmatprep.mubr.f32.mxu0 0.0
      %v11967 = vand.u32 %v10720, 4294901760
      %v11968 = vsub.f32 %v10720, %v11967
      %v11969 = vand.u32 %v11968, 4294901760
      %11970 = vmatmul.mubr.f32.gmra.mxu0 %v11969
      %v11971 = vpop.f32.mrf.mxu0
      %v11972 = vadd.f32 %v11652, %v11971
      %v11973 = vpop.f32.mrf.mxu0
      %11974 = vmatprep.mubr.f32.mxu0 0.0
      %v11975 = vand.u32 %v10723, 4294901760
      %v11976 = vsub.f32 %v10723, %v11975
      %v11977 = vand.u32 %v11976, 4294901760
      %11978 = vmatmul.mubr.f32.gmra.mxu0 %v11977
      %v11979 = vpop.f32.mrf.mxu0
      %v11980 = vadd.f32 %v11659, %v11979
      %v11981 = vpop.f32.mrf.mxu0
      %11982 = vmatprep.mubr.f32.mxu0 0.0
      %v11983 = vand.u32 %v10726, 4294901760
      %v11984 = vsub.f32 %v10726, %v11983
      %v11985 = vand.u32 %v11984, 4294901760
      %11986 = vmatmul.mubr.f32.gmra.mxu0 %v11985
      %v11987 = vpop.f32.mrf.mxu0
      %v11988 = vadd.f32 %v11666, %v11987
      %v11989 = vpop.f32.mrf.mxu0
      %11990 = vdwg.mxu0
      %11991 = vmatprep.subr.mxu0 0.0
      %11992 = vmatpush1.msra.mxu0 0.0
      %11993 = vmatprep.subr.mxu0 0.0
      %11994 = vmatpush1.msra.mxu0 0.0
      %11995 = vmatprep.subr.mxu0 0.0
      %11996 = vmatpush1.msra.mxu0 0.0
      %11997 = vmatprep.subr.mxu0 0.0
      %11998 = vmatpush1.msra.mxu0 0.0
      %11999 = vmatprep.subr.mxu0 0.0
      %12000 = vmatpush1.msra.mxu0 0.0
      %12001 = vmatprep.subr.mxu0 0.0
      %12002 = vmatpush1.msra.mxu0 0.0
      %12003 = vmatprep.subr.mxu0 0.0
      %12004 = vmatpush1.msra.mxu0 0.0
      %12005 = vmatprep.subr.mxu0 0.0
      %12006 = vmatpush1.msra.mxu0 0.0
      %12007 = vmatprep.subr.mxu0 0.0
      %12008 = vmatpush1.msra.mxu0 0.0
      %12009 = vmatprep.subr.mxu0 0.0
      %12010 = vmatpush1.msra.mxu0 0.0
      %12011 = vmatprep.subr.mxu0 0.0
      %12012 = vmatpush1.msra.mxu0 0.0
      %12013 = vmatprep.subr.mxu0 0.0
      %12014 = vmatpush1.msra.mxu0 0.0
      %12015 = vmatprep.subr.mxu0 0.0
      %12016 = vmatpush1.msra.mxu0 0.0
      %12017 = vmatprep.subr.mxu0 0.0
      %12018 = vmatpush1.msra.mxu0 0.0
      %12019 = vmatprep.subr.mxu0 0.0
      %12020 = vmatpush1.msra.mxu0 0.0
      %12021 = vmatprep.subr.mxu0 0.0
      %v12022 = vand.u32 %v10728, 4294901760
      %v12023 = vsub.f32 %v10728, %v12022
      %v12024 = vand.u32 %v12023, 4294901760
      %12025 = vmatpush1.msra.mxu0 %v12024
      %12026 = vmatprep.subr.mxu0 0.0
      %12027 = vmatpush2.msra.mxu0 0.0
      %12028 = vmatprep.subr.mxu0 0.0
      %12029 = vmatpush2.msra.mxu0 0.0
      %12030 = vmatprep.subr.mxu0 0.0
      %12031 = vmatpush2.msra.mxu0 0.0
      %12032 = vmatprep.subr.mxu0 0.0
      %12033 = vmatpush2.msra.mxu0 0.0
      %12034 = vmatprep.subr.mxu0 0.0
      %12035 = vmatpush2.msra.mxu0 0.0
      %12036 = vmatprep.subr.mxu0 0.0
      %12037 = vmatpush2.msra.mxu0 0.0
      %12038 = vmatprep.subr.mxu0 0.0
      %12039 = vmatpush2.msra.mxu0 0.0
      %12040 = vmatprep.subr.mxu0 0.0
      %12041 = vmatpush2.msra.mxu0 0.0
      %12042 = vmatprep.subr.mxu0 0.0
      %12043 = vmatpush2.msra.mxu0 0.0
      %12044 = vmatprep.subr.mxu0 0.0
      %12045 = vmatpush2.msra.mxu0 0.0
      %12046 = vmatprep.subr.mxu0 0.0
      %12047 = vmatpush2.msra.mxu0 0.0
      %12048 = vmatprep.subr.mxu0 0.0
      %12049 = vmatpush2.msra.mxu0 0.0
      %12050 = vmatprep.subr.mxu0 0.0
      %12051 = vmatpush2.msra.mxu0 0.0
      %12052 = vmatprep.subr.mxu0 0.0
      %12053 = vmatpush2.msra.mxu0 0.0
      %12054 = vmatprep.subr.mxu0 0.0
      %12055 = vmatpush2.msra.mxu0 0.0
      %12056 = vmatprep.subr.mxu0 0.0
      %12057 = vmatpush2.msra.mxu0 0.0
      %12058 = vmatprep.mubr.f32.mxu0 0.0
      %v12059 = vand.u32 %v10633, 4294901760
      %12060 = vmatmul.mubr.f32.gmra.mxu0 %v12059
      %v12061 = vpop.f32.mrf.mxu0
      %v12062 = vadd.f32 %v11740, %v12061
      %v12063 = vpop.f32.mrf.mxu0
      %12064 = vmatprep.mubr.f32.mxu0 0.0
      %v12065 = vand.u32 %v10636, 4294901760
      %12066 = vmatmul.mubr.f32.gmra.mxu0 %v12065
      %v12067 = vpop.f32.mrf.mxu0
      %v12068 = vadd.f32 %v11748, %v12067
      %v12069 = vpop.f32.mrf.mxu0
      %12070 = vmatprep.mubr.f32.mxu0 0.0
      %v12071 = vand.u32 %v10639, 4294901760
      %12072 = vmatmul.mubr.f32.gmra.mxu0 %v12071
      %v12073 = vpop.f32.mrf.mxu0
      %v12074 = vadd.f32 %v11756, %v12073
      %v12075 = vpop.f32.mrf.mxu0
      %12076 = vmatprep.mubr.f32.mxu0 0.0
      %v12077 = vand.u32 %v10642, 4294901760
      %12078 = vmatmul.mubr.f32.gmra.mxu0 %v12077
      %v12079 = vpop.f32.mrf.mxu0
      %v12080 = vadd.f32 %v11764, %v12079
      %v12081 = vpop.f32.mrf.mxu0
      %12082 = vmatprep.mubr.f32.mxu0 0.0
      %v12083 = vand.u32 %v10645, 4294901760
      %12084 = vmatmul.mubr.f32.gmra.mxu0 %v12083
      %v12085 = vpop.f32.mrf.mxu0
      %v12086 = vadd.f32 %v11772, %v12085
      %v12087 = vpop.f32.mrf.mxu0
      %12088 = vmatprep.mubr.f32.mxu0 0.0
      %v12089 = vand.u32 %v10648, 4294901760
      %12090 = vmatmul.mubr.f32.gmra.mxu0 %v12089
      %v12091 = vpop.f32.mrf.mxu0
      %v12092 = vadd.f32 %v11780, %v12091
      %v12093 = vpop.f32.mrf.mxu0
      %12094 = vmatprep.mubr.f32.mxu0 0.0
      %v12095 = vand.u32 %v10651, 4294901760
      %12096 = vmatmul.mubr.f32.gmra.mxu0 %v12095
      %v12097 = vpop.f32.mrf.mxu0
      %v12098 = vadd.f32 %v11788, %v12097
      %v12099 = vpop.f32.mrf.mxu0
      %12100 = vmatprep.mubr.f32.mxu0 0.0
      %v12101 = vand.u32 %v10654, 4294901760
      %12102 = vmatmul.mubr.f32.gmra.mxu0 %v12101
      %v12103 = vpop.f32.mrf.mxu0
      %v12104 = vadd.f32 %v11796, %v12103
      %v12105 = vpop.f32.mrf.mxu0
      %12106 = vmatprep.mubr.f32.mxu0 0.0
      %v12107 = vand.u32 %v10657, 4294901760
      %12108 = vmatmul.mubr.f32.gmra.mxu0 %v12107
      %v12109 = vpop.f32.mrf.mxu0
      %v12110 = vadd.f32 %v11804, %v12109
      %v12111 = vpop.f32.mrf.mxu0
      %12112 = vmatprep.mubr.f32.mxu0 0.0
      %v12113 = vand.u32 %v10660, 4294901760
      %12114 = vmatmul.mubr.f32.gmra.mxu0 %v12113
      %v12115 = vpop.f32.mrf.mxu0
      %v12116 = vadd.f32 %v11812, %v12115
      %v12117 = vpop.f32.mrf.mxu0
      %12118 = vmatprep.mubr.f32.mxu0 0.0
      %v12119 = vand.u32 %v10663, 4294901760
      %12120 = vmatmul.mubr.f32.gmra.mxu0 %v12119
      %v12121 = vpop.f32.mrf.mxu0
      %v12122 = vadd.f32 %v11820, %v12121
      %v12123 = vpop.f32.mrf.mxu0
      %12124 = vmatprep.mubr.f32.mxu0 0.0
      %v12125 = vand.u32 %v10666, 4294901760
      %12126 = vmatmul.mubr.f32.gmra.mxu0 %v12125
      %v12127 = vpop.f32.mrf.mxu0
      %v12128 = vadd.f32 %v11828, %v12127
      %v12129 = vpop.f32.mrf.mxu0
      %12130 = vmatprep.mubr.f32.mxu0 0.0
      %v12131 = vand.u32 %v10669, 4294901760
      %12132 = vmatmul.mubr.f32.gmra.mxu0 %v12131
      %v12133 = vpop.f32.mrf.mxu0
      %v12134 = vadd.f32 %v11836, %v12133
      %v12135 = vpop.f32.mrf.mxu0
      %12136 = vmatprep.mubr.f32.mxu0 0.0
      %v12137 = vand.u32 %v10672, 4294901760
      %12138 = vmatmul.mubr.f32.gmra.mxu0 %v12137
      %v12139 = vpop.f32.mrf.mxu0
      %v12140 = vadd.f32 %v11844, %v12139
      %v12141 = vpop.f32.mrf.mxu0
      %12142 = vmatprep.mubr.f32.mxu0 0.0
      %v12143 = vand.u32 %v10675, 4294901760
      %12144 = vmatmul.mubr.f32.gmra.mxu0 %v12143
      %v12145 = vpop.f32.mrf.mxu0
      %v12146 = vadd.f32 %v11852, %v12145
      %v12147 = vpop.f32.mrf.mxu0
      %12148 = vmatprep.mubr.f32.mxu0 0.0
      %v12149 = vand.u32 %v10678, 4294901760
      %12150 = vmatmul.mubr.f32.gmra.mxu0 %v12149
      %v12151 = vpop.f32.mrf.mxu0
      %v12152 = vadd.f32 %v11860, %v12151
      %v12153 = vpop.f32.mrf.mxu0
      %12154 = vmatprep.mubr.f32.mxu0 0.0
      %v12155 = vand.u32 %v10681, 4294901760
      %12156 = vmatmul.mubr.f32.gmra.mxu0 %v12155
      %v12157 = vpop.f32.mrf.mxu0
      %v12158 = vadd.f32 %v11868, %v12157
      %v12159 = vpop.f32.mrf.mxu0
      %12160 = vmatprep.mubr.f32.mxu0 0.0
      %v12161 = vand.u32 %v10684, 4294901760
      %12162 = vmatmul.mubr.f32.gmra.mxu0 %v12161
      %v12163 = vpop.f32.mrf.mxu0
      %v12164 = vadd.f32 %v11876, %v12163
      %v12165 = vpop.f32.mrf.mxu0
      %12166 = vmatprep.mubr.f32.mxu0 0.0
      %v12167 = vand.u32 %v10687, 4294901760
      %12168 = vmatmul.mubr.f32.gmra.mxu0 %v12167
      %v12169 = vpop.f32.mrf.mxu0
      %v12170 = vadd.f32 %v11884, %v12169
      %v12171 = vpop.f32.mrf.mxu0
      %12172 = vmatprep.mubr.f32.mxu0 0.0
      %v12173 = vand.u32 %v10690, 4294901760
      %12174 = vmatmul.mubr.f32.gmra.mxu0 %v12173
      %v12175 = vpop.f32.mrf.mxu0
      %v12176 = vadd.f32 %v11892, %v12175
      %v12177 = vpop.f32.mrf.mxu0
      %12178 = vmatprep.mubr.f32.mxu0 0.0
      %v12179 = vand.u32 %v10693, 4294901760
      %12180 = vmatmul.mubr.f32.gmra.mxu0 %v12179
      %v12181 = vpop.f32.mrf.mxu0
      %v12182 = vadd.f32 %v11900, %v12181
      %v12183 = vpop.f32.mrf.mxu0
      %12184 = vmatprep.mubr.f32.mxu0 0.0
      %v12185 = vand.u32 %v10696, 4294901760
      %12186 = vmatmul.mubr.f32.gmra.mxu0 %v12185
      %v12187 = vpop.f32.mrf.mxu0
      %v12188 = vadd.f32 %v11908, %v12187
      %v12189 = vpop.f32.mrf.mxu0
      %12190 = vmatprep.mubr.f32.mxu0 0.0
      %v12191 = vand.u32 %v10699, 4294901760
      %12192 = vmatmul.mubr.f32.gmra.mxu0 %v12191
      %v12193 = vpop.f32.mrf.mxu0
      %v12194 = vadd.f32 %v11916, %v12193
      %v12195 = vpop.f32.mrf.mxu0
      %12196 = vmatprep.mubr.f32.mxu0 0.0
      %v12197 = vand.u32 %v10702, 4294901760
      %12198 = vmatmul.mubr.f32.gmra.mxu0 %v12197
      %v12199 = vpop.f32.mrf.mxu0
      %v12200 = vadd.f32 %v11924, %v12199
      %v12201 = vpop.f32.mrf.mxu0
      %12202 = vmatprep.mubr.f32.mxu0 0.0
      %v12203 = vand.u32 %v10705, 4294901760
      %12204 = vmatmul.mubr.f32.gmra.mxu0 %v12203
      %v12205 = vpop.f32.mrf.mxu0
      %v12206 = vadd.f32 %v11932, %v12205
      %v12207 = vpop.f32.mrf.mxu0
      %12208 = vmatprep.mubr.f32.mxu0 0.0
      %v12209 = vand.u32 %v10708, 4294901760
      %12210 = vmatmul.mubr.f32.gmra.mxu0 %v12209
      %v12211 = vpop.f32.mrf.mxu0
      %v12212 = vadd.f32 %v11940, %v12211
      %v12213 = vpop.f32.mrf.mxu0
      %12214 = vmatprep.mubr.f32.mxu0 0.0
      %v12215 = vand.u32 %v10711, 4294901760
      %12216 = vmatmul.mubr.f32.gmra.mxu0 %v12215
      %v12217 = vpop.f32.mrf.mxu0
      %v12218 = vadd.f32 %v11948, %v12217
      %v12219 = vpop.f32.mrf.mxu0
      %12220 = vmatprep.mubr.f32.mxu0 0.0
      %v12221 = vand.u32 %v10714, 4294901760
      %12222 = vmatmul.mubr.f32.gmra.mxu0 %v12221
      %v12223 = vpop.f32.mrf.mxu0
      %v12224 = vadd.f32 %v11956, %v12223
      %v12225 = vpop.f32.mrf.mxu0
      %12226 = vmatprep.mubr.f32.mxu0 0.0
      %v12227 = vand.u32 %v10717, 4294901760
      %12228 = vmatmul.mubr.f32.gmra.mxu0 %v12227
      %v12229 = vpop.f32.mrf.mxu0
      %v12230 = vadd.f32 %v11964, %v12229
      %v12231 = vpop.f32.mrf.mxu0
      %12232 = vmatprep.mubr.f32.mxu0 0.0
      %v12233 = vand.u32 %v10720, 4294901760
      %12234 = vmatmul.mubr.f32.gmra.mxu0 %v12233
      %v12235 = vpop.f32.mrf.mxu0
      %v12236 = vadd.f32 %v11972, %v12235
      %v12237 = vpop.f32.mrf.mxu0
      %12238 = vmatprep.mubr.f32.mxu0 0.0
      %v12239 = vand.u32 %v10723, 4294901760
      %12240 = vmatmul.mubr.f32.gmra.mxu0 %v12239
      %v12241 = vpop.f32.mrf.mxu0
      %v12242 = vadd.f32 %v11980, %v12241
      %v12243 = vpop.f32.mrf.mxu0
      %12244 = vmatprep.mubr.f32.mxu0 0.0
      %v12245 = vand.u32 %v10726, 4294901760
      %12246 = vmatmul.mubr.f32.gmra.mxu0 %v12245
      %v12247 = vpop.f32.mrf.mxu0
      %v12248 = vadd.f32 %v11988, %v12247
      %v12249 = vpop.f32.mrf.mxu0
      %12250 = vdwg.mxu0
      %12251 = vmatprep.subr.mxu0 0.0
      %12252 = vmatpush1.msra.mxu0 0.0
      %12253 = vmatprep.subr.mxu0 0.0
      %12254 = vmatpush1.msra.mxu0 0.0
      %12255 = vmatprep.subr.mxu0 0.0
      %12256 = vmatpush1.msra.mxu0 0.0
      %12257 = vmatprep.subr.mxu0 0.0
      %12258 = vmatpush1.msra.mxu0 0.0
      %12259 = vmatprep.subr.mxu0 0.0
      %12260 = vmatpush1.msra.mxu0 0.0
      %12261 = vmatprep.subr.mxu0 0.0
      %12262 = vmatpush1.msra.mxu0 0.0
      %12263 = vmatprep.subr.mxu0 0.0
      %12264 = vmatpush1.msra.mxu0 0.0
      %12265 = vmatprep.subr.mxu0 0.0
      %12266 = vmatpush1.msra.mxu0 0.0
      %12267 = vmatprep.subr.mxu0 0.0
      %12268 = vmatpush1.msra.mxu0 0.0
      %12269 = vmatprep.subr.mxu0 0.0
      %12270 = vmatpush1.msra.mxu0 0.0
      %12271 = vmatprep.subr.mxu0 0.0
      %12272 = vmatpush1.msra.mxu0 0.0
      %12273 = vmatprep.subr.mxu0 0.0
      %12274 = vmatpush1.msra.mxu0 0.0
      %12275 = vmatprep.subr.mxu0 0.0
      %12276 = vmatpush1.msra.mxu0 0.0
      %12277 = vmatprep.subr.mxu0 0.0
      %12278 = vmatpush1.msra.mxu0 0.0
      %12279 = vmatprep.subr.mxu0 0.0
      %12280 = vmatpush1.msra.mxu0 0.0
      %12281 = vmatprep.subr.mxu0 0.0
      %v12282 = vand.u32 %v10728, 4294901760
      %12283 = vmatpush1.msra.mxu0 %v12282
      %12284 = vmatprep.subr.mxu0 0.0
      %12285 = vmatpush2.msra.mxu0 0.0
      %12286 = vmatprep.subr.mxu0 0.0
      %12287 = vmatpush2.msra.mxu0 0.0
      %12288 = vmatprep.subr.mxu0 0.0
      %12289 = vmatpush2.msra.mxu0 0.0
      %12290 = vmatprep.subr.mxu0 0.0
      %12291 = vmatpush2.msra.mxu0 0.0
      %12292 = vmatprep.subr.mxu0 0.0
      %12293 = vmatpush2.msra.mxu0 0.0
      %12294 = vmatprep.subr.mxu0 0.0
      %12295 = vmatpush2.msra.mxu0 0.0
      %12296 = vmatprep.subr.mxu0 0.0
      %12297 = vmatpush2.msra.mxu0 0.0
      %12298 = vmatprep.subr.mxu0 0.0
      %12299 = vmatpush2.msra.mxu0 0.0
      %12300 = vmatprep.subr.mxu0 0.0
      %12301 = vmatpush2.msra.mxu0 0.0
      %12302 = vmatprep.subr.mxu0 0.0
      %12303 = vmatpush2.msra.mxu0 0.0
      %12304 = vmatprep.subr.mxu0 0.0
      %12305 = vmatpush2.msra.mxu0 0.0
      %12306 = vmatprep.subr.mxu0 0.0
      %12307 = vmatpush2.msra.mxu0 0.0
      %12308 = vmatprep.subr.mxu0 0.0
      %12309 = vmatpush2.msra.mxu0 0.0
      %12310 = vmatprep.subr.mxu0 0.0
      %12311 = vmatpush2.msra.mxu0 0.0
      %12312 = vmatprep.subr.mxu0 0.0
      %12313 = vmatpush2.msra.mxu0 0.0
      %12314 = vmatprep.subr.mxu0 0.0
      %12315 = vmatpush2.msra.mxu0 0.0
      %12316 = vmatprep.mubr.f32.mxu0 0.0
      %v12317 = vand.u32 %v10633, 4294901760
      %12318 = vmatmul.mubr.f32.gmra.mxu0 %v12317
      %v12319 = vpop.f32.mrf.mxu0
      %v12320 = vadd.f32 %v12062, %v12319
      %v12321 = vpop.f32.mrf.mxu0
      %12322 = vmatprep.mubr.f32.mxu0 0.0
      %v12323 = vand.u32 %v10636, 4294901760
      %12324 = vmatmul.mubr.f32.gmra.mxu0 %v12323
      %v12325 = vpop.f32.mrf.mxu0
      %v12326 = vadd.f32 %v12068, %v12325
      %v12327 = vpop.f32.mrf.mxu0
      %12328 = vmatprep.mubr.f32.mxu0 0.0
      %v12329 = vand.u32 %v10639, 4294901760
      %12330 = vmatmul.mubr.f32.gmra.mxu0 %v12329
      %v12331 = vpop.f32.mrf.mxu0
      %v12332 = vadd.f32 %v12074, %v12331
      %v12333 = vpop.f32.mrf.mxu0
      %12334 = vmatprep.mubr.f32.mxu0 0.0
      %v12335 = vand.u32 %v10642, 4294901760
      %12336 = vmatmul.mubr.f32.gmra.mxu0 %v12335
      %v12337 = vpop.f32.mrf.mxu0
      %v12338 = vadd.f32 %v12080, %v12337
      %v12339 = vpop.f32.mrf.mxu0
      %12340 = vmatprep.mubr.f32.mxu0 0.0
      %v12341 = vand.u32 %v10645, 4294901760
      %12342 = vmatmul.mubr.f32.gmra.mxu0 %v12341
      %v12343 = vpop.f32.mrf.mxu0
      %v12344 = vadd.f32 %v12086, %v12343
      %v12345 = vpop.f32.mrf.mxu0
      %12346 = vmatprep.mubr.f32.mxu0 0.0
      %v12347 = vand.u32 %v10648, 4294901760
      %12348 = vmatmul.mubr.f32.gmra.mxu0 %v12347
      %v12349 = vpop.f32.mrf.mxu0
      %v12350 = vadd.f32 %v12092, %v12349
      %v12351 = vpop.f32.mrf.mxu0
      %12352 = vmatprep.mubr.f32.mxu0 0.0
      %v12353 = vand.u32 %v10651, 4294901760
      %12354 = vmatmul.mubr.f32.gmra.mxu0 %v12353
      %v12355 = vpop.f32.mrf.mxu0
      %v12356 = vadd.f32 %v12098, %v12355
      %v12357 = vpop.f32.mrf.mxu0
      %12358 = vmatprep.mubr.f32.mxu0 0.0
      %v12359 = vand.u32 %v10654, 4294901760
      %12360 = vmatmul.mubr.f32.gmra.mxu0 %v12359
      %v12361 = vpop.f32.mrf.mxu0
      %v12362 = vadd.f32 %v12104, %v12361
      %v12363 = vpop.f32.mrf.mxu0
      %12364 = vmatprep.mubr.f32.mxu0 0.0
      %v12365 = vand.u32 %v10657, 4294901760
      %12366 = vmatmul.mubr.f32.gmra.mxu0 %v12365
      %v12367 = vpop.f32.mrf.mxu0
      %v12368 = vadd.f32 %v12110, %v12367
      %v12369 = vpop.f32.mrf.mxu0
      %12370 = vmatprep.mubr.f32.mxu0 0.0
      %v12371 = vand.u32 %v10660, 4294901760
      %12372 = vmatmul.mubr.f32.gmra.mxu0 %v12371
      %v12373 = vpop.f32.mrf.mxu0
      %v12374 = vadd.f32 %v12116, %v12373
      %v12375 = vpop.f32.mrf.mxu0
      %12376 = vmatprep.mubr.f32.mxu0 0.0
      %v12377 = vand.u32 %v10663, 4294901760
      %12378 = vmatmul.mubr.f32.gmra.mxu0 %v12377
      %v12379 = vpop.f32.mrf.mxu0
      %v12380 = vadd.f32 %v12122, %v12379
      %v12381 = vpop.f32.mrf.mxu0
      %12382 = vmatprep.mubr.f32.mxu0 0.0
      %v12383 = vand.u32 %v10666, 4294901760
      %12384 = vmatmul.mubr.f32.gmra.mxu0 %v12383
      %v12385 = vpop.f32.mrf.mxu0
      %v12386 = vadd.f32 %v12128, %v12385
      %v12387 = vpop.f32.mrf.mxu0
      %12388 = vmatprep.mubr.f32.mxu0 0.0
      %v12389 = vand.u32 %v10669, 4294901760
      %12390 = vmatmul.mubr.f32.gmra.mxu0 %v12389
      %v12391 = vpop.f32.mrf.mxu0
      %v12392 = vadd.f32 %v12134, %v12391
      %v12393 = vpop.f32.mrf.mxu0
      %12394 = vmatprep.mubr.f32.mxu0 0.0
      %v12395 = vand.u32 %v10672, 4294901760
      %12396 = vmatmul.mubr.f32.gmra.mxu0 %v12395
      %v12397 = vpop.f32.mrf.mxu0
      %v12398 = vadd.f32 %v12140, %v12397
      %v12399 = vpop.f32.mrf.mxu0
      %12400 = vmatprep.mubr.f32.mxu0 0.0
      %v12401 = vand.u32 %v10675, 4294901760
      %12402 = vmatmul.mubr.f32.gmra.mxu0 %v12401
      %v12403 = vpop.f32.mrf.mxu0
      %v12404 = vadd.f32 %v12146, %v12403
      %v12405 = vpop.f32.mrf.mxu0
      %12406 = vmatprep.mubr.f32.mxu0 0.0
      %v12407 = vand.u32 %v10678, 4294901760
      %12408 = vmatmul.mubr.f32.gmra.mxu0 %v12407
      %v12409 = vpop.f32.mrf.mxu0
      %v12410 = vadd.f32 %v12152, %v12409
      %v12411 = vpop.f32.mrf.mxu0
      %12412 = vmatprep.mubr.f32.mxu0 0.0
      %v12413 = vand.u32 %v10681, 4294901760
      %12414 = vmatmul.mubr.f32.gmra.mxu0 %v12413
      %v12415 = vpop.f32.mrf.mxu0
      %v12416 = vadd.f32 %v12158, %v12415
      %v12417 = vpop.f32.mrf.mxu0
      %12418 = vmatprep.mubr.f32.mxu0 0.0
      %v12419 = vand.u32 %v10684, 4294901760
      %12420 = vmatmul.mubr.f32.gmra.mxu0 %v12419
      %v12421 = vpop.f32.mrf.mxu0
      %v12422 = vadd.f32 %v12164, %v12421
      %v12423 = vpop.f32.mrf.mxu0
      %12424 = vmatprep.mubr.f32.mxu0 0.0
      %v12425 = vand.u32 %v10687, 4294901760
      %12426 = vmatmul.mubr.f32.gmra.mxu0 %v12425
      %v12427 = vpop.f32.mrf.mxu0
      %v12428 = vadd.f32 %v12170, %v12427
      %v12429 = vpop.f32.mrf.mxu0
      %12430 = vmatprep.mubr.f32.mxu0 0.0
      %v12431 = vand.u32 %v10690, 4294901760
      %12432 = vmatmul.mubr.f32.gmra.mxu0 %v12431
      %v12433 = vpop.f32.mrf.mxu0
      %v12434 = vadd.f32 %v12176, %v12433
      %v12435 = vpop.f32.mrf.mxu0
      %12436 = vmatprep.mubr.f32.mxu0 0.0
      %v12437 = vand.u32 %v10693, 4294901760
      %12438 = vmatmul.mubr.f32.gmra.mxu0 %v12437
      %v12439 = vpop.f32.mrf.mxu0
      %v12440 = vadd.f32 %v12182, %v12439
      %v12441 = vpop.f32.mrf.mxu0
      %12442 = vmatprep.mubr.f32.mxu0 0.0
      %v12443 = vand.u32 %v10696, 4294901760
      %12444 = vmatmul.mubr.f32.gmra.mxu0 %v12443
      %v12445 = vpop.f32.mrf.mxu0
      %v12446 = vadd.f32 %v12188, %v12445
      %v12447 = vpop.f32.mrf.mxu0
      %12448 = vmatprep.mubr.f32.mxu0 0.0
      %v12449 = vand.u32 %v10699, 4294901760
      %12450 = vmatmul.mubr.f32.gmra.mxu0 %v12449
      %v12451 = vpop.f32.mrf.mxu0
      %v12452 = vadd.f32 %v12194, %v12451
      %v12453 = vpop.f32.mrf.mxu0
      %12454 = vmatprep.mubr.f32.mxu0 0.0
      %v12455 = vand.u32 %v10702, 4294901760
      %12456 = vmatmul.mubr.f32.gmra.mxu0 %v12455
      %v12457 = vpop.f32.mrf.mxu0
      %v12458 = vadd.f32 %v12200, %v12457
      %v12459 = vpop.f32.mrf.mxu0
      %12460 = vmatprep.mubr.f32.mxu0 0.0
      %v12461 = vand.u32 %v10705, 4294901760
      %12462 = vmatmul.mubr.f32.gmra.mxu0 %v12461
      %v12463 = vpop.f32.mrf.mxu0
      %v12464 = vadd.f32 %v12206, %v12463
      %v12465 = vpop.f32.mrf.mxu0
      %12466 = vmatprep.mubr.f32.mxu0 0.0
      %v12467 = vand.u32 %v10708, 4294901760
      %12468 = vmatmul.mubr.f32.gmra.mxu0 %v12467
      %v12469 = vpop.f32.mrf.mxu0
      %v12470 = vadd.f32 %v12212, %v12469
      %v12471 = vpop.f32.mrf.mxu0
      %12472 = vmatprep.mubr.f32.mxu0 0.0
      %v12473 = vand.u32 %v10711, 4294901760
      %12474 = vmatmul.mubr.f32.gmra.mxu0 %v12473
      %v12475 = vpop.f32.mrf.mxu0
      %v12476 = vadd.f32 %v12218, %v12475
      %v12477 = vpop.f32.mrf.mxu0
      %12478 = vmatprep.mubr.f32.mxu0 0.0
      %v12479 = vand.u32 %v10714, 4294901760
      %12480 = vmatmul.mubr.f32.gmra.mxu0 %v12479
      %v12481 = vpop.f32.mrf.mxu0
      %v12482 = vadd.f32 %v12224, %v12481
      %v12483 = vpop.f32.mrf.mxu0
      %12484 = vmatprep.mubr.f32.mxu0 0.0
      %v12485 = vand.u32 %v10717, 4294901760
      %12486 = vmatmul.mubr.f32.gmra.mxu0 %v12485
      %v12487 = vpop.f32.mrf.mxu0
      %v12488 = vadd.f32 %v12230, %v12487
      %v12489 = vpop.f32.mrf.mxu0
      %12490 = vmatprep.mubr.f32.mxu0 0.0
      %v12491 = vand.u32 %v10720, 4294901760
      %12492 = vmatmul.mubr.f32.gmra.mxu0 %v12491
      %v12493 = vpop.f32.mrf.mxu0
      %v12494 = vadd.f32 %v12236, %v12493
      %v12495 = vpop.f32.mrf.mxu0
      %12496 = vmatprep.mubr.f32.mxu0 0.0
      %v12497 = vand.u32 %v10723, 4294901760
      %12498 = vmatmul.mubr.f32.gmra.mxu0 %v12497
      %v12499 = vpop.f32.mrf.mxu0
      %v12500 = vadd.f32 %v12242, %v12499
      %v12501 = vpop.f32.mrf.mxu0
      %12502 = vmatprep.mubr.f32.mxu0 0.0
      %v12503 = vand.u32 %v10726, 4294901760
      %12504 = vmatmul.mubr.f32.gmra.mxu0 %v12503
      %v12505 = vpop.f32.mrf.mxu0
      %v12506 = vadd.f32 %v12248, %v12505
      %v12507 = vpop.f32.mrf.mxu0
      %12508 = vdwg.mxu0
      %v12509 = vadd.f32 %v10599, %v12320
      %v12510 = vadd.f32 %v10600, %v12326
      %v12511 = vadd.f32 %v10601, %v12332
      %v12512 = vadd.f32 %v10602, %v12338
      %v12513 = vadd.f32 %v10603, %v12344
      %v12514 = vadd.f32 %v10604, %v12350
      %v12515 = vadd.f32 %v10605, %v12356
      %v12516 = vadd.f32 %v10606, %v12362
      %v12517 = vadd.f32 %v10607, %v12368
      %v12518 = vadd.f32 %v10608, %v12374
      %v12519 = vadd.f32 %v10609, %v12380
      %v12520 = vadd.f32 %v10610, %v12386
      %v12521 = vadd.f32 %v10611, %v12392
      %v12522 = vadd.f32 %v10612, %v12398
      %v12523 = vadd.f32 %v10613, %v12404
      %v12524 = vadd.f32 %v10614, %v12410
      %v12525 = vadd.f32 %v10615, %v12416
      %v12526 = vadd.f32 %v10616, %v12422
      %v12527 = vadd.f32 %v10617, %v12428
      %v12528 = vadd.f32 %v10618, %v12434
      %v12529 = vadd.f32 %v10619, %v12440
      %v12530 = vadd.f32 %v10620, %v12446
      %v12531 = vadd.f32 %v10621, %v12452
      %v12532 = vadd.f32 %v10622, %v12458
      %v12533 = vadd.f32 %v10623, %v12464
      %v12534 = vadd.f32 %v10624, %v12470
      %v12535 = vadd.f32 %v10625, %v12476
      %v12536 = vadd.f32 %v10626, %v12482
      %v12537 = vadd.f32 %v10627, %v12488
      %v12538 = vadd.f32 %v10628, %v12494
      %v12539 = vadd.f32 %v10629, %v12500
      %v12540 = vadd.f32 %v10630, %v12506
      %v12541 = vld [vmem:[%s4] sm:$0x1]
      %v12543 = vlaneseq
      %v12544 = vshrl.u32 %v12543, 7
      %v12545 = vsub.s32 0, %v12544
      %v12546 = vrot.slane %v12541, %v12545
      %v12548 = vadd.f32 %v12509, %v12546
      %v12549 = vadd.f32 %v12510, %v12546
      %v12550 = vadd.f32 %v12511, %v12546
      %v12551 = vadd.f32 %v12512, %v12546
      %v12552 = vadd.f32 %v12513, %v12546
      %v12553 = vadd.f32 %v12514, %v12546
      %v12554 = vadd.f32 %v12515, %v12546
      %v12555 = vadd.f32 %v12516, %v12546
      %v12556 = vadd.f32 %v12517, %v12546
      %v12557 = vadd.f32 %v12518, %v12546
      %v12558 = vadd.f32 %v12519, %v12546
      %v12559 = vadd.f32 %v12520, %v12546
      %v12560 = vadd.f32 %v12521, %v12546
      %v12561 = vadd.f32 %v12522, %v12546
      %v12562 = vadd.f32 %v12523, %v12546
      %v12563 = vadd.f32 %v12524, %v12546
      %v12564 = vadd.f32 %v12525, %v12546
      %v12565 = vadd.f32 %v12526, %v12546
      %v12566 = vadd.f32 %v12527, %v12546
      %v12567 = vadd.f32 %v12528, %v12546
      %v12568 = vadd.f32 %v12529, %v12546
      %v12569 = vadd.f32 %v12530, %v12546
      %v12570 = vadd.f32 %v12531, %v12546
      %v12571 = vadd.f32 %v12532, %v12546
      %v12572 = vadd.f32 %v12533, %v12546
      %v12573 = vadd.f32 %v12534, %v12546
      %v12574 = vadd.f32 %v12535, %v12546
      %v12575 = vadd.f32 %v12536, %v12546
      %v12576 = vadd.f32 %v12537, %v12546
      %v12577 = vadd.f32 %v12538, %v12546
      %v12578 = vadd.f32 %v12539, %v12546
      %v12579 = vadd.f32 %v12540, %v12546
      %v12580 = vsub.f32 0.0, %v12548
      %v12581 = vsub.f32 0.0, %v12549
      %v12582 = vsub.f32 0.0, %v12550
      %v12583 = vsub.f32 0.0, %v12551
      %v12584 = vsub.f32 0.0, %v12552
      %v12585 = vsub.f32 0.0, %v12553
      %v12586 = vsub.f32 0.0, %v12554
      %v12587 = vsub.f32 0.0, %v12555
      %v12588 = vsub.f32 0.0, %v12556
      %v12589 = vsub.f32 0.0, %v12557
      %v12590 = vsub.f32 0.0, %v12558
      %v12591 = vsub.f32 0.0, %v12559
      %v12592 = vsub.f32 0.0, %v12560
      %v12593 = vsub.f32 0.0, %v12561
      %v12594 = vsub.f32 0.0, %v12562
      %v12595 = vsub.f32 0.0, %v12563
      %v12596 = vsub.f32 0.0, %v12564
      %v12597 = vsub.f32 0.0, %v12565
      %v12598 = vsub.f32 0.0, %v12566
      %v12599 = vsub.f32 0.0, %v12567
      %v12600 = vsub.f32 0.0, %v12568
      %v12601 = vsub.f32 0.0, %v12569
      %v12602 = vsub.f32 0.0, %v12570
      %v12603 = vsub.f32 0.0, %v12571
      %v12604 = vsub.f32 0.0, %v12572
      %v12605 = vsub.f32 0.0, %v12573
      %v12606 = vsub.f32 0.0, %v12574
      %v12607 = vsub.f32 0.0, %v12575
      %v12608 = vsub.f32 0.0, %v12576
      %v12609 = vsub.f32 0.0, %v12577
      %v12610 = vsub.f32 0.0, %v12578
      %v12611 = vsub.f32 0.0, %v12579
      %v12612 = vmul.f32 %v12580, 1.442695
      %v12613 = vpow.pop %v12612
      %v12614 = vmul.f32 %v12581, 1.442695
      %v12615 = vpow.pop %v12614
      %v12616 = vmul.f32 %v12582, 1.442695
      %v12617 = vpow.pop %v12616
      %v12618 = vmul.f32 %v12583, 1.442695
      %v12619 = vpow.pop %v12618
      %v12620 = vmul.f32 %v12584, 1.442695
      %v12621 = vpow.pop %v12620
      %v12622 = vmul.f32 %v12585, 1.442695
      %v12623 = vpow.pop %v12622
      %v12624 = vmul.f32 %v12586, 1.442695
      %v12625 = vpow.pop %v12624
      %v12626 = vmul.f32 %v12587, 1.442695
      %v12627 = vpow.pop %v12626
      %v12628 = vmul.f32 %v12588, 1.442695
      %v12629 = vpow.pop %v12628
      %v12630 = vmul.f32 %v12589, 1.442695
      %v12631 = vpow.pop %v12630
      %v12632 = vmul.f32 %v12590, 1.442695
      %v12633 = vpow.pop %v12632
      %v12634 = vmul.f32 %v12591, 1.442695
      %v12635 = vpow.pop %v12634
      %v12636 = vmul.f32 %v12592, 1.442695
      %v12637 = vpow.pop %v12636
      %v12638 = vmul.f32 %v12593, 1.442695
      %v12639 = vpow.pop %v12638
      %v12640 = vmul.f32 %v12594, 1.442695
      %v12641 = vpow.pop %v12640
      %v12642 = vmul.f32 %v12595, 1.442695
      %v12643 = vpow.pop %v12642
      %v12644 = vmul.f32 %v12596, 1.442695
      %v12645 = vpow.pop %v12644
      %v12646 = vmul.f32 %v12597, 1.442695
      %v12647 = vpow.pop %v12646
      %v12648 = vmul.f32 %v12598, 1.442695
      %v12649 = vpow.pop %v12648
      %v12650 = vmul.f32 %v12599, 1.442695
      %v12651 = vpow.pop %v12650
      %v12652 = vmul.f32 %v12600, 1.442695
      %v12653 = vpow.pop %v12652
      %v12654 = vmul.f32 %v12601, 1.442695
      %v12655 = vpow.pop %v12654
      %v12656 = vmul.f32 %v12602, 1.442695
      %v12657 = vpow.pop %v12656
      %v12658 = vmul.f32 %v12603, 1.442695
      %v12659 = vpow.pop %v12658
      %v12660 = vmul.f32 %v12604, 1.442695
      %v12661 = vpow.pop %v12660
      %v12662 = vmul.f32 %v12605, 1.442695
      %v12663 = vpow.pop %v12662
      %v12664 = vmul.f32 %v12606, 1.442695
      %v12665 = vpow.pop %v12664
      %v12666 = vmul.f32 %v12607, 1.442695
      %v12667 = vpow.pop %v12666
      %v12668 = vmul.f32 %v12608, 1.442695
      %v12669 = vpow.pop %v12668
      %v12670 = vmul.f32 %v12609, 1.442695
      %v12671 = vpow.pop %v12670
      %v12672 = vmul.f32 %v12610, 1.442695
      %v12673 = vpow.pop %v12672
      %v12674 = vmul.f32 %v12611, 1.442695
      %v12675 = vpow.pop %v12674
      %v12676 = vadd.f32 %v12613, 1.0
      %v12677 = vadd.f32 %v12615, 1.0
      %v12678 = vadd.f32 %v12617, 1.0
      %v12679 = vadd.f32 %v12619, 1.0
      %v12680 = vadd.f32 %v12621, 1.0
      %v12681 = vadd.f32 %v12623, 1.0
      %v12682 = vadd.f32 %v12625, 1.0
      %v12683 = vadd.f32 %v12627, 1.0
      %v12684 = vadd.f32 %v12629, 1.0
      %v12685 = vadd.f32 %v12631, 1.0
      %v12686 = vadd.f32 %v12633, 1.0
      %v12687 = vadd.f32 %v12635, 1.0
      %v12688 = vadd.f32 %v12637, 1.0
      %v12689 = vadd.f32 %v12639, 1.0
      %v12690 = vadd.f32 %v12641, 1.0
      %v12691 = vadd.f32 %v12643, 1.0
      %v12692 = vadd.f32 %v12645, 1.0
      %v12693 = vadd.f32 %v12647, 1.0
      %v12694 = vadd.f32 %v12649, 1.0
      %v12695 = vadd.f32 %v12651, 1.0
      %v12696 = vadd.f32 %v12653, 1.0
      %v12697 = vadd.f32 %v12655, 1.0
      %v12698 = vadd.f32 %v12657, 1.0
      %v12699 = vadd.f32 %v12659, 1.0
      %v12700 = vadd.f32 %v12661, 1.0
      %v12701 = vadd.f32 %v12663, 1.0
      %v12702 = vadd.f32 %v12665, 1.0
      %v12703 = vadd.f32 %v12667, 1.0
      %v12704 = vadd.f32 %v12669, 1.0
      %v12705 = vadd.f32 %v12671, 1.0
      %v12706 = vadd.f32 %v12673, 1.0
      %v12707 = vadd.f32 %v12675, 1.0
      %v12708 = vrcp.pop %v12676
      %v12709 = vrcp.pop %v12677
      %v12710 = vrcp.pop %v12678
      %v12711 = vrcp.pop %v12679
      %v12712 = vrcp.pop %v12680
      %v12713 = vrcp.pop %v12681
      %v12714 = vrcp.pop %v12682
      %v12715 = vrcp.pop %v12683
      %v12716 = vrcp.pop %v12684
      %v12717 = vrcp.pop %v12685
      %v12718 = vrcp.pop %v12686
      %v12719 = vrcp.pop %v12687
      %v12720 = vrcp.pop %v12688
      %v12721 = vrcp.pop %v12689
      %v12722 = vrcp.pop %v12690
      %v12723 = vrcp.pop %v12691
      %v12724 = vrcp.pop %v12692
      %v12725 = vrcp.pop %v12693
      %v12726 = vrcp.pop %v12694
      %v12727 = vrcp.pop %v12695
      %v12728 = vrcp.pop %v12696
      %v12729 = vrcp.pop %v12697
      %v12730 = vrcp.pop %v12698
      %v12731 = vrcp.pop %v12699
      %v12732 = vrcp.pop %v12700
      %v12733 = vrcp.pop %v12701
      %v12734 = vrcp.pop %v12702
      %v12735 = vrcp.pop %v12703
      %v12736 = vrcp.pop %v12704
      %v12737 = vrcp.pop %v12705
      %v12738 = vrcp.pop %v12706
      %v12739 = vrcp.pop %v12707
      %v12740 = vmul.f32 %v12548, %v12708
      %v12741 = vmul.f32 %v12549, %v12709
      %v12742 = vmul.f32 %v12550, %v12710
      %v12743 = vmul.f32 %v12551, %v12711
      %v12744 = vmul.f32 %v12552, %v12712
      %v12745 = vmul.f32 %v12553, %v12713
      %v12746 = vmul.f32 %v12554, %v12714
      %v12747 = vmul.f32 %v12555, %v12715
      %v12748 = vmul.f32 %v12556, %v12716
      %v12749 = vmul.f32 %v12557, %v12717
      %v12750 = vmul.f32 %v12558, %v12718
      %v12751 = vmul.f32 %v12559, %v12719
      %v12752 = vmul.f32 %v12560, %v12720
      %v12753 = vmul.f32 %v12561, %v12721
      %v12754 = vmul.f32 %v12562, %v12722
      %v12755 = vmul.f32 %v12563, %v12723
      %v12756 = vmul.f32 %v12564, %v12724
      %v12757 = vmul.f32 %v12565, %v12725
      %v12758 = vmul.f32 %v12566, %v12726
      %v12759 = vmul.f32 %v12567, %v12727
      %v12760 = vmul.f32 %v12568, %v12728
      %v12761 = vmul.f32 %v12569, %v12729
      %v12762 = vmul.f32 %v12570, %v12730
      %v12763 = vmul.f32 %v12571, %v12731
      %v12764 = vmul.f32 %v12572, %v12732
      %v12765 = vmul.f32 %v12573, %v12733
      %v12766 = vmul.f32 %v12574, %v12734
      %v12767 = vmul.f32 %v12575, %v12735
      %v12768 = vmul.f32 %v12576, %v12736
      %v12769 = vmul.f32 %v12577, %v12737
      %v12770 = vmul.f32 %v12578, %v12738
      %v12771 = vmul.f32 %v12579, %v12739
      %vm12772 = vcmask 64512
      %12773 = vst.msk [vmem:[%s224] sm:$0xff] %vm12772, %v12740
      %12774 = vst.msk [vmem:[%s224 + $0x8] sm:$0xff] %vm12772, %v12741
      %12775 = vst.msk [vmem:[%s224 + $0x10] sm:$0xff] %vm12772, %v12742
      %12776 = vst.msk [vmem:[%s224 + $0x18] sm:$0xff] %vm12772, %v12743
      %12777 = vst.msk [vmem:[%s224 + $0x20] sm:$0xff] %vm12772, %v12744
      %12778 = vst.msk [vmem:[%s224 + $0x28] sm:$0xff] %vm12772, %v12745
      %12779 = vst.msk [vmem:[%s224 + $0x30] sm:$0xff] %vm12772, %v12746
      %12780 = vst.msk [vmem:[%s224 + $0x38] sm:$0xff] %vm12772, %v12747
      %12781 = vst.msk [vmem:[%s224 + $0x40] sm:$0xff] %vm12772, %v12748
      %12782 = vst.msk [vmem:[%s224 + $0x48] sm:$0xff] %vm12772, %v12749
      %12783 = vst.msk [vmem:[%s224 + $0x50] sm:$0xff] %vm12772, %v12750
      %12784 = vst.msk [vmem:[%s224 + $0x58] sm:$0xff] %vm12772, %v12751
      %12785 = vst.msk [vmem:[%s224 + $0x60] sm:$0xff] %vm12772, %v12752
      %12786 = vst.msk [vmem:[%s224 + $0x68] sm:$0xff] %vm12772, %v12753
      %12787 = vst.msk [vmem:[%s224 + $0x70] sm:$0xff] %vm12772, %v12754
      %12788 = vst.msk [vmem:[%s224 + $0x78] sm:$0xff] %vm12772, %v12755
      %12789 = vst.msk [vmem:[%s224 + $0x80] sm:$0xff] %vm12772, %v12756
      %12790 = vst.msk [vmem:[%s224 + $0x88] sm:$0xff] %vm12772, %v12757
      %12791 = vst.msk [vmem:[%s224 + $0x90] sm:$0xff] %vm12772, %v12758
      %12792 = vst.msk [vmem:[%s224 + $0x98] sm:$0xff] %vm12772, %v12759
      %12793 = vst.msk [vmem:[%s224 + $0xa0] sm:$0xff] %vm12772, %v12760
      %12794 = vst.msk [vmem:[%s224 + $0xa8] sm:$0xff] %vm12772, %v12761
      %12795 = vst.msk [vmem:[%s224 + $0xb0] sm:$0xff] %vm12772, %v12762
      %12796 = vst.msk [vmem:[%s224 + $0xb8] sm:$0xff] %vm12772, %v12763
      %12797 = vst.msk [vmem:[%s224 + $0xc0] sm:$0xff] %vm12772, %v12764
      %12798 = vst.msk [vmem:[%s224 + $0xc8] sm:$0xff] %vm12772, %v12765
      %12799 = vst.msk [vmem:[%s224 + $0xd0] sm:$0xff] %vm12772, %v12766
      %12800 = vst.msk [vmem:[%s224 + $0xd8] sm:$0xff] %vm12772, %v12767
      %12801 = vst.msk [vmem:[%s224 + $0xe0] sm:$0xff] %vm12772, %v12768
      %12802 = vst.msk [vmem:[%s224 + $0xe8] sm:$0xff] %vm12772, %v12769
      %12803 = vst.msk [vmem:[%s224 + $0xf0] sm:$0xff] %vm12772, %v12770
      %12804 = vst.msk [vmem:[%s224 + $0xf8] sm:$0xff] %vm12772, %v12771
      %p12805 = scmp.lt.s32.totalorder %s16, 1
      %s12806 = scalar_select %p12805, %s16, 1
      %s12807 = smul.addr %s12806, 32
      %s12808 = smul.addr %s12807, 8
      %s12809 = scalar_lea.vmem %s5, %s12808
      // Predicated region
      $region41: #{tpu_custom_call.1} parent=39 // pred_check
        %p12810 = pneg %p144
      $region42: #{tpu_custom_call.1} parent=39 // pred_check_branch
        %12812 = sbr.rel (%p12810) target = $region44
      $region43: #{tpu_custom_call.1} parent=39 // pred_region
        _
      $region44: #{tpu_custom_call.1} parent=39 // pred_fallthru
        _
    $region40: #{tpu_custom_call.1} parent=5 // pred_fallthru
      _
    %p12813 = scmp.le.s32.totalorder 2, %s11
    // Predicated region
    $region45: #{tpu_custom_call.1} parent=5 // pred_check
      %p12814 = pneg %p12813
    $region46: #{tpu_custom_call.1} parent=5 // pred_check_branch
      %12816 = sbr.rel (%p12814) target = $region48
    $region47: #{tpu_custom_call.1} parent=5 // pred_region
      %s12817 = ssub.s32 %s11, 2
      // Predicated region
      $region49: #{tpu_custom_call.1} parent=47 // pred_check
        %p12818 = pneg %p150
      $region50: #{tpu_custom_call.1} parent=47 // pred_check_branch
        %12820 = sbr.rel (%p12818) target = $region52
      $region51: #{tpu_custom_call.1} parent=47 // pred_region
        %p12821 = scmp.lt.s32.totalorder %s17, 1
        %s12822 = scalar_select %p12821, %s17, 1
        %s12823 = smul.addr %s12822, 32
        %s12824 = smul.addr %s12823, 8
        %s12825 = scalar_lea.vmem %s5, %s12824
      $region52: #{tpu_custom_call.1} parent=47 // pred_fallthru
        _
    $region48: #{tpu_custom_call.1} parent=5 // pred_fallthru
      _
  $region6: #{tpu_custom_call.1} parent=0 // loop_footer
    %s15 = sadd.s32 1, %s11
  $region7: #{tpu_custom_call.1} parent=0 // loop_footer_branch
    %10 = sbr.rel target = $region3
  $region8: #{tpu_custom_call.1} parent=0 // loop_exit
    _

</llo_original>
